<compile_context>
chip_gen: v7x
topology: tpu7x:2x2x1
jax: 0.10.0
libtpu: 0.0.40
codegen_flags: <defaults>
</compile_context>

<pallas_src>
import jax
import jax.numpy as jnp
from jax.experimental import pallas as pl
from jax.experimental.pallas import tpu as pltpu

_BN_EPS = 1e-3

try:
    _VMEM_CAP = int(pltpu.get_tpu_info().vmem_capacity_bytes)
except Exception:  # conservative fallback
    _VMEM_CAP = 64 * 1024 * 1024
# Valid on v7x (64 MiB physical VMEM) while still allowing large tiles on v5e/v6e.
_VMEM_LIMIT = min((_VMEM_CAP * 3) // 4, 96 * 1024 * 1024)


def _cdiv(a, b):
    return -(-a // b)


def _pick_tile(n_rows, min_rows):
    """Row tile: big enough for the MXU, not wasteful on small late-stage maps,
    and >= the largest tap offset (so the halo window fits)."""
    tm = 256 if n_rows >= 1024 else 128
    while tm < min_rows:
        tm *= 2
    return tm


def _halo_rows(tm, max_off):
    th = 8
    while th < max_off:
        th *= 2
    return min(th, tm)


# --------------------------------------------------------------------------------------
# Pallas kernels
# --------------------------------------------------------------------------------------
def _make_tap_matmul_kernel(taps, tm, th, k, relu):
    """out = relu( sum_t x[row+roff_t, loff_t:loff_t+k] @ W_t + bias ), taps unrolled."""

    def kernel(xlo_ref, xhi_ref, w_ref, b_ref, o_ref, xcat_ref):
        # Stitch the row tile and its small halo into one contiguous VMEM window.
        xcat_ref[pl.ds(0, tm), :] = xlo_ref[...]
        xcat_ref[pl.ds(tm, th), :] = xhi_ref[...]
        acc = None
        for t, (roff, loff) in enumerate(taps):
            xw = xcat_ref[pl.ds(roff, tm), pl.ds(loff, k)]
            part = jnp.dot(xw, w_ref[t], preferred_element_type=jnp.float32)
            acc = part if acc is None else acc + part
        acc = acc + b_ref[...]
        if relu:
            acc = jnp.maximum(acc, 0.0)
        o_ref[...] = acc.astype(o_ref.dtype)

    return kernel


def _make_matmul_kernel(relu):
    """1x1 conv fast path: out = relu(x @ W + bias)."""

    def kernel(x_ref, w_ref, b_ref, o_ref):
        acc = jnp.dot(x_ref[...], w_ref[0], preferred_element_type=jnp.float32)
        acc = acc + b_ref[...]
        if relu:
            acc = jnp.maximum(acc, 0.0)
        o_ref[...] = acc.astype(o_ref.dtype)

    return kernel


def _make_tap_conv_pool_kernel(taps, tm, th, k):
    """Fused 3x3/stride-2 conv (+BN+ReLU) and 3x3/stride-2 max pool on the same
    space-to-depth tap slices.  One HBM read of the activation feeds both outputs."""

    def kernel(xlo_ref, xhi_ref, w_ref, b_ref, o_ref, p_ref, xcat_ref):
        xcat_ref[pl.ds(0, tm), :] = xlo_ref[...]
        xcat_ref[pl.ds(tm, th), :] = xhi_ref[...]
        acc = None
        pmax = None
        for t, (roff, loff) in enumerate(taps):
            xw = xcat_ref[pl.ds(roff, tm), pl.ds(loff, k)]
            part = jnp.dot(xw, w_ref[t], preferred_element_type=jnp.float32)
            acc = part if acc is None else acc + part
            pmax = xw if pmax is None else jnp.maximum(pmax, xw)
        acc = jnp.maximum(acc + b_ref[...], 0.0)
        o_ref[...] = acc.astype(o_ref.dtype)
        p_ref[...] = pmax

    return kernel


# --------------------------------------------------------------------------------------
# pallas_call wrappers
# --------------------------------------------------------------------------------------
def _tap_matmul(xflat, w_taps, bias, taps, relu=True):
    """xflat: (R, Kin) bf16;  w_taps: (ntaps, K, Cout) bf16;  taps: ((row_off, lane_off),...).
    Returns (>=R, Cout) bf16; rows past the caller's valid count are junk and get cropped."""
    R, Kin = xflat.shape
    ntaps, K, Cout = w_taps.shape
    max_off = max(r for r, _ in taps)
    tm = _pick_tile(R, max(max_off, 8))
    nt = _cdiv(R, tm)
    bias2 = bias.reshape(1, Cout).astype(jnp.float32)
    cparams = pltpu.CompilerParams(
        dimension_semantics=("parallel",), vmem_limit_bytes=_VMEM_LIMIT)

    if max_off == 0 and ntaps == 1 and K == Kin:      # 1x1 conv: plain fused matmul
        rows = nt * tm
        xpad = jnp.pad(xflat, ((0, rows - R), (0, 0)))
        return pl.pallas_call(
            _make_matmul_kernel(relu),
            out_shape=jax.ShapeDtypeStruct((rows, Cout), jnp.bfloat16),
            grid_spec=pltpu.PrefetchScalarGridSpec(
                num_scalar_prefetch=0,
                grid=(nt,),
                in_specs=[
                    pl.BlockSpec((tm, Kin), lambda i: (i, 0)),
                    pl.BlockSpec((1, K, Cout), lambda i: (0, 0, 0)),
                    pl.BlockSpec((1, Cout), lambda i: (0, 0)),
                ],
                out_specs=pl.BlockSpec((tm, Cout), lambda i: (i, 0)),
            ),
            compiler_params=cparams,
        )(xpad, w_taps, bias2)

    th = _halo_rows(tm, max_off)
    step = tm // th
    rows = nt * tm + th
    xpad = jnp.pad(xflat, ((0, rows - R), (0, 0)))
    return pl.pallas_call(
        _make_tap_matmul_kernel(tuple(taps), tm, th, K, relu),
        out_shape=jax.ShapeDtypeStruct((nt * tm, Cout), jnp.bfloat16),
        grid_spec=pltpu.PrefetchScalarGridSpec(
            num_scalar_prefetch=0,
            grid=(nt,),
            in_specs=[
                pl.BlockSpec((tm, Kin), lambda i: (i, 0)),               # row tile
                pl.BlockSpec((th, Kin), lambda i: ((i + 1) * step, 0)),  # halo block
                pl.BlockSpec((ntaps, K, Cout), lambda i: (0, 0, 0)),     # resident weights
                pl.BlockSpec((1, Cout), lambda i: (0, 0)),
            ],
            out_specs=pl.BlockSpec((tm, Cout), lambda i: (i, 0)),
            scratch_shapes=[pltpu.VMEM((tm + th, Kin), jnp.bfloat16)],
        ),
        compiler_params=cparams,
    )(xpad, xpad, w_taps, bias2)


def _tap_conv_pool(xflat, w_taps, bias, taps, c_pool):
    """Fused tap-conv + tap-maxpool over the same (R, Kin) flattened s2d activation."""
    R, Kin = xflat.shape
    ntaps, K, Cout = w_taps.shape
    max_off = max(r for r, _ in taps)
    tm = _pick_tile(R, max(max_off, 8))
    nt = _cdiv(R, tm)
    th = _halo_rows(tm, max_off)
    step = tm // th
    rows = nt * tm + th
    xpad = jnp.pad(xflat, ((0, rows - R), (0, 0)))
    bias2 = bias.reshape(1, Cout).astype(jnp.float32)
    return pl.pallas_call(
        _make_tap_conv_pool_kernel(tuple(taps), tm, th, K),
        out_shape=(jax.ShapeDtypeStruct((nt * tm, Cout), jnp.bfloat16),
                   jax.ShapeDtypeStruct((nt * tm, c_pool), jnp.bfloat16)),
        grid_spec=pltpu.PrefetchScalarGridSpec(
            num_scalar_prefetch=0,
            grid=(nt,),
            in_specs=[
                pl.BlockSpec((tm, Kin), lambda i: (i, 0)),
                pl.BlockSpec((th, Kin), lambda i: ((i + 1) * step, 0)),
                pl.BlockSpec((ntaps, K, Cout), lambda i: (0, 0, 0)),
                pl.BlockSpec((1, Cout), lambda i: (0, 0)),
            ],
            out_specs=(pl.BlockSpec((tm, Cout), lambda i: (i, 0)),
                       pl.BlockSpec((tm, c_pool), lambda i: (i, 0))),
            scratch_shapes=[pltpu.VMEM((tm + th, Kin), jnp.bfloat16)],
        ),
        compiler_params=pltpu.CompilerParams(
            dimension_semantics=("parallel",), vmem_limit_bytes=_VMEM_LIMIT),
    )(xpad, xpad, w_taps, bias2)


# --------------------------------------------------------------------------------------
# Layout helpers (pure XLA glue around the kernels)
# --------------------------------------------------------------------------------------
def _space_to_depth2(x):
    """(N,H,W,C) -> (N,Hs,Ws,4C) with y[n,i,j,(a*2+b)*C+c] = x[n,2i+a,2j+b,c] (zero pad).
    Hs = Ho+1, Ws = Wo+1 where (Ho,Wo) is the VALID 3x3 / stride-2 output size."""
    N, H, W, C = x.shape
    Ho, Wo = (H - 3) // 2 + 1, (W - 3) // 2 + 1
    Hs, Ws = Ho + 1, Wo + 1
    xp = jnp.pad(x, ((0, 0), (0, 2 * Hs - H), (0, 2 * Ws - W), (0, 0)))
    y = xp.reshape(N, Hs, 2, Ws, 2, C).transpose(0, 1, 3, 2, 4, 5).reshape(N, Hs, Ws, 4 * C)
    return y, Ho, Wo, Hs, Ws


def _s2d_taps(ws, c):
    # 3x3/stride-2 tap (dy, dx)  ->  contiguous (row, lane) slice of the s2d view.
    return tuple(((dy // 2) * ws + dx // 2, ((dy % 2) * 2 + dx % 2) * c)
                 for dy in range(3) for dx in range(3))


def _conv_s1(x, w_taps, bias, kh, kw, pad, relu=True):
    """Stride-1 conv (VALID on the padded input) as a flattened tap matmul."""
    N, H, W, C = x.shape
    if pad:
        x = jnp.pad(x, ((0, 0), (pad, pad), (pad, pad), (0, 0)))
    Hp, Wp = H + 2 * pad, W + 2 * pad
    Ho, Wo = Hp - kh + 1, Wp - kw + 1
    taps = tuple((dy * Wp + dx, 0) for dy in range(kh) for dx in range(kw))
    out = _tap_matmul(x.reshape(N * Hp * Wp, C), w_taps, bias, taps, relu)
    Cout = w_taps.shape[-1]
    return out[: N * Hp * Wp].reshape(N, Hp, Wp, Cout)[:, :Ho, :Wo, :]


def _conv_s2_3x3(y, dims, w_taps, bias, c_in, relu=True):
    """3x3 stride-2 VALID conv evaluated on a precomputed space-to-depth view."""
    N, Ho, Wo, Hs, Ws = dims
    taps = _s2d_taps(Ws, c_in)
    out = _tap_matmul(y.reshape(N * Hs * Ws, 4 * c_in), w_taps, bias, taps, relu)
    Cout = w_taps.shape[-1]
    return out[: N * Hs * Ws].reshape(N, Hs, Ws, Cout)[:, :Ho, :Wo, :]


def _conv_pool_s2_3x3(y, dims, w_taps, bias, c_in):
    """Fused 3x3/s2 conv + 3x3/s2 max pool, both reading the shared s2d view once."""
    N, Ho, Wo, Hs, Ws = dims
    taps = _s2d_taps(Ws, c_in)
    conv, pool = _tap_conv_pool(y.reshape(N * Hs * Ws, 4 * c_in), w_taps, bias, taps, c_in)
    Cout = w_taps.shape[-1]
    b3 = conv[: N * Hs * Ws].reshape(N, Hs, Ws, Cout)[:, :Ho, :Wo, :]
    bp = pool[: N * Hs * Ws].reshape(N, Hs, Ws, c_in)[:, :Ho, :Wo, :]
    return b3, bp


# --------------------------------------------------------------------------------------
# Parameters (deterministic synthetic weights; BN folded) and module forward
# --------------------------------------------------------------------------------------
def _init_basic_conv(key, cin, cout, kh, kw):
    """BasicConv2d = Conv2d(bias=False) + BatchNorm2d(eps=1e-3, eval) + ReLU.
    Eval BN (mean=0, var=1, gamma=1, beta=0) is folded into the weights."""
    w = jax.random.truncated_normal(key, -2.0, 2.0, (kh, kw, cin, cout), jnp.float32) * 0.1
    w = w / jnp.sqrt(1.0 + _BN_EPS)                       # gamma / sqrt(var + eps)
    w_taps = w.reshape(kh * kw, cin, cout).astype(jnp.bfloat16)
    bias = jnp.zeros((cout,), jnp.float32)                # beta - mean * scale == 0
    return w_taps, bias


def init_inception_b(key, in_channels):
    k = jax.random.split(key, 4)
    return {
        "b3": _init_basic_conv(k[0], in_channels, 384, 3, 3),   # branch3x3 (stride 2)
        "bd1": _init_basic_conv(k[1], in_channels, 64, 1, 1),   # branch3x3dbl_1
        "bd2": _init_basic_conv(k[2], 64, 96, 3, 3),            # branch3x3dbl_2 (pad 1)
        "bd3": _init_basic_conv(k[3], 96, 96, 3, 3),            # branch3x3dbl_3 (stride 2)
    }


@jax.jit
def inception_b_forward(params, x_nchw):
    x = jnp.transpose(x_nchw, (0, 2, 3, 1)).astype(jnp.bfloat16)   # NCHW -> NHWC, bf16
    N, H, W, C = x.shape

    # One shared space-to-depth view feeds the fused branch3x3 conv + stride-2 max pool.
    y, Ho, Wo, Hs, Ws = _space_to_depth2(x)
    dims = (N, Ho, Wo, Hs, Ws)

    # branch3x3 (3x3 / stride-2 conv, C -> 384) and branch_pool (3x3 / stride-2 max pool)
    # computed in one fused kernel over the same tap slices.
    b3, bp = _conv_pool_s2_3x3(y, dims, *params["b3"], c_in=C)

    # branch3x3dbl: 1x1 -> 3x3 (pad 1) -> 3x3 (stride 2)
    t = _conv_s1(x, *params["bd1"], kh=1, kw=1, pad=0)
    t = _conv_s1(t, *params["bd2"], kh=3, kw=3, pad=1)
    ty, tHo, tWo, tHs, tWs = _space_to_depth2(t)
    bd = _conv_s2_3x3(ty, (N, tHo, tWo, tHs, tWs), *params["bd3"], c_in=96)

    out = jnp.concatenate([b3, bd, bp], axis=-1)          # matches torch.cat order
    return jnp.transpose(out, (0, 3, 1, 2)).astype(jnp.float32)   # back to NCHW


# --------------------------------------------------------------------------------------
# Pure-XLA reference (f32) for a loose functional check
# --------------------------------------------------------------------------------------
def _ref_basic_conv(x, w_taps, bias, kh, kw, stride, pad):
    cin, cout = w_taps.shape[1], w_taps.shape[2]
    w = w_taps.astype(jnp.float32).reshape(kh, kw, cin, cout)
    out = jax.lax.conv_general_dilated(
        x, w, window_strides=(stride, stride),
        padding=((pad, pad), (pad, pad)),
        dimension_numbers=("NHWC", "HWIO", "NHWC"))
    out = out + bias.reshape(1, 1, 1, cout)
    return jnp.maximum(out, 0.0)


def _ref_inception_b(params, x_nchw):
    x = jnp.transpose(x_nchw, (0, 2, 3, 1)).astype(jnp.float32)
    b3 = _ref_basic_conv(x, *params["b3"], kh=3, kw=3, stride=2, pad=0)
    t = _ref_basic_conv(x, *params["bd1"], kh=1, kw=1, stride=1, pad=0)
    t = _ref_basic_conv(t, *params["bd2"], kh=3, kw=3, stride=1, pad=1)
    bd = _ref_basic_conv(t, *params["bd3"], kh=3, kw=3, stride=2, pad=0)
    bp = jax.lax.reduce_window(x, -jnp.inf, jax.lax.max,
                               (1, 3, 3, 1), (1, 2, 2, 1), "VALID")
    out = jnp.concatenate([b3, bd, bp], axis=-1)
    return jnp.transpose(out, (0, 3, 1, 2))


# --------------------------------------------------------------------------------------
if __name__ == "__main__":
    key = jax.random.PRNGKey(0)
    k_params, k_x = jax.random.split(key)

    # Small shapes consistent with the module (real Inception-B input is 288 x 35 x 35).
    batch, in_channels, hw = 2, 64, 17
    params = init_inception_b(k_params, in_channels)
    x = jax.random.normal(k_x, (batch, in_channels, hw, hw), jnp.float32)

    out = jax.block_until_ready(inception_b_forward(params, x))

    ho = (hw - 3) // 2 + 1
    assert out.shape == (batch, 384 + 96 + in_channels, ho, ho), out.shape
    assert bool(jnp.all(jnp.isfinite(out)))

    # Loose functional check vs an XLA reference (kernel stores activations in bf16).
    ref = jax.block_until_ready(_ref_inception_b(params, x))
    err = float(jnp.max(jnp.abs(out - ref)))
    scale = float(jnp.max(jnp.abs(ref)))
    assert err <= 0.05 * scale + 1e-2, (err, scale)

    print("KERNEL_OK")
</pallas_src>

<mosaic_0001>
module attributes {stable_mosaic.version = 11 : i64} {
  func.func @kernel(%arg0: i32, %arg1: memref<128x256xbf16, #tpu.memory_space<vmem>>, %arg2: memref<16x256xbf16, #tpu.memory_space<vmem>>, %arg3: memref<9x64x384xbf16, #tpu.memory_space<vmem>>, %arg4: memref<1x384xf32, #tpu.memory_space<vmem>>, %arg5: memref<128x384xbf16, #tpu.memory_space<vmem>>, %arg6: memref<128x64xbf16, #tpu.memory_space<vmem>>, %arg7: memref<144x256xbf16, #tpu.memory_space<vmem>>) attributes {dimension_semantics = [#tpu.dimension_semantics<parallel>], iteration_bounds = array<i64: 2>, scalar_prefetch = 0 : i64, scratch_operands = 1 : i64, tpu.core_type = #tpu.core_type<tc>, window_params = [{transform_indices = @transform_0, window_bounds = array<i64: 128, 256>}, {transform_indices = @transform_1, window_bounds = array<i64: 16, 256>}, {pipeline_mode = #tpu.pipeline_mode<synchronous>, transform_indices = @transform_2, window_bounds = array<i64: 9, 64, 384>}, {pipeline_mode = #tpu.pipeline_mode<synchronous>, transform_indices = @transform_3, window_bounds = array<i64: 1, 384>}, {transform_indices = @transform_4, window_bounds = array<i64: 128, 384>}, {transform_indices = @transform_5, window_bounds = array<i64: 128, 64>}]} {
    %c0 = arith.constant 0 : index
    %c0_0 = arith.constant 0 : index
    %0 = vector.load %arg1[%c0, %c0_0] : memref<128x256xbf16, #tpu.memory_space<vmem>>, vector<128x256xbf16>
    %c0_1 = arith.constant 0 : index
    %c0_2 = arith.constant 0 : index
    %1 = vector.load %arg7[%c0_1, %c0_2] : memref<144x256xbf16, #tpu.memory_space<vmem>>, vector<128x256xbf16>
    tpu.vector_store %arg7[%c0_1, %c0_2], %0 {strides = array<i32>} : memref<144x256xbf16, #tpu.memory_space<vmem>>, vector<128x256xbf16>,
    %c0_3 = arith.constant 0 : index
    %c0_4 = arith.constant 0 : index
    %2 = vector.load %arg2[%c0_3, %c0_4] : memref<16x256xbf16, #tpu.memory_space<vmem>>, vector<16x256xbf16>
    %c128 = arith.constant 128 : index
    %c0_5 = arith.constant 0 : index
    %3 = vector.load %arg7[%c128, %c0_5] : memref<144x256xbf16, #tpu.memory_space<vmem>>, vector<16x256xbf16>
    tpu.vector_store %arg7[%c128, %c0_5], %2 {strides = array<i32>} : memref<144x256xbf16, #tpu.memory_space<vmem>>, vector<16x256xbf16>,
    %c0_6 = arith.constant 0 : index
    %c0_7 = arith.constant 0 : index
    %4 = vector.load %arg7[%c0_6, %c0_7] : memref<144x256xbf16, #tpu.memory_space<vmem>>, vector<128x64xbf16>
    %c0_8 = arith.constant 0 : index
    %c0_9 = arith.constant 0 : index
    %c0_10 = arith.constant 0 : index
    %5 = vector.load %arg3[%c0_8, %c0_9, %c0_10] : memref<9x64x384xbf16, #tpu.memory_space<vmem>>, vector<1x64x384xbf16>
    %6 = vector.shape_cast %5 : vector<1x64x384xbf16> to vector<64x384xbf16>
    %cst = arith.constant dense<0.000000e+00> : vector<128x384xf32>
    %7 = tpu.matmul %4, %6, %cst {dimension_numbers = #tpu.dot_dimension_numbers<[1], [0], [0], [1], [0, 0, 1, 1], [], []>} : vector<128x64xbf16>, vector<64x384xbf16>, vector<128x384xf32> -> vector<128x384xf32>
    %c0_11 = arith.constant 0 : index
    %c64 = arith.constant 64 : index
    %8 = vector.load %arg7[%c0_11, %c64] : memref<144x256xbf16, #tpu.memory_space<vmem>>, vector<128x64xbf16>
    %c1 = arith.constant 1 : index
    %c0_12 = arith.constant 0 : index
    %c0_13 = arith.constant 0 : index
    %9 = vector.load %arg3[%c1, %c0_12, %c0_13] : memref<9x64x384xbf16, #tpu.memory_space<vmem>>, vector<1x64x384xbf16>
    %10 = vector.shape_cast %9 : vector<1x64x384xbf16> to vector<64x384xbf16>
    %cst_14 = arith.constant dense<0.000000e+00> : vector<128x384xf32>
    %11 = tpu.matmul %8, %10, %cst_14 {dimension_numbers = #tpu.dot_dimension_numbers<[1], [0], [0], [1], [0, 0, 1, 1], [], []>} : vector<128x64xbf16>, vector<64x384xbf16>, vector<128x384xf32> -> vector<128x384xf32>
    %12 = arith.addf %7, %11 : vector<128x384xf32>
    %13 = arith.maximumf %4, %8 : vector<128x64xbf16>
    %c1_15 = arith.constant 1 : index
    %c0_16 = arith.constant 0 : index
    %14 = vector.load %arg7[%c1_15, %c0_16] : memref<144x256xbf16, #tpu.memory_space<vmem>>, vector<128x64xbf16>
    %c2 = arith.constant 2 : index
    %c0_17 = arith.constant 0 : index
    %c0_18 = arith.constant 0 : index
    %15 = vector.load %arg3[%c2, %c0_17, %c0_18] : memref<9x64x384xbf16, #tpu.memory_space<vmem>>, vector<1x64x384xbf16>
    %16 = vector.shape_cast %15 : vector<1x64x384xbf16> to vector<64x384xbf16>
    %cst_19 = arith.constant dense<0.000000e+00> : vector<128x384xf32>
    %17 = tpu.matmul %14, %16, %cst_19 {dimension_numbers = #tpu.dot_dimension_numbers<[1], [0], [0], [1], [0, 0, 1, 1], [], []>} : vector<128x64xbf16>, vector<64x384xbf16>, vector<128x384xf32> -> vector<128x384xf32>
    %18 = arith.addf %12, %17 : vector<128x384xf32>
    %19 = arith.maximumf %13, %14 : vector<128x64xbf16>
    %c0_20 = arith.constant 0 : index
    %c128_21 = arith.constant 128 : index
    %20 = vector.load %arg7[%c0_20, %c128_21] : memref<144x256xbf16, #tpu.memory_space<vmem>>, vector<128x64xbf16>
    %c3 = arith.constant 3 : index
    %c0_22 = arith.constant 0 : index
    %c0_23 = arith.constant 0 : index
    %21 = vector.load %arg3[%c3, %c0_22, %c0_23] : memref<9x64x384xbf16, #tpu.memory_space<vmem>>, vector<1x64x384xbf16>
    %22 = vector.shape_cast %21 : vector<1x64x384xbf16> to vector<64x384xbf16>
    %cst_24 = arith.constant dense<0.000000e+00> : vector<128x384xf32>
    %23 = tpu.matmul %20, %22, %cst_24 {dimension_numbers = #tpu.dot_dimension_numbers<[1], [0], [0], [1], [0, 0, 1, 1], [], []>} : vector<128x64xbf16>, vector<64x384xbf16>, vector<128x384xf32> -> vector<128x384xf32>
    %24 = arith.addf %18, %23 : vector<128x384xf32>
    %25 = arith.maximumf %19, %20 : vector<128x64xbf16>
    %c0_25 = arith.constant 0 : index
    %c192 = arith.constant 192 : index
    %26 = vector.load %arg7[%c0_25, %c192] : memref<144x256xbf16, #tpu.memory_space<vmem>>, vector<128x64xbf16>
    %c4 = arith.constant 4 : index
    %c0_26 = arith.constant 0 : index
    %c0_27 = arith.constant 0 : index
    %27 = vector.load %arg3[%c4, %c0_26, %c0_27] : memref<9x64x384xbf16, #tpu.memory_space<vmem>>, vector<1x64x384xbf16>
    %28 = vector.shape_cast %27 : vector<1x64x384xbf16> to vector<64x384xbf16>
    %cst_28 = arith.constant dense<0.000000e+00> : vector<128x384xf32>
    %29 = tpu.matmul %26, %28, %cst_28 {dimension_numbers = #tpu.dot_dimension_numbers<[1], [0], [0], [1], [0, 0, 1, 1], [], []>} : vector<128x64xbf16>, vector<64x384xbf16>, vector<128x384xf32> -> vector<128x384xf32>
    %30 = arith.addf %24, %29 : vector<128x384xf32>
    %31 = arith.maximumf %25, %26 : vector<128x64xbf16>
    %c1_29 = arith.constant 1 : index
    %c128_30 = arith.constant 128 : index
    %32 = vector.load %arg7[%c1_29, %c128_30] : memref<144x256xbf16, #tpu.memory_space<vmem>>, vector<128x64xbf16>
    %c5 = arith.constant 5 : index
    %c0_31 = arith.constant 0 : index
    %c0_32 = arith.constant 0 : index
    %33 = vector.load %arg3[%c5, %c0_31, %c0_32] : memref<9x64x384xbf16, #tpu.memory_space<vmem>>, vector<1x64x384xbf16>
    %34 = vector.shape_cast %33 : vector<1x64x384xbf16> to vector<64x384xbf16>
    %cst_33 = arith.constant dense<0.000000e+00> : vector<128x384xf32>
    %35 = tpu.matmul %32, %34, %cst_33 {dimension_numbers = #tpu.dot_dimension_numbers<[1], [0], [0], [1], [0, 0, 1, 1], [], []>} : vector<128x64xbf16>, vector<64x384xbf16>, vector<128x384xf32> -> vector<128x384xf32>
    %36 = arith.addf %30, %35 : vector<128x384xf32>
    %37 = arith.maximumf %31, %32 : vector<128x64xbf16>
    %c9 = arith.constant 9 : index
    %c0_34 = arith.constant 0 : index
    %38 = vector.load %arg7[%c9, %c0_34] : memref<144x256xbf16, #tpu.memory_space<vmem>>, vector<128x64xbf16>
    %c6 = arith.constant 6 : index
    %c0_35 = arith.constant 0 : index
    %c0_36 = arith.constant 0 : index
    %39 = vector.load %arg3[%c6, %c0_35, %c0_36] : memref<9x64x384xbf16, #tpu.memory_space<vmem>>, vector<1x64x384xbf16>
    %40 = vector.shape_cast %39 : vector<1x64x384xbf16> to vector<64x384xbf16>
    %cst_37 = arith.constant dense<0.000000e+00> : vector<128x384xf32>
    %41 = tpu.matmul %38, %40, %cst_37 {dimension_numbers = #tpu.dot_dimension_numbers<[1], [0], [0], [1], [0, 0, 1, 1], [], []>} : vector<128x64xbf16>, vector<64x384xbf16>, vector<128x384xf32> -> vector<128x384xf32>
    %42 = arith.addf %36, %41 : vector<128x384xf32>
    %43 = arith.maximumf %37, %38 : vector<128x64xbf16>
    %c9_38 = arith.constant 9 : index
    %c64_39 = arith.constant 64 : index
    %44 = vector.load %arg7[%c9_38, %c64_39] : memref<144x256xbf16, #tpu.memory_space<vmem>>, vector<128x64xbf16>
    %c7 = arith.constant 7 : index
    %c0_40 = arith.constant 0 : index
    %c0_41 = arith.constant 0 : index
    %45 = vector.load %arg3[%c7, %c0_40, %c0_41] : memref<9x64x384xbf16, #tpu.memory_space<vmem>>, vector<1x64x384xbf16>
    %46 = vector.shape_cast %45 : vector<1x64x384xbf16> to vector<64x384xbf16>
    %cst_42 = arith.constant dense<0.000000e+00> : vector<128x384xf32>
    %47 = tpu.matmul %44, %46, %cst_42 {dimension_numbers = #tpu.dot_dimension_numbers<[1], [0], [0], [1], [0, 0, 1, 1], [], []>} : vector<128x64xbf16>, vector<64x384xbf16>, vector<128x384xf32> -> vector<128x384xf32>
    %48 = arith.addf %42, %47 : vector<128x384xf32>
    %49 = arith.maximumf %43, %44 : vector<128x64xbf16>
    %c10 = arith.constant 10 : index
    %c0_43 = arith.constant 0 : index
    %50 = vector.load %arg7[%c10, %c0_43] : memref<144x256xbf16, #tpu.memory_space<vmem>>, vector<128x64xbf16>
    %c8 = arith.constant 8 : index
    %c0_44 = arith.constant 0 : index
    %c0_45 = arith.constant 0 : index
    %51 = vector.load %arg3[%c8, %c0_44, %c0_45] : memref<9x64x384xbf16, #tpu.memory_space<vmem>>, vector<1x64x384xbf16>
    %52 = vector.shape_cast %51 : vector<1x64x384xbf16> to vector<64x384xbf16>
    %cst_46 = arith.constant dense<0.000000e+00> : vector<128x384xf32>
    %53 = tpu.matmul %50, %52, %cst_46 {dimension_numbers = #tpu.dot_dimension_numbers<[1], [0], [0], [1], [0, 0, 1, 1], [], []>} : vector<128x64xbf16>, vector<64x384xbf16>, vector<128x384xf32> -> vector<128x384xf32>
    %54 = arith.addf %48, %53 : vector<128x384xf32>
    %55 = arith.maximumf %49, %50 : vector<128x64xbf16>
    %c0_47 = arith.constant 0 : index
    %c0_48 = arith.constant 0 : index
    %56 = vector.load %arg4[%c0_47, %c0_48] : memref<1x384xf32, #tpu.memory_space<vmem>>, vector<1x384xf32>
    %57 = vector.broadcast %56 : vector<1x384xf32> to vector<128x384xf32>
    %58 = arith.addf %54, %57 : vector<128x384xf32>
    %cst_49 = arith.constant 0.000000e+00 : f32
    %59 = vector.broadcast %cst_49 : f32 to vector<128x384xf32>
    %60 = arith.maximumf %58, %59 : vector<128x384xf32>
    %61 = arith.truncf %60 : vector<128x384xf32> to vector<128x384xbf16>
    %c0_50 = arith.constant 0 : index
    %c0_51 = arith.constant 0 : index
    %62 = vector.load %arg5[%c0_50, %c0_51] : memref<128x384xbf16, #tpu.memory_space<vmem>>, vector<128x384xbf16>
    tpu.vector_store %arg5[%c0_50, %c0_51], %61 {strides = array<i32>} : memref<128x384xbf16, #tpu.memory_space<vmem>>, vector<128x384xbf16>,
    %c0_52 = arith.constant 0 : index
    %c0_53 = arith.constant 0 : index
    %63 = vector.load %arg6[%c0_52, %c0_53] : memref<128x64xbf16, #tpu.memory_space<vmem>>, vector<128x64xbf16>
    tpu.vector_store %arg6[%c0_52, %c0_53], %55 {strides = array<i32>} : memref<128x64xbf16, #tpu.memory_space<vmem>>, vector<128x64xbf16>,
    return
  }
  func.func @transform_0(%arg0: i32) -> (i32, i32) {
    %c0_i32 = arith.constant 0 : i32
    %c0_i32_0 = arith.constant 0 : i32
    return %arg0, %c0_i32 : i32, i32
  }
  func.func @transform_1(%arg0: i32) -> (i32, i32) {
    %c1_i32 = arith.constant 1 : i32
    %0 = arith.addi %arg0, %c1_i32 : i32
    %c8_i32 = arith.constant 8 : i32
    %1 = arith.muli %0, %c8_i32 : i32
    %c0_i32 = arith.constant 0 : i32
    %c0_i32_0 = arith.constant 0 : i32
    return %1, %c0_i32 : i32, i32
  }
  func.func @transform_2(%arg0: i32) -> (i32, i32, i32) {
    %c0_i32 = arith.constant 0 : i32
    %c0_i32_0 = arith.constant 0 : i32
    %c0_i32_1 = arith.constant 0 : i32
    %c0_i32_2 = arith.constant 0 : i32
    return %c0_i32, %c0_i32_0, %c0_i32_1 : i32, i32, i32
  }
  func.func @transform_3(%arg0: i32) -> (i32, i32) {
    %c0_i32 = arith.constant 0 : i32
    %c0_i32_0 = arith.constant 0 : i32
    %c0_i32_1 = arith.constant 0 : i32
    return %c0_i32, %c0_i32_0 : i32, i32
  }
  func.func @transform_4(%arg0: i32) -> (i32, i32) {
    %c0_i32 = arith.constant 0 : i32
    %c0_i32_0 = arith.constant 0 : i32
    return %arg0, %c0_i32 : i32, i32
  }
  func.func @transform_5(%arg0: i32) -> (i32, i32) {
    %c0_i32 = arith.constant 0 : i32
    %c0_i32_0 = arith.constant 0 : i32
    return %arg0, %c0_i32 : i32, i32
  }
}

module attributes {stable_mosaic.version = 11 : i64} {
  func.func @kernel(%arg0: i32, %arg1: memref<128x64xbf16, #tpu.memory_space<vmem>>, %arg2: memref<1x64x64xbf16, #tpu.memory_space<vmem>>, %arg3: memref<1x64xf32, #tpu.memory_space<vmem>>, %arg4: memref<128x64xbf16, #tpu.memory_space<vmem>>) attributes {dimension_semantics = [#tpu.dimension_semantics<parallel>], iteration_bounds = array<i64: 5>, scalar_prefetch = 0 : i64, scratch_operands = 0 : i64, tpu.core_type = #tpu.core_type<tc>, window_params = [{transform_indices = @transform_0, window_bounds = array<i64: 128, 64>}, {pipeline_mode = #tpu.pipeline_mode<synchronous>, transform_indices = @transform_1, window_bounds = array<i64: 1, 64, 64>}, {pipeline_mode = #tpu.pipeline_mode<synchronous>, transform_indices = @transform_2, window_bounds = array<i64: 1, 64>}, {transform_indices = @transform_3, window_bounds = array<i64: 128, 64>}]} {
    %c0 = arith.constant 0 : index
    %c0_0 = arith.constant 0 : index
    %0 = vector.load %arg1[%c0, %c0_0] : memref<128x64xbf16, #tpu.memory_space<vmem>>, vector<128x64xbf16>
    %c0_1 = arith.constant 0 : index
    %c0_2 = arith.constant 0 : index
    %c0_3 = arith.constant 0 : index
    %1 = vector.load %arg2[%c0_1, %c0_2, %c0_3] : memref<1x64x64xbf16, #tpu.memory_space<vmem>>, vector<1x64x64xbf16>
    %2 = vector.shape_cast %1 : vector<1x64x64xbf16> to vector<64x64xbf16>
    %cst = arith.constant dense<0.000000e+00> : vector<128x64xf32>
    %3 = tpu.matmul %0, %2, %cst {dimension_numbers = #tpu.dot_dimension_numbers<[1], [0], [0], [1], [0, 0, 1, 1], [], []>} : vector<128x64xbf16>, vector<64x64xbf16>, vector<128x64xf32> -> vector<128x64xf32>
    %c0_4 = arith.constant 0 : index
    %c0_5 = arith.constant 0 : index
    %4 = vector.load %arg3[%c0_4, %c0_5] : memref<1x64xf32, #tpu.memory_space<vmem>>, vector<1x64xf32>
    %5 = vector.broadcast %4 : vector<1x64xf32> to vector<128x64xf32>
    %6 = arith.addf %3, %5 : vector<128x64xf32>
    %cst_6 = arith.constant 0.000000e+00 : f32
    %7 = vector.broadcast %cst_6 : f32 to vector<128x64xf32>
    %8 = arith.maximumf %6, %7 : vector<128x64xf32>
    %9 = arith.truncf %8 : vector<128x64xf32> to vector<128x64xbf16>
    %c0_7 = arith.constant 0 : index
    %c0_8 = arith.constant 0 : index
    %10 = vector.load %arg4[%c0_7, %c0_8] : memref<128x64xbf16, #tpu.memory_space<vmem>>, vector<128x64xbf16>
    tpu.vector_store %arg4[%c0_7, %c0_8], %9 {strides = array<i32>} : memref<128x64xbf16, #tpu.memory_space<vmem>>, vector<128x64xbf16>,
    return
  }
  func.func @transform_0(%arg0: i32) -> (i32, i32) {
    %c0_i32 = arith.constant 0 : i32
    %c0_i32_0 = arith.constant 0 : i32
    return %arg0, %c0_i32 : i32, i32
  }
  func.func @transform_1(%arg0: i32) -> (i32, i32, i32) {
    %c0_i32 = arith.constant 0 : i32
    %c0_i32_0 = arith.constant 0 : i32
    %c0_i32_1 = arith.constant 0 : i32
    %c0_i32_2 = arith.constant 0 : i32
    return %c0_i32, %c0_i32_0, %c0_i32_1 : i32, i32, i32
  }
  func.func @transform_2(%arg0: i32) -> (i32, i32) {
    %c0_i32 = arith.constant 0 : i32
    %c0_i32_0 = arith.constant 0 : i32
    %c0_i32_1 = arith.constant 0 : i32
    return %c0_i32, %c0_i32_0 : i32, i32
  }
  func.func @transform_3(%arg0: i32) -> (i32, i32) {
    %c0_i32 = arith.constant 0 : i32
    %c0_i32_0 = arith.constant 0 : i32
    return %arg0, %c0_i32 : i32, i32
  }
}

module attributes {stable_mosaic.version = 11 : i64} {
  func.func @kernel(%arg0: i32, %arg1: memref<128x64xbf16, #tpu.memory_space<vmem>>, %arg2: memref<64x64xbf16, #tpu.memory_space<vmem>>, %arg3: memref<9x64x96xbf16, #tpu.memory_space<vmem>>, %arg4: memref<1x96xf32, #tpu.memory_space<vmem>>, %arg5: memref<128x96xbf16, #tpu.memory_space<vmem>>, %arg6: memref<192x64xbf16, #tpu.memory_space<vmem>>) attributes {dimension_semantics = [#tpu.dimension_semantics<parallel>], iteration_bounds = array<i64: 6>, scalar_prefetch = 0 : i64, scratch_operands = 1 : i64, tpu.core_type = #tpu.core_type<tc>, window_params = [{transform_indices = @transform_0, window_bounds = array<i64: 128, 64>}, {transform_indices = @transform_1, window_bounds = array<i64: 64, 64>}, {pipeline_mode = #tpu.pipeline_mode<synchronous>, transform_indices = @transform_2, window_bounds = array<i64: 9, 64, 96>}, {pipeline_mode = #tpu.pipeline_mode<synchronous>, transform_indices = @transform_3, window_bounds = array<i64: 1, 96>}, {transform_indices = @transform_4, window_bounds = array<i64: 128, 96>}]} {
    %c0 = arith.constant 0 : index
    %c0_0 = arith.constant 0 : index
    %0 = vector.load %arg1[%c0, %c0_0] : memref<128x64xbf16, #tpu.memory_space<vmem>>, vector<128x64xbf16>
    %c0_1 = arith.constant 0 : index
    %c0_2 = arith.constant 0 : index
    %1 = vector.load %arg6[%c0_1, %c0_2] : memref<192x64xbf16, #tpu.memory_space<vmem>>, vector<128x64xbf16>
    tpu.vector_store %arg6[%c0_1, %c0_2], %0 {strides = array<i32>} : memref<192x64xbf16, #tpu.memory_space<vmem>>, vector<128x64xbf16>,
    %c0_3 = arith.constant 0 : index
    %c0_4 = arith.constant 0 : index
    %2 = vector.load %arg2[%c0_3, %c0_4] : memref<64x64xbf16, #tpu.memory_space<vmem>>, vector<64x64xbf16>
    %c128 = arith.constant 128 : index
    %c0_5 = arith.constant 0 : index
    %3 = vector.load %arg6[%c128, %c0_5] : memref<192x64xbf16, #tpu.memory_space<vmem>>, vector<64x64xbf16>
    tpu.vector_store %arg6[%c128, %c0_5], %2 {strides = array<i32>} : memref<192x64xbf16, #tpu.memory_space<vmem>>, vector<64x64xbf16>,
    %c0_6 = arith.constant 0 : index
    %c0_7 = arith.constant 0 : index
    %4 = vector.load %arg6[%c0_6, %c0_7] : memref<192x64xbf16, #tpu.memory_space<vmem>>, vector<128x64xbf16>
    %c0_8 = arith.constant 0 : index
    %c0_9 = arith.constant 0 : index
    %c0_10 = arith.constant 0 : index
    %5 = vector.load %arg3[%c0_8, %c0_9, %c0_10] : memref<9x64x96xbf16, #tpu.memory_space<vmem>>, vector<1x64x96xbf16>
    %6 = vector.shape_cast %5 : vector<1x64x96xbf16> to vector<64x96xbf16>
    %cst = arith.constant dense<0.000000e+00> : vector<128x96xf32>
    %7 = tpu.matmul %4, %6, %cst {dimension_numbers = #tpu.dot_dimension_numbers<[1], [0], [0], [1], [0, 0, 1, 1], [], []>} : vector<128x64xbf16>, vector<64x96xbf16>, vector<128x96xf32> -> vector<128x96xf32>
    %c1 = arith.constant 1 : index
    %c0_11 = arith.constant 0 : index
    %8 = vector.load %arg6[%c1, %c0_11] : memref<192x64xbf16, #tpu.memory_space<vmem>>, vector<128x64xbf16>
    %c1_12 = arith.constant 1 : index
    %c0_13 = arith.constant 0 : index
    %c0_14 = arith.constant 0 : index
    %9 = vector.load %arg3[%c1_12, %c0_13, %c0_14] : memref<9x64x96xbf16, #tpu.memory_space<vmem>>, vector<1x64x96xbf16>
    %10 = vector.shape_cast %9 : vector<1x64x96xbf16> to vector<64x96xbf16>
    %cst_15 = arith.constant dense<0.000000e+00> : vector<128x96xf32>
    %11 = tpu.matmul %8, %10, %cst_15 {dimension_numbers = #tpu.dot_dimension_numbers<[1], [0], [0], [1], [0, 0, 1, 1], [], []>} : vector<128x64xbf16>, vector<64x96xbf16>, vector<128x96xf32> -> vector<128x96xf32>
    %12 = arith.addf %7, %11 : vector<128x96xf32>
    %c2 = arith.constant 2 : index
    %c0_16 = arith.constant 0 : index
    %13 = vector.load %arg6[%c2, %c0_16] : memref<192x64xbf16, #tpu.memory_space<vmem>>, vector<128x64xbf16>
    %c2_17 = arith.constant 2 : index
    %c0_18 = arith.constant 0 : index
    %c0_19 = arith.constant 0 : index
    %14 = vector.load %arg3[%c2_17, %c0_18, %c0_19] : memref<9x64x96xbf16, #tpu.memory_space<vmem>>, vector<1x64x96xbf16>
    %15 = vector.shape_cast %14 : vector<1x64x96xbf16> to vector<64x96xbf16>
    %cst_20 = arith.constant dense<0.000000e+00> : vector<128x96xf32>
    %16 = tpu.matmul %13, %15, %cst_20 {dimension_numbers = #tpu.dot_dimension_numbers<[1], [0], [0], [1], [0, 0, 1, 1], [], []>} : vector<128x64xbf16>, vector<64x96xbf16>, vector<128x96xf32> -> vector<128x96xf32>
    %17 = arith.addf %12, %16 : vector<128x96xf32>
    %c19 = arith.constant 19 : index
    %c0_21 = arith.constant 0 : index
    %18 = vector.load %arg6[%c19, %c0_21] : memref<192x64xbf16, #tpu.memory_space<vmem>>, vector<128x64xbf16>
    %c3 = arith.constant 3 : index
    %c0_22 = arith.constant 0 : index
    %c0_23 = arith.constant 0 : index
    %19 = vector.load %arg3[%c3, %c0_22, %c0_23] : memref<9x64x96xbf16, #tpu.memory_space<vmem>>, vector<1x64x96xbf16>
    %20 = vector.shape_cast %19 : vector<1x64x96xbf16> to vector<64x96xbf16>
    %cst_24 = arith.constant dense<0.000000e+00> : vector<128x96xf32>
    %21 = tpu.matmul %18, %20, %cst_24 {dimension_numbers = #tpu.dot_dimension_numbers<[1], [0], [0], [1], [0, 0, 1, 1], [], []>} : vector<128x64xbf16>, vector<64x96xbf16>, vector<128x96xf32> -> vector<128x96xf32>
    %22 = arith.addf %17, %21 : vector<128x96xf32>
    %c20 = arith.constant 20 : index
    %c0_25 = arith.constant 0 : index
    %23 = vector.load %arg6[%c20, %c0_25] : memref<192x64xbf16, #tpu.memory_space<vmem>>, vector<128x64xbf16>
    %c4 = arith.constant 4 : index
    %c0_26 = arith.constant 0 : index
    %c0_27 = arith.constant 0 : index
    %24 = vector.load %arg3[%c4, %c0_26, %c0_27] : memref<9x64x96xbf16, #tpu.memory_space<vmem>>, vector<1x64x96xbf16>
    %25 = vector.shape_cast %24 : vector<1x64x96xbf16> to vector<64x96xbf16>
    %cst_28 = arith.constant dense<0.000000e+00> : vector<128x96xf32>
    %26 = tpu.matmul %23, %25, %cst_28 {dimension_numbers = #tpu.dot_dimension_numbers<[1], [0], [0], [1], [0, 0, 1, 1], [], []>} : vector<128x64xbf16>, vector<64x96xbf16>, vector<128x96xf32> -> vector<128x96xf32>
    %27 = arith.addf %22, %26 : vector<128x96xf32>
    %c21 = arith.constant 21 : index
    %c0_29 = arith.constant 0 : index
    %28 = vector.load %arg6[%c21, %c0_29] : memref<192x64xbf16, #tpu.memory_space<vmem>>, vector<128x64xbf16>
    %c5 = arith.constant 5 : index
    %c0_30 = arith.constant 0 : index
    %c0_31 = arith.constant 0 : index
    %29 = vector.load %arg3[%c5, %c0_30, %c0_31] : memref<9x64x96xbf16, #tpu.memory_space<vmem>>, vector<1x64x96xbf16>
    %30 = vector.shape_cast %29 : vector<1x64x96xbf16> to vector<64x96xbf16>
    %cst_32 = arith.constant dense<0.000000e+00> : vector<128x96xf32>
    %31 = tpu.matmul %28, %30, %cst_32 {dimension_numbers = #tpu.dot_dimension_numbers<[1], [0], [0], [1], [0, 0, 1, 1], [], []>} : vector<128x64xbf16>, vector<64x96xbf16>, vector<128x96xf32> -> vector<128x96xf32>
    %32 = arith.addf %27, %31 : vector<128x96xf32>
    %c38 = arith.constant 38 : index
    %c0_33 = arith.constant 0 : index
    %33 = vector.load %arg6[%c38, %c0_33] : memref<192x64xbf16, #tpu.memory_space<vmem>>, vector<128x64xbf16>
    %c6 = arith.constant 6 : index
    %c0_34 = arith.constant 0 : index
    %c0_35 = arith.constant 0 : index
    %34 = vector.load %arg3[%c6, %c0_34, %c0_35] : memref<9x64x96xbf16, #tpu.memory_space<vmem>>, vector<1x64x96xbf16>
    %35 = vector.shape_cast %34 : vector<1x64x96xbf16> to vector<64x96xbf16>
    %cst_36 = arith.constant dense<0.000000e+00> : vector<128x96xf32>
    %36 = tpu.matmul %33, %35, %cst_36 {dimension_numbers = #tpu.dot_dimension_numbers<[1], [0], [0], [1], [0, 0, 1, 1], [], []>} : vector<128x64xbf16>, vector<64x96xbf16>, vector<128x96xf32> -> vector<128x96xf32>
    %37 = arith.addf %32, %36 : vector<128x96xf32>
    %c39 = arith.constant 39 : index
    %c0_37 = arith.constant 0 : index
    %38 = vector.load %arg6[%c39, %c0_37] : memref<192x64xbf16, #tpu.memory_space<vmem>>, vector<128x64xbf16>
    %c7 = arith.constant 7 : index
    %c0_38 = arith.constant 0 : index
    %c0_39 = arith.constant 0 : index
    %39 = vector.load %arg3[%c7, %c0_38, %c0_39] : memref<9x64x96xbf16, #tpu.memory_space<vmem>>, vector<1x64x96xbf16>
    %40 = vector.shape_cast %39 : vector<1x64x96xbf16> to vector<64x96xbf16>
    %cst_40 = arith.constant dense<0.000000e+00> : vector<128x96xf32>
    %41 = tpu.matmul %38, %40, %cst_40 {dimension_numbers = #tpu.dot_dimension_numbers<[1], [0], [0], [1], [0, 0, 1, 1], [], []>} : vector<128x64xbf16>, vector<64x96xbf16>, vector<128x96xf32> -> vector<128x96xf32>
    %42 = arith.addf %37, %41 : vector<128x96xf32>
    %c40 = arith.constant 40 : index
    %c0_41 = arith.constant 0 : index
    %43 = vector.load %arg6[%c40, %c0_41] : memref<192x64xbf16, #tpu.memory_space<vmem>>, vector<128x64xbf16>
    %c8 = arith.constant 8 : index
    %c0_42 = arith.constant 0 : index
    %c0_43 = arith.constant 0 : index
    %44 = vector.load %arg3[%c8, %c0_42, %c0_43] : memref<9x64x96xbf16, #tpu.memory_space<vmem>>, vector<1x64x96xbf16>
    %45 = vector.shape_cast %44 : vector<1x64x96xbf16> to vector<64x96xbf16>
    %cst_44 = arith.constant dense<0.000000e+00> : vector<128x96xf32>
    %46 = tpu.matmul %43, %45, %cst_44 {dimension_numbers = #tpu.dot_dimension_numbers<[1], [0], [0], [1], [0, 0, 1, 1], [], []>} : vector<128x64xbf16>, vector<64x96xbf16>, vector<128x96xf32> -> vector<128x96xf32>
    %47 = arith.addf %42, %46 : vector<128x96xf32>
    %c0_45 = arith.constant 0 : index
    %c0_46 = arith.constant 0 : index
    %48 = vector.load %arg4[%c0_45, %c0_46] : memref<1x96xf32, #tpu.memory_space<vmem>>, vector<1x96xf32>
    %49 = vector.broadcast %48 : vector<1x96xf32> to vector<128x96xf32>
    %50 = arith.addf %47, %49 : vector<128x96xf32>
    %cst_47 = arith.constant 0.000000e+00 : f32
    %51 = vector.broadcast %cst_47 : f32 to vector<128x96xf32>
    %52 = arith.maximumf %50, %51 : vector<128x96xf32>
    %53 = arith.truncf %52 : vector<128x96xf32> to vector<128x96xbf16>
    %c0_48 = arith.constant 0 : index
    %c0_49 = arith.constant 0 : index
    %54 = vector.load %arg5[%c0_48, %c0_49] : memref<128x96xbf16, #tpu.memory_space<vmem>>, vector<128x96xbf16>
    tpu.vector_store %arg5[%c0_48, %c0_49], %53 {strides = array<i32>} : memref<128x96xbf16, #tpu.memory_space<vmem>>, vector<128x96xbf16>,
    return
  }
  func.func @transform_0(%arg0: i32) -> (i32, i32) {
    %c0_i32 = arith.constant 0 : i32
    %c0_i32_0 = arith.constant 0 : i32
    return %arg0, %c0_i32 : i32, i32
  }
  func.func @transform_1(%arg0: i32) -> (i32, i32) {
    %c1_i32 = arith.constant 1 : i32
    %0 = arith.addi %arg0, %c1_i32 : i32
    %c2_i32 = arith.constant 2 : i32
    %1 = arith.muli %0, %c2_i32 : i32
    %c0_i32 = arith.constant 0 : i32
    %c0_i32_0 = arith.constant 0 : i32
    return %1, %c0_i32 : i32, i32
  }
  func.func @transform_2(%arg0: i32) -> (i32, i32, i32) {
    %c0_i32 = arith.constant 0 : i32
    %c0_i32_0 = arith.constant 0 : i32
    %c0_i32_1 = arith.constant 0 : i32
    %c0_i32_2 = arith.constant 0 : i32
    return %c0_i32, %c0_i32_0, %c0_i32_1 : i32, i32, i32
  }
  func.func @transform_3(%arg0: i32) -> (i32, i32) {
    %c0_i32 = arith.constant 0 : i32
    %c0_i32_0 = arith.constant 0 : i32
    %c0_i32_1 = arith.constant 0 : i32
    return %c0_i32, %c0_i32_0 : i32, i32
  }
  func.func @transform_4(%arg0: i32) -> (i32, i32) {
    %c0_i32 = arith.constant 0 : i32
    %c0_i32_0 = arith.constant 0 : i32
    return %arg0, %c0_i32 : i32, i32
  }
}

module attributes {stable_mosaic.version = 11 : i64} {
  func.func @kernel(%arg0: i32, %arg1: memref<128x384xbf16, #tpu.memory_space<vmem>>, %arg2: memref<16x384xbf16, #tpu.memory_space<vmem>>, %arg3: memref<9x96x96xbf16, #tpu.memory_space<vmem>>, %arg4: memref<1x96xf32, #tpu.memory_space<vmem>>, %arg5: memref<128x96xbf16, #tpu.memory_space<vmem>>, %arg6: memref<144x384xbf16, #tpu.memory_space<vmem>>) attributes {dimension_semantics = [#tpu.dimension_semantics<parallel>], iteration_bounds = array<i64: 2>, scalar_prefetch = 0 : i64, scratch_operands = 1 : i64, tpu.core_type = #tpu.core_type<tc>, window_params = [{transform_indices = @transform_0, window_bounds = array<i64: 128, 384>}, {transform_indices = @transform_1, window_bounds = array<i64: 16, 384>}, {pipeline_mode = #tpu.pipeline_mode<synchronous>, transform_indices = @transform_2, window_bounds = array<i64: 9, 96, 96>}, {pipeline_mode = #tpu.pipeline_mode<synchronous>, transform_indices = @transform_3, window_bounds = array<i64: 1, 96>}, {transform_indices = @transform_4, window_bounds = array<i64: 128, 96>}]} {
    %c0 = arith.constant 0 : index
    %c0_0 = arith.constant 0 : index
    %0 = vector.load %arg1[%c0, %c0_0] : memref<128x384xbf16, #tpu.memory_space<vmem>>, vector<128x384xbf16>
    %c0_1 = arith.constant 0 : index
    %c0_2 = arith.constant 0 : index
    %1 = vector.load %arg6[%c0_1, %c0_2] : memref<144x384xbf16, #tpu.memory_space<vmem>>, vector<128x384xbf16>
    tpu.vector_store %arg6[%c0_1, %c0_2], %0 {strides = array<i32>} : memref<144x384xbf16, #tpu.memory_space<vmem>>, vector<128x384xbf16>,
    %c0_3 = arith.constant 0 : index
    %c0_4 = arith.constant 0 : index
    %2 = vector.load %arg2[%c0_3, %c0_4] : memref<16x384xbf16, #tpu.memory_space<vmem>>, vector<16x384xbf16>
    %c128 = arith.constant 128 : index
    %c0_5 = arith.constant 0 : index
    %3 = vector.load %arg6[%c128, %c0_5] : memref<144x384xbf16, #tpu.memory_space<vmem>>, vector<16x384xbf16>
    tpu.vector_store %arg6[%c128, %c0_5], %2 {strides = array<i32>} : memref<144x384xbf16, #tpu.memory_space<vmem>>, vector<16x384xbf16>,
    %c0_6 = arith.constant 0 : index
    %c0_7 = arith.constant 0 : index
    %4 = vector.load %arg6[%c0_6, %c0_7] : memref<144x384xbf16, #tpu.memory_space<vmem>>, vector<128x96xbf16>
    %c0_8 = arith.constant 0 : index
    %c0_9 = arith.constant 0 : index
    %c0_10 = arith.constant 0 : index
    %5 = vector.load %arg3[%c0_8, %c0_9, %c0_10] : memref<9x96x96xbf16, #tpu.memory_space<vmem>>, vector<1x96x96xbf16>
    %6 = vector.shape_cast %5 : vector<1x96x96xbf16> to vector<96x96xbf16>
    %cst = arith.constant dense<0.000000e+00> : vector<128x96xf32>
    %7 = tpu.matmul %4, %6, %cst {dimension_numbers = #tpu.dot_dimension_numbers<[1], [0], [0], [1], [0, 0, 1, 1], [], []>} : vector<128x96xbf16>, vector<96x96xbf16>, vector<128x96xf32> -> vector<128x96xf32>
    %c0_11 = arith.constant 0 : index
    %c96 = arith.constant 96 : index
    %8 = vector.load %arg6[%c0_11, %c96] : memref<144x384xbf16, #tpu.memory_space<vmem>>, vector<128x96xbf16>
    %c1 = arith.constant 1 : index
    %c0_12 = arith.constant 0 : index
    %c0_13 = arith.constant 0 : index
    %9 = vector.load %arg3[%c1, %c0_12, %c0_13] : memref<9x96x96xbf16, #tpu.memory_space<vmem>>, vector<1x96x96xbf16>
    %10 = vector.shape_cast %9 : vector<1x96x96xbf16> to vector<96x96xbf16>
    %cst_14 = arith.constant dense<0.000000e+00> : vector<128x96xf32>
    %11 = tpu.matmul %8, %10, %cst_14 {dimension_numbers = #tpu.dot_dimension_numbers<[1], [0], [0], [1], [0, 0, 1, 1], [], []>} : vector<128x96xbf16>, vector<96x96xbf16>, vector<128x96xf32> -> vector<128x96xf32>
    %12 = arith.addf %7, %11 : vector<128x96xf32>
    %c1_15 = arith.constant 1 : index
    %c0_16 = arith.constant 0 : index
    %13 = vector.load %arg6[%c1_15, %c0_16] : memref<144x384xbf16, #tpu.memory_space<vmem>>, vector<128x96xbf16>
    %c2 = arith.constant 2 : index
    %c0_17 = arith.constant 0 : index
    %c0_18 = arith.constant 0 : index
    %14 = vector.load %arg3[%c2, %c0_17, %c0_18] : memref<9x96x96xbf16, #tpu.memory_space<vmem>>, vector<1x96x96xbf16>
    %15 = vector.shape_cast %14 : vector<1x96x96xbf16> to vector<96x96xbf16>
    %cst_19 = arith.constant dense<0.000000e+00> : vector<128x96xf32>
    %16 = tpu.matmul %13, %15, %cst_19 {dimension_numbers = #tpu.dot_dimension_numbers<[1], [0], [0], [1], [0, 0, 1, 1], [], []>} : vector<128x96xbf16>, vector<96x96xbf16>, vector<128x96xf32> -> vector<128x96xf32>
    %17 = arith.addf %12, %16 : vector<128x96xf32>
    %c0_20 = arith.constant 0 : index
    %c192 = arith.constant 192 : index
    %18 = vector.load %arg6[%c0_20, %c192] : memref<144x384xbf16, #tpu.memory_space<vmem>>, vector<128x96xbf16>
    %c3 = arith.constant 3 : index
    %c0_21 = arith.constant 0 : index
    %c0_22 = arith.constant 0 : index
    %19 = vector.load %arg3[%c3, %c0_21, %c0_22] : memref<9x96x96xbf16, #tpu.memory_space<vmem>>, vector<1x96x96xbf16>
    %20 = vector.shape_cast %19 : vector<1x96x96xbf16> to vector<96x96xbf16>
    %cst_23 = arith.constant dense<0.000000e+00> : vector<128x96xf32>
    %21 = tpu.matmul %18, %20, %cst_23 {dimension_numbers = #tpu.dot_dimension_numbers<[1], [0], [0], [1], [0, 0, 1, 1], [], []>} : vector<128x96xbf16>, vector<96x96xbf16>, vector<128x96xf32> -> vector<128x96xf32>
    %22 = arith.addf %17, %21 : vector<128x96xf32>
    %c0_24 = arith.constant 0 : index
    %c288 = arith.constant 288 : index
    %23 = vector.load %arg6[%c0_24, %c288] : memref<144x384xbf16, #tpu.memory_space<vmem>>, vector<128x96xbf16>
    %c4 = arith.constant 4 : index
    %c0_25 = arith.constant 0 : index
    %c0_26 = arith.constant 0 : index
    %24 = vector.load %arg3[%c4, %c0_25, %c0_26] : memref<9x96x96xbf16, #tpu.memory_space<vmem>>, vector<1x96x96xbf16>
    %25 = vector.shape_cast %24 : vector<1x96x96xbf16> to vector<96x96xbf16>
    %cst_27 = arith.constant dense<0.000000e+00> : vector<128x96xf32>
    %26 = tpu.matmul %23, %25, %cst_27 {dimension_numbers = #tpu.dot_dimension_numbers<[1], [0], [0], [1], [0, 0, 1, 1], [], []>} : vector<128x96xbf16>, vector<96x96xbf16>, vector<128x96xf32> -> vector<128x96xf32>
    %27 = arith.addf %22, %26 : vector<128x96xf32>
    %c1_28 = arith.constant 1 : index
    %c192_29 = arith.constant 192 : index
    %28 = vector.load %arg6[%c1_28, %c192_29] : memref<144x384xbf16, #tpu.memory_space<vmem>>, vector<128x96xbf16>
    %c5 = arith.constant 5 : index
    %c0_30 = arith.constant 0 : index
    %c0_31 = arith.constant 0 : index
    %29 = vector.load %arg3[%c5, %c0_30, %c0_31] : memref<9x96x96xbf16, #tpu.memory_space<vmem>>, vector<1x96x96xbf16>
    %30 = vector.shape_cast %29 : vector<1x96x96xbf16> to vector<96x96xbf16>
    %cst_32 = arith.constant dense<0.000000e+00> : vector<128x96xf32>
    %31 = tpu.matmul %28, %30, %cst_32 {dimension_numbers = #tpu.dot_dimension_numbers<[1], [0], [0], [1], [0, 0, 1, 1], [], []>} : vector<128x96xbf16>, vector<96x96xbf16>, vector<128x96xf32> -> vector<128x96xf32>
    %32 = arith.addf %27, %31 : vector<128x96xf32>
    %c9 = arith.constant 9 : index
    %c0_33 = arith.constant 0 : index
    %33 = vector.load %arg6[%c9, %c0_33] : memref<144x384xbf16, #tpu.memory_space<vmem>>, vector<128x96xbf16>
    %c6 = arith.constant 6 : index
    %c0_34 = arith.constant 0 : index
    %c0_35 = arith.constant 0 : index
    %34 = vector.load %arg3[%c6, %c0_34, %c0_35] : memref<9x96x96xbf16, #tpu.memory_space<vmem>>, vector<1x96x96xbf16>
    %35 = vector.shape_cast %34 : vector<1x96x96xbf16> to vector<96x96xbf16>
    %cst_36 = arith.constant dense<0.000000e+00> : vector<128x96xf32>
    %36 = tpu.matmul %33, %35, %cst_36 {dimension_numbers = #tpu.dot_dimension_numbers<[1], [0], [0], [1], [0, 0, 1, 1], [], []>} : vector<128x96xbf16>, vector<96x96xbf16>, vector<128x96xf32> -> vector<128x96xf32>
    %37 = arith.addf %32, %36 : vector<128x96xf32>
    %c9_37 = arith.constant 9 : index
    %c96_38 = arith.constant 96 : index
    %38 = vector.load %arg6[%c9_37, %c96_38] : memref<144x384xbf16, #tpu.memory_space<vmem>>, vector<128x96xbf16>
    %c7 = arith.constant 7 : index
    %c0_39 = arith.constant 0 : index
    %c0_40 = arith.constant 0 : index
    %39 = vector.load %arg3[%c7, %c0_39, %c0_40] : memref<9x96x96xbf16, #tpu.memory_space<vmem>>, vector<1x96x96xbf16>
    %40 = vector.shape_cast %39 : vector<1x96x96xbf16> to vector<96x96xbf16>
    %cst_41 = arith.constant dense<0.000000e+00> : vector<128x96xf32>
    %41 = tpu.matmul %38, %40, %cst_41 {dimension_numbers = #tpu.dot_dimension_numbers<[1], [0], [0], [1], [0, 0, 1, 1], [], []>} : vector<128x96xbf16>, vector<96x96xbf16>, vector<128x96xf32> -> vector<128x96xf32>
    %42 = arith.addf %37, %41 : vector<128x96xf32>
    %c10 = arith.constant 10 : index
    %c0_42 = arith.constant 0 : index
    %43 = vector.load %arg6[%c10, %c0_42] : memref<144x384xbf16, #tpu.memory_space<vmem>>, vector<128x96xbf16>
    %c8 = arith.constant 8 : index
    %c0_43 = arith.constant 0 : index
    %c0_44 = arith.constant 0 : index
    %44 = vector.load %arg3[%c8, %c0_43, %c0_44] : memref<9x96x96xbf16, #tpu.memory_space<vmem>>, vector<1x96x96xbf16>
    %45 = vector.shape_cast %44 : vector<1x96x96xbf16> to vector<96x96xbf16>
    %cst_45 = arith.constant dense<0.000000e+00> : vector<128x96xf32>
    %46 = tpu.matmul %43, %45, %cst_45 {dimension_numbers = #tpu.dot_dimension_numbers<[1], [0], [0], [1], [0, 0, 1, 1], [], []>} : vector<128x96xbf16>, vector<96x96xbf16>, vector<128x96xf32> -> vector<128x96xf32>
    %47 = arith.addf %42, %46 : vector<128x96xf32>
    %c0_46 = arith.constant 0 : index
    %c0_47 = arith.constant 0 : index
    %48 = vector.load %arg4[%c0_46, %c0_47] : memref<1x96xf32, #tpu.memory_space<vmem>>, vector<1x96xf32>
    %49 = vector.broadcast %48 : vector<1x96xf32> to vector<128x96xf32>
    %50 = arith.addf %47, %49 : vector<128x96xf32>
    %cst_48 = arith.constant 0.000000e+00 : f32
    %51 = vector.broadcast %cst_48 : f32 to vector<128x96xf32>
    %52 = arith.maximumf %50, %51 : vector<128x96xf32>
    %53 = arith.truncf %52 : vector<128x96xf32> to vector<128x96xbf16>
    %c0_49 = arith.constant 0 : index
    %c0_50 = arith.constant 0 : index
    %54 = vector.load %arg5[%c0_49, %c0_50] : memref<128x96xbf16, #tpu.memory_space<vmem>>, vector<128x96xbf16>
    tpu.vector_store %arg5[%c0_49, %c0_50], %53 {strides = array<i32>} : memref<128x96xbf16, #tpu.memory_space<vmem>>, vector<128x96xbf16>,
    return
  }
  func.func @transform_0(%arg0: i32) -> (i32, i32) {
    %c0_i32 = arith.constant 0 : i32
    %c0_i32_0 = arith.constant 0 : i32
    return %arg0, %c0_i32 : i32, i32
  }
  func.func @transform_1(%arg0: i32) -> (i32, i32) {
    %c1_i32 = arith.constant 1 : i32
    %0 = arith.addi %arg0, %c1_i32 : i32
    %c8_i32 = arith.constant 8 : i32
    %1 = arith.muli %0, %c8_i32 : i32
    %c0_i32 = arith.constant 0 : i32
    %c0_i32_0 = arith.constant 0 : i32
    return %1, %c0_i32 : i32, i32
  }
  func.func @transform_2(%arg0: i32) -> (i32, i32, i32) {
    %c0_i32 = arith.constant 0 : i32
    %c0_i32_0 = arith.constant 0 : i32
    %c0_i32_1 = arith.constant 0 : i32
    %c0_i32_2 = arith.constant 0 : i32
    return %c0_i32, %c0_i32_0, %c0_i32_1 : i32, i32, i32
  }
  func.func @transform_3(%arg0: i32) -> (i32, i32) {
    %c0_i32 = arith.constant 0 : i32
    %c0_i32_0 = arith.constant 0 : i32
    %c0_i32_1 = arith.constant 0 : i32
    return %c0_i32, %c0_i32_0 : i32, i32
  }
  func.func @transform_4(%arg0: i32) -> (i32, i32) {
    %c0_i32 = arith.constant 0 : i32
    %c0_i32_0 = arith.constant 0 : i32
    return %arg0, %c0_i32 : i32, i32
  }
}

</mosaic_0001>

<llo_original>
// kernel: inception_b_forward.5
$region0: #{inception_b_forward.5}
  #allocation0 [shape = 'u32[]', space=smem, size = 0x4, offset = 0x4, fixed_abs, tag = 'smem constant byte address 0x4 - core index']
  #allocation1 [shape = 'u32[144,128]{1,0:T(1,128)}', space=vmem, size = 0x12000, scoped, tag = 'internal scratch']
  %s0 = inlined_call_operand.vmem [shape: bf16[640,64], index: 0, kind: input, shape index: {}]
  %s1 = inlined_call_operand.vmem [shape: bf16[1,64,64], index: 1, kind: input, shape index: {}]
  %s2 = inlined_call_operand.vmem [shape: f32[1,64], index: 2, kind: input, shape index: {}]
  %s3 = inlined_call_operand.vmem [shape: bf16[640,64], index: 3, kind: output, shape index: {}]
  %s4 = sld [smem:[#allocation0]]
  $region45: #{inception_b_forward.5} parent=0
    _
  %s6 = ssub.s32 1, %s4
  %s7 = scalar_select 0, %s6, %s4
  loop: start=0, step=1, limit=7
  $region2: #{inception_b_forward.5} parent=0 // loop_pre_header
    _
  $region3: #{inception_b_forward.5} parent=0 // loop_header
    %s9 = sphi 0, %s13
    %p10 = scmp.ge.s32.totalorder %s9, 7
    %s19 = sphi 0, %s21
    %s22 = sphi 0, %s19
    %s23 = sphi 0, %s22
    %s39 = sphi 0, %s23
    %s43 = sphi 0, %s43
    %s45 = sphi 0, %s43
    %s46 = sphi 0, %s45
    %s60 = sphi 0, %s46
    %s64 = sphi 0, %s64
    %s66 = sphi 0, %s64
    %s67 = sphi 0, %s66
    %s81 = sphi 0, %s67
    %s87 = sphi 0, %s89
    %s90 = sphi 0, %s87
    %s91 = sphi 0, %s90
    %s107 = sphi 0, %s91
  $region4: #{inception_b_forward.5} parent=0 // loop_header_branch
    %12 = sbr.rel (%p10) target = $region8
  $region5: #{inception_b_forward.5} parent=0 // loop_body
    %s14 = ssub.s32 %s9, 1
    %s15 = ssub.s32 %s9, 2
    %s16 = sadd.s32 %s9, 1
    %s17 = ssub.s32 %s9, %s16
    %p18 = scmp.eq.s32.totalorder %s17, 0
    %s20 = sadd.s32 %s19, 1
    %s21 = scalar_select %p18, %s19, %s20
    %p24 = pneg %p18
    %p25 = scmp.eq.s32.totalorder %s9, 4
    %p26 = por %p24, %p25
    %p27 = scmp.ne.s32.totalorder %s19, %s22
    %p28 = scmp.eq.s32.totalorder %s9, 0
    %p29 = por %p27, %p28
    %p30 = scmp.ne.s32.totalorder %s19, %s22
    %p31 = scmp.eq.s32.totalorder %s14, 4
    %p32 = por %p30, %p31
    %p33 = scmp.ne.s32.totalorder %s22, %s23
    %p34 = scmp.eq.s32.totalorder %s14, 0
    %p35 = por %p33, %p34
    %p36 = scmp.ne.s32.totalorder %s22, %s23
    %p37 = scmp.eq.s32.totalorder %s15, 4
    %p38 = por %p36, %p37
    %p40 = scmp.ne.s32.totalorder %s23, %s39
    %p41 = scmp.eq.s32.totalorder %s15, 0
    %p42 = por %p40, %p41
    %s44 = sadd.s32 %s43, 1
    %p47 = scmp.eq.s32.totalorder %s9, 4
    %p48 = scmp.ne.s32.totalorder %s43, %s45
    %p49 = scmp.eq.s32.totalorder %s9, 0
    %p50 = por %p48, %p49
    %p51 = scmp.ne.s32.totalorder %s43, %s45
    %p52 = scmp.eq.s32.totalorder %s14, 4
    %p53 = por %p51, %p52
    %p54 = scmp.ne.s32.totalorder %s45, %s46
    %p55 = scmp.eq.s32.totalorder %s14, 0
    %p56 = por %p54, %p55
    %p57 = scmp.ne.s32.totalorder %s45, %s46
    %p58 = scmp.eq.s32.totalorder %s15, 4
    %p59 = por %p57, %p58
    %p61 = scmp.ne.s32.totalorder %s46, %s60
    %p62 = scmp.eq.s32.totalorder %s15, 0
    %p63 = por %p61, %p62
    %s65 = sadd.s32 %s64, 1
    %p68 = scmp.eq.s32.totalorder %s9, 4
    %p69 = scmp.ne.s32.totalorder %s64, %s66
    %p70 = scmp.eq.s32.totalorder %s9, 0
    %p71 = por %p69, %p70
    %p72 = scmp.ne.s32.totalorder %s64, %s66
    %p73 = scmp.eq.s32.totalorder %s14, 4
    %p74 = por %p72, %p73
    %p75 = scmp.ne.s32.totalorder %s66, %s67
    %p76 = scmp.eq.s32.totalorder %s14, 0
    %p77 = por %p75, %p76
    %p78 = scmp.ne.s32.totalorder %s66, %s67
    %p79 = scmp.eq.s32.totalorder %s15, 4
    %p80 = por %p78, %p79
    %p82 = scmp.ne.s32.totalorder %s67, %s81
    %p83 = scmp.eq.s32.totalorder %s15, 0
    %p84 = por %p82, %p83
    %s85 = ssub.s32 %s9, %s16
    %p86 = scmp.eq.s32.totalorder %s85, 0
    %s88 = sadd.s32 %s87, 1
    %s89 = scalar_select %p86, %s87, %s88
    %p92 = pneg %p86
    %p93 = scmp.eq.s32.totalorder %s9, 4
    %p94 = por %p92, %p93
    %p95 = scmp.ne.s32.totalorder %s87, %s90
    %p96 = scmp.eq.s32.totalorder %s9, 0
    %p97 = por %p95, %p96
    %p98 = scmp.ne.s32.totalorder %s87, %s90
    %p99 = scmp.eq.s32.totalorder %s14, 4
    %p100 = por %p98, %p99
    %p101 = scmp.ne.s32.totalorder %s90, %s91
    %p102 = scmp.eq.s32.totalorder %s14, 0
    %p103 = por %p101, %p102
    %p104 = scmp.ne.s32.totalorder %s90, %s91
    %p105 = scmp.eq.s32.totalorder %s15, 4
    %p106 = por %p104, %p105
    %p108 = scmp.ne.s32.totalorder %s91, %s107
    %p109 = scmp.eq.s32.totalorder %s15, 0
    %p110 = por %p108, %p109
    %p111 = scmp.le.s32.totalorder 1, %s9
    %p112 = scmp.lt.s32.totalorder %s9, 6
    %p113 = pnand %p111, %p112
    %p114 = pneg %p113
    // Predicated region
    $region9: #{inception_b_forward.5} parent=5 // pred_check
      _
    $region10: #{inception_b_forward.5} parent=5 // pred_check_branch
      %116 = sbr.rel (%p113) target = $region12
    $region11: #{inception_b_forward.5} parent=5 // pred_region
      %s117 = ssub.s32 %s9, 1
      // Predicated region
      $region13: #{inception_b_forward.5} parent=11 // pred_check
        %p118 = pneg %p56
      $region14: #{inception_b_forward.5} parent=11 // pred_check_branch
        %120 = sbr.rel (%p118) target = $region16
      $region15: #{inception_b_forward.5} parent=11 // pred_region
        _
      $region16: #{inception_b_forward.5} parent=11 // pred_fallthru
        _
      // Predicated region
      $region17: #{inception_b_forward.5} parent=11 // pred_check
        %p121 = pneg %p77
      $region18: #{inception_b_forward.5} parent=11 // pred_check_branch
        %123 = sbr.rel (%p121) target = $region20
      $region19: #{inception_b_forward.5} parent=11 // pred_region
        _
      $region20: #{inception_b_forward.5} parent=11 // pred_fallthru
        _
    $region12: #{inception_b_forward.5} parent=5 // pred_fallthru
      _
    %p124 = scmp.lt.s32.totalorder %s9, 5
    // Predicated region
    $region21: #{inception_b_forward.5} parent=5 // pred_check
      %p125 = pneg %p124
    $region22: #{inception_b_forward.5} parent=5 // pred_check_branch
      %127 = sbr.rel (%p125) target = $region24
    $region23: #{inception_b_forward.5} parent=5 // pred_region
      // Predicated region
      $region25: #{inception_b_forward.5} parent=23 // pred_check
        %p128 = pneg %p29
      $region26: #{inception_b_forward.5} parent=23 // pred_check_branch
        %130 = sbr.rel (%p128) target = $region28
      $region27: #{inception_b_forward.5} parent=23 // pred_region
        %s131 = smul.u32 16, %s9
        %p132 = scmp.lt.s32.totalorder %s131, 79
        %s133 = scalar_select %p132, %s131, 79
        %s134 = smul.addr %s133, 4
        %s135 = scalar_lea.vmem %s0, %s134
        %s136 = smul.u32 16, %s9
      $region28: #{inception_b_forward.5} parent=23 // pred_fallthru
        _
    $region24: #{inception_b_forward.5} parent=5 // pred_fallthru
      _
    %p137 = scmp.le.s32.totalorder 1, %s9
    %p138 = scmp.lt.s32.totalorder %s9, 6
    %p139 = pnand %p137, %p138
    %p140 = pneg %p139
    // Predicated region
    $region29: #{inception_b_forward.5} parent=5 // pred_check
      _
    $region30: #{inception_b_forward.5} parent=5 // pred_check_branch
      %142 = sbr.rel (%p139) target = $region32
    $region31: #{inception_b_forward.5} parent=5 // pred_region
      %s143 = ssub.s32 %s9, 1
      %s144 = smul.u32 16, %s14
      %p145 = scmp.lt.s32.totalorder %s144, 79
      %s146 = scalar_select %p145, %s144, 79
      %s147 = smul.addr %s146, 4
      %s148 = scalar_lea.vmem %s0, %s147
      %p149 = pneg %p35
      %p150 = pneg %p32
      %p151 = pneg %p56
      %p152 = pneg %p53
      %p153 = pneg %p77
      %p154 = pneg %p74
      %p155 = pneg %p103
      %p156 = pneg %p100
      %s157 = smul.u32 16, %s14
      %p158 = scmp.lt.s32.totalorder %s157, 79
      %s159 = scalar_select %p158, %s157, 79
      %s160 = smul.addr %s159, 4
      %s161 = scalar_lea.vmem %s3, %s160
      %s162 = smul.u32 16, %s14
      %p163 = scmp.lt.s32.totalorder %s162, 79
      %s164 = scalar_select %p163, %s162, 79
      %s165 = smul.addr %s164, 4
      %s166 = scalar_lea.vmem %s0, %s165
      %s167 = smul.u32 16, %s14
      %s168 = smul.u32 16, %s14
      %p169 = scmp.lt.s32.totalorder %s168, 79
      %s170 = scalar_select %p169, %s168, 79
      %s171 = smul.addr %s170, 4
      %s172 = scalar_lea.vmem %s3, %s171
      %s173 = smul.u32 16, %s14
      %v175 = vld [vmem:[%s166] sm:$0xf]
      %v176 = vld [vmem:[%s166 + $0x4] sm:$0xf]
      %v177 = vld [vmem:[%s166 + $0x8] sm:$0xf]
      %v178 = vld [vmem:[%s166 + $0xc] sm:$0xf]
      %v179 = vld [vmem:[%s166 + $0x10] sm:$0xf]
      %v180 = vld [vmem:[%s166 + $0x14] sm:$0xf]
      %v181 = vld [vmem:[%s166 + $0x18] sm:$0xf]
      %v182 = vld [vmem:[%s166 + $0x1c] sm:$0xf]
      %v183 = vld [vmem:[%s166 + $0x20] sm:$0xf]
      %v184 = vld [vmem:[%s166 + $0x24] sm:$0xf]
      %v185 = vld [vmem:[%s166 + $0x28] sm:$0xf]
      %v186 = vld [vmem:[%s166 + $0x2c] sm:$0xf]
      %v187 = vld [vmem:[%s166 + $0x30] sm:$0xf]
      %v188 = vld [vmem:[%s166 + $0x34] sm:$0xf]
      %v189 = vld [vmem:[%s166 + $0x38] sm:$0xf]
      %v190 = vld [vmem:[%s166 + $0x3c] sm:$0xf]
      %v191 = vld [vmem:[%s1] sm:$0xf]
      %v192 = vld [vmem:[%s1 + $0x4] sm:$0xf]
      %v193 = vld [vmem:[%s1 + $0x8] sm:$0xf]
      %v194 = vld [vmem:[%s1 + $0xc] sm:$0xf]
      %v195 = vld [vmem:[%s1 + $0x10] sm:$0xf]
      %v196 = vld [vmem:[%s1 + $0x14] sm:$0xf]
      %v197 = vld [vmem:[%s1 + $0x18] sm:$0xf]
      %v198 = vld [vmem:[%s1 + $0x1c] sm:$0xf]
      %v199 = vld [vmem:[%s2] sm:$0x1]
      %v201 = vlaneseq
      %v202 = vshrl.u32 %v201, 7
      %v203 = vsub.s32 0, %v202
      %v204 = vrot.slane %v199, %v203
      %v222 = vunpack.c.l.b16 %v175
      %v223 = vunpack.c.l.b16 %v176
      %v224 = vunpack.c.l.b16 %v177
      %v225 = vunpack.c.l.b16 %v178
      %v226 = vunpack.c.l.b16 %v179
      %v227 = vunpack.c.l.b16 %v180
      %v228 = vunpack.c.l.b16 %v181
      %v229 = vunpack.c.l.b16 %v182
      %v230 = vunpack.c.l.b16 %v183
      %v231 = vunpack.c.l.b16 %v184
      %v232 = vunpack.c.l.b16 %v185
      %v233 = vunpack.c.l.b16 %v186
      %v234 = vunpack.c.l.b16 %v187
      %v235 = vunpack.c.l.b16 %v188
      %v236 = vunpack.c.l.b16 %v189
      %v237 = vunpack.c.l.b16 %v190
      %v238 = vpack.c.b16 %v223, %v222
      %v239 = vpack.c.b16 %v225, %v224
      %v240 = vpack.c.b16 %v227, %v226
      %v241 = vpack.c.b16 %v229, %v228
      %v242 = vpack.c.b16 %v231, %v230
      %v243 = vpack.c.b16 %v233, %v232
      %v244 = vpack.c.b16 %v235, %v234
      %v245 = vpack.c.b16 %v237, %v236
      %v254 = vunpack.c.l.b16 %v191
      %v255 = vunpack.c.l.b16 %v192
      %v256 = vunpack.c.l.b16 %v193
      %v257 = vunpack.c.l.b16 %v194
      %v258 = vunpack.c.l.b16 %v195
      %v259 = vunpack.c.l.b16 %v196
      %v260 = vunpack.c.l.b16 %v197
      %v261 = vunpack.c.l.b16 %v198
      %v262 = vpack.c.b16 %v255, %v254
      %v263 = vpack.c.b16 %v257, %v256
      %v264 = vpack.c.b16 %v259, %v258
      %v265 = vpack.c.b16 %v261, %v260
      %vm270 = vcmask 523264
      %v272 = vsel %vm270, %v238, 0
      %v275 = vsel %vm270, %v239, 0
      %v278 = vsel %vm270, %v240, 0
      %v281 = vsel %vm270, %v241, 0
      %v284 = vsel %vm270, %v242, 0
      %v287 = vsel %vm270, %v243, 0
      %v290 = vsel %vm270, %v244, 0
      %v293 = vsel %vm270, %v245, 0
      %295 = vmatprep.subr.bf16.mxu0 0
      %296 = vmatpush1.bf16.msra.mxu0 %v262
      %297 = vmatprep.subr.bf16.mxu0 0
      %298 = vmatpush1.bf16.msra.mxu0 %v263
      %299 = vmatprep.subr.bf16.mxu0 0
      %300 = vmatpush1.bf16.msra.mxu0 %v264
      %301 = vmatprep.subr.bf16.mxu0 0
      %302 = vmatpush1.bf16.msra.mxu0 %v265
      %303 = vmatprep.subr.bf16.mxu0 0
      %304 = vmatpush1.bf16.msra.mxu0 0
      %305 = vmatprep.subr.bf16.mxu0 0
      %306 = vmatpush1.bf16.msra.mxu0 0
      %307 = vmatprep.subr.bf16.mxu0 0
      %308 = vmatpush1.bf16.msra.mxu0 0
      %309 = vmatprep.subr.bf16.mxu0 0
      %310 = vmatpush1.bf16.msra.mxu0 0
      %311 = vmatprep.subr.bf16.mxu0 0
      %312 = vmatpush1.bf16.msra.mxu0 0
      %313 = vmatprep.subr.bf16.mxu0 0
      %314 = vmatpush1.bf16.msra.mxu0 0
      %315 = vmatprep.subr.bf16.mxu0 0
      %316 = vmatpush1.bf16.msra.mxu0 0
      %317 = vmatprep.subr.bf16.mxu0 0
      %318 = vmatpush1.bf16.msra.mxu0 0
      %319 = vmatprep.subr.bf16.mxu0 0
      %320 = vmatpush1.bf16.msra.mxu0 0
      %321 = vmatprep.subr.bf16.mxu0 0
      %322 = vmatpush1.bf16.msra.mxu0 0
      %323 = vmatprep.subr.bf16.mxu0 0
      %324 = vmatpush1.bf16.msra.mxu0 0
      %325 = vmatprep.subr.bf16.mxu0 0
      %326 = vmatpush1.bf16.msra.mxu0 0
      %327 = vmatprep.mubr.bf16.mxu0 0
      %328 = vmatmul.mubr.bf16.gmra.mrb[0].mxu0 %v272
      %v329 = vpop.f32.mrb[0].mxu0
      %v330 = vadd.f32 %v204, %v329
      %v331 = vpop.f32.mrb[0].mxu0
      %v332 = vpop.f32.mrb[0].mxu0
      %v333 = vadd.f32 %v204, %v332
      %v334 = vpop.f32.mrb[0].mxu0
      %335 = vmatprep.mubr.bf16.mxu0 0
      %336 = vmatmul.mubr.bf16.gmra.mrb[0].mxu0 %v275
      %v337 = vpop.f32.mrb[0].mxu0
      %v338 = vadd.f32 %v204, %v337
      %v339 = vpop.f32.mrb[0].mxu0
      %v340 = vpop.f32.mrb[0].mxu0
      %v341 = vadd.f32 %v204, %v340
      %v342 = vpop.f32.mrb[0].mxu0
      %343 = vmatprep.mubr.bf16.mxu0 0
      %344 = vmatmul.mubr.bf16.gmra.mrb[0].mxu0 %v278
      %v345 = vpop.f32.mrb[0].mxu0
      %v346 = vadd.f32 %v204, %v345
      %v347 = vpop.f32.mrb[0].mxu0
      %v348 = vpop.f32.mrb[0].mxu0
      %v349 = vadd.f32 %v204, %v348
      %v350 = vpop.f32.mrb[0].mxu0
      %351 = vmatprep.mubr.bf16.mxu0 0
      %352 = vmatmul.mubr.bf16.gmra.mrb[0].mxu0 %v281
      %v353 = vpop.f32.mrb[0].mxu0
      %v354 = vadd.f32 %v204, %v353
      %v355 = vpop.f32.mrb[0].mxu0
      %v356 = vpop.f32.mrb[0].mxu0
      %v357 = vadd.f32 %v204, %v356
      %v358 = vpop.f32.mrb[0].mxu0
      %359 = vmatprep.mubr.bf16.mxu0 0
      %360 = vmatmul.mubr.bf16.gmra.mrb[0].mxu0 %v284
      %v361 = vpop.f32.mrb[0].mxu0
      %v362 = vadd.f32 %v204, %v361
      %v363 = vpop.f32.mrb[0].mxu0
      %v364 = vpop.f32.mrb[0].mxu0
      %v365 = vadd.f32 %v204, %v364
      %v366 = vpop.f32.mrb[0].mxu0
      %367 = vmatprep.mubr.bf16.mxu0 0
      %368 = vmatmul.mubr.bf16.gmra.mrb[0].mxu0 %v287
      %v369 = vpop.f32.mrb[0].mxu0
      %v370 = vadd.f32 %v204, %v369
      %v371 = vpop.f32.mrb[0].mxu0
      %v372 = vpop.f32.mrb[0].mxu0
      %v373 = vadd.f32 %v204, %v372
      %v374 = vpop.f32.mrb[0].mxu0
      %375 = vmatprep.mubr.bf16.mxu0 0
      %376 = vmatmul.mubr.bf16.gmra.mrb[0].mxu0 %v290
      %v377 = vpop.f32.mrb[0].mxu0
      %v378 = vadd.f32 %v204, %v377
      %v379 = vpop.f32.mrb[0].mxu0
      %v380 = vpop.f32.mrb[0].mxu0
      %v381 = vadd.f32 %v204, %v380
      %v382 = vpop.f32.mrb[0].mxu0
      %383 = vmatprep.mubr.bf16.mxu0 0
      %384 = vmatmul.mubr.bf16.gmra.mrb[0].mxu0 %v293
      %v385 = vpop.f32.mrb[0].mxu0
      %v386 = vadd.f32 %v204, %v385
      %v387 = vpop.f32.mrb[0].mxu0
      %v388 = vpop.f32.mrb[0].mxu0
      %v389 = vadd.f32 %v204, %v388
      %v390 = vpop.f32.mrb[0].mxu0
      %391 = vdwg.mxu0
      %v392 = vmax.f32 %v330, 0.0
      %v393 = vmax.f32 %v333, 0.0
      %v394 = vmax.f32 %v338, 0.0
      %v395 = vmax.f32 %v341, 0.0
      %v396 = vmax.f32 %v346, 0.0
      %v397 = vmax.f32 %v349, 0.0
      %v398 = vmax.f32 %v354, 0.0
      %v399 = vmax.f32 %v357, 0.0
      %v400 = vmax.f32 %v362, 0.0
      %v401 = vmax.f32 %v365, 0.0
      %v402 = vmax.f32 %v370, 0.0
      %v403 = vmax.f32 %v373, 0.0
      %v404 = vmax.f32 %v378, 0.0
      %v405 = vmax.f32 %v381, 0.0
      %v406 = vmax.f32 %v386, 0.0
      %v407 = vmax.f32 %v389, 0.0
      %v408 = vpack.c.bf16 %v393, %v392
      %v409 = vpack.c.bf16 %v395, %v394
      %v410 = vpack.c.bf16 %v397, %v396
      %v411 = vpack.c.bf16 %v399, %v398
      %v412 = vpack.c.bf16 %v401, %v400
      %v413 = vpack.c.bf16 %v403, %v402
      %v414 = vpack.c.bf16 %v405, %v404
      %v415 = vpack.c.bf16 %v407, %v406
      %v424 = vunpack.c.l.b16 %v408
      %v425 = vunpack.c.h.b16 %v408
      %v426 = vunpack.c.l.b16 %v409
      %v427 = vunpack.c.h.b16 %v409
      %v428 = vunpack.c.l.b16 %v410
      %v429 = vunpack.c.h.b16 %v410
      %v430 = vunpack.c.l.b16 %v411
      %v431 = vunpack.c.h.b16 %v411
      %v432 = vunpack.c.l.b16 %v412
      %v433 = vunpack.c.h.b16 %v412
      %v434 = vunpack.c.l.b16 %v413
      %v435 = vunpack.c.h.b16 %v413
      %v436 = vunpack.c.l.b16 %v414
      %v437 = vunpack.c.h.b16 %v414
      %v438 = vunpack.c.l.b16 %v415
      %v439 = vunpack.c.h.b16 %v415
      %v440 = vpack.c.b16 %v424, %v424
      %v441 = vpack.c.b16 %v425, %v425
      %v442 = vpack.c.b16 %v426, %v426
      %v443 = vpack.c.b16 %v427, %v427
      %v444 = vpack.c.b16 %v428, %v428
      %v445 = vpack.c.b16 %v429, %v429
      %v446 = vpack.c.b16 %v430, %v430
      %v447 = vpack.c.b16 %v431, %v431
      %v448 = vpack.c.b16 %v432, %v432
      %v449 = vpack.c.b16 %v433, %v433
      %v450 = vpack.c.b16 %v434, %v434
      %v451 = vpack.c.b16 %v435, %v435
      %v452 = vpack.c.b16 %v436, %v436
      %v453 = vpack.c.b16 %v437, %v437
      %v454 = vpack.c.b16 %v438, %v438
      %v455 = vpack.c.b16 %v439, %v439
      %vm472 = vcmask 519168
      %473 = vst.msk [vmem:[%s172] sm:$0xf] %vm472, %v440
      %474 = vst.msk [vmem:[%s172 + $0x4] sm:$0xf] %vm472, %v441
      %475 = vst.msk [vmem:[%s172 + $0x8] sm:$0xf] %vm472, %v442
      %476 = vst.msk [vmem:[%s172 + $0xc] sm:$0xf] %vm472, %v443
      %477 = vst.msk [vmem:[%s172 + $0x10] sm:$0xf] %vm472, %v444
      %478 = vst.msk [vmem:[%s172 + $0x14] sm:$0xf] %vm472, %v445
      %479 = vst.msk [vmem:[%s172 + $0x18] sm:$0xf] %vm472, %v446
      %480 = vst.msk [vmem:[%s172 + $0x1c] sm:$0xf] %vm472, %v447
      %481 = vst.msk [vmem:[%s172 + $0x20] sm:$0xf] %vm472, %v448
      %482 = vst.msk [vmem:[%s172 + $0x24] sm:$0xf] %vm472, %v449
      %483 = vst.msk [vmem:[%s172 + $0x28] sm:$0xf] %vm472, %v450
      %484 = vst.msk [vmem:[%s172 + $0x2c] sm:$0xf] %vm472, %v451
      %485 = vst.msk [vmem:[%s172 + $0x30] sm:$0xf] %vm472, %v452
      %486 = vst.msk [vmem:[%s172 + $0x34] sm:$0xf] %vm472, %v453
      %487 = vst.msk [vmem:[%s172 + $0x38] sm:$0xf] %vm472, %v454
      %488 = vst.msk [vmem:[%s172 + $0x3c] sm:$0xf] %vm472, %v455
      %s489 = smul.u32 16, %s14
      %p490 = scmp.lt.s32.totalorder %s489, 79
      %s491 = scalar_select %p490, %s489, 79
      %s492 = smul.addr %s491, 4
      %s493 = scalar_lea.vmem %s3, %s492
      // Predicated region
      $region33: #{inception_b_forward.5} parent=31 // pred_check
        %p494 = pneg %p100
      $region34: #{inception_b_forward.5} parent=31 // pred_check_branch
        %496 = sbr.rel (%p494) target = $region36
      $region35: #{inception_b_forward.5} parent=31 // pred_region
        %s497 = smul.u32 16, %s14
      $region36: #{inception_b_forward.5} parent=31 // pred_fallthru
        _
    $region32: #{inception_b_forward.5} parent=5 // pred_fallthru
      _
    %p498 = scmp.le.s32.totalorder 2, %s9
    // Predicated region
    $region37: #{inception_b_forward.5} parent=5 // pred_check
      %p499 = pneg %p498
    $region38: #{inception_b_forward.5} parent=5 // pred_check_branch
      %501 = sbr.rel (%p499) target = $region40
    $region39: #{inception_b_forward.5} parent=5 // pred_region
      %s502 = ssub.s32 %s9, 2
      // Predicated region
      $region41: #{inception_b_forward.5} parent=39 // pred_check
        %p503 = pneg %p106
      $region42: #{inception_b_forward.5} parent=39 // pred_check_branch
        %505 = sbr.rel (%p503) target = $region44
      $region43: #{inception_b_forward.5} parent=39 // pred_region
        %s506 = smul.u32 16, %s15
        %p507 = scmp.lt.s32.totalorder %s506, 79
        %s508 = scalar_select %p507, %s506, 79
        %s509 = smul.addr %s508, 4
        %s510 = scalar_lea.vmem %s3, %s509
      $region44: #{inception_b_forward.5} parent=39 // pred_fallthru
        _
    $region40: #{inception_b_forward.5} parent=5 // pred_fallthru
      _
  $region6: #{inception_b_forward.5} parent=0 // loop_footer
    %s13 = sadd.s32 1, %s9
  $region7: #{inception_b_forward.5} parent=0 // loop_footer_branch
    %8 = sbr.rel target = $region3
  $region8: #{inception_b_forward.5} parent=0 // loop_exit
    _

// kernel: inception_b_forward.4
$region0: #{inception_b_forward.4}
  #allocation0 [shape = 'u32[]', space=smem, size = 0x4, offset = 0x4, fixed_abs, tag = 'smem constant byte address 0x4 - core index']
  #allocation1 [shape = 'u32[144,128]{1,0:T(1,128)}', space=vmem, size = 0x12000, scoped, tag = 'internal scratch']
  #allocation2 [shape = 'bf16[144,256]{1,0:T(16,128)(2,1)}', space=vmem, size = 0x12000, scoped, tag = 'scratch operand']
  %s0 = inlined_call_operand.vmem [shape: bf16[272,256], index: 0, kind: input, shape index: {}, may-alias: {0,1}]
  %s1 = inlined_call_operand.vmem [shape: bf16[272,256], index: 1, kind: input, shape index: {}, may-alias: {0,1}]
  %s2 = inlined_call_operand.vmem [shape: bf16[9,64,384], index: 2, kind: input, shape index: {}]
  %s3 = inlined_call_operand.vmem [shape: f32[1,384], index: 3, kind: input, shape index: {}]
  %s4 = inlined_call_operand.vmem [shape: bf16[256,384], index: 4, kind: output, shape index: {0}]
  %s5 = inlined_call_operand.vmem [shape: bf16[256,64], index: 5, kind: output, shape index: {1}]
  %6 = xla_tuple %s4, %s5
  %s7 = sld [smem:[#allocation0]]
  $region57: #{inception_b_forward.4} parent=0
    _
  %s9 = ssub.s32 1, %s7
  %s10 = scalar_select 0, %s9, %s7
  loop: start=0, step=1, limit=4
  $region2: #{inception_b_forward.4} parent=0 // loop_pre_header
    _
  $region3: #{inception_b_forward.4} parent=0 // loop_header
    %s12 = sphi 0, %s16
    %p13 = scmp.ge.s32.totalorder %s12, 4
    %s22 = sphi 0, %s24
    %s25 = sphi 0, %s22
    %s26 = sphi 0, %s25
    %s42 = sphi 0, %s26
    %s52 = sphi 0, %s54
    %s55 = sphi 0, %s52
    %s56 = sphi 0, %s55
    %s72 = sphi 0, %s56
    %s76 = sphi 0, %s76
    %s78 = sphi 0, %s76
    %s79 = sphi 0, %s78
    %s93 = sphi 0, %s79
    %s97 = sphi 0, %s97
    %s99 = sphi 0, %s97
    %s100 = sphi 0, %s99
    %s114 = sphi 0, %s100
    %s120 = sphi 0, %s122
    %s123 = sphi 0, %s120
    %s124 = sphi 0, %s123
    %s140 = sphi 0, %s124
    %s146 = sphi 0, %s148
    %s149 = sphi 0, %s146
    %s150 = sphi 0, %s149
    %s166 = sphi 0, %s150
  $region4: #{inception_b_forward.4} parent=0 // loop_header_branch
    %15 = sbr.rel (%p13) target = $region8
  $region5: #{inception_b_forward.4} parent=0 // loop_body
    %s17 = ssub.s32 %s12, 1
    %s18 = ssub.s32 %s12, 2
    %s19 = sadd.s32 %s12, 1
    %s20 = ssub.s32 %s12, %s19
    %p21 = scmp.eq.s32.totalorder %s20, 0
    %s23 = sadd.s32 %s22, 1
    %s24 = scalar_select %p21, %s22, %s23
    %p27 = pneg %p21
    %p28 = scmp.eq.s32.totalorder %s12, 1
    %p29 = por %p27, %p28
    %p30 = scmp.ne.s32.totalorder %s22, %s25
    %p31 = scmp.eq.s32.totalorder %s12, 0
    %p32 = por %p30, %p31
    %p33 = scmp.ne.s32.totalorder %s22, %s25
    %p34 = scmp.eq.s32.totalorder %s17, 1
    %p35 = por %p33, %p34
    %p36 = scmp.ne.s32.totalorder %s25, %s26
    %p37 = scmp.eq.s32.totalorder %s17, 0
    %p38 = por %p36, %p37
    %p39 = scmp.ne.s32.totalorder %s25, %s26
    %p40 = scmp.eq.s32.totalorder %s18, 1
    %p41 = por %p39, %p40
    %p43 = scmp.ne.s32.totalorder %s26, %s42
    %p44 = scmp.eq.s32.totalorder %s18, 0
    %p45 = por %p43, %p44
    %s46 = sadd.s32 %s12, 1
    %s47 = smul.u32 %s46, 8
    %s48 = sadd.s32 %s19, 1
    %s49 = smul.u32 %s48, 8
    %s50 = ssub.s32 %s47, %s49
    %p51 = scmp.eq.s32.totalorder %s50, 0
    %s53 = sadd.s32 %s52, 1
    %s54 = scalar_select %p51, %s52, %s53
    %p57 = pneg %p51
    %p58 = scmp.eq.s32.totalorder %s12, 1
    %p59 = por %p57, %p58
    %p60 = scmp.ne.s32.totalorder %s52, %s55
    %p61 = scmp.eq.s32.totalorder %s12, 0
    %p62 = por %p60, %p61
    %p63 = scmp.ne.s32.totalorder %s52, %s55
    %p64 = scmp.eq.s32.totalorder %s17, 1
    %p65 = por %p63, %p64
    %p66 = scmp.ne.s32.totalorder %s55, %s56
    %p67 = scmp.eq.s32.totalorder %s17, 0
    %p68 = por %p66, %p67
    %p69 = scmp.ne.s32.totalorder %s55, %s56
    %p70 = scmp.eq.s32.totalorder %s18, 1
    %p71 = por %p69, %p70
    %p73 = scmp.ne.s32.totalorder %s56, %s72
    %p74 = scmp.eq.s32.totalorder %s18, 0
    %p75 = por %p73, %p74
    %s77 = sadd.s32 %s76, 1
    %p80 = scmp.eq.s32.totalorder %s12, 1
    %p81 = scmp.ne.s32.totalorder %s76, %s78
    %p82 = scmp.eq.s32.totalorder %s12, 0
    %p83 = por %p81, %p82
    %p84 = scmp.ne.s32.totalorder %s76, %s78
    %p85 = scmp.eq.s32.totalorder %s17, 1
    %p86 = por %p84, %p85
    %p87 = scmp.ne.s32.totalorder %s78, %s79
    %p88 = scmp.eq.s32.totalorder %s17, 0
    %p89 = por %p87, %p88
    %p90 = scmp.ne.s32.totalorder %s78, %s79
    %p91 = scmp.eq.s32.totalorder %s18, 1
    %p92 = por %p90, %p91
    %p94 = scmp.ne.s32.totalorder %s79, %s93
    %p95 = scmp.eq.s32.totalorder %s18, 0
    %p96 = por %p94, %p95
    %s98 = sadd.s32 %s97, 1
    %p101 = scmp.eq.s32.totalorder %s12, 1
    %p102 = scmp.ne.s32.totalorder %s97, %s99
    %p103 = scmp.eq.s32.totalorder %s12, 0
    %p104 = por %p102, %p103
    %p105 = scmp.ne.s32.totalorder %s97, %s99
    %p106 = scmp.eq.s32.totalorder %s17, 1
    %p107 = por %p105, %p106
    %p108 = scmp.ne.s32.totalorder %s99, %s100
    %p109 = scmp.eq.s32.totalorder %s17, 0
    %p110 = por %p108, %p109
    %p111 = scmp.ne.s32.totalorder %s99, %s100
    %p112 = scmp.eq.s32.totalorder %s18, 1
    %p113 = por %p111, %p112
    %p115 = scmp.ne.s32.totalorder %s100, %s114
    %p116 = scmp.eq.s32.totalorder %s18, 0
    %p117 = por %p115, %p116
    %s118 = ssub.s32 %s12, %s19
    %p119 = scmp.eq.s32.totalorder %s118, 0
    %s121 = sadd.s32 %s120, 1
    %s122 = scalar_select %p119, %s120, %s121
    %p125 = pneg %p119
    %p126 = scmp.eq.s32.totalorder %s12, 1
    %p127 = por %p125, %p126
    %p128 = scmp.ne.s32.totalorder %s120, %s123
    %p129 = scmp.eq.s32.totalorder %s12, 0
    %p130 = por %p128, %p129
    %p131 = scmp.ne.s32.totalorder %s120, %s123
    %p132 = scmp.eq.s32.totalorder %s17, 1
    %p133 = por %p131, %p132
    %p134 = scmp.ne.s32.totalorder %s123, %s124
    %p135 = scmp.eq.s32.totalorder %s17, 0
    %p136 = por %p134, %p135
    %p137 = scmp.ne.s32.totalorder %s123, %s124
    %p138 = scmp.eq.s32.totalorder %s18, 1
    %p139 = por %p137, %p138
    %p141 = scmp.ne.s32.totalorder %s124, %s140
    %p142 = scmp.eq.s32.totalorder %s18, 0
    %p143 = por %p141, %p142
    %s144 = ssub.s32 %s12, %s19
    %p145 = scmp.eq.s32.totalorder %s144, 0
    %s147 = sadd.s32 %s146, 1
    %s148 = scalar_select %p145, %s146, %s147
    %p151 = pneg %p145
    %p152 = scmp.eq.s32.totalorder %s12, 1
    %p153 = por %p151, %p152
    %p154 = scmp.ne.s32.totalorder %s146, %s149
    %p155 = scmp.eq.s32.totalorder %s12, 0
    %p156 = por %p154, %p155
    %p157 = scmp.ne.s32.totalorder %s146, %s149
    %p158 = scmp.eq.s32.totalorder %s17, 1
    %p159 = por %p157, %p158
    %p160 = scmp.ne.s32.totalorder %s149, %s150
    %p161 = scmp.eq.s32.totalorder %s17, 0
    %p162 = por %p160, %p161
    %p163 = scmp.ne.s32.totalorder %s149, %s150
    %p164 = scmp.eq.s32.totalorder %s18, 1
    %p165 = por %p163, %p164
    %p167 = scmp.ne.s32.totalorder %s150, %s166
    %p168 = scmp.eq.s32.totalorder %s18, 0
    %p169 = por %p167, %p168
    %p170 = scmp.le.s32.totalorder 1, %s12
    %p171 = scmp.lt.s32.totalorder %s12, 3
    %p172 = pnand %p170, %p171
    %p173 = pneg %p172
    // Predicated region
    $region9: #{inception_b_forward.4} parent=5 // pred_check
      _
    $region10: #{inception_b_forward.4} parent=5 // pred_check_branch
      %175 = sbr.rel (%p172) target = $region12
    $region11: #{inception_b_forward.4} parent=5 // pred_region
      %s176 = ssub.s32 %s12, 1
      // Predicated region
      $region13: #{inception_b_forward.4} parent=11 // pred_check
        %p177 = pneg %p89
      $region14: #{inception_b_forward.4} parent=11 // pred_check_branch
        %179 = sbr.rel (%p177) target = $region16
      $region15: #{inception_b_forward.4} parent=11 // pred_region
        _
      $region16: #{inception_b_forward.4} parent=11 // pred_fallthru
        _
      // Predicated region
      $region17: #{inception_b_forward.4} parent=11 // pred_check
        %p180 = pneg %p110
      $region18: #{inception_b_forward.4} parent=11 // pred_check_branch
        %182 = sbr.rel (%p180) target = $region20
      $region19: #{inception_b_forward.4} parent=11 // pred_region
        _
      $region20: #{inception_b_forward.4} parent=11 // pred_fallthru
        _
    $region12: #{inception_b_forward.4} parent=5 // pred_fallthru
      _
    %p183 = scmp.lt.s32.totalorder %s12, 2
    // Predicated region
    $region21: #{inception_b_forward.4} parent=5 // pred_check
      %p184 = pneg %p183
    $region22: #{inception_b_forward.4} parent=5 // pred_check_branch
      %186 = sbr.rel (%p184) target = $region24
    $region23: #{inception_b_forward.4} parent=5 // pred_region
      // Predicated region
      $region25: #{inception_b_forward.4} parent=23 // pred_check
        %p187 = pneg %p32
      $region26: #{inception_b_forward.4} parent=23 // pred_check_branch
        %189 = sbr.rel (%p187) target = $region28
      $region27: #{inception_b_forward.4} parent=23 // pred_region
        %s190 = smul.u32 16, %s12
        %s191 = ssub.s32 34, %s190
        %p192 = scmp.lt.s32.totalorder %s191, 16
        %s193 = scalar_select %p192, %s191, 16
        %s194 = smul.u32 64, %s193
        %s195 = smul.u32 %s194, 2
        %p196 = scmp.lt.s32.totalorder %s190, 33
        %s197 = scalar_select %p196, %s190, 33
        %s198 = smul.addr %s197, 2
        %s199 = smul.addr %s198, 4
        %s200 = scalar_lea.vmem %s0, %s199
        %s201 = smul.u32 16, %s12
        %s202 = ssub.s32 34, %s201
        %p203 = scmp.lt.s32.totalorder %s202, 16
        %s204 = scalar_select %p203, %s202, 16
        %s205 = smul.u32 64, %s204
        %s206 = smul.u32 %s205, 2
      $region28: #{inception_b_forward.4} parent=23 // pred_fallthru
        _
      // Predicated region
      $region29: #{inception_b_forward.4} parent=23 // pred_check
        %p207 = pneg %p62
      $region30: #{inception_b_forward.4} parent=23 // pred_check_branch
        %209 = sbr.rel (%p207) target = $region32
      $region31: #{inception_b_forward.4} parent=23 // pred_region
        %s210 = sadd.s32 %s12, 1
        %s211 = smul.u32 %s210, 8
        %s212 = smul.u32 2, %s211
        %p213 = scmp.lt.s32.totalorder %s212, 33
        %s214 = scalar_select %p213, %s212, 33
        %s215 = smul.addr %s214, 2
        %s216 = smul.addr %s215, 4
        %s217 = scalar_lea.vmem %s1, %s216
        %s218 = sadd.s32 %s12, 1
        %s219 = smul.u32 %s218, 8
        %s220 = smul.u32 2, %s219
      $region32: #{inception_b_forward.4} parent=23 // pred_fallthru
        _
    $region24: #{inception_b_forward.4} parent=5 // pred_fallthru
      _
    %p221 = scmp.le.s32.totalorder 1, %s12
    %p222 = scmp.lt.s32.totalorder %s12, 3
    %p223 = pnand %p221, %p222
    %p224 = pneg %p223
    // Predicated region
    $region33: #{inception_b_forward.4} parent=5 // pred_check
      _
    $region34: #{inception_b_forward.4} parent=5 // pred_check_branch
      %226 = sbr.rel (%p223) target = $region36
    $region35: #{inception_b_forward.4} parent=5 // pred_region
      %s227 = ssub.s32 %s12, 1
      %s228 = smul.u32 16, %s17
      %s229 = ssub.s32 34, %s228
      %p230 = scmp.lt.s32.totalorder %s229, 16
      %s231 = scalar_select %p230, %s229, 16
      %s232 = smul.u32 64, %s231
      %s233 = smul.u32 %s232, 2
      %p234 = scmp.lt.s32.totalorder %s228, 33
      %s235 = scalar_select %p234, %s228, 33
      %s236 = smul.addr %s235, 2
      %s237 = smul.addr %s236, 4
      %s238 = scalar_lea.vmem %s0, %s237
      %p239 = pneg %p38
      %p240 = pneg %p35
      %s241 = sadd.s32 %s17, 1
      %s242 = smul.u32 %s241, 8
      %s243 = smul.u32 2, %s242
      %p244 = scmp.lt.s32.totalorder %s243, 33
      %s245 = scalar_select %p244, %s243, 33
      %s246 = smul.addr %s245, 2
      %s247 = smul.addr %s246, 4
      %s248 = scalar_lea.vmem %s1, %s247
      %p249 = pneg %p68
      %p250 = pneg %p65
      %p251 = pneg %p89
      %p252 = pneg %p86
      %p253 = pneg %p110
      %p254 = pneg %p107
      %p255 = pneg %p136
      %p256 = pneg %p133
      %s257 = smul.u32 16, %s17
      %p258 = scmp.lt.s32.totalorder %s257, 31
      %s259 = scalar_select %p258, %s257, 31
      %s260 = smul.addr %s259, 3
      %s261 = smul.addr %s260, 4
      %s262 = scalar_lea.vmem %s4, %s261
      %p263 = pneg %p162
      %p264 = pneg %p159
      %s265 = smul.u32 16, %s17
      %p266 = scmp.lt.s32.totalorder %s265, 31
      %s267 = scalar_select %p266, %s265, 31
      %s268 = smul.addr %s267, 4
      %s269 = scalar_lea.vmem %s5, %s268
      %s270 = smul.u32 16, %s17
      %s271 = ssub.s32 34, %s270
      %p272 = scmp.lt.s32.totalorder %s271, 16
      %s273 = scalar_select %p272, %s271, 16
      %s274 = smul.u32 64, %s273
      %s275 = smul.u32 %s274, 2
      %p276 = scmp.lt.s32.totalorder %s270, 33
      %s277 = scalar_select %p276, %s270, 33
      %s278 = smul.addr %s277, 2
      %s279 = smul.addr %s278, 4
      %s280 = scalar_lea.vmem %s0, %s279
      %s281 = smul.u32 16, %s17
      %s282 = ssub.s32 34, %s281
      %p283 = scmp.lt.s32.totalorder %s282, 16
      %s284 = scalar_select %p283, %s282, 16
      %s285 = smul.u32 64, %s284
      %s286 = smul.u32 %s285, 2
      %s287 = sadd.s32 %s17, 1
      %s288 = smul.u32 %s287, 8
      %s289 = smul.u32 2, %s288
      %p290 = scmp.lt.s32.totalorder %s289, 33
      %s291 = scalar_select %p290, %s289, 33
      %s292 = smul.addr %s291, 2
      %s293 = smul.addr %s292, 4
      %s294 = scalar_lea.vmem %s1, %s293
      %s295 = sadd.s32 %s17, 1
      %s296 = smul.u32 %s295, 8
      %s297 = smul.u32 2, %s296
      %s298 = smul.u32 16, %s17
      %p299 = scmp.lt.s32.totalorder %s298, 31
      %s300 = scalar_select %p299, %s298, 31
      %s301 = smul.addr %s300, 3
      %s302 = smul.addr %s301, 4
      %s303 = scalar_lea.vmem %s4, %s302
      %s304 = smul.u32 16, %s17
      %s305 = smul.u32 16, %s17
      %p306 = scmp.lt.s32.totalorder %s305, 31
      %s307 = scalar_select %p306, %s305, 31
      %s308 = smul.addr %s307, 4
      %s309 = scalar_lea.vmem %s5, %s308
      %s310 = smul.u32 16, %s17
      %v312 = vld [vmem:[%s280] sm:$0xff]
      %v313 = vld [vmem:[%s280 + $0x8] sm:$0xff]
      %v314 = vld [vmem:[%s280 + $0x10] sm:$0xff]
      %v315 = vld [vmem:[%s280 + $0x18] sm:$0xff]
      %v316 = vld [vmem:[%s280 + $0x20] sm:$0xff]
      %v317 = vld [vmem:[%s280 + $0x28] sm:$0xff]
      %v318 = vld [vmem:[%s280 + $0x30] sm:$0xff]
      %v319 = vld [vmem:[%s280 + $0x38] sm:$0xff]
      %v320 = vld [vmem:[%s280 + $0x40] sm:$0xff]
      %v321 = vld [vmem:[%s280 + $0x48] sm:$0xff]
      %v322 = vld [vmem:[%s280 + $0x50] sm:$0xff]
      %v323 = vld [vmem:[%s280 + $0x58] sm:$0xff]
      %v324 = vld [vmem:[%s280 + $0x60] sm:$0xff]
      %v325 = vld [vmem:[%s280 + $0x68] sm:$0xff]
      %v326 = vld [vmem:[%s280 + $0x70] sm:$0xff]
      %v327 = vld [vmem:[%s280 + $0x78] sm:$0xff]
      %v344 = vunpack.c.l.b16 %v312
      %v345 = vunpack.c.h.b16 %v312
      %v346 = vunpack.c.l.b16 %v313
      %v347 = vunpack.c.h.b16 %v313
      %v348 = vunpack.c.l.b16 %v314
      %v349 = vunpack.c.h.b16 %v314
      %v350 = vunpack.c.l.b16 %v315
      %v351 = vunpack.c.h.b16 %v315
      %v352 = vunpack.c.l.b16 %v316
      %v353 = vunpack.c.h.b16 %v316
      %v354 = vunpack.c.l.b16 %v317
      %v355 = vunpack.c.h.b16 %v317
      %v356 = vunpack.c.l.b16 %v318
      %v357 = vunpack.c.h.b16 %v318
      %v358 = vunpack.c.l.b16 %v319
      %v359 = vunpack.c.h.b16 %v319
      %v360 = vunpack.c.l.b16 %v320
      %v361 = vunpack.c.h.b16 %v320
      %v362 = vunpack.c.l.b16 %v321
      %v363 = vunpack.c.h.b16 %v321
      %v364 = vunpack.c.l.b16 %v322
      %v365 = vunpack.c.h.b16 %v322
      %v366 = vunpack.c.l.b16 %v323
      %v367 = vunpack.c.h.b16 %v323
      %v368 = vunpack.c.l.b16 %v324
      %v369 = vunpack.c.h.b16 %v324
      %v370 = vunpack.c.l.b16 %v325
      %v371 = vunpack.c.h.b16 %v325
      %v372 = vunpack.c.l.b16 %v326
      %v373 = vunpack.c.h.b16 %v326
      %v374 = vunpack.c.l.b16 %v327
      %v375 = vunpack.c.h.b16 %v327
      %v376 = vpack.c.b16 %v346, %v344
      %v377 = vpack.c.b16 %v347, %v345
      %v378 = vpack.c.b16 %v350, %v348
      %v379 = vpack.c.b16 %v351, %v349
      %v380 = vpack.c.b16 %v354, %v352
      %v381 = vpack.c.b16 %v355, %v353
      %v382 = vpack.c.b16 %v358, %v356
      %v383 = vpack.c.b16 %v359, %v357
      %v384 = vpack.c.b16 %v362, %v360
      %v385 = vpack.c.b16 %v363, %v361
      %v386 = vpack.c.b16 %v366, %v364
      %v387 = vpack.c.b16 %v367, %v365
      %v388 = vpack.c.b16 %v370, %v368
      %v389 = vpack.c.b16 %v371, %v369
      %v390 = vpack.c.b16 %v374, %v372
      %v391 = vpack.c.b16 %v375, %v373
      %408 = vst [vmem:[#allocation2] sm:$0xff] %v376
      %409 = vst [vmem:[#allocation2 + $0x8] sm:$0xff] %v377
      %410 = vst [vmem:[#allocation2 + $0x10] sm:$0xff] %v378
      %411 = vst [vmem:[#allocation2 + $0x18] sm:$0xff] %v379
      %412 = vst [vmem:[#allocation2 + $0x20] sm:$0xff] %v380
      %413 = vst [vmem:[#allocation2 + $0x28] sm:$0xff] %v381
      %414 = vst [vmem:[#allocation2 + $0x30] sm:$0xff] %v382
      %415 = vst [vmem:[#allocation2 + $0x38] sm:$0xff] %v383
      %416 = vst [vmem:[#allocation2 + $0x40] sm:$0xff] %v384
      %417 = vst [vmem:[#allocation2 + $0x48] sm:$0xff] %v385
      %418 = vst [vmem:[#allocation2 + $0x50] sm:$0xff] %v386
      %419 = vst [vmem:[#allocation2 + $0x58] sm:$0xff] %v387
      %420 = vst [vmem:[#allocation2 + $0x60] sm:$0xff] %v388
      %421 = vst [vmem:[#allocation2 + $0x68] sm:$0xff] %v389
      %422 = vst [vmem:[#allocation2 + $0x70] sm:$0xff] %v390
      %423 = vst [vmem:[#allocation2 + $0x78] sm:$0xff] %v391
      %v424 = vld [vmem:[%s294] sm:$0xff]
      %v425 = vld [vmem:[%s294 + $0x8] sm:$0xff]
      %v428 = vunpack.c.l.b16 %v424
      %v429 = vunpack.c.h.b16 %v424
      %v430 = vunpack.c.l.b16 %v425
      %v431 = vunpack.c.h.b16 %v425
      %v432 = vpack.c.b16 %v430, %v428
      %v433 = vpack.c.b16 %v431, %v429
      %436 = vst [vmem:[#allocation2 + $0x80] sm:$0xff] %v432
      %437 = vst [vmem:[#allocation2 + $0x88] sm:$0xff] %v433
      %v438 = vld [vmem:[#allocation2] sm:$0xff]
      %v439 = vld [vmem:[#allocation2 + $0x10] sm:$0xff]
      %v440 = vld [vmem:[#allocation2 + $0x20] sm:$0xff]
      %v441 = vld [vmem:[#allocation2 + $0x30] sm:$0xff]
      %v442 = vld [vmem:[#allocation2 + $0x40] sm:$0xff]
      %v443 = vld [vmem:[#allocation2 + $0x50] sm:$0xff]
      %v444 = vld [vmem:[#allocation2 + $0x60] sm:$0xff]
      %v445 = vld [vmem:[#allocation2 + $0x70] sm:$0xff]
      %v446 = vld [vmem:[%s2] sm:$0xff]
      %v447 = vld [vmem:[%s2 + $0x8] sm:$0xf]
      %v448 = vld [vmem:[%s2 + $0xc] sm:$0xff]
      %v449 = vld [vmem:[%s2 + $0x14] sm:$0xf]
      %v450 = vld [vmem:[%s2 + $0x18] sm:$0xff]
      %v451 = vld [vmem:[%s2 + $0x20] sm:$0xf]
      %v452 = vld [vmem:[%s2 + $0x24] sm:$0xff]
      %v453 = vld [vmem:[%s2 + $0x2c] sm:$0xf]
      %v454 = vld [vmem:[%s2 + $0x30] sm:$0xff]
      %v455 = vld [vmem:[%s2 + $0x38] sm:$0xf]
      %v456 = vld [vmem:[%s2 + $0x3c] sm:$0xff]
      %v457 = vld [vmem:[%s2 + $0x44] sm:$0xf]
      %v458 = vld [vmem:[%s2 + $0x48] sm:$0xff]
      %v459 = vld [vmem:[%s2 + $0x50] sm:$0xf]
      %v460 = vld [vmem:[%s2 + $0x54] sm:$0xff]
      %v461 = vld [vmem:[%s2 + $0x5c] sm:$0xf]
      %s462 = scalar_lea.vmem %s2, 96
      %v463 = vld [vmem:[%s462] sm:$0xff]
      %v464 = vld [vmem:[%s462 + $0x8] sm:$0xf]
      %v465 = vld [vmem:[%s462 + $0xc] sm:$0xff]
      %v466 = vld [vmem:[%s462 + $0x14] sm:$0xf]
      %v467 = vld [vmem:[%s462 + $0x18] sm:$0xff]
      %v468 = vld [vmem:[%s462 + $0x20] sm:$0xf]
      %v469 = vld [vmem:[%s462 + $0x24] sm:$0xff]
      %v470 = vld [vmem:[%s462 + $0x2c] sm:$0xf]
      %v471 = vld [vmem:[%s462 + $0x30] sm:$0xff]
      %v472 = vld [vmem:[%s462 + $0x38] sm:$0xf]
      %v473 = vld [vmem:[%s462 + $0x3c] sm:$0xff]
      %v474 = vld [vmem:[%s462 + $0x44] sm:$0xf]
      %v475 = vld [vmem:[%s462 + $0x48] sm:$0xff]
      %v476 = vld [vmem:[%s462 + $0x50] sm:$0xf]
      %v477 = vld [vmem:[%s462 + $0x54] sm:$0xff]
      %v478 = vld [vmem:[%s462 + $0x5c] sm:$0xf]
      %487 = vrot.lane.b32.xlu0 %v438, 64
      %v488 = vpop.permute.xlu0 %487
      %489 = vrot.lane.b32.xlu0 %v439, 64
      %v490 = vpop.permute.xlu0 %489
      %491 = vrot.lane.b32.xlu0 %v440, 64
      %v492 = vpop.permute.xlu0 %491
      %493 = vrot.lane.b32.xlu0 %v441, 64
      %v494 = vpop.permute.xlu0 %493
      %495 = vrot.lane.b32.xlu0 %v442, 64
      %v496 = vpop.permute.xlu0 %495
      %497 = vrot.lane.b32.xlu0 %v443, 64
      %v498 = vpop.permute.xlu0 %497
      %499 = vrot.lane.b32.xlu0 %v444, 64
      %v500 = vpop.permute.xlu0 %499
      %501 = vrot.lane.b32.xlu0 %v445, 64
      %v502 = vpop.permute.xlu0 %501
      %v519 = vunpack.c.l.b16 %v463
      %v520 = vunpack.c.h.b16 %v463
      %v521 = vunpack.c.l.b16 %v464
      %v522 = vunpack.c.l.b16 %v465
      %v523 = vunpack.c.h.b16 %v465
      %v524 = vunpack.c.l.b16 %v466
      %v525 = vunpack.c.l.b16 %v467
      %v526 = vunpack.c.h.b16 %v467
      %v527 = vunpack.c.l.b16 %v468
      %v528 = vunpack.c.l.b16 %v469
      %v529 = vunpack.c.h.b16 %v469
      %v530 = vunpack.c.l.b16 %v470
      %v531 = vunpack.c.l.b16 %v471
      %v532 = vunpack.c.h.b16 %v471
      %v533 = vunpack.c.l.b16 %v472
      %v534 = vunpack.c.l.b16 %v473
      %v535 = vunpack.c.h.b16 %v473
      %v536 = vunpack.c.l.b16 %v474
      %v537 = vunpack.c.l.b16 %v475
      %v538 = vunpack.c.h.b16 %v475
      %v539 = vunpack.c.l.b16 %v476
      %v540 = vunpack.c.l.b16 %v477
      %v541 = vunpack.c.h.b16 %v477
      %v542 = vunpack.c.l.b16 %v478
      %v543 = vpack.c.b16 %v522, %v519
      %v544 = vpack.c.b16 %v523, %v520
      %v545 = vpack.c.b16 %v524, %v521
      %v546 = vpack.c.b16 %v528, %v525
      %v547 = vpack.c.b16 %v529, %v526
      %v548 = vpack.c.b16 %v530, %v527
      %v549 = vpack.c.b16 %v534, %v531
      %v550 = vpack.c.b16 %v535, %v532
      %v551 = vpack.c.b16 %v536, %v533
      %v552 = vpack.c.b16 %v540, %v537
      %v553 = vpack.c.b16 %v541, %v538
      %v554 = vpack.c.b16 %v542, %v539
      %vm567 = vcmask 523264
      %v569 = vsel %vm567, %v488, 0
      %v572 = vsel %vm567, %v490, 0
      %v575 = vsel %vm567, %v492, 0
      %v578 = vsel %vm567, %v494, 0
      %v581 = vsel %vm567, %v496, 0
      %v584 = vsel %vm567, %v498, 0
      %v587 = vsel %vm567, %v500, 0
      %v590 = vsel %vm567, %v502, 0
      %592 = vmatprep.subr.bf16.mxu0 %v544
      %593 = vmatpush1.bf16.msra.mxu0 %v543
      %594 = vmatprep.subr.bf16.mxu0 %v547
      %595 = vmatpush1.bf16.msra.mxu0 %v546
      %596 = vmatprep.subr.bf16.mxu0 %v550
      %597 = vmatpush1.bf16.msra.mxu0 %v549
      %598 = vmatprep.subr.bf16.mxu0 %v553
      %599 = vmatpush1.bf16.msra.mxu0 %v552
      %600 = vmatprep.subr.bf16.mxu0 0
      %601 = vmatpush1.bf16.msra.mxu0 0
      %602 = vmatprep.subr.bf16.mxu0 0
      %603 = vmatpush1.bf16.msra.mxu0 0
      %604 = vmatprep.subr.bf16.mxu0 0
      %605 = vmatpush1.bf16.msra.mxu0 0
      %606 = vmatprep.subr.bf16.mxu0 0
      %607 = vmatpush1.bf16.msra.mxu0 0
      %608 = vmatprep.subr.bf16.mxu0 0
      %609 = vmatpush1.bf16.msra.mxu0 0
      %610 = vmatprep.subr.bf16.mxu0 0
      %611 = vmatpush1.bf16.msra.mxu0 0
      %612 = vmatprep.subr.bf16.mxu0 0
      %613 = vmatpush1.bf16.msra.mxu0 0
      %614 = vmatprep.subr.bf16.mxu0 0
      %615 = vmatpush1.bf16.msra.mxu0 0
      %616 = vmatprep.subr.bf16.mxu0 0
      %617 = vmatpush1.bf16.msra.mxu0 0
      %618 = vmatprep.subr.bf16.mxu0 0
      %619 = vmatpush1.bf16.msra.mxu0 0
      %620 = vmatprep.subr.bf16.mxu0 0
      %621 = vmatpush1.bf16.msra.mxu0 0
      %622 = vmatprep.subr.bf16.mxu0 0
      %623 = vmatpush1.bf16.msra.mxu0 0
      %624 = vmatprep.mubr.bf16.mxu0 0
      %625 = vmatmul.mubr.bf16.gmra.mrb[0].mxu0 %v569
      %v626 = vpop.f32.mrb[0].mxu0
      %v627 = vadd.f32 0.0, %v626
      %v628 = vpop.f32.mrb[0].mxu0
      %v629 = vadd.f32 0.0, %v628
      %v630 = vpop.f32.mrb[0].mxu0
      %v631 = vadd.f32 0.0, %v630
      %v632 = vpop.f32.mrb[0].mxu0
      %v633 = vadd.f32 0.0, %v632
      %634 = vmatprep.mubr.bf16.mxu0 0
      %635 = vmatmul.mubr.bf16.gmra.mrb[0].mxu0 %v572
      %v636 = vpop.f32.mrb[0].mxu0
      %v637 = vadd.f32 0.0, %v636
      %v638 = vpop.f32.mrb[0].mxu0
      %v639 = vadd.f32 0.0, %v638
      %v640 = vpop.f32.mrb[0].mxu0
      %v641 = vadd.f32 0.0, %v640
      %v642 = vpop.f32.mrb[0].mxu0
      %v643 = vadd.f32 0.0, %v642
      %644 = vmatprep.mubr.bf16.mxu0 0
      %645 = vmatmul.mubr.bf16.gmra.mrb[0].mxu0 %v575
      %v646 = vpop.f32.mrb[0].mxu0
      %v647 = vadd.f32 0.0, %v646
      %v648 = vpop.f32.mrb[0].mxu0
      %v649 = vadd.f32 0.0, %v648
      %v650 = vpop.f32.mrb[0].mxu0
      %v651 = vadd.f32 0.0, %v650
      %v652 = vpop.f32.mrb[0].mxu0
      %v653 = vadd.f32 0.0, %v652
      %654 = vmatprep.mubr.bf16.mxu0 0
      %655 = vmatmul.mubr.bf16.gmra.mrb[0].mxu0 %v578
      %v656 = vpop.f32.mrb[0].mxu0
      %v657 = vadd.f32 0.0, %v656
      %v658 = vpop.f32.mrb[0].mxu0
      %v659 = vadd.f32 0.0, %v658
      %v660 = vpop.f32.mrb[0].mxu0
      %v661 = vadd.f32 0.0, %v660
      %v662 = vpop.f32.mrb[0].mxu0
      %v663 = vadd.f32 0.0, %v662
      %664 = vmatprep.mubr.bf16.mxu0 0
      %665 = vmatmul.mubr.bf16.gmra.mrb[0].mxu0 %v581
      %v666 = vpop.f32.mrb[0].mxu0
      %v667 = vadd.f32 0.0, %v666
      %v668 = vpop.f32.mrb[0].mxu0
      %v669 = vadd.f32 0.0, %v668
      %v670 = vpop.f32.mrb[0].mxu0
      %v671 = vadd.f32 0.0, %v670
      %v672 = vpop.f32.mrb[0].mxu0
      %v673 = vadd.f32 0.0, %v672
      %674 = vmatprep.mubr.bf16.mxu0 0
      %675 = vmatmul.mubr.bf16.gmra.mrb[0].mxu0 %v584
      %v676 = vpop.f32.mrb[0].mxu0
      %v677 = vadd.f32 0.0, %v676
      %v678 = vpop.f32.mrb[0].mxu0
      %v679 = vadd.f32 0.0, %v678
      %v680 = vpop.f32.mrb[0].mxu0
      %v681 = vadd.f32 0.0, %v680
      %v682 = vpop.f32.mrb[0].mxu0
      %v683 = vadd.f32 0.0, %v682
      %684 = vmatprep.mubr.bf16.mxu0 0
      %685 = vmatmul.mubr.bf16.gmra.mrb[0].mxu0 %v587
      %v686 = vpop.f32.mrb[0].mxu0
      %v687 = vadd.f32 0.0, %v686
      %v688 = vpop.f32.mrb[0].mxu0
      %v689 = vadd.f32 0.0, %v688
      %v690 = vpop.f32.mrb[0].mxu0
      %v691 = vadd.f32 0.0, %v690
      %v692 = vpop.f32.mrb[0].mxu0
      %v693 = vadd.f32 0.0, %v692
      %694 = vmatprep.mubr.bf16.mxu0 0
      %695 = vmatmul.mubr.bf16.gmra.mrb[0].mxu0 %v590
      %v696 = vpop.f32.mrb[0].mxu0
      %v697 = vadd.f32 0.0, %v696
      %v698 = vpop.f32.mrb[0].mxu0
      %v699 = vadd.f32 0.0, %v698
      %v700 = vpop.f32.mrb[0].mxu0
      %v701 = vadd.f32 0.0, %v700
      %v702 = vpop.f32.mrb[0].mxu0
      %v703 = vadd.f32 0.0, %v702
      %704 = vdwg.mxu0
      %705 = vmatprep.subr.bf16.mxu0 0
      %706 = vmatpush1.bf16.msra.mxu0 %v545
      %707 = vmatprep.subr.bf16.mxu0 0
      %708 = vmatpush1.bf16.msra.mxu0 %v548
      %709 = vmatprep.subr.bf16.mxu0 0
      %710 = vmatpush1.bf16.msra.mxu0 %v551
      %711 = vmatprep.subr.bf16.mxu0 0
      %712 = vmatpush1.bf16.msra.mxu0 %v554
      %713 = vmatprep.subr.bf16.mxu0 0
      %714 = vmatpush1.bf16.msra.mxu0 0
      %715 = vmatprep.subr.bf16.mxu0 0
      %716 = vmatpush1.bf16.msra.mxu0 0
      %717 = vmatprep.subr.bf16.mxu0 0
      %718 = vmatpush1.bf16.msra.mxu0 0
      %719 = vmatprep.subr.bf16.mxu0 0
      %720 = vmatpush1.bf16.msra.mxu0 0
      %721 = vmatprep.subr.bf16.mxu0 0
      %722 = vmatpush1.bf16.msra.mxu0 0
      %723 = vmatprep.subr.bf16.mxu0 0
      %724 = vmatpush1.bf16.msra.mxu0 0
      %725 = vmatprep.subr.bf16.mxu0 0
      %726 = vmatpush1.bf16.msra.mxu0 0
      %727 = vmatprep.subr.bf16.mxu0 0
      %728 = vmatpush1.bf16.msra.mxu0 0
      %729 = vmatprep.subr.bf16.mxu0 0
      %730 = vmatpush1.bf16.msra.mxu0 0
      %731 = vmatprep.subr.bf16.mxu0 0
      %732 = vmatpush1.bf16.msra.mxu0 0
      %733 = vmatprep.subr.bf16.mxu0 0
      %734 = vmatpush1.bf16.msra.mxu0 0
      %735 = vmatprep.subr.bf16.mxu0 0
      %736 = vmatpush1.bf16.msra.mxu0 0
      %737 = vmatprep.mubr.bf16.mxu0 0
      %738 = vmatmul.mubr.bf16.gmra.mrb[0].mxu0 %v569
      %v739 = vpop.f32.mrb[0].mxu0
      %v740 = vadd.f32 0.0, %v739
      %v741 = vpop.f32.mrb[0].mxu0
      %v742 = vpop.f32.mrb[0].mxu0
      %v743 = vadd.f32 0.0, %v742
      %v744 = vpop.f32.mrb[0].mxu0
      %745 = vmatprep.mubr.bf16.mxu0 0
      %746 = vmatmul.mubr.bf16.gmra.mrb[0].mxu0 %v572
      %v747 = vpop.f32.mrb[0].mxu0
      %v748 = vadd.f32 0.0, %v747
      %v749 = vpop.f32.mrb[0].mxu0
      %v750 = vpop.f32.mrb[0].mxu0
      %v751 = vadd.f32 0.0, %v750
      %v752 = vpop.f32.mrb[0].mxu0
      %753 = vmatprep.mubr.bf16.mxu0 0
      %754 = vmatmul.mubr.bf16.gmra.mrb[0].mxu0 %v575
      %v755 = vpop.f32.mrb[0].mxu0
      %v756 = vadd.f32 0.0, %v755
      %v757 = vpop.f32.mrb[0].mxu0
      %v758 = vpop.f32.mrb[0].mxu0
      %v759 = vadd.f32 0.0, %v758
      %v760 = vpop.f32.mrb[0].mxu0
      %761 = vmatprep.mubr.bf16.mxu0 0
      %762 = vmatmul.mubr.bf16.gmra.mrb[0].mxu0 %v578
      %v763 = vpop.f32.mrb[0].mxu0
      %v764 = vadd.f32 0.0, %v763
      %v765 = vpop.f32.mrb[0].mxu0
      %v766 = vpop.f32.mrb[0].mxu0
      %v767 = vadd.f32 0.0, %v766
      %v768 = vpop.f32.mrb[0].mxu0
      %769 = vmatprep.mubr.bf16.mxu0 0
      %770 = vmatmul.mubr.bf16.gmra.mrb[0].mxu0 %v581
      %v771 = vpop.f32.mrb[0].mxu0
      %v772 = vadd.f32 0.0, %v771
      %v773 = vpop.f32.mrb[0].mxu0
      %v774 = vpop.f32.mrb[0].mxu0
      %v775 = vadd.f32 0.0, %v774
      %v776 = vpop.f32.mrb[0].mxu0
      %777 = vmatprep.mubr.bf16.mxu0 0
      %778 = vmatmul.mubr.bf16.gmra.mrb[0].mxu0 %v584
      %v779 = vpop.f32.mrb[0].mxu0
      %v780 = vadd.f32 0.0, %v779
      %v781 = vpop.f32.mrb[0].mxu0
      %v782 = vpop.f32.mrb[0].mxu0
      %v783 = vadd.f32 0.0, %v782
      %v784 = vpop.f32.mrb[0].mxu0
      %785 = vmatprep.mubr.bf16.mxu0 0
      %786 = vmatmul.mubr.bf16.gmra.mrb[0].mxu0 %v587
      %v787 = vpop.f32.mrb[0].mxu0
      %v788 = vadd.f32 0.0, %v787
      %v789 = vpop.f32.mrb[0].mxu0
      %v790 = vpop.f32.mrb[0].mxu0
      %v791 = vadd.f32 0.0, %v790
      %v792 = vpop.f32.mrb[0].mxu0
      %793 = vmatprep.mubr.bf16.mxu0 0
      %794 = vmatmul.mubr.bf16.gmra.mrb[0].mxu0 %v590
      %v795 = vpop.f32.mrb[0].mxu0
      %v796 = vadd.f32 0.0, %v795
      %v797 = vpop.f32.mrb[0].mxu0
      %v798 = vpop.f32.mrb[0].mxu0
      %v799 = vadd.f32 0.0, %v798
      %v800 = vpop.f32.mrb[0].mxu0
      %801 = vdwg.mxu0
      %v818 = vunpack.c.l.b16 %v446
      %v819 = vunpack.c.h.b16 %v446
      %v820 = vunpack.c.l.b16 %v447
      %v821 = vunpack.c.l.b16 %v448
      %v822 = vunpack.c.h.b16 %v448
      %v823 = vunpack.c.l.b16 %v449
      %v824 = vunpack.c.l.b16 %v450
      %v825 = vunpack.c.h.b16 %v450
      %v826 = vunpack.c.l.b16 %v451
      %v827 = vunpack.c.l.b16 %v452
      %v828 = vunpack.c.h.b16 %v452
      %v829 = vunpack.c.l.b16 %v453
      %v830 = vunpack.c.l.b16 %v454
      %v831 = vunpack.c.h.b16 %v454
      %v832 = vunpack.c.l.b16 %v455
      %v833 = vunpack.c.l.b16 %v456
      %v834 = vunpack.c.h.b16 %v456
      %v835 = vunpack.c.l.b16 %v457
      %v836 = vunpack.c.l.b16 %v458
      %v837 = vunpack.c.h.b16 %v458
      %v838 = vunpack.c.l.b16 %v459
      %v839 = vunpack.c.l.b16 %v460
      %v840 = vunpack.c.h.b16 %v460
      %v841 = vunpack.c.l.b16 %v461
      %v842 = vpack.c.b16 %v821, %v818
      %v843 = vpack.c.b16 %v822, %v819
      %v844 = vpack.c.b16 %v823, %v820
      %v845 = vpack.c.b16 %v827, %v824
      %v846 = vpack.c.b16 %v828, %v825
      %v847 = vpack.c.b16 %v829, %v826
      %v848 = vpack.c.b16 %v833, %v830
      %v849 = vpack.c.b16 %v834, %v831
      %v850 = vpack.c.b16 %v835, %v832
      %v851 = vpack.c.b16 %v839, %v836
      %v852 = vpack.c.b16 %v840, %v837
      %v853 = vpack.c.b16 %v841, %v838
      %v867 = vsel %vm567, %v438, 0
      %v870 = vsel %vm567, %v439, 0
      %v873 = vsel %vm567, %v440, 0
      %v876 = vsel %vm567, %v441, 0
      %v879 = vsel %vm567, %v442, 0
      %v882 = vsel %vm567, %v443, 0
      %v885 = vsel %vm567, %v444, 0
      %v888 = vsel %vm567, %v445, 0
      %890 = vmatprep.subr.bf16.mxu0 %v843
      %891 = vmatpush1.bf16.msra.mxu0 %v842
      %892 = vmatprep.subr.bf16.mxu0 %v846
      %893 = vmatpush1.bf16.msra.mxu0 %v845
      %894 = vmatprep.subr.bf16.mxu0 %v849
      %895 = vmatpush1.bf16.msra.mxu0 %v848
      %896 = vmatprep.subr.bf16.mxu0 %v852
      %897 = vmatpush1.bf16.msra.mxu0 %v851
      %898 = vmatprep.subr.bf16.mxu0 0
      %899 = vmatpush1.bf16.msra.mxu0 0
      %900 = vmatprep.subr.bf16.mxu0 0
      %901 = vmatpush1.bf16.msra.mxu0 0
      %902 = vmatprep.subr.bf16.mxu0 0
      %903 = vmatpush1.bf16.msra.mxu0 0
      %904 = vmatprep.subr.bf16.mxu0 0
      %905 = vmatpush1.bf16.msra.mxu0 0
      %906 = vmatprep.subr.bf16.mxu0 0
      %907 = vmatpush1.bf16.msra.mxu0 0
      %908 = vmatprep.subr.bf16.mxu0 0
      %909 = vmatpush1.bf16.msra.mxu0 0
      %910 = vmatprep.subr.bf16.mxu0 0
      %911 = vmatpush1.bf16.msra.mxu0 0
      %912 = vmatprep.subr.bf16.mxu0 0
      %913 = vmatpush1.bf16.msra.mxu0 0
      %914 = vmatprep.subr.bf16.mxu0 0
      %915 = vmatpush1.bf16.msra.mxu0 0
      %916 = vmatprep.subr.bf16.mxu0 0
      %917 = vmatpush1.bf16.msra.mxu0 0
      %918 = vmatprep.subr.bf16.mxu0 0
      %919 = vmatpush1.bf16.msra.mxu0 0
      %920 = vmatprep.subr.bf16.mxu0 0
      %921 = vmatpush1.bf16.msra.mxu0 0
      %922 = vmatprep.mubr.bf16.mxu0 0
      %923 = vmatmul.mubr.bf16.gmra.mrb[0].mxu0 %v867
      %v924 = vpop.f32.mrb[0].mxu0
      %v925 = vadd.f32 %v627, %v924
      %v926 = vpop.f32.mrb[0].mxu0
      %v927 = vadd.f32 %v629, %v926
      %v928 = vpop.f32.mrb[0].mxu0
      %v929 = vadd.f32 %v631, %v928
      %v930 = vpop.f32.mrb[0].mxu0
      %v931 = vadd.f32 %v633, %v930
      %932 = vmatprep.mubr.bf16.mxu0 0
      %933 = vmatmul.mubr.bf16.gmra.mrb[0].mxu0 %v870
      %v934 = vpop.f32.mrb[0].mxu0
      %v935 = vadd.f32 %v637, %v934
      %v936 = vpop.f32.mrb[0].mxu0
      %v937 = vadd.f32 %v639, %v936
      %v938 = vpop.f32.mrb[0].mxu0
      %v939 = vadd.f32 %v641, %v938
      %v940 = vpop.f32.mrb[0].mxu0
      %v941 = vadd.f32 %v643, %v940
      %942 = vmatprep.mubr.bf16.mxu0 0
      %943 = vmatmul.mubr.bf16.gmra.mrb[0].mxu0 %v873
      %v944 = vpop.f32.mrb[0].mxu0
      %v945 = vadd.f32 %v647, %v944
      %v946 = vpop.f32.mrb[0].mxu0
      %v947 = vadd.f32 %v649, %v946
      %v948 = vpop.f32.mrb[0].mxu0
      %v949 = vadd.f32 %v651, %v948
      %v950 = vpop.f32.mrb[0].mxu0
      %v951 = vadd.f32 %v653, %v950
      %952 = vmatprep.mubr.bf16.mxu0 0
      %953 = vmatmul.mubr.bf16.gmra.mrb[0].mxu0 %v876
      %v954 = vpop.f32.mrb[0].mxu0
      %v955 = vadd.f32 %v657, %v954
      %v956 = vpop.f32.mrb[0].mxu0
      %v957 = vadd.f32 %v659, %v956
      %v958 = vpop.f32.mrb[0].mxu0
      %v959 = vadd.f32 %v661, %v958
      %v960 = vpop.f32.mrb[0].mxu0
      %v961 = vadd.f32 %v663, %v960
      %962 = vmatprep.mubr.bf16.mxu0 0
      %963 = vmatmul.mubr.bf16.gmra.mrb[0].mxu0 %v879
      %v964 = vpop.f32.mrb[0].mxu0
      %v965 = vadd.f32 %v667, %v964
      %v966 = vpop.f32.mrb[0].mxu0
      %v967 = vadd.f32 %v669, %v966
      %v968 = vpop.f32.mrb[0].mxu0
      %v969 = vadd.f32 %v671, %v968
      %v970 = vpop.f32.mrb[0].mxu0
      %v971 = vadd.f32 %v673, %v970
      %972 = vmatprep.mubr.bf16.mxu0 0
      %973 = vmatmul.mubr.bf16.gmra.mrb[0].mxu0 %v882
      %v974 = vpop.f32.mrb[0].mxu0
      %v975 = vadd.f32 %v677, %v974
      %v976 = vpop.f32.mrb[0].mxu0
      %v977 = vadd.f32 %v679, %v976
      %v978 = vpop.f32.mrb[0].mxu0
      %v979 = vadd.f32 %v681, %v978
      %v980 = vpop.f32.mrb[0].mxu0
      %v981 = vadd.f32 %v683, %v980
      %982 = vmatprep.mubr.bf16.mxu0 0
      %983 = vmatmul.mubr.bf16.gmra.mrb[0].mxu0 %v885
      %v984 = vpop.f32.mrb[0].mxu0
      %v985 = vadd.f32 %v687, %v984
      %v986 = vpop.f32.mrb[0].mxu0
      %v987 = vadd.f32 %v689, %v986
      %v988 = vpop.f32.mrb[0].mxu0
      %v989 = vadd.f32 %v691, %v988
      %v990 = vpop.f32.mrb[0].mxu0
      %v991 = vadd.f32 %v693, %v990
      %992 = vmatprep.mubr.bf16.mxu0 0
      %993 = vmatmul.mubr.bf16.gmra.mrb[0].mxu0 %v888
      %v994 = vpop.f32.mrb[0].mxu0
      %v995 = vadd.f32 %v697, %v994
      %v996 = vpop.f32.mrb[0].mxu0
      %v997 = vadd.f32 %v699, %v996
      %v998 = vpop.f32.mrb[0].mxu0
      %v999 = vadd.f32 %v701, %v998
      %v1000 = vpop.f32.mrb[0].mxu0
      %v1001 = vadd.f32 %v703, %v1000
      %1002 = vdwg.mxu0
      %1003 = vmatprep.subr.bf16.mxu0 0
      %1004 = vmatpush1.bf16.msra.mxu0 %v844
      %1005 = vmatprep.subr.bf16.mxu0 0
      %1006 = vmatpush1.bf16.msra.mxu0 %v847
      %1007 = vmatprep.subr.bf16.mxu0 0
      %1008 = vmatpush1.bf16.msra.mxu0 %v850
      %1009 = vmatprep.subr.bf16.mxu0 0
      %1010 = vmatpush1.bf16.msra.mxu0 %v853
      %1011 = vmatprep.subr.bf16.mxu0 0
      %1012 = vmatpush1.bf16.msra.mxu0 0
      %1013 = vmatprep.subr.bf16.mxu0 0
      %1014 = vmatpush1.bf16.msra.mxu0 0
      %1015 = vmatprep.subr.bf16.mxu0 0
      %1016 = vmatpush1.bf16.msra.mxu0 0
      %1017 = vmatprep.subr.bf16.mxu0 0
      %1018 = vmatpush1.bf16.msra.mxu0 0
      %1019 = vmatprep.subr.bf16.mxu0 0
      %1020 = vmatpush1.bf16.msra.mxu0 0
      %1021 = vmatprep.subr.bf16.mxu0 0
      %1022 = vmatpush1.bf16.msra.mxu0 0
      %1023 = vmatprep.subr.bf16.mxu0 0
      %1024 = vmatpush1.bf16.msra.mxu0 0
      %1025 = vmatprep.subr.bf16.mxu0 0
      %1026 = vmatpush1.bf16.msra.mxu0 0
      %1027 = vmatprep.subr.bf16.mxu0 0
      %1028 = vmatpush1.bf16.msra.mxu0 0
      %1029 = vmatprep.subr.bf16.mxu0 0
      %1030 = vmatpush1.bf16.msra.mxu0 0
      %1031 = vmatprep.subr.bf16.mxu0 0
      %1032 = vmatpush1.bf16.msra.mxu0 0
      %1033 = vmatprep.subr.bf16.mxu0 0
      %1034 = vmatpush1.bf16.msra.mxu0 0
      %1035 = vmatprep.mubr.bf16.mxu0 0
      %1036 = vmatmul.mubr.bf16.gmra.mrb[0].mxu0 %v867
      %v1037 = vpop.f32.mrb[0].mxu0
      %v1038 = vadd.f32 %v740, %v1037
      %v1039 = vpop.f32.mrb[0].mxu0
      %v1040 = vpop.f32.mrb[0].mxu0
      %v1041 = vadd.f32 %v743, %v1040
      %v1042 = vpop.f32.mrb[0].mxu0
      %1043 = vmatprep.mubr.bf16.mxu0 0
      %1044 = vmatmul.mubr.bf16.gmra.mrb[0].mxu0 %v870
      %v1045 = vpop.f32.mrb[0].mxu0
      %v1046 = vadd.f32 %v748, %v1045
      %v1047 = vpop.f32.mrb[0].mxu0
      %v1048 = vpop.f32.mrb[0].mxu0
      %v1049 = vadd.f32 %v751, %v1048
      %v1050 = vpop.f32.mrb[0].mxu0
      %1051 = vmatprep.mubr.bf16.mxu0 0
      %1052 = vmatmul.mubr.bf16.gmra.mrb[0].mxu0 %v873
      %v1053 = vpop.f32.mrb[0].mxu0
      %v1054 = vadd.f32 %v756, %v1053
      %v1055 = vpop.f32.mrb[0].mxu0
      %v1056 = vpop.f32.mrb[0].mxu0
      %v1057 = vadd.f32 %v759, %v1056
      %v1058 = vpop.f32.mrb[0].mxu0
      %1059 = vmatprep.mubr.bf16.mxu0 0
      %1060 = vmatmul.mubr.bf16.gmra.mrb[0].mxu0 %v876
      %v1061 = vpop.f32.mrb[0].mxu0
      %v1062 = vadd.f32 %v764, %v1061
      %v1063 = vpop.f32.mrb[0].mxu0
      %v1064 = vpop.f32.mrb[0].mxu0
      %v1065 = vadd.f32 %v767, %v1064
      %v1066 = vpop.f32.mrb[0].mxu0
      %1067 = vmatprep.mubr.bf16.mxu0 0
      %1068 = vmatmul.mubr.bf16.gmra.mrb[0].mxu0 %v879
      %v1069 = vpop.f32.mrb[0].mxu0
      %v1070 = vadd.f32 %v772, %v1069
      %v1071 = vpop.f32.mrb[0].mxu0
      %v1072 = vpop.f32.mrb[0].mxu0
      %v1073 = vadd.f32 %v775, %v1072
      %v1074 = vpop.f32.mrb[0].mxu0
      %1075 = vmatprep.mubr.bf16.mxu0 0
      %1076 = vmatmul.mubr.bf16.gmra.mrb[0].mxu0 %v882
      %v1077 = vpop.f32.mrb[0].mxu0
      %v1078 = vadd.f32 %v780, %v1077
      %v1079 = vpop.f32.mrb[0].mxu0
      %v1080 = vpop.f32.mrb[0].mxu0
      %v1081 = vadd.f32 %v783, %v1080
      %v1082 = vpop.f32.mrb[0].mxu0
      %1083 = vmatprep.mubr.bf16.mxu0 0
      %1084 = vmatmul.mubr.bf16.gmra.mrb[0].mxu0 %v885
      %v1085 = vpop.f32.mrb[0].mxu0
      %v1086 = vadd.f32 %v788, %v1085
      %v1087 = vpop.f32.mrb[0].mxu0
      %v1088 = vpop.f32.mrb[0].mxu0
      %v1089 = vadd.f32 %v791, %v1088
      %v1090 = vpop.f32.mrb[0].mxu0
      %1091 = vmatprep.mubr.bf16.mxu0 0
      %1092 = vmatmul.mubr.bf16.gmra.mrb[0].mxu0 %v888
      %v1093 = vpop.f32.mrb[0].mxu0
      %v1094 = vadd.f32 %v796, %v1093
      %v1095 = vpop.f32.mrb[0].mxu0
      %v1096 = vpop.f32.mrb[0].mxu0
      %v1097 = vadd.f32 %v799, %v1096
      %v1098 = vpop.f32.mrb[0].mxu0
      %1099 = vdwg.mxu0
      %v1108 = vmax.bf16 %v438, %v488
      %v1109 = vmax.bf16 %v439, %v490
      %v1110 = vmax.bf16 %v440, %v492
      %v1111 = vmax.bf16 %v441, %v494
      %v1112 = vmax.bf16 %v442, %v496
      %v1113 = vmax.bf16 %v443, %v498
      %v1114 = vmax.bf16 %v444, %v500
      %v1115 = vmax.bf16 %v445, %v502
      %v1116 = vld [vmem:[#allocation2] sm:$0xff]
      %v1117 = vld [vmem:[#allocation2 + $0x10] sm:$0xff]
      %v1118 = vld [vmem:[#allocation2 + $0x20] sm:$0xff]
      %v1119 = vld [vmem:[#allocation2 + $0x30] sm:$0xff]
      %v1120 = vld [vmem:[#allocation2 + $0x40] sm:$0xff]
      %v1121 = vld [vmem:[#allocation2 + $0x50] sm:$0xff]
      %v1122 = vld [vmem:[#allocation2 + $0x60] sm:$0xff]
      %v1123 = vld [vmem:[#allocation2 + $0x70] sm:$0xff]
      %v1124 = vld [vmem:[#allocation2 + $0x80] sm:$0x1]
      %s1125 = scalar_lea.vmem %s2, 192
      %v1126 = vld [vmem:[%s1125] sm:$0xff]
      %v1127 = vld [vmem:[%s1125 + $0x8] sm:$0xf]
      %v1128 = vld [vmem:[%s1125 + $0xc] sm:$0xff]
      %v1129 = vld [vmem:[%s1125 + $0x14] sm:$0xf]
      %v1130 = vld [vmem:[%s1125 + $0x18] sm:$0xff]
      %v1131 = vld [vmem:[%s1125 + $0x20] sm:$0xf]
      %v1132 = vld [vmem:[%s1125 + $0x24] sm:$0xff]
      %v1133 = vld [vmem:[%s1125 + $0x2c] sm:$0xf]
      %v1134 = vld [vmem:[%s1125 + $0x30] sm:$0xff]
      %v1135 = vld [vmem:[%s1125 + $0x38] sm:$0xf]
      %v1136 = vld [vmem:[%s1125 + $0x3c] sm:$0xff]
      %v1137 = vld [vmem:[%s1125 + $0x44] sm:$0xf]
      %v1138 = vld [vmem:[%s1125 + $0x48] sm:$0xff]
      %v1139 = vld [vmem:[%s1125 + $0x50] sm:$0xf]
      %v1140 = vld [vmem:[%s1125 + $0x54] sm:$0xff]
      %v1141 = vld [vmem:[%s1125 + $0x5c] sm:$0xf]
      %vm1142 = vsmask.f32 7424
      %v1144 = vshrl.u32 %v1116, 16
      %v1146 = vshll.u32 %v1116, 16
      %v1148 = vrot.slane %v1146, 1
      %v1149 = vor.u32 %v1144, %v1148
      %v1151 = vshll.u32 %v1117, 16
      %v1153 = vrot.slane %v1151, 1
      %v1154 = vsel %vm1142, %v1149, %v1153
      %v1155 = vshrl.u32 %v1117, 16
      %v1157 = vor.u32 %v1155, %v1153
      %v1159 = vshll.u32 %v1118, 16
      %v1161 = vrot.slane %v1159, 1
      %v1162 = vsel %vm1142, %v1157, %v1161
      %v1163 = vshrl.u32 %v1118, 16
      %v1165 = vor.u32 %v1163, %v1161
      %v1167 = vshll.u32 %v1119, 16
      %v1169 = vrot.slane %v1167, 1
      %v1170 = vsel %vm1142, %v1165, %v1169
      %v1171 = vshrl.u32 %v1119, 16
      %v1173 = vor.u32 %v1171, %v1169
      %v1175 = vshll.u32 %v1120, 16
      %v1177 = vrot.slane %v1175, 1
      %v1178 = vsel %vm1142, %v1173, %v1177
      %v1179 = vshrl.u32 %v1120, 16
      %v1181 = vor.u32 %v1179, %v1177
      %v1183 = vshll.u32 %v1121, 16
      %v1185 = vrot.slane %v1183, 1
      %v1186 = vsel %vm1142, %v1181, %v1185
      %v1187 = vshrl.u32 %v1121, 16
      %v1189 = vor.u32 %v1187, %v1185
      %v1191 = vshll.u32 %v1122, 16
      %v1193 = vrot.slane %v1191, 1
      %v1194 = vsel %vm1142, %v1189, %v1193
      %v1195 = vshrl.u32 %v1122, 16
      %v1197 = vor.u32 %v1195, %v1193
      %v1199 = vshll.u32 %v1123, 16
      %v1201 = vrot.slane %v1199, 1
      %v1202 = vsel %vm1142, %v1197, %v1201
      %v1203 = vshrl.u32 %v1123, 16
      %v1205 = vor.u32 %v1203, %v1201
      %v1207 = vshll.u32 %v1124, 16
      %v1209 = vrot.slane %v1207, 1
      %v1210 = vsel %vm1142, %v1205, %v1209
      %v1227 = vunpack.c.l.b16 %v1126
      %v1228 = vunpack.c.h.b16 %v1126
      %v1229 = vunpack.c.l.b16 %v1127
      %v1230 = vunpack.c.l.b16 %v1128
      %v1231 = vunpack.c.h.b16 %v1128
      %v1232 = vunpack.c.l.b16 %v1129
      %v1233 = vunpack.c.l.b16 %v1130
      %v1234 = vunpack.c.h.b16 %v1130
      %v1235 = vunpack.c.l.b16 %v1131
      %v1236 = vunpack.c.l.b16 %v1132
      %v1237 = vunpack.c.h.b16 %v1132
      %v1238 = vunpack.c.l.b16 %v1133
      %v1239 = vunpack.c.l.b16 %v1134
      %v1240 = vunpack.c.h.b16 %v1134
      %v1241 = vunpack.c.l.b16 %v1135
      %v1242 = vunpack.c.l.b16 %v1136
      %v1243 = vunpack.c.h.b16 %v1136
      %v1244 = vunpack.c.l.b16 %v1137
      %v1245 = vunpack.c.l.b16 %v1138
      %v1246 = vunpack.c.h.b16 %v1138
      %v1247 = vunpack.c.l.b16 %v1139
      %v1248 = vunpack.c.l.b16 %v1140
      %v1249 = vunpack.c.h.b16 %v1140
      %v1250 = vunpack.c.l.b16 %v1141
      %v1251 = vpack.c.b16 %v1230, %v1227
      %v1252 = vpack.c.b16 %v1231, %v1228
      %v1253 = vpack.c.b16 %v1232, %v1229
      %v1254 = vpack.c.b16 %v1236, %v1233
      %v1255 = vpack.c.b16 %v1237, %v1234
      %v1256 = vpack.c.b16 %v1238, %v1235
      %v1257 = vpack.c.b16 %v1242, %v1239
      %v1258 = vpack.c.b16 %v1243, %v1240
      %v1259 = vpack.c.b16 %v1244, %v1241
      %v1260 = vpack.c.b16 %v1248, %v1245
      %v1261 = vpack.c.b16 %v1249, %v1246
      %v1262 = vpack.c.b16 %v1250, %v1247
      %v1276 = vsel %vm567, %v1154, 0
      %v1279 = vsel %vm567, %v1162, 0
      %v1282 = vsel %vm567, %v1170, 0
      %v1285 = vsel %vm567, %v1178, 0
      %v1288 = vsel %vm567, %v1186, 0
      %v1291 = vsel %vm567, %v1194, 0
      %v1294 = vsel %vm567, %v1202, 0
      %v1297 = vsel %vm567, %v1210, 0
      %1299 = vmatprep.subr.bf16.mxu0 %v1252
      %1300 = vmatpush1.bf16.msra.mxu0 %v1251
      %1301 = vmatprep.subr.bf16.mxu0 %v1255
      %1302 = vmatpush1.bf16.msra.mxu0 %v1254
      %1303 = vmatprep.subr.bf16.mxu0 %v1258
      %1304 = vmatpush1.bf16.msra.mxu0 %v1257
      %1305 = vmatprep.subr.bf16.mxu0 %v1261
      %1306 = vmatpush1.bf16.msra.mxu0 %v1260
      %1307 = vmatprep.subr.bf16.mxu0 0
      %1308 = vmatpush1.bf16.msra.mxu0 0
      %1309 = vmatprep.subr.bf16.mxu0 0
      %1310 = vmatpush1.bf16.msra.mxu0 0
      %1311 = vmatprep.subr.bf16.mxu0 0
      %1312 = vmatpush1.bf16.msra.mxu0 0
      %1313 = vmatprep.subr.bf16.mxu0 0
      %1314 = vmatpush1.bf16.msra.mxu0 0
      %1315 = vmatprep.subr.bf16.mxu0 0
      %1316 = vmatpush1.bf16.msra.mxu0 0
      %1317 = vmatprep.subr.bf16.mxu0 0
      %1318 = vmatpush1.bf16.msra.mxu0 0
      %1319 = vmatprep.subr.bf16.mxu0 0
      %1320 = vmatpush1.bf16.msra.mxu0 0
      %1321 = vmatprep.subr.bf16.mxu0 0
      %1322 = vmatpush1.bf16.msra.mxu0 0
      %1323 = vmatprep.subr.bf16.mxu0 0
      %1324 = vmatpush1.bf16.msra.mxu0 0
      %1325 = vmatprep.subr.bf16.mxu0 0
      %1326 = vmatpush1.bf16.msra.mxu0 0
      %1327 = vmatprep.subr.bf16.mxu0 0
      %1328 = vmatpush1.bf16.msra.mxu0 0
      %1329 = vmatprep.subr.bf16.mxu0 0
      %1330 = vmatpush1.bf16.msra.mxu0 0
      %1331 = vmatprep.mubr.bf16.mxu0 0
      %1332 = vmatmul.mubr.bf16.gmra.mrb[0].mxu0 %v1276
      %v1333 = vpop.f32.mrb[0].mxu0
      %v1334 = vadd.f32 0.0, %v1333
      %v1335 = vpop.f32.mrb[0].mxu0
      %v1336 = vadd.f32 0.0, %v1335
      %v1337 = vpop.f32.mrb[0].mxu0
      %v1338 = vadd.f32 0.0, %v1337
      %v1339 = vpop.f32.mrb[0].mxu0
      %v1340 = vadd.f32 0.0, %v1339
      %1341 = vmatprep.mubr.bf16.mxu0 0
      %1342 = vmatmul.mubr.bf16.gmra.mrb[0].mxu0 %v1279
      %v1343 = vpop.f32.mrb[0].mxu0
      %v1344 = vadd.f32 0.0, %v1343
      %v1345 = vpop.f32.mrb[0].mxu0
      %v1346 = vadd.f32 0.0, %v1345
      %v1347 = vpop.f32.mrb[0].mxu0
      %v1348 = vadd.f32 0.0, %v1347
      %v1349 = vpop.f32.mrb[0].mxu0
      %v1350 = vadd.f32 0.0, %v1349
      %1351 = vmatprep.mubr.bf16.mxu0 0
      %1352 = vmatmul.mubr.bf16.gmra.mrb[0].mxu0 %v1282
      %v1353 = vpop.f32.mrb[0].mxu0
      %v1354 = vadd.f32 0.0, %v1353
      %v1355 = vpop.f32.mrb[0].mxu0
      %v1356 = vadd.f32 0.0, %v1355
      %v1357 = vpop.f32.mrb[0].mxu0
      %v1358 = vadd.f32 0.0, %v1357
      %v1359 = vpop.f32.mrb[0].mxu0
      %v1360 = vadd.f32 0.0, %v1359
      %1361 = vmatprep.mubr.bf16.mxu0 0
      %1362 = vmatmul.mubr.bf16.gmra.mrb[0].mxu0 %v1285
      %v1363 = vpop.f32.mrb[0].mxu0
      %v1364 = vadd.f32 0.0, %v1363
      %v1365 = vpop.f32.mrb[0].mxu0
      %v1366 = vadd.f32 0.0, %v1365
      %v1367 = vpop.f32.mrb[0].mxu0
      %v1368 = vadd.f32 0.0, %v1367
      %v1369 = vpop.f32.mrb[0].mxu0
      %v1370 = vadd.f32 0.0, %v1369
      %1371 = vmatprep.mubr.bf16.mxu0 0
      %1372 = vmatmul.mubr.bf16.gmra.mrb[0].mxu0 %v1288
      %v1373 = vpop.f32.mrb[0].mxu0
      %v1374 = vadd.f32 0.0, %v1373
      %v1375 = vpop.f32.mrb[0].mxu0
      %v1376 = vadd.f32 0.0, %v1375
      %v1377 = vpop.f32.mrb[0].mxu0
      %v1378 = vadd.f32 0.0, %v1377
      %v1379 = vpop.f32.mrb[0].mxu0
      %v1380 = vadd.f32 0.0, %v1379
      %1381 = vmatprep.mubr.bf16.mxu0 0
      %1382 = vmatmul.mubr.bf16.gmra.mrb[0].mxu0 %v1291
      %v1383 = vpop.f32.mrb[0].mxu0
      %v1384 = vadd.f32 0.0, %v1383
      %v1385 = vpop.f32.mrb[0].mxu0
      %v1386 = vadd.f32 0.0, %v1385
      %v1387 = vpop.f32.mrb[0].mxu0
      %v1388 = vadd.f32 0.0, %v1387
      %v1389 = vpop.f32.mrb[0].mxu0
      %v1390 = vadd.f32 0.0, %v1389
      %1391 = vmatprep.mubr.bf16.mxu0 0
      %1392 = vmatmul.mubr.bf16.gmra.mrb[0].mxu0 %v1294
      %v1393 = vpop.f32.mrb[0].mxu0
      %v1394 = vadd.f32 0.0, %v1393
      %v1395 = vpop.f32.mrb[0].mxu0
      %v1396 = vadd.f32 0.0, %v1395
      %v1397 = vpop.f32.mrb[0].mxu0
      %v1398 = vadd.f32 0.0, %v1397
      %v1399 = vpop.f32.mrb[0].mxu0
      %v1400 = vadd.f32 0.0, %v1399
      %1401 = vmatprep.mubr.bf16.mxu0 0
      %1402 = vmatmul.mubr.bf16.gmra.mrb[0].mxu0 %v1297
      %v1403 = vpop.f32.mrb[0].mxu0
      %v1404 = vadd.f32 0.0, %v1403
      %v1405 = vpop.f32.mrb[0].mxu0
      %v1406 = vadd.f32 0.0, %v1405
      %v1407 = vpop.f32.mrb[0].mxu0
      %v1408 = vadd.f32 0.0, %v1407
      %v1409 = vpop.f32.mrb[0].mxu0
      %v1410 = vadd.f32 0.0, %v1409
      %1411 = vdwg.mxu0
      %1412 = vmatprep.subr.bf16.mxu0 0
      %1413 = vmatpush1.bf16.msra.mxu0 %v1253
      %1414 = vmatprep.subr.bf16.mxu0 0
      %1415 = vmatpush1.bf16.msra.mxu0 %v1256
      %1416 = vmatprep.subr.bf16.mxu0 0
      %1417 = vmatpush1.bf16.msra.mxu0 %v1259
      %1418 = vmatprep.subr.bf16.mxu0 0
      %1419 = vmatpush1.bf16.msra.mxu0 %v1262
      %1420 = vmatprep.subr.bf16.mxu0 0
      %1421 = vmatpush1.bf16.msra.mxu0 0
      %1422 = vmatprep.subr.bf16.mxu0 0
      %1423 = vmatpush1.bf16.msra.mxu0 0
      %1424 = vmatprep.subr.bf16.mxu0 0
      %1425 = vmatpush1.bf16.msra.mxu0 0
      %1426 = vmatprep.subr.bf16.mxu0 0
      %1427 = vmatpush1.bf16.msra.mxu0 0
      %1428 = vmatprep.subr.bf16.mxu0 0
      %1429 = vmatpush1.bf16.msra.mxu0 0
      %1430 = vmatprep.subr.bf16.mxu0 0
      %1431 = vmatpush1.bf16.msra.mxu0 0
      %1432 = vmatprep.subr.bf16.mxu0 0
      %1433 = vmatpush1.bf16.msra.mxu0 0
      %1434 = vmatprep.subr.bf16.mxu0 0
      %1435 = vmatpush1.bf16.msra.mxu0 0
      %1436 = vmatprep.subr.bf16.mxu0 0
      %1437 = vmatpush1.bf16.msra.mxu0 0
      %1438 = vmatprep.subr.bf16.mxu0 0
      %1439 = vmatpush1.bf16.msra.mxu0 0
      %1440 = vmatprep.subr.bf16.mxu0 0
      %1441 = vmatpush1.bf16.msra.mxu0 0
      %1442 = vmatprep.subr.bf16.mxu0 0
      %1443 = vmatpush1.bf16.msra.mxu0 0
      %1444 = vmatprep.mubr.bf16.mxu0 0
      %1445 = vmatmul.mubr.bf16.gmra.mrb[0].mxu0 %v1276
      %v1446 = vpop.f32.mrb[0].mxu0
      %v1447 = vadd.f32 0.0, %v1446
      %v1448 = vpop.f32.mrb[0].mxu0
      %v1449 = vpop.f32.mrb[0].mxu0
      %v1450 = vadd.f32 0.0, %v1449
      %v1451 = vpop.f32.mrb[0].mxu0
      %1452 = vmatprep.mubr.bf16.mxu0 0
      %1453 = vmatmul.mubr.bf16.gmra.mrb[0].mxu0 %v1279
      %v1454 = vpop.f32.mrb[0].mxu0
      %v1455 = vadd.f32 0.0, %v1454
      %v1456 = vpop.f32.mrb[0].mxu0
      %v1457 = vpop.f32.mrb[0].mxu0
      %v1458 = vadd.f32 0.0, %v1457
      %v1459 = vpop.f32.mrb[0].mxu0
      %1460 = vmatprep.mubr.bf16.mxu0 0
      %1461 = vmatmul.mubr.bf16.gmra.mrb[0].mxu0 %v1282
      %v1462 = vpop.f32.mrb[0].mxu0
      %v1463 = vadd.f32 0.0, %v1462
      %v1464 = vpop.f32.mrb[0].mxu0
      %v1465 = vpop.f32.mrb[0].mxu0
      %v1466 = vadd.f32 0.0, %v1465
      %v1467 = vpop.f32.mrb[0].mxu0
      %1468 = vmatprep.mubr.bf16.mxu0 0
      %1469 = vmatmul.mubr.bf16.gmra.mrb[0].mxu0 %v1285
      %v1470 = vpop.f32.mrb[0].mxu0
      %v1471 = vadd.f32 0.0, %v1470
      %v1472 = vpop.f32.mrb[0].mxu0
      %v1473 = vpop.f32.mrb[0].mxu0
      %v1474 = vadd.f32 0.0, %v1473
      %v1475 = vpop.f32.mrb[0].mxu0
      %1476 = vmatprep.mubr.bf16.mxu0 0
      %1477 = vmatmul.mubr.bf16.gmra.mrb[0].mxu0 %v1288
      %v1478 = vpop.f32.mrb[0].mxu0
      %v1479 = vadd.f32 0.0, %v1478
      %v1480 = vpop.f32.mrb[0].mxu0
      %v1481 = vpop.f32.mrb[0].mxu0
      %v1482 = vadd.f32 0.0, %v1481
      %v1483 = vpop.f32.mrb[0].mxu0
      %1484 = vmatprep.mubr.bf16.mxu0 0
      %1485 = vmatmul.mubr.bf16.gmra.mrb[0].mxu0 %v1291
      %v1486 = vpop.f32.mrb[0].mxu0
      %v1487 = vadd.f32 0.0, %v1486
      %v1488 = vpop.f32.mrb[0].mxu0
      %v1489 = vpop.f32.mrb[0].mxu0
      %v1490 = vadd.f32 0.0, %v1489
      %v1491 = vpop.f32.mrb[0].mxu0
      %1492 = vmatprep.mubr.bf16.mxu0 0
      %1493 = vmatmul.mubr.bf16.gmra.mrb[0].mxu0 %v1294
      %v1494 = vpop.f32.mrb[0].mxu0
      %v1495 = vadd.f32 0.0, %v1494
      %v1496 = vpop.f32.mrb[0].mxu0
      %v1497 = vpop.f32.mrb[0].mxu0
      %v1498 = vadd.f32 0.0, %v1497
      %v1499 = vpop.f32.mrb[0].mxu0
      %1500 = vmatprep.mubr.bf16.mxu0 0
      %1501 = vmatmul.mubr.bf16.gmra.mrb[0].mxu0 %v1297
      %v1502 = vpop.f32.mrb[0].mxu0
      %v1503 = vadd.f32 0.0, %v1502
      %v1504 = vpop.f32.mrb[0].mxu0
      %v1505 = vpop.f32.mrb[0].mxu0
      %v1506 = vadd.f32 0.0, %v1505
      %v1507 = vpop.f32.mrb[0].mxu0
      %1508 = vdwg.mxu0
      %v1509 = vadd.f32 %v925, %v1334
      %v1510 = vadd.f32 %v927, %v1336
      %v1511 = vadd.f32 %v1038, %v1447
      %v1512 = vadd.f32 %v929, %v1338
      %v1513 = vadd.f32 %v931, %v1340
      %v1514 = vadd.f32 %v1041, %v1450
      %v1515 = vadd.f32 %v935, %v1344
      %v1516 = vadd.f32 %v937, %v1346
      %v1517 = vadd.f32 %v1046, %v1455
      %v1518 = vadd.f32 %v939, %v1348
      %v1519 = vadd.f32 %v941, %v1350
      %v1520 = vadd.f32 %v1049, %v1458
      %v1521 = vadd.f32 %v945, %v1354
      %v1522 = vadd.f32 %v947, %v1356
      %v1523 = vadd.f32 %v1054, %v1463
      %v1524 = vadd.f32 %v949, %v1358
      %v1525 = vadd.f32 %v951, %v1360
      %v1526 = vadd.f32 %v1057, %v1466
      %v1527 = vadd.f32 %v955, %v1364
      %v1528 = vadd.f32 %v957, %v1366
      %v1529 = vadd.f32 %v1062, %v1471
      %v1530 = vadd.f32 %v959, %v1368
      %v1531 = vadd.f32 %v961, %v1370
      %v1532 = vadd.f32 %v1065, %v1474
      %v1533 = vadd.f32 %v965, %v1374
      %v1534 = vadd.f32 %v967, %v1376
      %v1535 = vadd.f32 %v1070, %v1479
      %v1536 = vadd.f32 %v969, %v1378
      %v1537 = vadd.f32 %v971, %v1380
      %v1538 = vadd.f32 %v1073, %v1482
      %v1539 = vadd.f32 %v975, %v1384
      %v1540 = vadd.f32 %v977, %v1386
      %v1541 = vadd.f32 %v1078, %v1487
      %v1542 = vadd.f32 %v979, %v1388
      %v1543 = vadd.f32 %v981, %v1390
      %v1544 = vadd.f32 %v1081, %v1490
      %v1545 = vadd.f32 %v985, %v1394
      %v1546 = vadd.f32 %v987, %v1396
      %v1547 = vadd.f32 %v1086, %v1495
      %v1548 = vadd.f32 %v989, %v1398
      %v1549 = vadd.f32 %v991, %v1400
      %v1550 = vadd.f32 %v1089, %v1498
      %v1551 = vadd.f32 %v995, %v1404
      %v1552 = vadd.f32 %v997, %v1406
      %v1553 = vadd.f32 %v1094, %v1503
      %v1554 = vadd.f32 %v999, %v1408
      %v1555 = vadd.f32 %v1001, %v1410
      %v1556 = vadd.f32 %v1097, %v1506
      %v1565 = vmax.bf16 %v1108, %v1154
      %v1566 = vmax.bf16 %v1109, %v1162
      %v1567 = vmax.bf16 %v1110, %v1170
      %v1568 = vmax.bf16 %v1111, %v1178
      %v1569 = vmax.bf16 %v1112, %v1186
      %v1570 = vmax.bf16 %v1113, %v1194
      %v1571 = vmax.bf16 %v1114, %v1202
      %v1572 = vmax.bf16 %v1115, %v1210
      %v1573 = vld [vmem:[#allocation2 + $0x8] sm:$0xff]
      %v1574 = vld [vmem:[#allocation2 + $0x18] sm:$0xff]
      %v1575 = vld [vmem:[#allocation2 + $0x28] sm:$0xff]
      %v1576 = vld [vmem:[#allocation2 + $0x38] sm:$0xff]
      %v1577 = vld [vmem:[#allocation2 + $0x48] sm:$0xff]
      %v1578 = vld [vmem:[#allocation2 + $0x58] sm:$0xff]
      %v1579 = vld [vmem:[#allocation2 + $0x68] sm:$0xff]
      %v1580 = vld [vmem:[#allocation2 + $0x78] sm:$0xff]
      %s1581 = scalar_lea.vmem %s2, 288
      %v1582 = vld [vmem:[%s1581] sm:$0xff]
      %v1583 = vld [vmem:[%s1581 + $0x8] sm:$0xf]
      %v1584 = vld [vmem:[%s1581 + $0xc] sm:$0xff]
      %v1585 = vld [vmem:[%s1581 + $0x14] sm:$0xf]
      %v1586 = vld [vmem:[%s1581 + $0x18] sm:$0xff]
      %v1587 = vld [vmem:[%s1581 + $0x20] sm:$0xf]
      %v1588 = vld [vmem:[%s1581 + $0x24] sm:$0xff]
      %v1589 = vld [vmem:[%s1581 + $0x2c] sm:$0xf]
      %v1590 = vld [vmem:[%s1581 + $0x30] sm:$0xff]
      %v1591 = vld [vmem:[%s1581 + $0x38] sm:$0xf]
      %v1592 = vld [vmem:[%s1581 + $0x3c] sm:$0xff]
      %v1593 = vld [vmem:[%s1581 + $0x44] sm:$0xf]
      %v1594 = vld [vmem:[%s1581 + $0x48] sm:$0xff]
      %v1595 = vld [vmem:[%s1581 + $0x50] sm:$0xf]
      %v1596 = vld [vmem:[%s1581 + $0x54] sm:$0xff]
      %v1597 = vld [vmem:[%s1581 + $0x5c] sm:$0xf]
      %v1614 = vunpack.c.l.b16 %v1582
      %v1615 = vunpack.c.h.b16 %v1582
      %v1616 = vunpack.c.l.b16 %v1583
      %v1617 = vunpack.c.l.b16 %v1584
      %v1618 = vunpack.c.h.b16 %v1584
      %v1619 = vunpack.c.l.b16 %v1585
      %v1620 = vunpack.c.l.b16 %v1586
      %v1621 = vunpack.c.h.b16 %v1586
      %v1622 = vunpack.c.l.b16 %v1587
      %v1623 = vunpack.c.l.b16 %v1588
      %v1624 = vunpack.c.h.b16 %v1588
      %v1625 = vunpack.c.l.b16 %v1589
      %v1626 = vunpack.c.l.b16 %v1590
      %v1627 = vunpack.c.h.b16 %v1590
      %v1628 = vunpack.c.l.b16 %v1591
      %v1629 = vunpack.c.l.b16 %v1592
      %v1630 = vunpack.c.h.b16 %v1592
      %v1631 = vunpack.c.l.b16 %v1593
      %v1632 = vunpack.c.l.b16 %v1594
      %v1633 = vunpack.c.h.b16 %v1594
      %v1634 = vunpack.c.l.b16 %v1595
      %v1635 = vunpack.c.l.b16 %v1596
      %v1636 = vunpack.c.h.b16 %v1596
      %v1637 = vunpack.c.l.b16 %v1597
      %v1638 = vpack.c.b16 %v1617, %v1614
      %v1639 = vpack.c.b16 %v1618, %v1615
      %v1640 = vpack.c.b16 %v1619, %v1616
      %v1641 = vpack.c.b16 %v1623, %v1620
      %v1642 = vpack.c.b16 %v1624, %v1621
      %v1643 = vpack.c.b16 %v1625, %v1622
      %v1644 = vpack.c.b16 %v1629, %v1626
      %v1645 = vpack.c.b16 %v1630, %v1627
      %v1646 = vpack.c.b16 %v1631, %v1628
      %v1647 = vpack.c.b16 %v1635, %v1632
      %v1648 = vpack.c.b16 %v1636, %v1633
      %v1649 = vpack.c.b16 %v1637, %v1634
      %v1663 = vsel %vm567, %v1573, 0
      %v1666 = vsel %vm567, %v1574, 0
      %v1669 = vsel %vm567, %v1575, 0
      %v1672 = vsel %vm567, %v1576, 0
      %v1675 = vsel %vm567, %v1577, 0
      %v1678 = vsel %vm567, %v1578, 0
      %v1681 = vsel %vm567, %v1579, 0
      %v1684 = vsel %vm567, %v1580, 0
      %1686 = vmatprep.subr.bf16.mxu0 %v1639
      %1687 = vmatpush1.bf16.msra.mxu0 %v1638
      %1688 = vmatprep.subr.bf16.mxu0 %v1642
      %1689 = vmatpush1.bf16.msra.mxu0 %v1641
      %1690 = vmatprep.subr.bf16.mxu0 %v1645
      %1691 = vmatpush1.bf16.msra.mxu0 %v1644
      %1692 = vmatprep.subr.bf16.mxu0 %v1648
      %1693 = vmatpush1.bf16.msra.mxu0 %v1647
      %1694 = vmatprep.subr.bf16.mxu0 0
      %1695 = vmatpush1.bf16.msra.mxu0 0
      %1696 = vmatprep.subr.bf16.mxu0 0
      %1697 = vmatpush1.bf16.msra.mxu0 0
      %1698 = vmatprep.subr.bf16.mxu0 0
      %1699 = vmatpush1.bf16.msra.mxu0 0
      %1700 = vmatprep.subr.bf16.mxu0 0
      %1701 = vmatpush1.bf16.msra.mxu0 0
      %1702 = vmatprep.subr.bf16.mxu0 0
      %1703 = vmatpush1.bf16.msra.mxu0 0
      %1704 = vmatprep.subr.bf16.mxu0 0
      %1705 = vmatpush1.bf16.msra.mxu0 0
      %1706 = vmatprep.subr.bf16.mxu0 0
      %1707 = vmatpush1.bf16.msra.mxu0 0
      %1708 = vmatprep.subr.bf16.mxu0 0
      %1709 = vmatpush1.bf16.msra.mxu0 0
      %1710 = vmatprep.subr.bf16.mxu0 0
      %1711 = vmatpush1.bf16.msra.mxu0 0
      %1712 = vmatprep.subr.bf16.mxu0 0
      %1713 = vmatpush1.bf16.msra.mxu0 0
      %1714 = vmatprep.subr.bf16.mxu0 0
      %1715 = vmatpush1.bf16.msra.mxu0 0
      %1716 = vmatprep.subr.bf16.mxu0 0
      %1717 = vmatpush1.bf16.msra.mxu0 0
      %1718 = vmatprep.mubr.bf16.mxu0 0
      %1719 = vmatmul.mubr.bf16.gmra.mrb[0].mxu0 %v1663
      %v1720 = vpop.f32.mrb[0].mxu0
      %v1721 = vadd.f32 0.0, %v1720
      %v1722 = vpop.f32.mrb[0].mxu0
      %v1723 = vadd.f32 0.0, %v1722
      %v1724 = vpop.f32.mrb[0].mxu0
      %v1725 = vadd.f32 0.0, %v1724
      %v1726 = vpop.f32.mrb[0].mxu0
      %v1727 = vadd.f32 0.0, %v1726
      %1728 = vmatprep.mubr.bf16.mxu0 0
      %1729 = vmatmul.mubr.bf16.gmra.mrb[0].mxu0 %v1666
      %v1730 = vpop.f32.mrb[0].mxu0
      %v1731 = vadd.f32 0.0, %v1730
      %v1732 = vpop.f32.mrb[0].mxu0
      %v1733 = vadd.f32 0.0, %v1732
      %v1734 = vpop.f32.mrb[0].mxu0
      %v1735 = vadd.f32 0.0, %v1734
      %v1736 = vpop.f32.mrb[0].mxu0
      %v1737 = vadd.f32 0.0, %v1736
      %1738 = vmatprep.mubr.bf16.mxu0 0
      %1739 = vmatmul.mubr.bf16.gmra.mrb[0].mxu0 %v1669
      %v1740 = vpop.f32.mrb[0].mxu0
      %v1741 = vadd.f32 0.0, %v1740
      %v1742 = vpop.f32.mrb[0].mxu0
      %v1743 = vadd.f32 0.0, %v1742
      %v1744 = vpop.f32.mrb[0].mxu0
      %v1745 = vadd.f32 0.0, %v1744
      %v1746 = vpop.f32.mrb[0].mxu0
      %v1747 = vadd.f32 0.0, %v1746
      %1748 = vmatprep.mubr.bf16.mxu0 0
      %1749 = vmatmul.mubr.bf16.gmra.mrb[0].mxu0 %v1672
      %v1750 = vpop.f32.mrb[0].mxu0
      %v1751 = vadd.f32 0.0, %v1750
      %v1752 = vpop.f32.mrb[0].mxu0
      %v1753 = vadd.f32 0.0, %v1752
      %v1754 = vpop.f32.mrb[0].mxu0
      %v1755 = vadd.f32 0.0, %v1754
      %v1756 = vpop.f32.mrb[0].mxu0
      %v1757 = vadd.f32 0.0, %v1756
      %1758 = vmatprep.mubr.bf16.mxu0 0
      %1759 = vmatmul.mubr.bf16.gmra.mrb[0].mxu0 %v1675
      %v1760 = vpop.f32.mrb[0].mxu0
      %v1761 = vadd.f32 0.0, %v1760
      %v1762 = vpop.f32.mrb[0].mxu0
      %v1763 = vadd.f32 0.0, %v1762
      %v1764 = vpop.f32.mrb[0].mxu0
      %v1765 = vadd.f32 0.0, %v1764
      %v1766 = vpop.f32.mrb[0].mxu0
      %v1767 = vadd.f32 0.0, %v1766
      %1768 = vmatprep.mubr.bf16.mxu0 0
      %1769 = vmatmul.mubr.bf16.gmra.mrb[0].mxu0 %v1678
      %v1770 = vpop.f32.mrb[0].mxu0
      %v1771 = vadd.f32 0.0, %v1770
      %v1772 = vpop.f32.mrb[0].mxu0
      %v1773 = vadd.f32 0.0, %v1772
      %v1774 = vpop.f32.mrb[0].mxu0
      %v1775 = vadd.f32 0.0, %v1774
      %v1776 = vpop.f32.mrb[0].mxu0
      %v1777 = vadd.f32 0.0, %v1776
      %1778 = vmatprep.mubr.bf16.mxu0 0
      %1779 = vmatmul.mubr.bf16.gmra.mrb[0].mxu0 %v1681
      %v1780 = vpop.f32.mrb[0].mxu0
      %v1781 = vadd.f32 0.0, %v1780
      %v1782 = vpop.f32.mrb[0].mxu0
      %v1783 = vadd.f32 0.0, %v1782
      %v1784 = vpop.f32.mrb[0].mxu0
      %v1785 = vadd.f32 0.0, %v1784
      %v1786 = vpop.f32.mrb[0].mxu0
      %v1787 = vadd.f32 0.0, %v1786
      %1788 = vmatprep.mubr.bf16.mxu0 0
      %1789 = vmatmul.mubr.bf16.gmra.mrb[0].mxu0 %v1684
      %v1790 = vpop.f32.mrb[0].mxu0
      %v1791 = vadd.f32 0.0, %v1790
      %v1792 = vpop.f32.mrb[0].mxu0
      %v1793 = vadd.f32 0.0, %v1792
      %v1794 = vpop.f32.mrb[0].mxu0
      %v1795 = vadd.f32 0.0, %v1794
      %v1796 = vpop.f32.mrb[0].mxu0
      %v1797 = vadd.f32 0.0, %v1796
      %1798 = vdwg.mxu0
      %1799 = vmatprep.subr.bf16.mxu0 0
      %1800 = vmatpush1.bf16.msra.mxu0 %v1640
      %1801 = vmatprep.subr.bf16.mxu0 0
      %1802 = vmatpush1.bf16.msra.mxu0 %v1643
      %1803 = vmatprep.subr.bf16.mxu0 0
      %1804 = vmatpush1.bf16.msra.mxu0 %v1646
      %1805 = vmatprep.subr.bf16.mxu0 0
      %1806 = vmatpush1.bf16.msra.mxu0 %v1649
      %1807 = vmatprep.subr.bf16.mxu0 0
      %1808 = vmatpush1.bf16.msra.mxu0 0
      %1809 = vmatprep.subr.bf16.mxu0 0
      %1810 = vmatpush1.bf16.msra.mxu0 0
      %1811 = vmatprep.subr.bf16.mxu0 0
      %1812 = vmatpush1.bf16.msra.mxu0 0
      %1813 = vmatprep.subr.bf16.mxu0 0
      %1814 = vmatpush1.bf16.msra.mxu0 0
      %1815 = vmatprep.subr.bf16.mxu0 0
      %1816 = vmatpush1.bf16.msra.mxu0 0
      %1817 = vmatprep.subr.bf16.mxu0 0
      %1818 = vmatpush1.bf16.msra.mxu0 0
      %1819 = vmatprep.subr.bf16.mxu0 0
      %1820 = vmatpush1.bf16.msra.mxu0 0
      %1821 = vmatprep.subr.bf16.mxu0 0
      %1822 = vmatpush1.bf16.msra.mxu0 0
      %1823 = vmatprep.subr.bf16.mxu0 0
      %1824 = vmatpush1.bf16.msra.mxu0 0
      %1825 = vmatprep.subr.bf16.mxu0 0
      %1826 = vmatpush1.bf16.msra.mxu0 0
      %1827 = vmatprep.subr.bf16.mxu0 0
      %1828 = vmatpush1.bf16.msra.mxu0 0
      %1829 = vmatprep.subr.bf16.mxu0 0
      %1830 = vmatpush1.bf16.msra.mxu0 0
      %1831 = vmatprep.mubr.bf16.mxu0 0
      %1832 = vmatmul.mubr.bf16.gmra.mrb[0].mxu0 %v1663
      %v1833 = vpop.f32.mrb[0].mxu0
      %v1834 = vadd.f32 0.0, %v1833
      %v1835 = vpop.f32.mrb[0].mxu0
      %v1836 = vpop.f32.mrb[0].mxu0
      %v1837 = vadd.f32 0.0, %v1836
      %v1838 = vpop.f32.mrb[0].mxu0
      %1839 = vmatprep.mubr.bf16.mxu0 0
      %1840 = vmatmul.mubr.bf16.gmra.mrb[0].mxu0 %v1666
      %v1841 = vpop.f32.mrb[0].mxu0
      %v1842 = vadd.f32 0.0, %v1841
      %v1843 = vpop.f32.mrb[0].mxu0
      %v1844 = vpop.f32.mrb[0].mxu0
      %v1845 = vadd.f32 0.0, %v1844
      %v1846 = vpop.f32.mrb[0].mxu0
      %1847 = vmatprep.mubr.bf16.mxu0 0
      %1848 = vmatmul.mubr.bf16.gmra.mrb[0].mxu0 %v1669
      %v1849 = vpop.f32.mrb[0].mxu0
      %v1850 = vadd.f32 0.0, %v1849
      %v1851 = vpop.f32.mrb[0].mxu0
      %v1852 = vpop.f32.mrb[0].mxu0
      %v1853 = vadd.f32 0.0, %v1852
      %v1854 = vpop.f32.mrb[0].mxu0
      %1855 = vmatprep.mubr.bf16.mxu0 0
      %1856 = vmatmul.mubr.bf16.gmra.mrb[0].mxu0 %v1672
      %v1857 = vpop.f32.mrb[0].mxu0
      %v1858 = vadd.f32 0.0, %v1857
      %v1859 = vpop.f32.mrb[0].mxu0
      %v1860 = vpop.f32.mrb[0].mxu0
      %v1861 = vadd.f32 0.0, %v1860
      %v1862 = vpop.f32.mrb[0].mxu0
      %1863 = vmatprep.mubr.bf16.mxu0 0
      %1864 = vmatmul.mubr.bf16.gmra.mrb[0].mxu0 %v1675
      %v1865 = vpop.f32.mrb[0].mxu0
      %v1866 = vadd.f32 0.0, %v1865
      %v1867 = vpop.f32.mrb[0].mxu0
      %v1868 = vpop.f32.mrb[0].mxu0
      %v1869 = vadd.f32 0.0, %v1868
      %v1870 = vpop.f32.mrb[0].mxu0
      %1871 = vmatprep.mubr.bf16.mxu0 0
      %1872 = vmatmul.mubr.bf16.gmra.mrb[0].mxu0 %v1678
      %v1873 = vpop.f32.mrb[0].mxu0
      %v1874 = vadd.f32 0.0, %v1873
      %v1875 = vpop.f32.mrb[0].mxu0
      %v1876 = vpop.f32.mrb[0].mxu0
      %v1877 = vadd.f32 0.0, %v1876
      %v1878 = vpop.f32.mrb[0].mxu0
      %1879 = vmatprep.mubr.bf16.mxu0 0
      %1880 = vmatmul.mubr.bf16.gmra.mrb[0].mxu0 %v1681
      %v1881 = vpop.f32.mrb[0].mxu0
      %v1882 = vadd.f32 0.0, %v1881
      %v1883 = vpop.f32.mrb[0].mxu0
      %v1884 = vpop.f32.mrb[0].mxu0
      %v1885 = vadd.f32 0.0, %v1884
      %v1886 = vpop.f32.mrb[0].mxu0
      %1887 = vmatprep.mubr.bf16.mxu0 0
      %1888 = vmatmul.mubr.bf16.gmra.mrb[0].mxu0 %v1684
      %v1889 = vpop.f32.mrb[0].mxu0
      %v1890 = vadd.f32 0.0, %v1889
      %v1891 = vpop.f32.mrb[0].mxu0
      %v1892 = vpop.f32.mrb[0].mxu0
      %v1893 = vadd.f32 0.0, %v1892
      %v1894 = vpop.f32.mrb[0].mxu0
      %1895 = vdwg.mxu0
      %v1896 = vadd.f32 %v1509, %v1721
      %v1897 = vadd.f32 %v1510, %v1723
      %v1898 = vadd.f32 %v1511, %v1834
      %v1899 = vadd.f32 %v1512, %v1725
      %v1900 = vadd.f32 %v1513, %v1727
      %v1901 = vadd.f32 %v1514, %v1837
      %v1902 = vadd.f32 %v1515, %v1731
      %v1903 = vadd.f32 %v1516, %v1733
      %v1904 = vadd.f32 %v1517, %v1842
      %v1905 = vadd.f32 %v1518, %v1735
      %v1906 = vadd.f32 %v1519, %v1737
      %v1907 = vadd.f32 %v1520, %v1845
      %v1908 = vadd.f32 %v1521, %v1741
      %v1909 = vadd.f32 %v1522, %v1743
      %v1910 = vadd.f32 %v1523, %v1850
      %v1911 = vadd.f32 %v1524, %v1745
      %v1912 = vadd.f32 %v1525, %v1747
      %v1913 = vadd.f32 %v1526, %v1853
      %v1914 = vadd.f32 %v1527, %v1751
      %v1915 = vadd.f32 %v1528, %v1753
      %v1916 = vadd.f32 %v1529, %v1858
      %v1917 = vadd.f32 %v1530, %v1755
      %v1918 = vadd.f32 %v1531, %v1757
      %v1919 = vadd.f32 %v1532, %v1861
      %v1920 = vadd.f32 %v1533, %v1761
      %v1921 = vadd.f32 %v1534, %v1763
      %v1922 = vadd.f32 %v1535, %v1866
      %v1923 = vadd.f32 %v1536, %v1765
      %v1924 = vadd.f32 %v1537, %v1767
      %v1925 = vadd.f32 %v1538, %v1869
      %v1926 = vadd.f32 %v1539, %v1771
      %v1927 = vadd.f32 %v1540, %v1773
      %v1928 = vadd.f32 %v1541, %v1874
      %v1929 = vadd.f32 %v1542, %v1775
      %v1930 = vadd.f32 %v1543, %v1777
      %v1931 = vadd.f32 %v1544, %v1877
      %v1932 = vadd.f32 %v1545, %v1781
      %v1933 = vadd.f32 %v1546, %v1783
      %v1934 = vadd.f32 %v1547, %v1882
      %v1935 = vadd.f32 %v1548, %v1785
      %v1936 = vadd.f32 %v1549, %v1787
      %v1937 = vadd.f32 %v1550, %v1885
      %v1938 = vadd.f32 %v1551, %v1791
      %v1939 = vadd.f32 %v1552, %v1793
      %v1940 = vadd.f32 %v1553, %v1890
      %v1941 = vadd.f32 %v1554, %v1795
      %v1942 = vadd.f32 %v1555, %v1797
      %v1943 = vadd.f32 %v1556, %v1893
      %v1944 = vmax.bf16 %v1565, %v1573
      %v1945 = vmax.bf16 %v1566, %v1574
      %v1946 = vmax.bf16 %v1567, %v1575
      %v1947 = vmax.bf16 %v1568, %v1576
      %v1948 = vmax.bf16 %v1569, %v1577
      %v1949 = vmax.bf16 %v1570, %v1578
      %v1950 = vmax.bf16 %v1571, %v1579
      %v1951 = vmax.bf16 %v1572, %v1580
      %s1952 = scalar_lea.vmem %s2, 384
      %v1953 = vld [vmem:[%s1952] sm:$0xff]
      %v1954 = vld [vmem:[%s1952 + $0x8] sm:$0xf]
      %v1955 = vld [vmem:[%s1952 + $0xc] sm:$0xff]
      %v1956 = vld [vmem:[%s1952 + $0x14] sm:$0xf]
      %v1957 = vld [vmem:[%s1952 + $0x18] sm:$0xff]
      %v1958 = vld [vmem:[%s1952 + $0x20] sm:$0xf]
      %v1959 = vld [vmem:[%s1952 + $0x24] sm:$0xff]
      %v1960 = vld [vmem:[%s1952 + $0x2c] sm:$0xf]
      %v1961 = vld [vmem:[%s1952 + $0x30] sm:$0xff]
      %v1962 = vld [vmem:[%s1952 + $0x38] sm:$0xf]
      %v1963 = vld [vmem:[%s1952 + $0x3c] sm:$0xff]
      %v1964 = vld [vmem:[%s1952 + $0x44] sm:$0xf]
      %v1965 = vld [vmem:[%s1952 + $0x48] sm:$0xff]
      %v1966 = vld [vmem:[%s1952 + $0x50] sm:$0xf]
      %v1967 = vld [vmem:[%s1952 + $0x54] sm:$0xff]
      %v1968 = vld [vmem:[%s1952 + $0x5c] sm:$0xf]
      %1977 = vrot.lane.b32.xlu0 %v1573, 64
      %v1978 = vpop.permute.xlu0 %1977
      %1979 = vrot.lane.b32.xlu0 %v1574, 64
      %v1980 = vpop.permute.xlu0 %1979
      %1981 = vrot.lane.b32.xlu0 %v1575, 64
      %v1982 = vpop.permute.xlu0 %1981
      %1983 = vrot.lane.b32.xlu0 %v1576, 64
      %v1984 = vpop.permute.xlu0 %1983
      %1985 = vrot.lane.b32.xlu0 %v1577, 64
      %v1986 = vpop.permute.xlu0 %1985
      %1987 = vrot.lane.b32.xlu0 %v1578, 64
      %v1988 = vpop.permute.xlu0 %1987
      %1989 = vrot.lane.b32.xlu0 %v1579, 64
      %v1990 = vpop.permute.xlu0 %1989
      %1991 = vrot.lane.b32.xlu0 %v1580, 64
      %v1992 = vpop.permute.xlu0 %1991
      %v2009 = vunpack.c.l.b16 %v1953
      %v2010 = vunpack.c.h.b16 %v1953
      %v2011 = vunpack.c.l.b16 %v1954
      %v2012 = vunpack.c.l.b16 %v1955
      %v2013 = vunpack.c.h.b16 %v1955
      %v2014 = vunpack.c.l.b16 %v1956
      %v2015 = vunpack.c.l.b16 %v1957
      %v2016 = vunpack.c.h.b16 %v1957
      %v2017 = vunpack.c.l.b16 %v1958
      %v2018 = vunpack.c.l.b16 %v1959
      %v2019 = vunpack.c.h.b16 %v1959
      %v2020 = vunpack.c.l.b16 %v1960
      %v2021 = vunpack.c.l.b16 %v1961
      %v2022 = vunpack.c.h.b16 %v1961
      %v2023 = vunpack.c.l.b16 %v1962
      %v2024 = vunpack.c.l.b16 %v1963
      %v2025 = vunpack.c.h.b16 %v1963
      %v2026 = vunpack.c.l.b16 %v1964
      %v2027 = vunpack.c.l.b16 %v1965
      %v2028 = vunpack.c.h.b16 %v1965
      %v2029 = vunpack.c.l.b16 %v1966
      %v2030 = vunpack.c.l.b16 %v1967
      %v2031 = vunpack.c.h.b16 %v1967
      %v2032 = vunpack.c.l.b16 %v1968
      %v2033 = vpack.c.b16 %v2012, %v2009
      %v2034 = vpack.c.b16 %v2013, %v2010
      %v2035 = vpack.c.b16 %v2014, %v2011
      %v2036 = vpack.c.b16 %v2018, %v2015
      %v2037 = vpack.c.b16 %v2019, %v2016
      %v2038 = vpack.c.b16 %v2020, %v2017
      %v2039 = vpack.c.b16 %v2024, %v2021
      %v2040 = vpack.c.b16 %v2025, %v2022
      %v2041 = vpack.c.b16 %v2026, %v2023
      %v2042 = vpack.c.b16 %v2030, %v2027
      %v2043 = vpack.c.b16 %v2031, %v2028
      %v2044 = vpack.c.b16 %v2032, %v2029
      %v2058 = vsel %vm567, %v1978, 0
      %v2061 = vsel %vm567, %v1980, 0
      %v2064 = vsel %vm567, %v1982, 0
      %v2067 = vsel %vm567, %v1984, 0
      %v2070 = vsel %vm567, %v1986, 0
      %v2073 = vsel %vm567, %v1988, 0
      %v2076 = vsel %vm567, %v1990, 0
      %v2079 = vsel %vm567, %v1992, 0
      %2081 = vmatprep.subr.bf16.mxu0 %v2034
      %2082 = vmatpush1.bf16.msra.mxu0 %v2033
      %2083 = vmatprep.subr.bf16.mxu0 %v2037
      %2084 = vmatpush1.bf16.msra.mxu0 %v2036
      %2085 = vmatprep.subr.bf16.mxu0 %v2040
      %2086 = vmatpush1.bf16.msra.mxu0 %v2039
      %2087 = vmatprep.subr.bf16.mxu0 %v2043
      %2088 = vmatpush1.bf16.msra.mxu0 %v2042
      %2089 = vmatprep.subr.bf16.mxu0 0
      %2090 = vmatpush1.bf16.msra.mxu0 0
      %2091 = vmatprep.subr.bf16.mxu0 0
      %2092 = vmatpush1.bf16.msra.mxu0 0
      %2093 = vmatprep.subr.bf16.mxu0 0
      %2094 = vmatpush1.bf16.msra.mxu0 0
      %2095 = vmatprep.subr.bf16.mxu0 0
      %2096 = vmatpush1.bf16.msra.mxu0 0
      %2097 = vmatprep.subr.bf16.mxu0 0
      %2098 = vmatpush1.bf16.msra.mxu0 0
      %2099 = vmatprep.subr.bf16.mxu0 0
      %2100 = vmatpush1.bf16.msra.mxu0 0
      %2101 = vmatprep.subr.bf16.mxu0 0
      %2102 = vmatpush1.bf16.msra.mxu0 0
      %2103 = vmatprep.subr.bf16.mxu0 0
      %2104 = vmatpush1.bf16.msra.mxu0 0
      %2105 = vmatprep.subr.bf16.mxu0 0
      %2106 = vmatpush1.bf16.msra.mxu0 0
      %2107 = vmatprep.subr.bf16.mxu0 0
      %2108 = vmatpush1.bf16.msra.mxu0 0
      %2109 = vmatprep.subr.bf16.mxu0 0
      %2110 = vmatpush1.bf16.msra.mxu0 0
      %2111 = vmatprep.subr.bf16.mxu0 0
      %2112 = vmatpush1.bf16.msra.mxu0 0
      %2113 = vmatprep.mubr.bf16.mxu0 0
      %2114 = vmatmul.mubr.bf16.gmra.mrb[0].mxu0 %v2058
      %v2115 = vpop.f32.mrb[0].mxu0
      %v2116 = vadd.f32 0.0, %v2115
      %v2117 = vpop.f32.mrb[0].mxu0
      %v2118 = vadd.f32 0.0, %v2117
      %v2119 = vpop.f32.mrb[0].mxu0
      %v2120 = vadd.f32 0.0, %v2119
      %v2121 = vpop.f32.mrb[0].mxu0
      %v2122 = vadd.f32 0.0, %v2121
      %2123 = vmatprep.mubr.bf16.mxu0 0
      %2124 = vmatmul.mubr.bf16.gmra.mrb[0].mxu0 %v2061
      %v2125 = vpop.f32.mrb[0].mxu0
      %v2126 = vadd.f32 0.0, %v2125
      %v2127 = vpop.f32.mrb[0].mxu0
      %v2128 = vadd.f32 0.0, %v2127
      %v2129 = vpop.f32.mrb[0].mxu0
      %v2130 = vadd.f32 0.0, %v2129
      %v2131 = vpop.f32.mrb[0].mxu0
      %v2132 = vadd.f32 0.0, %v2131
      %2133 = vmatprep.mubr.bf16.mxu0 0
      %2134 = vmatmul.mubr.bf16.gmra.mrb[0].mxu0 %v2064
      %v2135 = vpop.f32.mrb[0].mxu0
      %v2136 = vadd.f32 0.0, %v2135
      %v2137 = vpop.f32.mrb[0].mxu0
      %v2138 = vadd.f32 0.0, %v2137
      %v2139 = vpop.f32.mrb[0].mxu0
      %v2140 = vadd.f32 0.0, %v2139
      %v2141 = vpop.f32.mrb[0].mxu0
      %v2142 = vadd.f32 0.0, %v2141
      %2143 = vmatprep.mubr.bf16.mxu0 0
      %2144 = vmatmul.mubr.bf16.gmra.mrb[0].mxu0 %v2067
      %v2145 = vpop.f32.mrb[0].mxu0
      %v2146 = vadd.f32 0.0, %v2145
      %v2147 = vpop.f32.mrb[0].mxu0
      %v2148 = vadd.f32 0.0, %v2147
      %v2149 = vpop.f32.mrb[0].mxu0
      %v2150 = vadd.f32 0.0, %v2149
      %v2151 = vpop.f32.mrb[0].mxu0
      %v2152 = vadd.f32 0.0, %v2151
      %2153 = vmatprep.mubr.bf16.mxu0 0
      %2154 = vmatmul.mubr.bf16.gmra.mrb[0].mxu0 %v2070
      %v2155 = vpop.f32.mrb[0].mxu0
      %v2156 = vadd.f32 0.0, %v2155
      %v2157 = vpop.f32.mrb[0].mxu0
      %v2158 = vadd.f32 0.0, %v2157
      %v2159 = vpop.f32.mrb[0].mxu0
      %v2160 = vadd.f32 0.0, %v2159
      %v2161 = vpop.f32.mrb[0].mxu0
      %v2162 = vadd.f32 0.0, %v2161
      %2163 = vmatprep.mubr.bf16.mxu0 0
      %2164 = vmatmul.mubr.bf16.gmra.mrb[0].mxu0 %v2073
      %v2165 = vpop.f32.mrb[0].mxu0
      %v2166 = vadd.f32 0.0, %v2165
      %v2167 = vpop.f32.mrb[0].mxu0
      %v2168 = vadd.f32 0.0, %v2167
      %v2169 = vpop.f32.mrb[0].mxu0
      %v2170 = vadd.f32 0.0, %v2169
      %v2171 = vpop.f32.mrb[0].mxu0
      %v2172 = vadd.f32 0.0, %v2171
      %2173 = vmatprep.mubr.bf16.mxu0 0
      %2174 = vmatmul.mubr.bf16.gmra.mrb[0].mxu0 %v2076
      %v2175 = vpop.f32.mrb[0].mxu0
      %v2176 = vadd.f32 0.0, %v2175
      %v2177 = vpop.f32.mrb[0].mxu0
      %v2178 = vadd.f32 0.0, %v2177
      %v2179 = vpop.f32.mrb[0].mxu0
      %v2180 = vadd.f32 0.0, %v2179
      %v2181 = vpop.f32.mrb[0].mxu0
      %v2182 = vadd.f32 0.0, %v2181
      %2183 = vmatprep.mubr.bf16.mxu0 0
      %2184 = vmatmul.mubr.bf16.gmra.mrb[0].mxu0 %v2079
      %v2185 = vpop.f32.mrb[0].mxu0
      %v2186 = vadd.f32 0.0, %v2185
      %v2187 = vpop.f32.mrb[0].mxu0
      %v2188 = vadd.f32 0.0, %v2187
      %v2189 = vpop.f32.mrb[0].mxu0
      %v2190 = vadd.f32 0.0, %v2189
      %v2191 = vpop.f32.mrb[0].mxu0
      %v2192 = vadd.f32 0.0, %v2191
      %2193 = vdwg.mxu0
      %2194 = vmatprep.subr.bf16.mxu0 0
      %2195 = vmatpush1.bf16.msra.mxu0 %v2035
      %2196 = vmatprep.subr.bf16.mxu0 0
      %2197 = vmatpush1.bf16.msra.mxu0 %v2038
      %2198 = vmatprep.subr.bf16.mxu0 0
      %2199 = vmatpush1.bf16.msra.mxu0 %v2041
      %2200 = vmatprep.subr.bf16.mxu0 0
      %2201 = vmatpush1.bf16.msra.mxu0 %v2044
      %2202 = vmatprep.subr.bf16.mxu0 0
      %2203 = vmatpush1.bf16.msra.mxu0 0
      %2204 = vmatprep.subr.bf16.mxu0 0
      %2205 = vmatpush1.bf16.msra.mxu0 0
      %2206 = vmatprep.subr.bf16.mxu0 0
      %2207 = vmatpush1.bf16.msra.mxu0 0
      %2208 = vmatprep.subr.bf16.mxu0 0
      %2209 = vmatpush1.bf16.msra.mxu0 0
      %2210 = vmatprep.subr.bf16.mxu0 0
      %2211 = vmatpush1.bf16.msra.mxu0 0
      %2212 = vmatprep.subr.bf16.mxu0 0
      %2213 = vmatpush1.bf16.msra.mxu0 0
      %2214 = vmatprep.subr.bf16.mxu0 0
      %2215 = vmatpush1.bf16.msra.mxu0 0
      %2216 = vmatprep.subr.bf16.mxu0 0
      %2217 = vmatpush1.bf16.msra.mxu0 0
      %2218 = vmatprep.subr.bf16.mxu0 0
      %2219 = vmatpush1.bf16.msra.mxu0 0
      %2220 = vmatprep.subr.bf16.mxu0 0
      %2221 = vmatpush1.bf16.msra.mxu0 0
      %2222 = vmatprep.subr.bf16.mxu0 0
      %2223 = vmatpush1.bf16.msra.mxu0 0
      %2224 = vmatprep.subr.bf16.mxu0 0
      %2225 = vmatpush1.bf16.msra.mxu0 0
      %2226 = vmatprep.mubr.bf16.mxu0 0
      %2227 = vmatmul.mubr.bf16.gmra.mrb[0].mxu0 %v2058
      %v2228 = vpop.f32.mrb[0].mxu0
      %v2229 = vadd.f32 0.0, %v2228
      %v2230 = vpop.f32.mrb[0].mxu0
      %v2231 = vpop.f32.mrb[0].mxu0
      %v2232 = vadd.f32 0.0, %v2231
      %v2233 = vpop.f32.mrb[0].mxu0
      %2234 = vmatprep.mubr.bf16.mxu0 0
      %2235 = vmatmul.mubr.bf16.gmra.mrb[0].mxu0 %v2061
      %v2236 = vpop.f32.mrb[0].mxu0
      %v2237 = vadd.f32 0.0, %v2236
      %v2238 = vpop.f32.mrb[0].mxu0
      %v2239 = vpop.f32.mrb[0].mxu0
      %v2240 = vadd.f32 0.0, %v2239
      %v2241 = vpop.f32.mrb[0].mxu0
      %2242 = vmatprep.mubr.bf16.mxu0 0
      %2243 = vmatmul.mubr.bf16.gmra.mrb[0].mxu0 %v2064
      %v2244 = vpop.f32.mrb[0].mxu0
      %v2245 = vadd.f32 0.0, %v2244
      %v2246 = vpop.f32.mrb[0].mxu0
      %v2247 = vpop.f32.mrb[0].mxu0
      %v2248 = vadd.f32 0.0, %v2247
      %v2249 = vpop.f32.mrb[0].mxu0
      %2250 = vmatprep.mubr.bf16.mxu0 0
      %2251 = vmatmul.mubr.bf16.gmra.mrb[0].mxu0 %v2067
      %v2252 = vpop.f32.mrb[0].mxu0
      %v2253 = vadd.f32 0.0, %v2252
      %v2254 = vpop.f32.mrb[0].mxu0
      %v2255 = vpop.f32.mrb[0].mxu0
      %v2256 = vadd.f32 0.0, %v2255
      %v2257 = vpop.f32.mrb[0].mxu0
      %2258 = vmatprep.mubr.bf16.mxu0 0
      %2259 = vmatmul.mubr.bf16.gmra.mrb[0].mxu0 %v2070
      %v2260 = vpop.f32.mrb[0].mxu0
      %v2261 = vadd.f32 0.0, %v2260
      %v2262 = vpop.f32.mrb[0].mxu0
      %v2263 = vpop.f32.mrb[0].mxu0
      %v2264 = vadd.f32 0.0, %v2263
      %v2265 = vpop.f32.mrb[0].mxu0
      %2266 = vmatprep.mubr.bf16.mxu0 0
      %2267 = vmatmul.mubr.bf16.gmra.mrb[0].mxu0 %v2073
      %v2268 = vpop.f32.mrb[0].mxu0
      %v2269 = vadd.f32 0.0, %v2268
      %v2270 = vpop.f32.mrb[0].mxu0
      %v2271 = vpop.f32.mrb[0].mxu0
      %v2272 = vadd.f32 0.0, %v2271
      %v2273 = vpop.f32.mrb[0].mxu0
      %2274 = vmatprep.mubr.bf16.mxu0 0
      %2275 = vmatmul.mubr.bf16.gmra.mrb[0].mxu0 %v2076
      %v2276 = vpop.f32.mrb[0].mxu0
      %v2277 = vadd.f32 0.0, %v2276
      %v2278 = vpop.f32.mrb[0].mxu0
      %v2279 = vpop.f32.mrb[0].mxu0
      %v2280 = vadd.f32 0.0, %v2279
      %v2281 = vpop.f32.mrb[0].mxu0
      %2282 = vmatprep.mubr.bf16.mxu0 0
      %2283 = vmatmul.mubr.bf16.gmra.mrb[0].mxu0 %v2079
      %v2284 = vpop.f32.mrb[0].mxu0
      %v2285 = vadd.f32 0.0, %v2284
      %v2286 = vpop.f32.mrb[0].mxu0
      %v2287 = vpop.f32.mrb[0].mxu0
      %v2288 = vadd.f32 0.0, %v2287
      %v2289 = vpop.f32.mrb[0].mxu0
      %2290 = vdwg.mxu0
      %v2291 = vadd.f32 %v1896, %v2116
      %v2292 = vadd.f32 %v1897, %v2118
      %v2293 = vadd.f32 %v1898, %v2229
      %v2294 = vadd.f32 %v1899, %v2120
      %v2295 = vadd.f32 %v1900, %v2122
      %v2296 = vadd.f32 %v1901, %v2232
      %v2297 = vadd.f32 %v1902, %v2126
      %v2298 = vadd.f32 %v1903, %v2128
      %v2299 = vadd.f32 %v1904, %v2237
      %v2300 = vadd.f32 %v1905, %v2130
      %v2301 = vadd.f32 %v1906, %v2132
      %v2302 = vadd.f32 %v1907, %v2240
      %v2303 = vadd.f32 %v1908, %v2136
      %v2304 = vadd.f32 %v1909, %v2138
      %v2305 = vadd.f32 %v1910, %v2245
      %v2306 = vadd.f32 %v1911, %v2140
      %v2307 = vadd.f32 %v1912, %v2142
      %v2308 = vadd.f32 %v1913, %v2248
      %v2309 = vadd.f32 %v1914, %v2146
      %v2310 = vadd.f32 %v1915, %v2148
      %v2311 = vadd.f32 %v1916, %v2253
      %v2312 = vadd.f32 %v1917, %v2150
      %v2313 = vadd.f32 %v1918, %v2152
      %v2314 = vadd.f32 %v1919, %v2256
      %v2315 = vadd.f32 %v1920, %v2156
      %v2316 = vadd.f32 %v1921, %v2158
      %v2317 = vadd.f32 %v1922, %v2261
      %v2318 = vadd.f32 %v1923, %v2160
      %v2319 = vadd.f32 %v1924, %v2162
      %v2320 = vadd.f32 %v1925, %v2264
      %v2321 = vadd.f32 %v1926, %v2166
      %v2322 = vadd.f32 %v1927, %v2168
      %v2323 = vadd.f32 %v1928, %v2269
      %v2324 = vadd.f32 %v1929, %v2170
      %v2325 = vadd.f32 %v1930, %v2172
      %v2326 = vadd.f32 %v1931, %v2272
      %v2327 = vadd.f32 %v1932, %v2176
      %v2328 = vadd.f32 %v1933, %v2178
      %v2329 = vadd.f32 %v1934, %v2277
      %v2330 = vadd.f32 %v1935, %v2180
      %v2331 = vadd.f32 %v1936, %v2182
      %v2332 = vadd.f32 %v1937, %v2280
      %v2333 = vadd.f32 %v1938, %v2186
      %v2334 = vadd.f32 %v1939, %v2188
      %v2335 = vadd.f32 %v1940, %v2285
      %v2336 = vadd.f32 %v1941, %v2190
      %v2337 = vadd.f32 %v1942, %v2192
      %v2338 = vadd.f32 %v1943, %v2288
      %v2347 = vmax.bf16 %v1944, %v1978
      %v2348 = vmax.bf16 %v1945, %v1980
      %v2349 = vmax.bf16 %v1946, %v1982
      %v2350 = vmax.bf16 %v1947, %v1984
      %v2351 = vmax.bf16 %v1948, %v1986
      %v2352 = vmax.bf16 %v1949, %v1988
      %v2353 = vmax.bf16 %v1950, %v1990
      %v2354 = vmax.bf16 %v1951, %v1992
      %v2355 = vld [vmem:[#allocation2 + $0x8] sm:$0xff]
      %v2356 = vld [vmem:[#allocation2 + $0x18] sm:$0xff]
      %v2357 = vld [vmem:[#allocation2 + $0x28] sm:$0xff]
      %v2358 = vld [vmem:[#allocation2 + $0x38] sm:$0xff]
      %v2359 = vld [vmem:[#allocation2 + $0x48] sm:$0xff]
      %v2360 = vld [vmem:[#allocation2 + $0x58] sm:$0xff]
      %v2361 = vld [vmem:[#allocation2 + $0x68] sm:$0xff]
      %v2362 = vld [vmem:[#allocation2 + $0x78] sm:$0xff]
      %v2363 = vld [vmem:[#allocation2 + $0x88] sm:$0x1]
      %s2364 = scalar_lea.vmem %s2, 480
      %v2365 = vld [vmem:[%s2364] sm:$0xff]
      %v2366 = vld [vmem:[%s2364 + $0x8] sm:$0xf]
      %v2367 = vld [vmem:[%s2364 + $0xc] sm:$0xff]
      %v2368 = vld [vmem:[%s2364 + $0x14] sm:$0xf]
      %v2369 = vld [vmem:[%s2364 + $0x18] sm:$0xff]
      %v2370 = vld [vmem:[%s2364 + $0x20] sm:$0xf]
      %v2371 = vld [vmem:[%s2364 + $0x24] sm:$0xff]
      %v2372 = vld [vmem:[%s2364 + $0x2c] sm:$0xf]
      %v2373 = vld [vmem:[%s2364 + $0x30] sm:$0xff]
      %v2374 = vld [vmem:[%s2364 + $0x38] sm:$0xf]
      %v2375 = vld [vmem:[%s2364 + $0x3c] sm:$0xff]
      %v2376 = vld [vmem:[%s2364 + $0x44] sm:$0xf]
      %v2377 = vld [vmem:[%s2364 + $0x48] sm:$0xff]
      %v2378 = vld [vmem:[%s2364 + $0x50] sm:$0xf]
      %v2379 = vld [vmem:[%s2364 + $0x54] sm:$0xff]
      %v2380 = vld [vmem:[%s2364 + $0x5c] sm:$0xf]
      %v2382 = vshrl.u32 %v2355, 16
      %v2384 = vshll.u32 %v2355, 16
      %v2386 = vrot.slane %v2384, 1
      %v2387 = vor.u32 %v2382, %v2386
      %v2389 = vshll.u32 %v2356, 16
      %v2391 = vrot.slane %v2389, 1
      %v2392 = vsel %vm1142, %v2387, %v2391
      %v2393 = vshrl.u32 %v2356, 16
      %v2395 = vor.u32 %v2393, %v2391
      %v2397 = vshll.u32 %v2357, 16
      %v2399 = vrot.slane %v2397, 1
      %v2400 = vsel %vm1142, %v2395, %v2399
      %v2401 = vshrl.u32 %v2357, 16
      %v2403 = vor.u32 %v2401, %v2399
      %v2405 = vshll.u32 %v2358, 16
      %v2407 = vrot.slane %v2405, 1
      %v2408 = vsel %vm1142, %v2403, %v2407
      %v2409 = vshrl.u32 %v2358, 16
      %v2411 = vor.u32 %v2409, %v2407
      %v2413 = vshll.u32 %v2359, 16
      %v2415 = vrot.slane %v2413, 1
      %v2416 = vsel %vm1142, %v2411, %v2415
      %v2417 = vshrl.u32 %v2359, 16
      %v2419 = vor.u32 %v2417, %v2415
      %v2421 = vshll.u32 %v2360, 16
      %v2423 = vrot.slane %v2421, 1
      %v2424 = vsel %vm1142, %v2419, %v2423
      %v2425 = vshrl.u32 %v2360, 16
      %v2427 = vor.u32 %v2425, %v2423
      %v2429 = vshll.u32 %v2361, 16
      %v2431 = vrot.slane %v2429, 1
      %v2432 = vsel %vm1142, %v2427, %v2431
      %v2433 = vshrl.u32 %v2361, 16
      %v2435 = vor.u32 %v2433, %v2431
      %v2437 = vshll.u32 %v2362, 16
      %v2439 = vrot.slane %v2437, 1
      %v2440 = vsel %vm1142, %v2435, %v2439
      %v2441 = vshrl.u32 %v2362, 16
      %v2443 = vor.u32 %v2441, %v2439
      %v2445 = vshll.u32 %v2363, 16
      %v2447 = vrot.slane %v2445, 1
      %v2448 = vsel %vm1142, %v2443, %v2447
      %v2465 = vunpack.c.l.b16 %v2365
      %v2466 = vunpack.c.h.b16 %v2365
      %v2467 = vunpack.c.l.b16 %v2366
      %v2468 = vunpack.c.l.b16 %v2367
      %v2469 = vunpack.c.h.b16 %v2367
      %v2470 = vunpack.c.l.b16 %v2368
      %v2471 = vunpack.c.l.b16 %v2369
      %v2472 = vunpack.c.h.b16 %v2369
      %v2473 = vunpack.c.l.b16 %v2370
      %v2474 = vunpack.c.l.b16 %v2371
      %v2475 = vunpack.c.h.b16 %v2371
      %v2476 = vunpack.c.l.b16 %v2372
      %v2477 = vunpack.c.l.b16 %v2373
      %v2478 = vunpack.c.h.b16 %v2373
      %v2479 = vunpack.c.l.b16 %v2374
      %v2480 = vunpack.c.l.b16 %v2375
      %v2481 = vunpack.c.h.b16 %v2375
      %v2482 = vunpack.c.l.b16 %v2376
      %v2483 = vunpack.c.l.b16 %v2377
      %v2484 = vunpack.c.h.b16 %v2377
      %v2485 = vunpack.c.l.b16 %v2378
      %v2486 = vunpack.c.l.b16 %v2379
      %v2487 = vunpack.c.h.b16 %v2379
      %v2488 = vunpack.c.l.b16 %v2380
      %v2489 = vpack.c.b16 %v2468, %v2465
      %v2490 = vpack.c.b16 %v2469, %v2466
      %v2491 = vpack.c.b16 %v2470, %v2467
      %v2492 = vpack.c.b16 %v2474, %v2471
      %v2493 = vpack.c.b16 %v2475, %v2472
      %v2494 = vpack.c.b16 %v2476, %v2473
      %v2495 = vpack.c.b16 %v2480, %v2477
      %v2496 = vpack.c.b16 %v2481, %v2478
      %v2497 = vpack.c.b16 %v2482, %v2479
      %v2498 = vpack.c.b16 %v2486, %v2483
      %v2499 = vpack.c.b16 %v2487, %v2484
      %v2500 = vpack.c.b16 %v2488, %v2485
      %v2514 = vsel %vm567, %v2392, 0
      %v2517 = vsel %vm567, %v2400, 0
      %v2520 = vsel %vm567, %v2408, 0
      %v2523 = vsel %vm567, %v2416, 0
      %v2526 = vsel %vm567, %v2424, 0
      %v2529 = vsel %vm567, %v2432, 0
      %v2532 = vsel %vm567, %v2440, 0
      %v2535 = vsel %vm567, %v2448, 0
      %2537 = vmatprep.subr.bf16.mxu0 %v2490
      %2538 = vmatpush1.bf16.msra.mxu0 %v2489
      %2539 = vmatprep.subr.bf16.mxu0 %v2493
      %2540 = vmatpush1.bf16.msra.mxu0 %v2492
      %2541 = vmatprep.subr.bf16.mxu0 %v2496
      %2542 = vmatpush1.bf16.msra.mxu0 %v2495
      %2543 = vmatprep.subr.bf16.mxu0 %v2499
      %2544 = vmatpush1.bf16.msra.mxu0 %v2498
      %2545 = vmatprep.subr.bf16.mxu0 0
      %2546 = vmatpush1.bf16.msra.mxu0 0
      %2547 = vmatprep.subr.bf16.mxu0 0
      %2548 = vmatpush1.bf16.msra.mxu0 0
      %2549 = vmatprep.subr.bf16.mxu0 0
      %2550 = vmatpush1.bf16.msra.mxu0 0
      %2551 = vmatprep.subr.bf16.mxu0 0
      %2552 = vmatpush1.bf16.msra.mxu0 0
      %2553 = vmatprep.subr.bf16.mxu0 0
      %2554 = vmatpush1.bf16.msra.mxu0 0
      %2555 = vmatprep.subr.bf16.mxu0 0
      %2556 = vmatpush1.bf16.msra.mxu0 0
      %2557 = vmatprep.subr.bf16.mxu0 0
      %2558 = vmatpush1.bf16.msra.mxu0 0
      %2559 = vmatprep.subr.bf16.mxu0 0
      %2560 = vmatpush1.bf16.msra.mxu0 0
      %2561 = vmatprep.subr.bf16.mxu0 0
      %2562 = vmatpush1.bf16.msra.mxu0 0
      %2563 = vmatprep.subr.bf16.mxu0 0
      %2564 = vmatpush1.bf16.msra.mxu0 0
      %2565 = vmatprep.subr.bf16.mxu0 0
      %2566 = vmatpush1.bf16.msra.mxu0 0
      %2567 = vmatprep.subr.bf16.mxu0 0
      %2568 = vmatpush1.bf16.msra.mxu0 0
      %2569 = vmatprep.mubr.bf16.mxu0 0
      %2570 = vmatmul.mubr.bf16.gmra.mrb[0].mxu0 %v2514
      %v2571 = vpop.f32.mrb[0].mxu0
      %v2572 = vadd.f32 0.0, %v2571
      %v2573 = vpop.f32.mrb[0].mxu0
      %v2574 = vadd.f32 0.0, %v2573
      %v2575 = vpop.f32.mrb[0].mxu0
      %v2576 = vadd.f32 0.0, %v2575
      %v2577 = vpop.f32.mrb[0].mxu0
      %v2578 = vadd.f32 0.0, %v2577
      %2579 = vmatprep.mubr.bf16.mxu0 0
      %2580 = vmatmul.mubr.bf16.gmra.mrb[0].mxu0 %v2517
      %v2581 = vpop.f32.mrb[0].mxu0
      %v2582 = vadd.f32 0.0, %v2581
      %v2583 = vpop.f32.mrb[0].mxu0
      %v2584 = vadd.f32 0.0, %v2583
      %v2585 = vpop.f32.mrb[0].mxu0
      %v2586 = vadd.f32 0.0, %v2585
      %v2587 = vpop.f32.mrb[0].mxu0
      %v2588 = vadd.f32 0.0, %v2587
      %2589 = vmatprep.mubr.bf16.mxu0 0
      %2590 = vmatmul.mubr.bf16.gmra.mrb[0].mxu0 %v2520
      %v2591 = vpop.f32.mrb[0].mxu0
      %v2592 = vadd.f32 0.0, %v2591
      %v2593 = vpop.f32.mrb[0].mxu0
      %v2594 = vadd.f32 0.0, %v2593
      %v2595 = vpop.f32.mrb[0].mxu0
      %v2596 = vadd.f32 0.0, %v2595
      %v2597 = vpop.f32.mrb[0].mxu0
      %v2598 = vadd.f32 0.0, %v2597
      %2599 = vmatprep.mubr.bf16.mxu0 0
      %2600 = vmatmul.mubr.bf16.gmra.mrb[0].mxu0 %v2523
      %v2601 = vpop.f32.mrb[0].mxu0
      %v2602 = vadd.f32 0.0, %v2601
      %v2603 = vpop.f32.mrb[0].mxu0
      %v2604 = vadd.f32 0.0, %v2603
      %v2605 = vpop.f32.mrb[0].mxu0
      %v2606 = vadd.f32 0.0, %v2605
      %v2607 = vpop.f32.mrb[0].mxu0
      %v2608 = vadd.f32 0.0, %v2607
      %2609 = vmatprep.mubr.bf16.mxu0 0
      %2610 = vmatmul.mubr.bf16.gmra.mrb[0].mxu0 %v2526
      %v2611 = vpop.f32.mrb[0].mxu0
      %v2612 = vadd.f32 0.0, %v2611
      %v2613 = vpop.f32.mrb[0].mxu0
      %v2614 = vadd.f32 0.0, %v2613
      %v2615 = vpop.f32.mrb[0].mxu0
      %v2616 = vadd.f32 0.0, %v2615
      %v2617 = vpop.f32.mrb[0].mxu0
      %v2618 = vadd.f32 0.0, %v2617
      %2619 = vmatprep.mubr.bf16.mxu0 0
      %2620 = vmatmul.mubr.bf16.gmra.mrb[0].mxu0 %v2529
      %v2621 = vpop.f32.mrb[0].mxu0
      %v2622 = vadd.f32 0.0, %v2621
      %v2623 = vpop.f32.mrb[0].mxu0
      %v2624 = vadd.f32 0.0, %v2623
      %v2625 = vpop.f32.mrb[0].mxu0
      %v2626 = vadd.f32 0.0, %v2625
      %v2627 = vpop.f32.mrb[0].mxu0
      %v2628 = vadd.f32 0.0, %v2627
      %2629 = vmatprep.mubr.bf16.mxu0 0
      %2630 = vmatmul.mubr.bf16.gmra.mrb[0].mxu0 %v2532
      %v2631 = vpop.f32.mrb[0].mxu0
      %v2632 = vadd.f32 0.0, %v2631
      %v2633 = vpop.f32.mrb[0].mxu0
      %v2634 = vadd.f32 0.0, %v2633
      %v2635 = vpop.f32.mrb[0].mxu0
      %v2636 = vadd.f32 0.0, %v2635
      %v2637 = vpop.f32.mrb[0].mxu0
      %v2638 = vadd.f32 0.0, %v2637
      %2639 = vmatprep.mubr.bf16.mxu0 0
      %2640 = vmatmul.mubr.bf16.gmra.mrb[0].mxu0 %v2535
      %v2641 = vpop.f32.mrb[0].mxu0
      %v2642 = vadd.f32 0.0, %v2641
      %v2643 = vpop.f32.mrb[0].mxu0
      %v2644 = vadd.f32 0.0, %v2643
      %v2645 = vpop.f32.mrb[0].mxu0
      %v2646 = vadd.f32 0.0, %v2645
      %v2647 = vpop.f32.mrb[0].mxu0
      %v2648 = vadd.f32 0.0, %v2647
      %2649 = vdwg.mxu0
      %2650 = vmatprep.subr.bf16.mxu0 0
      %2651 = vmatpush1.bf16.msra.mxu0 %v2491
      %2652 = vmatprep.subr.bf16.mxu0 0
      %2653 = vmatpush1.bf16.msra.mxu0 %v2494
      %2654 = vmatprep.subr.bf16.mxu0 0
      %2655 = vmatpush1.bf16.msra.mxu0 %v2497
      %2656 = vmatprep.subr.bf16.mxu0 0
      %2657 = vmatpush1.bf16.msra.mxu0 %v2500
      %2658 = vmatprep.subr.bf16.mxu0 0
      %2659 = vmatpush1.bf16.msra.mxu0 0
      %2660 = vmatprep.subr.bf16.mxu0 0
      %2661 = vmatpush1.bf16.msra.mxu0 0
      %2662 = vmatprep.subr.bf16.mxu0 0
      %2663 = vmatpush1.bf16.msra.mxu0 0
      %2664 = vmatprep.subr.bf16.mxu0 0
      %2665 = vmatpush1.bf16.msra.mxu0 0
      %2666 = vmatprep.subr.bf16.mxu0 0
      %2667 = vmatpush1.bf16.msra.mxu0 0
      %2668 = vmatprep.subr.bf16.mxu0 0
      %2669 = vmatpush1.bf16.msra.mxu0 0
      %2670 = vmatprep.subr.bf16.mxu0 0
      %2671 = vmatpush1.bf16.msra.mxu0 0
      %2672 = vmatprep.subr.bf16.mxu0 0
      %2673 = vmatpush1.bf16.msra.mxu0 0
      %2674 = vmatprep.subr.bf16.mxu0 0
      %2675 = vmatpush1.bf16.msra.mxu0 0
      %2676 = vmatprep.subr.bf16.mxu0 0
      %2677 = vmatpush1.bf16.msra.mxu0 0
      %2678 = vmatprep.subr.bf16.mxu0 0
      %2679 = vmatpush1.bf16.msra.mxu0 0
      %2680 = vmatprep.subr.bf16.mxu0 0
      %2681 = vmatpush1.bf16.msra.mxu0 0
      %2682 = vmatprep.mubr.bf16.mxu0 0
      %2683 = vmatmul.mubr.bf16.gmra.mrb[0].mxu0 %v2514
      %v2684 = vpop.f32.mrb[0].mxu0
      %v2685 = vadd.f32 0.0, %v2684
      %v2686 = vpop.f32.mrb[0].mxu0
      %v2687 = vpop.f32.mrb[0].mxu0
      %v2688 = vadd.f32 0.0, %v2687
      %v2689 = vpop.f32.mrb[0].mxu0
      %2690 = vmatprep.mubr.bf16.mxu0 0
      %2691 = vmatmul.mubr.bf16.gmra.mrb[0].mxu0 %v2517
      %v2692 = vpop.f32.mrb[0].mxu0
      %v2693 = vadd.f32 0.0, %v2692
      %v2694 = vpop.f32.mrb[0].mxu0
      %v2695 = vpop.f32.mrb[0].mxu0
      %v2696 = vadd.f32 0.0, %v2695
      %v2697 = vpop.f32.mrb[0].mxu0
      %2698 = vmatprep.mubr.bf16.mxu0 0
      %2699 = vmatmul.mubr.bf16.gmra.mrb[0].mxu0 %v2520
      %v2700 = vpop.f32.mrb[0].mxu0
      %v2701 = vadd.f32 0.0, %v2700
      %v2702 = vpop.f32.mrb[0].mxu0
      %v2703 = vpop.f32.mrb[0].mxu0
      %v2704 = vadd.f32 0.0, %v2703
      %v2705 = vpop.f32.mrb[0].mxu0
      %2706 = vmatprep.mubr.bf16.mxu0 0
      %2707 = vmatmul.mubr.bf16.gmra.mrb[0].mxu0 %v2523
      %v2708 = vpop.f32.mrb[0].mxu0
      %v2709 = vadd.f32 0.0, %v2708
      %v2710 = vpop.f32.mrb[0].mxu0
      %v2711 = vpop.f32.mrb[0].mxu0
      %v2712 = vadd.f32 0.0, %v2711
      %v2713 = vpop.f32.mrb[0].mxu0
      %2714 = vmatprep.mubr.bf16.mxu0 0
      %2715 = vmatmul.mubr.bf16.gmra.mrb[0].mxu0 %v2526
      %v2716 = vpop.f32.mrb[0].mxu0
      %v2717 = vadd.f32 0.0, %v2716
      %v2718 = vpop.f32.mrb[0].mxu0
      %v2719 = vpop.f32.mrb[0].mxu0
      %v2720 = vadd.f32 0.0, %v2719
      %v2721 = vpop.f32.mrb[0].mxu0
      %2722 = vmatprep.mubr.bf16.mxu0 0
      %2723 = vmatmul.mubr.bf16.gmra.mrb[0].mxu0 %v2529
      %v2724 = vpop.f32.mrb[0].mxu0
      %v2725 = vadd.f32 0.0, %v2724
      %v2726 = vpop.f32.mrb[0].mxu0
      %v2727 = vpop.f32.mrb[0].mxu0
      %v2728 = vadd.f32 0.0, %v2727
      %v2729 = vpop.f32.mrb[0].mxu0
      %2730 = vmatprep.mubr.bf16.mxu0 0
      %2731 = vmatmul.mubr.bf16.gmra.mrb[0].mxu0 %v2532
      %v2732 = vpop.f32.mrb[0].mxu0
      %v2733 = vadd.f32 0.0, %v2732
      %v2734 = vpop.f32.mrb[0].mxu0
      %v2735 = vpop.f32.mrb[0].mxu0
      %v2736 = vadd.f32 0.0, %v2735
      %v2737 = vpop.f32.mrb[0].mxu0
      %2738 = vmatprep.mubr.bf16.mxu0 0
      %2739 = vmatmul.mubr.bf16.gmra.mrb[0].mxu0 %v2535
      %v2740 = vpop.f32.mrb[0].mxu0
      %v2741 = vadd.f32 0.0, %v2740
      %v2742 = vpop.f32.mrb[0].mxu0
      %v2743 = vpop.f32.mrb[0].mxu0
      %v2744 = vadd.f32 0.0, %v2743
      %v2745 = vpop.f32.mrb[0].mxu0
      %2746 = vdwg.mxu0
      %v2747 = vadd.f32 %v2291, %v2572
      %v2748 = vadd.f32 %v2292, %v2574
      %v2749 = vadd.f32 %v2293, %v2685
      %v2750 = vadd.f32 %v2294, %v2576
      %v2751 = vadd.f32 %v2295, %v2578
      %v2752 = vadd.f32 %v2296, %v2688
      %v2753 = vadd.f32 %v2297, %v2582
      %v2754 = vadd.f32 %v2298, %v2584
      %v2755 = vadd.f32 %v2299, %v2693
      %v2756 = vadd.f32 %v2300, %v2586
      %v2757 = vadd.f32 %v2301, %v2588
      %v2758 = vadd.f32 %v2302, %v2696
      %v2759 = vadd.f32 %v2303, %v2592
      %v2760 = vadd.f32 %v2304, %v2594
      %v2761 = vadd.f32 %v2305, %v2701
      %v2762 = vadd.f32 %v2306, %v2596
      %v2763 = vadd.f32 %v2307, %v2598
      %v2764 = vadd.f32 %v2308, %v2704
      %v2765 = vadd.f32 %v2309, %v2602
      %v2766 = vadd.f32 %v2310, %v2604
      %v2767 = vadd.f32 %v2311, %v2709
      %v2768 = vadd.f32 %v2312, %v2606
      %v2769 = vadd.f32 %v2313, %v2608
      %v2770 = vadd.f32 %v2314, %v2712
      %v2771 = vadd.f32 %v2315, %v2612
      %v2772 = vadd.f32 %v2316, %v2614
      %v2773 = vadd.f32 %v2317, %v2717
      %v2774 = vadd.f32 %v2318, %v2616
      %v2775 = vadd.f32 %v2319, %v2618
      %v2776 = vadd.f32 %v2320, %v2720
      %v2777 = vadd.f32 %v2321, %v2622
      %v2778 = vadd.f32 %v2322, %v2624
      %v2779 = vadd.f32 %v2323, %v2725
      %v2780 = vadd.f32 %v2324, %v2626
      %v2781 = vadd.f32 %v2325, %v2628
      %v2782 = vadd.f32 %v2326, %v2728
      %v2783 = vadd.f32 %v2327, %v2632
      %v2784 = vadd.f32 %v2328, %v2634
      %v2785 = vadd.f32 %v2329, %v2733
      %v2786 = vadd.f32 %v2330, %v2636
      %v2787 = vadd.f32 %v2331, %v2638
      %v2788 = vadd.f32 %v2332, %v2736
      %v2789 = vadd.f32 %v2333, %v2642
      %v2790 = vadd.f32 %v2334, %v2644
      %v2791 = vadd.f32 %v2335, %v2741
      %v2792 = vadd.f32 %v2336, %v2646
      %v2793 = vadd.f32 %v2337, %v2648
      %v2794 = vadd.f32 %v2338, %v2744
      %v2803 = vmax.bf16 %v2347, %v2392
      %v2804 = vmax.bf16 %v2348, %v2400
      %v2805 = vmax.bf16 %v2349, %v2408
      %v2806 = vmax.bf16 %v2350, %v2416
      %v2807 = vmax.bf16 %v2351, %v2424
      %v2808 = vmax.bf16 %v2352, %v2432
      %v2809 = vmax.bf16 %v2353, %v2440
      %v2810 = vmax.bf16 %v2354, %v2448
      %v2811 = vld [vmem:[#allocation2] sm:$0xf0]
      %v2812 = vld [vmem:[#allocation2 + $0x80] sm:$0x1f]
      %s2813 = scalar_lea.vmem %s2, 576
      %v2814 = vld [vmem:[%s2813] sm:$0xff]
      %v2815 = vld [vmem:[%s2813 + $0x8] sm:$0xf]
      %v2816 = vld [vmem:[%s2813 + $0xc] sm:$0xff]
      %v2817 = vld [vmem:[%s2813 + $0x14] sm:$0xf]
      %v2818 = vld [vmem:[%s2813 + $0x18] sm:$0xff]
      %v2819 = vld [vmem:[%s2813 + $0x20] sm:$0xf]
      %v2820 = vld [vmem:[%s2813 + $0x24] sm:$0xff]
      %v2821 = vld [vmem:[%s2813 + $0x2c] sm:$0xf]
      %v2822 = vld [vmem:[%s2813 + $0x30] sm:$0xff]
      %v2823 = vld [vmem:[%s2813 + $0x38] sm:$0xf]
      %v2824 = vld [vmem:[%s2813 + $0x3c] sm:$0xff]
      %v2825 = vld [vmem:[%s2813 + $0x44] sm:$0xf]
      %v2826 = vld [vmem:[%s2813 + $0x48] sm:$0xff]
      %v2827 = vld [vmem:[%s2813 + $0x50] sm:$0xf]
      %v2828 = vld [vmem:[%s2813 + $0x54] sm:$0xff]
      %v2829 = vld [vmem:[%s2813 + $0x5c] sm:$0xf]
      %vm2830 = vsmask.f32 3328
      %v2832 = vshrl.u32 %v2811, 16
      %v2834 = vrot.slane %v2832, 4
      %v2835 = vshll.u32 %v2811, 16
      %v2837 = vrot.slane %v2835, 5
      %v2838 = vor.u32 %v2834, %v2837
      %v2839 = vrot.slane %v1155, 4
      %v2840 = vrot.slane %v1151, 5
      %v2841 = vor.u32 %v2839, %v2840
      %v2842 = vsel %vm2830, %v2838, %v2841
      %v2843 = vrot.slane %v1163, 4
      %v2844 = vrot.slane %v1159, 5
      %v2845 = vor.u32 %v2843, %v2844
      %v2846 = vsel %vm2830, %v2841, %v2845
      %v2847 = vrot.slane %v1171, 4
      %v2848 = vrot.slane %v1167, 5
      %v2849 = vor.u32 %v2847, %v2848
      %v2850 = vsel %vm2830, %v2845, %v2849
      %v2851 = vrot.slane %v1179, 4
      %v2852 = vrot.slane %v1175, 5
      %v2853 = vor.u32 %v2851, %v2852
      %v2854 = vsel %vm2830, %v2849, %v2853
      %v2855 = vrot.slane %v1187, 4
      %v2856 = vrot.slane %v1183, 5
      %v2857 = vor.u32 %v2855, %v2856
      %v2858 = vsel %vm2830, %v2853, %v2857
      %v2859 = vrot.slane %v1195, 4
      %v2860 = vrot.slane %v1191, 5
      %v2861 = vor.u32 %v2859, %v2860
      %v2862 = vsel %vm2830, %v2857, %v2861
      %v2863 = vrot.slane %v1203, 4
      %v2864 = vrot.slane %v1199, 5
      %v2865 = vor.u32 %v2863, %v2864
      %v2866 = vsel %vm2830, %v2861, %v2865
      %v2868 = vshrl.u32 %v2812, 16
      %v2870 = vrot.slane %v2868, 4
      %v2871 = vshll.u32 %v2812, 16
      %v2873 = vrot.slane %v2871, 5
      %v2874 = vor.u32 %v2870, %v2873
      %v2875 = vsel %vm2830, %v2865, %v2874
      %v2892 = vunpack.c.l.b16 %v2814
      %v2893 = vunpack.c.h.b16 %v2814
      %v2894 = vunpack.c.l.b16 %v2815
      %v2895 = vunpack.c.l.b16 %v2816
      %v2896 = vunpack.c.h.b16 %v2816
      %v2897 = vunpack.c.l.b16 %v2817
      %v2898 = vunpack.c.l.b16 %v2818
      %v2899 = vunpack.c.h.b16 %v2818
      %v2900 = vunpack.c.l.b16 %v2819
      %v2901 = vunpack.c.l.b16 %v2820
      %v2902 = vunpack.c.h.b16 %v2820
      %v2903 = vunpack.c.l.b16 %v2821
      %v2904 = vunpack.c.l.b16 %v2822
      %v2905 = vunpack.c.h.b16 %v2822
      %v2906 = vunpack.c.l.b16 %v2823
      %v2907 = vunpack.c.l.b16 %v2824
      %v2908 = vunpack.c.h.b16 %v2824
      %v2909 = vunpack.c.l.b16 %v2825
      %v2910 = vunpack.c.l.b16 %v2826
      %v2911 = vunpack.c.h.b16 %v2826
      %v2912 = vunpack.c.l.b16 %v2827
      %v2913 = vunpack.c.l.b16 %v2828
      %v2914 = vunpack.c.h.b16 %v2828
      %v2915 = vunpack.c.l.b16 %v2829
      %v2916 = vpack.c.b16 %v2895, %v2892
      %v2917 = vpack.c.b16 %v2896, %v2893
      %v2918 = vpack.c.b16 %v2897, %v2894
      %v2919 = vpack.c.b16 %v2901, %v2898
      %v2920 = vpack.c.b16 %v2902, %v2899
      %v2921 = vpack.c.b16 %v2903, %v2900
      %v2922 = vpack.c.b16 %v2907, %v2904
      %v2923 = vpack.c.b16 %v2908, %v2905
      %v2924 = vpack.c.b16 %v2909, %v2906
      %v2925 = vpack.c.b16 %v2913, %v2910
      %v2926 = vpack.c.b16 %v2914, %v2911
      %v2927 = vpack.c.b16 %v2915, %v2912
      %v2941 = vsel %vm567, %v2842, 0
      %v2944 = vsel %vm567, %v2846, 0
      %v2947 = vsel %vm567, %v2850, 0
      %v2950 = vsel %vm567, %v2854, 0
      %v2953 = vsel %vm567, %v2858, 0
      %v2956 = vsel %vm567, %v2862, 0
      %v2959 = vsel %vm567, %v2866, 0
      %v2962 = vsel %vm567, %v2875, 0
      %2964 = vmatprep.subr.bf16.mxu0 %v2917
      %2965 = vmatpush1.bf16.msra.mxu0 %v2916
      %2966 = vmatprep.subr.bf16.mxu0 %v2920
      %2967 = vmatpush1.bf16.msra.mxu0 %v2919
      %2968 = vmatprep.subr.bf16.mxu0 %v2923
      %2969 = vmatpush1.bf16.msra.mxu0 %v2922
      %2970 = vmatprep.subr.bf16.mxu0 %v2926
      %2971 = vmatpush1.bf16.msra.mxu0 %v2925
      %2972 = vmatprep.subr.bf16.mxu0 0
      %2973 = vmatpush1.bf16.msra.mxu0 0
      %2974 = vmatprep.subr.bf16.mxu0 0
      %2975 = vmatpush1.bf16.msra.mxu0 0
      %2976 = vmatprep.subr.bf16.mxu0 0
      %2977 = vmatpush1.bf16.msra.mxu0 0
      %2978 = vmatprep.subr.bf16.mxu0 0
      %2979 = vmatpush1.bf16.msra.mxu0 0
      %2980 = vmatprep.subr.bf16.mxu0 0
      %2981 = vmatpush1.bf16.msra.mxu0 0
      %2982 = vmatprep.subr.bf16.mxu0 0
      %2983 = vmatpush1.bf16.msra.mxu0 0
      %2984 = vmatprep.subr.bf16.mxu0 0
      %2985 = vmatpush1.bf16.msra.mxu0 0
      %2986 = vmatprep.subr.bf16.mxu0 0
      %2987 = vmatpush1.bf16.msra.mxu0 0
      %2988 = vmatprep.subr.bf16.mxu0 0
      %2989 = vmatpush1.bf16.msra.mxu0 0
      %2990 = vmatprep.subr.bf16.mxu0 0
      %2991 = vmatpush1.bf16.msra.mxu0 0
      %2992 = vmatprep.subr.bf16.mxu0 0
      %2993 = vmatpush1.bf16.msra.mxu0 0
      %2994 = vmatprep.subr.bf16.mxu0 0
      %2995 = vmatpush1.bf16.msra.mxu0 0
      %2996 = vmatprep.mubr.bf16.mxu0 0
      %2997 = vmatmul.mubr.bf16.gmra.mrb[0].mxu0 %v2941
      %v2998 = vpop.f32.mrb[0].mxu0
      %v2999 = vadd.f32 0.0, %v2998
      %v3000 = vpop.f32.mrb[0].mxu0
      %v3001 = vadd.f32 0.0, %v3000
      %v3002 = vpop.f32.mrb[0].mxu0
      %v3003 = vadd.f32 0.0, %v3002
      %v3004 = vpop.f32.mrb[0].mxu0
      %v3005 = vadd.f32 0.0, %v3004
      %3006 = vmatprep.mubr.bf16.mxu0 0
      %3007 = vmatmul.mubr.bf16.gmra.mrb[0].mxu0 %v2944
      %v3008 = vpop.f32.mrb[0].mxu0
      %v3009 = vadd.f32 0.0, %v3008
      %v3010 = vpop.f32.mrb[0].mxu0
      %v3011 = vadd.f32 0.0, %v3010
      %v3012 = vpop.f32.mrb[0].mxu0
      %v3013 = vadd.f32 0.0, %v3012
      %v3014 = vpop.f32.mrb[0].mxu0
      %v3015 = vadd.f32 0.0, %v3014
      %3016 = vmatprep.mubr.bf16.mxu0 0
      %3017 = vmatmul.mubr.bf16.gmra.mrb[0].mxu0 %v2947
      %v3018 = vpop.f32.mrb[0].mxu0
      %v3019 = vadd.f32 0.0, %v3018
      %v3020 = vpop.f32.mrb[0].mxu0
      %v3021 = vadd.f32 0.0, %v3020
      %v3022 = vpop.f32.mrb[0].mxu0
      %v3023 = vadd.f32 0.0, %v3022
      %v3024 = vpop.f32.mrb[0].mxu0
      %v3025 = vadd.f32 0.0, %v3024
      %3026 = vmatprep.mubr.bf16.mxu0 0
      %3027 = vmatmul.mubr.bf16.gmra.mrb[0].mxu0 %v2950
      %v3028 = vpop.f32.mrb[0].mxu0
      %v3029 = vadd.f32 0.0, %v3028
      %v3030 = vpop.f32.mrb[0].mxu0
      %v3031 = vadd.f32 0.0, %v3030
      %v3032 = vpop.f32.mrb[0].mxu0
      %v3033 = vadd.f32 0.0, %v3032
      %v3034 = vpop.f32.mrb[0].mxu0
      %v3035 = vadd.f32 0.0, %v3034
      %3036 = vmatprep.mubr.bf16.mxu0 0
      %3037 = vmatmul.mubr.bf16.gmra.mrb[0].mxu0 %v2953
      %v3038 = vpop.f32.mrb[0].mxu0
      %v3039 = vadd.f32 0.0, %v3038
      %v3040 = vpop.f32.mrb[0].mxu0
      %v3041 = vadd.f32 0.0, %v3040
      %v3042 = vpop.f32.mrb[0].mxu0
      %v3043 = vadd.f32 0.0, %v3042
      %v3044 = vpop.f32.mrb[0].mxu0
      %v3045 = vadd.f32 0.0, %v3044
      %3046 = vmatprep.mubr.bf16.mxu0 0
      %3047 = vmatmul.mubr.bf16.gmra.mrb[0].mxu0 %v2956
      %v3048 = vpop.f32.mrb[0].mxu0
      %v3049 = vadd.f32 0.0, %v3048
      %v3050 = vpop.f32.mrb[0].mxu0
      %v3051 = vadd.f32 0.0, %v3050
      %v3052 = vpop.f32.mrb[0].mxu0
      %v3053 = vadd.f32 0.0, %v3052
      %v3054 = vpop.f32.mrb[0].mxu0
      %v3055 = vadd.f32 0.0, %v3054
      %3056 = vmatprep.mubr.bf16.mxu0 0
      %3057 = vmatmul.mubr.bf16.gmra.mrb[0].mxu0 %v2959
      %v3058 = vpop.f32.mrb[0].mxu0
      %v3059 = vadd.f32 0.0, %v3058
      %v3060 = vpop.f32.mrb[0].mxu0
      %v3061 = vadd.f32 0.0, %v3060
      %v3062 = vpop.f32.mrb[0].mxu0
      %v3063 = vadd.f32 0.0, %v3062
      %v3064 = vpop.f32.mrb[0].mxu0
      %v3065 = vadd.f32 0.0, %v3064
      %3066 = vmatprep.mubr.bf16.mxu0 0
      %3067 = vmatmul.mubr.bf16.gmra.mrb[0].mxu0 %v2962
      %v3068 = vpop.f32.mrb[0].mxu0
      %v3069 = vadd.f32 0.0, %v3068
      %v3070 = vpop.f32.mrb[0].mxu0
      %v3071 = vadd.f32 0.0, %v3070
      %v3072 = vpop.f32.mrb[0].mxu0
      %v3073 = vadd.f32 0.0, %v3072
      %v3074 = vpop.f32.mrb[0].mxu0
      %v3075 = vadd.f32 0.0, %v3074
      %3076 = vdwg.mxu0
      %3077 = vmatprep.subr.bf16.mxu0 0
      %3078 = vmatpush1.bf16.msra.mxu0 %v2918
      %3079 = vmatprep.subr.bf16.mxu0 0
      %3080 = vmatpush1.bf16.msra.mxu0 %v2921
      %3081 = vmatprep.subr.bf16.mxu0 0
      %3082 = vmatpush1.bf16.msra.mxu0 %v2924
      %3083 = vmatprep.subr.bf16.mxu0 0
      %3084 = vmatpush1.bf16.msra.mxu0 %v2927
      %3085 = vmatprep.subr.bf16.mxu0 0
      %3086 = vmatpush1.bf16.msra.mxu0 0
      %3087 = vmatprep.subr.bf16.mxu0 0
      %3088 = vmatpush1.bf16.msra.mxu0 0
      %3089 = vmatprep.subr.bf16.mxu0 0
      %3090 = vmatpush1.bf16.msra.mxu0 0
      %3091 = vmatprep.subr.bf16.mxu0 0
      %3092 = vmatpush1.bf16.msra.mxu0 0
      %3093 = vmatprep.subr.bf16.mxu0 0
      %3094 = vmatpush1.bf16.msra.mxu0 0
      %3095 = vmatprep.subr.bf16.mxu0 0
      %3096 = vmatpush1.bf16.msra.mxu0 0
      %3097 = vmatprep.subr.bf16.mxu0 0
      %3098 = vmatpush1.bf16.msra.mxu0 0
      %3099 = vmatprep.subr.bf16.mxu0 0
      %3100 = vmatpush1.bf16.msra.mxu0 0
      %3101 = vmatprep.subr.bf16.mxu0 0
      %3102 = vmatpush1.bf16.msra.mxu0 0
      %3103 = vmatprep.subr.bf16.mxu0 0
      %3104 = vmatpush1.bf16.msra.mxu0 0
      %3105 = vmatprep.subr.bf16.mxu0 0
      %3106 = vmatpush1.bf16.msra.mxu0 0
      %3107 = vmatprep.subr.bf16.mxu0 0
      %3108 = vmatpush1.bf16.msra.mxu0 0
      %3109 = vmatprep.mubr.bf16.mxu0 0
      %3110 = vmatmul.mubr.bf16.gmra.mrb[0].mxu0 %v2941
      %v3111 = vpop.f32.mrb[0].mxu0
      %v3112 = vadd.f32 0.0, %v3111
      %v3113 = vpop.f32.mrb[0].mxu0
      %v3114 = vpop.f32.mrb[0].mxu0
      %v3115 = vadd.f32 0.0, %v3114
      %v3116 = vpop.f32.mrb[0].mxu0
      %3117 = vmatprep.mubr.bf16.mxu0 0
      %3118 = vmatmul.mubr.bf16.gmra.mrb[0].mxu0 %v2944
      %v3119 = vpop.f32.mrb[0].mxu0
      %v3120 = vadd.f32 0.0, %v3119
      %v3121 = vpop.f32.mrb[0].mxu0
      %v3122 = vpop.f32.mrb[0].mxu0
      %v3123 = vadd.f32 0.0, %v3122
      %v3124 = vpop.f32.mrb[0].mxu0
      %3125 = vmatprep.mubr.bf16.mxu0 0
      %3126 = vmatmul.mubr.bf16.gmra.mrb[0].mxu0 %v2947
      %v3127 = vpop.f32.mrb[0].mxu0
      %v3128 = vadd.f32 0.0, %v3127
      %v3129 = vpop.f32.mrb[0].mxu0
      %v3130 = vpop.f32.mrb[0].mxu0
      %v3131 = vadd.f32 0.0, %v3130
      %v3132 = vpop.f32.mrb[0].mxu0
      %3133 = vmatprep.mubr.bf16.mxu0 0
      %3134 = vmatmul.mubr.bf16.gmra.mrb[0].mxu0 %v2950
      %v3135 = vpop.f32.mrb[0].mxu0
      %v3136 = vadd.f32 0.0, %v3135
      %v3137 = vpop.f32.mrb[0].mxu0
      %v3138 = vpop.f32.mrb[0].mxu0
      %v3139 = vadd.f32 0.0, %v3138
      %v3140 = vpop.f32.mrb[0].mxu0
      %3141 = vmatprep.mubr.bf16.mxu0 0
      %3142 = vmatmul.mubr.bf16.gmra.mrb[0].mxu0 %v2953
      %v3143 = vpop.f32.mrb[0].mxu0
      %v3144 = vadd.f32 0.0, %v3143
      %v3145 = vpop.f32.mrb[0].mxu0
      %v3146 = vpop.f32.mrb[0].mxu0
      %v3147 = vadd.f32 0.0, %v3146
      %v3148 = vpop.f32.mrb[0].mxu0
      %3149 = vmatprep.mubr.bf16.mxu0 0
      %3150 = vmatmul.mubr.bf16.gmra.mrb[0].mxu0 %v2956
      %v3151 = vpop.f32.mrb[0].mxu0
      %v3152 = vadd.f32 0.0, %v3151
      %v3153 = vpop.f32.mrb[0].mxu0
      %v3154 = vpop.f32.mrb[0].mxu0
      %v3155 = vadd.f32 0.0, %v3154
      %v3156 = vpop.f32.mrb[0].mxu0
      %3157 = vmatprep.mubr.bf16.mxu0 0
      %3158 = vmatmul.mubr.bf16.gmra.mrb[0].mxu0 %v2959
      %v3159 = vpop.f32.mrb[0].mxu0
      %v3160 = vadd.f32 0.0, %v3159
      %v3161 = vpop.f32.mrb[0].mxu0
      %v3162 = vpop.f32.mrb[0].mxu0
      %v3163 = vadd.f32 0.0, %v3162
      %v3164 = vpop.f32.mrb[0].mxu0
      %3165 = vmatprep.mubr.bf16.mxu0 0
      %3166 = vmatmul.mubr.bf16.gmra.mrb[0].mxu0 %v2962
      %v3167 = vpop.f32.mrb[0].mxu0
      %v3168 = vadd.f32 0.0, %v3167
      %v3169 = vpop.f32.mrb[0].mxu0
      %v3170 = vpop.f32.mrb[0].mxu0
      %v3171 = vadd.f32 0.0, %v3170
      %v3172 = vpop.f32.mrb[0].mxu0
      %3173 = vdwg.mxu0
      %v3174 = vadd.f32 %v2747, %v2999
      %v3175 = vadd.f32 %v2748, %v3001
      %v3176 = vadd.f32 %v2749, %v3112
      %v3177 = vadd.f32 %v2750, %v3003
      %v3178 = vadd.f32 %v2751, %v3005
      %v3179 = vadd.f32 %v2752, %v3115
      %v3180 = vadd.f32 %v2753, %v3009
      %v3181 = vadd.f32 %v2754, %v3011
      %v3182 = vadd.f32 %v2755, %v3120
      %v3183 = vadd.f32 %v2756, %v3013
      %v3184 = vadd.f32 %v2757, %v3015
      %v3185 = vadd.f32 %v2758, %v3123
      %v3186 = vadd.f32 %v2759, %v3019
      %v3187 = vadd.f32 %v2760, %v3021
      %v3188 = vadd.f32 %v2761, %v3128
      %v3189 = vadd.f32 %v2762, %v3023
      %v3190 = vadd.f32 %v2763, %v3025
      %v3191 = vadd.f32 %v2764, %v3131
      %v3192 = vadd.f32 %v2765, %v3029
      %v3193 = vadd.f32 %v2766, %v3031
      %v3194 = vadd.f32 %v2767, %v3136
      %v3195 = vadd.f32 %v2768, %v3033
      %v3196 = vadd.f32 %v2769, %v3035
      %v3197 = vadd.f32 %v2770, %v3139
      %v3198 = vadd.f32 %v2771, %v3039
      %v3199 = vadd.f32 %v2772, %v3041
      %v3200 = vadd.f32 %v2773, %v3144
      %v3201 = vadd.f32 %v2774, %v3043
      %v3202 = vadd.f32 %v2775, %v3045
      %v3203 = vadd.f32 %v2776, %v3147
      %v3204 = vadd.f32 %v2777, %v3049
      %v3205 = vadd.f32 %v2778, %v3051
      %v3206 = vadd.f32 %v2779, %v3152
      %v3207 = vadd.f32 %v2780, %v3053
      %v3208 = vadd.f32 %v2781, %v3055
      %v3209 = vadd.f32 %v2782, %v3155
      %v3210 = vadd.f32 %v2783, %v3059
      %v3211 = vadd.f32 %v2784, %v3061
      %v3212 = vadd.f32 %v2785, %v3160
      %v3213 = vadd.f32 %v2786, %v3063
      %v3214 = vadd.f32 %v2787, %v3065
      %v3215 = vadd.f32 %v2788, %v3163
      %v3216 = vadd.f32 %v2789, %v3069
      %v3217 = vadd.f32 %v2790, %v3071
      %v3218 = vadd.f32 %v2791, %v3168
      %v3219 = vadd.f32 %v2792, %v3073
      %v3220 = vadd.f32 %v2793, %v3075
      %v3221 = vadd.f32 %v2794, %v3171
      %v3230 = vmax.bf16 %v2803, %v2842
      %v3231 = vmax.bf16 %v2804, %v2846
      %v3232 = vmax.bf16 %v2805, %v2850
      %v3233 = vmax.bf16 %v2806, %v2854
      %v3234 = vmax.bf16 %v2807, %v2858
      %v3235 = vmax.bf16 %v2808, %v2862
      %v3236 = vmax.bf16 %v2809, %v2866
      %v3237 = vmax.bf16 %v2810, %v2875
      %s3238 = scalar_lea.vmem %s2, 672
      %v3239 = vld [vmem:[%s3238] sm:$0xff]
      %v3240 = vld [vmem:[%s3238 + $0x8] sm:$0xf]
      %v3241 = vld [vmem:[%s3238 + $0xc] sm:$0xff]
      %v3242 = vld [vmem:[%s3238 + $0x14] sm:$0xf]
      %v3243 = vld [vmem:[%s3238 + $0x18] sm:$0xff]
      %v3244 = vld [vmem:[%s3238 + $0x20] sm:$0xf]
      %v3245 = vld [vmem:[%s3238 + $0x24] sm:$0xff]
      %v3246 = vld [vmem:[%s3238 + $0x2c] sm:$0xf]
      %v3247 = vld [vmem:[%s3238 + $0x30] sm:$0xff]
      %v3248 = vld [vmem:[%s3238 + $0x38] sm:$0xf]
      %v3249 = vld [vmem:[%s3238 + $0x3c] sm:$0xff]
      %v3250 = vld [vmem:[%s3238 + $0x44] sm:$0xf]
      %v3251 = vld [vmem:[%s3238 + $0x48] sm:$0xff]
      %v3252 = vld [vmem:[%s3238 + $0x50] sm:$0xf]
      %v3253 = vld [vmem:[%s3238 + $0x54] sm:$0xff]
      %v3254 = vld [vmem:[%s3238 + $0x5c] sm:$0xf]
      %3255 = vrot.lane.b32.xlu0 %v2842, 64
      %v3256 = vpop.permute.xlu0 %3255
      %3257 = vrot.lane.b32.xlu0 %v2846, 64
      %v3258 = vpop.permute.xlu0 %3257
      %3259 = vrot.lane.b32.xlu0 %v2850, 64
      %v3260 = vpop.permute.xlu0 %3259
      %3261 = vrot.lane.b32.xlu0 %v2854, 64
      %v3262 = vpop.permute.xlu0 %3261
      %3263 = vrot.lane.b32.xlu0 %v2858, 64
      %v3264 = vpop.permute.xlu0 %3263
      %3265 = vrot.lane.b32.xlu0 %v2862, 64
      %v3266 = vpop.permute.xlu0 %3265
      %3267 = vrot.lane.b32.xlu0 %v2866, 64
      %v3268 = vpop.permute.xlu0 %3267
      %3269 = vrot.lane.b32.xlu0 %v2875, 64
      %v3270 = vpop.permute.xlu0 %3269
      %v3287 = vunpack.c.l.b16 %v3239
      %v3288 = vunpack.c.h.b16 %v3239
      %v3289 = vunpack.c.l.b16 %v3240
      %v3290 = vunpack.c.l.b16 %v3241
      %v3291 = vunpack.c.h.b16 %v3241
      %v3292 = vunpack.c.l.b16 %v3242
      %v3293 = vunpack.c.l.b16 %v3243
      %v3294 = vunpack.c.h.b16 %v3243
      %v3295 = vunpack.c.l.b16 %v3244
      %v3296 = vunpack.c.l.b16 %v3245
      %v3297 = vunpack.c.h.b16 %v3245
      %v3298 = vunpack.c.l.b16 %v3246
      %v3299 = vunpack.c.l.b16 %v3247
      %v3300 = vunpack.c.h.b16 %v3247
      %v3301 = vunpack.c.l.b16 %v3248
      %v3302 = vunpack.c.l.b16 %v3249
      %v3303 = vunpack.c.h.b16 %v3249
      %v3304 = vunpack.c.l.b16 %v3250
      %v3305 = vunpack.c.l.b16 %v3251
      %v3306 = vunpack.c.h.b16 %v3251
      %v3307 = vunpack.c.l.b16 %v3252
      %v3308 = vunpack.c.l.b16 %v3253
      %v3309 = vunpack.c.h.b16 %v3253
      %v3310 = vunpack.c.l.b16 %v3254
      %v3311 = vpack.c.b16 %v3290, %v3287
      %v3312 = vpack.c.b16 %v3291, %v3288
      %v3313 = vpack.c.b16 %v3292, %v3289
      %v3314 = vpack.c.b16 %v3296, %v3293
      %v3315 = vpack.c.b16 %v3297, %v3294
      %v3316 = vpack.c.b16 %v3298, %v3295
      %v3317 = vpack.c.b16 %v3302, %v3299
      %v3318 = vpack.c.b16 %v3303, %v3300
      %v3319 = vpack.c.b16 %v3304, %v3301
      %v3320 = vpack.c.b16 %v3308, %v3305
      %v3321 = vpack.c.b16 %v3309, %v3306
      %v3322 = vpack.c.b16 %v3310, %v3307
      %v3336 = vsel %vm567, %v3256, 0
      %v3339 = vsel %vm567, %v3258, 0
      %v3342 = vsel %vm567, %v3260, 0
      %v3345 = vsel %vm567, %v3262, 0
      %v3348 = vsel %vm567, %v3264, 0
      %v3351 = vsel %vm567, %v3266, 0
      %v3354 = vsel %vm567, %v3268, 0
      %v3357 = vsel %vm567, %v3270, 0
      %3359 = vmatprep.subr.bf16.mxu0 %v3312
      %3360 = vmatpush1.bf16.msra.mxu0 %v3311
      %3361 = vmatprep.subr.bf16.mxu0 %v3315
      %3362 = vmatpush1.bf16.msra.mxu0 %v3314
      %3363 = vmatprep.subr.bf16.mxu0 %v3318
      %3364 = vmatpush1.bf16.msra.mxu0 %v3317
      %3365 = vmatprep.subr.bf16.mxu0 %v3321
      %3366 = vmatpush1.bf16.msra.mxu0 %v3320
      %3367 = vmatprep.subr.bf16.mxu0 0
      %3368 = vmatpush1.bf16.msra.mxu0 0
      %3369 = vmatprep.subr.bf16.mxu0 0
      %3370 = vmatpush1.bf16.msra.mxu0 0
      %3371 = vmatprep.subr.bf16.mxu0 0
      %3372 = vmatpush1.bf16.msra.mxu0 0
      %3373 = vmatprep.subr.bf16.mxu0 0
      %3374 = vmatpush1.bf16.msra.mxu0 0
      %3375 = vmatprep.subr.bf16.mxu0 0
      %3376 = vmatpush1.bf16.msra.mxu0 0
      %3377 = vmatprep.subr.bf16.mxu0 0
      %3378 = vmatpush1.bf16.msra.mxu0 0
      %3379 = vmatprep.subr.bf16.mxu0 0
      %3380 = vmatpush1.bf16.msra.mxu0 0
      %3381 = vmatprep.subr.bf16.mxu0 0
      %3382 = vmatpush1.bf16.msra.mxu0 0
      %3383 = vmatprep.subr.bf16.mxu0 0
      %3384 = vmatpush1.bf16.msra.mxu0 0
      %3385 = vmatprep.subr.bf16.mxu0 0
      %3386 = vmatpush1.bf16.msra.mxu0 0
      %3387 = vmatprep.subr.bf16.mxu0 0
      %3388 = vmatpush1.bf16.msra.mxu0 0
      %3389 = vmatprep.subr.bf16.mxu0 0
      %3390 = vmatpush1.bf16.msra.mxu0 0
      %3391 = vmatprep.mubr.bf16.mxu0 0
      %3392 = vmatmul.mubr.bf16.gmra.mrb[0].mxu0 %v3336
      %v3393 = vpop.f32.mrb[0].mxu0
      %v3394 = vadd.f32 0.0, %v3393
      %v3395 = vpop.f32.mrb[0].mxu0
      %v3396 = vadd.f32 0.0, %v3395
      %v3397 = vpop.f32.mrb[0].mxu0
      %v3398 = vadd.f32 0.0, %v3397
      %v3399 = vpop.f32.mrb[0].mxu0
      %v3400 = vadd.f32 0.0, %v3399
      %3401 = vmatprep.mubr.bf16.mxu0 0
      %3402 = vmatmul.mubr.bf16.gmra.mrb[0].mxu0 %v3339
      %v3403 = vpop.f32.mrb[0].mxu0
      %v3404 = vadd.f32 0.0, %v3403
      %v3405 = vpop.f32.mrb[0].mxu0
      %v3406 = vadd.f32 0.0, %v3405
      %v3407 = vpop.f32.mrb[0].mxu0
      %v3408 = vadd.f32 0.0, %v3407
      %v3409 = vpop.f32.mrb[0].mxu0
      %v3410 = vadd.f32 0.0, %v3409
      %3411 = vmatprep.mubr.bf16.mxu0 0
      %3412 = vmatmul.mubr.bf16.gmra.mrb[0].mxu0 %v3342
      %v3413 = vpop.f32.mrb[0].mxu0
      %v3414 = vadd.f32 0.0, %v3413
      %v3415 = vpop.f32.mrb[0].mxu0
      %v3416 = vadd.f32 0.0, %v3415
      %v3417 = vpop.f32.mrb[0].mxu0
      %v3418 = vadd.f32 0.0, %v3417
      %v3419 = vpop.f32.mrb[0].mxu0
      %v3420 = vadd.f32 0.0, %v3419
      %3421 = vmatprep.mubr.bf16.mxu0 0
      %3422 = vmatmul.mubr.bf16.gmra.mrb[0].mxu0 %v3345
      %v3423 = vpop.f32.mrb[0].mxu0
      %v3424 = vadd.f32 0.0, %v3423
      %v3425 = vpop.f32.mrb[0].mxu0
      %v3426 = vadd.f32 0.0, %v3425
      %v3427 = vpop.f32.mrb[0].mxu0
      %v3428 = vadd.f32 0.0, %v3427
      %v3429 = vpop.f32.mrb[0].mxu0
      %v3430 = vadd.f32 0.0, %v3429
      %3431 = vmatprep.mubr.bf16.mxu0 0
      %3432 = vmatmul.mubr.bf16.gmra.mrb[0].mxu0 %v3348
      %v3433 = vpop.f32.mrb[0].mxu0
      %v3434 = vadd.f32 0.0, %v3433
      %v3435 = vpop.f32.mrb[0].mxu0
      %v3436 = vadd.f32 0.0, %v3435
      %v3437 = vpop.f32.mrb[0].mxu0
      %v3438 = vadd.f32 0.0, %v3437
      %v3439 = vpop.f32.mrb[0].mxu0
      %v3440 = vadd.f32 0.0, %v3439
      %3441 = vmatprep.mubr.bf16.mxu0 0
      %3442 = vmatmul.mubr.bf16.gmra.mrb[0].mxu0 %v3351
      %v3443 = vpop.f32.mrb[0].mxu0
      %v3444 = vadd.f32 0.0, %v3443
      %v3445 = vpop.f32.mrb[0].mxu0
      %v3446 = vadd.f32 0.0, %v3445
      %v3447 = vpop.f32.mrb[0].mxu0
      %v3448 = vadd.f32 0.0, %v3447
      %v3449 = vpop.f32.mrb[0].mxu0
      %v3450 = vadd.f32 0.0, %v3449
      %3451 = vmatprep.mubr.bf16.mxu0 0
      %3452 = vmatmul.mubr.bf16.gmra.mrb[0].mxu0 %v3354
      %v3453 = vpop.f32.mrb[0].mxu0
      %v3454 = vadd.f32 0.0, %v3453
      %v3455 = vpop.f32.mrb[0].mxu0
      %v3456 = vadd.f32 0.0, %v3455
      %v3457 = vpop.f32.mrb[0].mxu0
      %v3458 = vadd.f32 0.0, %v3457
      %v3459 = vpop.f32.mrb[0].mxu0
      %v3460 = vadd.f32 0.0, %v3459
      %3461 = vmatprep.mubr.bf16.mxu0 0
      %3462 = vmatmul.mubr.bf16.gmra.mrb[0].mxu0 %v3357
      %v3463 = vpop.f32.mrb[0].mxu0
      %v3464 = vadd.f32 0.0, %v3463
      %v3465 = vpop.f32.mrb[0].mxu0
      %v3466 = vadd.f32 0.0, %v3465
      %v3467 = vpop.f32.mrb[0].mxu0
      %v3468 = vadd.f32 0.0, %v3467
      %v3469 = vpop.f32.mrb[0].mxu0
      %v3470 = vadd.f32 0.0, %v3469
      %3471 = vdwg.mxu0
      %3472 = vmatprep.subr.bf16.mxu0 0
      %3473 = vmatpush1.bf16.msra.mxu0 %v3313
      %3474 = vmatprep.subr.bf16.mxu0 0
      %3475 = vmatpush1.bf16.msra.mxu0 %v3316
      %3476 = vmatprep.subr.bf16.mxu0 0
      %3477 = vmatpush1.bf16.msra.mxu0 %v3319
      %3478 = vmatprep.subr.bf16.mxu0 0
      %3479 = vmatpush1.bf16.msra.mxu0 %v3322
      %3480 = vmatprep.subr.bf16.mxu0 0
      %3481 = vmatpush1.bf16.msra.mxu0 0
      %3482 = vmatprep.subr.bf16.mxu0 0
      %3483 = vmatpush1.bf16.msra.mxu0 0
      %3484 = vmatprep.subr.bf16.mxu0 0
      %3485 = vmatpush1.bf16.msra.mxu0 0
      %3486 = vmatprep.subr.bf16.mxu0 0
      %3487 = vmatpush1.bf16.msra.mxu0 0
      %3488 = vmatprep.subr.bf16.mxu0 0
      %3489 = vmatpush1.bf16.msra.mxu0 0
      %3490 = vmatprep.subr.bf16.mxu0 0
      %3491 = vmatpush1.bf16.msra.mxu0 0
      %3492 = vmatprep.subr.bf16.mxu0 0
      %3493 = vmatpush1.bf16.msra.mxu0 0
      %3494 = vmatprep.subr.bf16.mxu0 0
      %3495 = vmatpush1.bf16.msra.mxu0 0
      %3496 = vmatprep.subr.bf16.mxu0 0
      %3497 = vmatpush1.bf16.msra.mxu0 0
      %3498 = vmatprep.subr.bf16.mxu0 0
      %3499 = vmatpush1.bf16.msra.mxu0 0
      %3500 = vmatprep.subr.bf16.mxu0 0
      %3501 = vmatpush1.bf16.msra.mxu0 0
      %3502 = vmatprep.subr.bf16.mxu0 0
      %3503 = vmatpush1.bf16.msra.mxu0 0
      %3504 = vmatprep.mubr.bf16.mxu0 0
      %3505 = vmatmul.mubr.bf16.gmra.mrb[0].mxu0 %v3336
      %v3506 = vpop.f32.mrb[0].mxu0
      %v3507 = vadd.f32 0.0, %v3506
      %v3508 = vpop.f32.mrb[0].mxu0
      %v3509 = vpop.f32.mrb[0].mxu0
      %v3510 = vadd.f32 0.0, %v3509
      %v3511 = vpop.f32.mrb[0].mxu0
      %3512 = vmatprep.mubr.bf16.mxu0 0
      %3513 = vmatmul.mubr.bf16.gmra.mrb[0].mxu0 %v3339
      %v3514 = vpop.f32.mrb[0].mxu0
      %v3515 = vadd.f32 0.0, %v3514
      %v3516 = vpop.f32.mrb[0].mxu0
      %v3517 = vpop.f32.mrb[0].mxu0
      %v3518 = vadd.f32 0.0, %v3517
      %v3519 = vpop.f32.mrb[0].mxu0
      %3520 = vmatprep.mubr.bf16.mxu0 0
      %3521 = vmatmul.mubr.bf16.gmra.mrb[0].mxu0 %v3342
      %v3522 = vpop.f32.mrb[0].mxu0
      %v3523 = vadd.f32 0.0, %v3522
      %v3524 = vpop.f32.mrb[0].mxu0
      %v3525 = vpop.f32.mrb[0].mxu0
      %v3526 = vadd.f32 0.0, %v3525
      %v3527 = vpop.f32.mrb[0].mxu0
      %3528 = vmatprep.mubr.bf16.mxu0 0
      %3529 = vmatmul.mubr.bf16.gmra.mrb[0].mxu0 %v3345
      %v3530 = vpop.f32.mrb[0].mxu0
      %v3531 = vadd.f32 0.0, %v3530
      %v3532 = vpop.f32.mrb[0].mxu0
      %v3533 = vpop.f32.mrb[0].mxu0
      %v3534 = vadd.f32 0.0, %v3533
      %v3535 = vpop.f32.mrb[0].mxu0
      %3536 = vmatprep.mubr.bf16.mxu0 0
      %3537 = vmatmul.mubr.bf16.gmra.mrb[0].mxu0 %v3348
      %v3538 = vpop.f32.mrb[0].mxu0
      %v3539 = vadd.f32 0.0, %v3538
      %v3540 = vpop.f32.mrb[0].mxu0
      %v3541 = vpop.f32.mrb[0].mxu0
      %v3542 = vadd.f32 0.0, %v3541
      %v3543 = vpop.f32.mrb[0].mxu0
      %3544 = vmatprep.mubr.bf16.mxu0 0
      %3545 = vmatmul.mubr.bf16.gmra.mrb[0].mxu0 %v3351
      %v3546 = vpop.f32.mrb[0].mxu0
      %v3547 = vadd.f32 0.0, %v3546
      %v3548 = vpop.f32.mrb[0].mxu0
      %v3549 = vpop.f32.mrb[0].mxu0
      %v3550 = vadd.f32 0.0, %v3549
      %v3551 = vpop.f32.mrb[0].mxu0
      %3552 = vmatprep.mubr.bf16.mxu0 0
      %3553 = vmatmul.mubr.bf16.gmra.mrb[0].mxu0 %v3354
      %v3554 = vpop.f32.mrb[0].mxu0
      %v3555 = vadd.f32 0.0, %v3554
      %v3556 = vpop.f32.mrb[0].mxu0
      %v3557 = vpop.f32.mrb[0].mxu0
      %v3558 = vadd.f32 0.0, %v3557
      %v3559 = vpop.f32.mrb[0].mxu0
      %3560 = vmatprep.mubr.bf16.mxu0 0
      %3561 = vmatmul.mubr.bf16.gmra.mrb[0].mxu0 %v3357
      %v3562 = vpop.f32.mrb[0].mxu0
      %v3563 = vadd.f32 0.0, %v3562
      %v3564 = vpop.f32.mrb[0].mxu0
      %v3565 = vpop.f32.mrb[0].mxu0
      %v3566 = vadd.f32 0.0, %v3565
      %v3567 = vpop.f32.mrb[0].mxu0
      %3568 = vdwg.mxu0
      %v3569 = vadd.f32 %v3174, %v3394
      %v3570 = vadd.f32 %v3175, %v3396
      %v3571 = vadd.f32 %v3176, %v3507
      %v3572 = vadd.f32 %v3177, %v3398
      %v3573 = vadd.f32 %v3178, %v3400
      %v3574 = vadd.f32 %v3179, %v3510
      %v3575 = vadd.f32 %v3180, %v3404
      %v3576 = vadd.f32 %v3181, %v3406
      %v3577 = vadd.f32 %v3182, %v3515
      %v3578 = vadd.f32 %v3183, %v3408
      %v3579 = vadd.f32 %v3184, %v3410
      %v3580 = vadd.f32 %v3185, %v3518
      %v3581 = vadd.f32 %v3186, %v3414
      %v3582 = vadd.f32 %v3187, %v3416
      %v3583 = vadd.f32 %v3188, %v3523
      %v3584 = vadd.f32 %v3189, %v3418
      %v3585 = vadd.f32 %v3190, %v3420
      %v3586 = vadd.f32 %v3191, %v3526
      %v3587 = vadd.f32 %v3192, %v3424
      %v3588 = vadd.f32 %v3193, %v3426
      %v3589 = vadd.f32 %v3194, %v3531
      %v3590 = vadd.f32 %v3195, %v3428
      %v3591 = vadd.f32 %v3196, %v3430
      %v3592 = vadd.f32 %v3197, %v3534
      %v3593 = vadd.f32 %v3198, %v3434
      %v3594 = vadd.f32 %v3199, %v3436
      %v3595 = vadd.f32 %v3200, %v3539
      %v3596 = vadd.f32 %v3201, %v3438
      %v3597 = vadd.f32 %v3202, %v3440
      %v3598 = vadd.f32 %v3203, %v3542
      %v3599 = vadd.f32 %v3204, %v3444
      %v3600 = vadd.f32 %v3205, %v3446
      %v3601 = vadd.f32 %v3206, %v3547
      %v3602 = vadd.f32 %v3207, %v3448
      %v3603 = vadd.f32 %v3208, %v3450
      %v3604 = vadd.f32 %v3209, %v3550
      %v3605 = vadd.f32 %v3210, %v3454
      %v3606 = vadd.f32 %v3211, %v3456
      %v3607 = vadd.f32 %v3212, %v3555
      %v3608 = vadd.f32 %v3213, %v3458
      %v3609 = vadd.f32 %v3214, %v3460
      %v3610 = vadd.f32 %v3215, %v3558
      %v3611 = vadd.f32 %v3216, %v3464
      %v3612 = vadd.f32 %v3217, %v3466
      %v3613 = vadd.f32 %v3218, %v3563
      %v3614 = vadd.f32 %v3219, %v3468
      %v3615 = vadd.f32 %v3220, %v3470
      %v3616 = vadd.f32 %v3221, %v3566
      %v3625 = vmax.bf16 %v3230, %v3256
      %v3626 = vmax.bf16 %v3231, %v3258
      %v3627 = vmax.bf16 %v3232, %v3260
      %v3628 = vmax.bf16 %v3233, %v3262
      %v3629 = vmax.bf16 %v3234, %v3264
      %v3630 = vmax.bf16 %v3235, %v3266
      %v3631 = vmax.bf16 %v3236, %v3268
      %v3632 = vmax.bf16 %v3237, %v3270
      %v3633 = vld [vmem:[#allocation2] sm:$0xe0]
      %s3634 = scalar_lea.vmem %s2, 768
      %v3635 = vld [vmem:[%s3634] sm:$0xff]
      %v3636 = vld [vmem:[%s3634 + $0x8] sm:$0xf]
      %v3637 = vld [vmem:[%s3634 + $0xc] sm:$0xff]
      %v3638 = vld [vmem:[%s3634 + $0x14] sm:$0xf]
      %v3639 = vld [vmem:[%s3634 + $0x18] sm:$0xff]
      %v3640 = vld [vmem:[%s3634 + $0x20] sm:$0xf]
      %v3641 = vld [vmem:[%s3634 + $0x24] sm:$0xff]
      %v3642 = vld [vmem:[%s3634 + $0x2c] sm:$0xf]
      %v3643 = vld [vmem:[%s3634 + $0x30] sm:$0xff]
      %v3644 = vld [vmem:[%s3634 + $0x38] sm:$0xf]
      %v3645 = vld [vmem:[%s3634 + $0x3c] sm:$0xff]
      %v3646 = vld [vmem:[%s3634 + $0x44] sm:$0xf]
      %v3647 = vld [vmem:[%s3634 + $0x48] sm:$0xff]
      %v3648 = vld [vmem:[%s3634 + $0x50] sm:$0xf]
      %v3649 = vld [vmem:[%s3634 + $0x54] sm:$0xff]
      %v3650 = vld [vmem:[%s3634 + $0x5c] sm:$0xf]
      %vm3660 = vcmask 1042432
      %v3661 = vrot.slane %v3633, 5
      %v3662 = vrot.slane %v1117, 5
      %v3663 = vsel %vm3660, %v3661, %v3662
      %v3664 = vrot.slane %v1118, 5
      %v3665 = vsel %vm3660, %v3662, %v3664
      %v3666 = vrot.slane %v1119, 5
      %v3667 = vsel %vm3660, %v3664, %v3666
      %v3668 = vrot.slane %v1120, 5
      %v3669 = vsel %vm3660, %v3666, %v3668
      %v3670 = vrot.slane %v1121, 5
      %v3671 = vsel %vm3660, %v3668, %v3670
      %v3672 = vrot.slane %v1122, 5
      %v3673 = vsel %vm3660, %v3670, %v3672
      %v3674 = vrot.slane %v1123, 5
      %v3675 = vsel %vm3660, %v3672, %v3674
      %v3676 = vrot.slane %v2812, 5
      %v3677 = vsel %vm3660, %v3674, %v3676
      %v3694 = vunpack.c.l.b16 %v3635
      %v3695 = vunpack.c.h.b16 %v3635
      %v3696 = vunpack.c.l.b16 %v3636
      %v3697 = vunpack.c.l.b16 %v3637
      %v3698 = vunpack.c.h.b16 %v3637
      %v3699 = vunpack.c.l.b16 %v3638
      %v3700 = vunpack.c.l.b16 %v3639
      %v3701 = vunpack.c.h.b16 %v3639
      %v3702 = vunpack.c.l.b16 %v3640
      %v3703 = vunpack.c.l.b16 %v3641
      %v3704 = vunpack.c.h.b16 %v3641
      %v3705 = vunpack.c.l.b16 %v3642
      %v3706 = vunpack.c.l.b16 %v3643
      %v3707 = vunpack.c.h.b16 %v3643
      %v3708 = vunpack.c.l.b16 %v3644
      %v3709 = vunpack.c.l.b16 %v3645
      %v3710 = vunpack.c.h.b16 %v3645
      %v3711 = vunpack.c.l.b16 %v3646
      %v3712 = vunpack.c.l.b16 %v3647
      %v3713 = vunpack.c.h.b16 %v3647
      %v3714 = vunpack.c.l.b16 %v3648
      %v3715 = vunpack.c.l.b16 %v3649
      %v3716 = vunpack.c.h.b16 %v3649
      %v3717 = vunpack.c.l.b16 %v3650
      %v3718 = vpack.c.b16 %v3697, %v3694
      %v3719 = vpack.c.b16 %v3698, %v3695
      %v3720 = vpack.c.b16 %v3699, %v3696
      %v3721 = vpack.c.b16 %v3703, %v3700
      %v3722 = vpack.c.b16 %v3704, %v3701
      %v3723 = vpack.c.b16 %v3705, %v3702
      %v3724 = vpack.c.b16 %v3709, %v3706
      %v3725 = vpack.c.b16 %v3710, %v3707
      %v3726 = vpack.c.b16 %v3711, %v3708
      %v3727 = vpack.c.b16 %v3715, %v3712
      %v3728 = vpack.c.b16 %v3716, %v3713
      %v3729 = vpack.c.b16 %v3717, %v3714
      %v3743 = vsel %vm567, %v3663, 0
      %v3746 = vsel %vm567, %v3665, 0
      %v3749 = vsel %vm567, %v3667, 0
      %v3752 = vsel %vm567, %v3669, 0
      %v3755 = vsel %vm567, %v3671, 0
      %v3758 = vsel %vm567, %v3673, 0
      %v3761 = vsel %vm567, %v3675, 0
      %v3764 = vsel %vm567, %v3677, 0
      %3766 = vmatprep.subr.bf16.mxu0 %v3719
      %3767 = vmatpush1.bf16.msra.mxu0 %v3718
      %3768 = vmatprep.subr.bf16.mxu0 %v3722
      %3769 = vmatpush1.bf16.msra.mxu0 %v3721
      %3770 = vmatprep.subr.bf16.mxu0 %v3725
      %3771 = vmatpush1.bf16.msra.mxu0 %v3724
      %3772 = vmatprep.subr.bf16.mxu0 %v3728
      %3773 = vmatpush1.bf16.msra.mxu0 %v3727
      %3774 = vmatprep.subr.bf16.mxu0 0
      %3775 = vmatpush1.bf16.msra.mxu0 0
      %3776 = vmatprep.subr.bf16.mxu0 0
      %3777 = vmatpush1.bf16.msra.mxu0 0
      %3778 = vmatprep.subr.bf16.mxu0 0
      %3779 = vmatpush1.bf16.msra.mxu0 0
      %3780 = vmatprep.subr.bf16.mxu0 0
      %3781 = vmatpush1.bf16.msra.mxu0 0
      %3782 = vmatprep.subr.bf16.mxu0 0
      %3783 = vmatpush1.bf16.msra.mxu0 0
      %3784 = vmatprep.subr.bf16.mxu0 0
      %3785 = vmatpush1.bf16.msra.mxu0 0
      %3786 = vmatprep.subr.bf16.mxu0 0
      %3787 = vmatpush1.bf16.msra.mxu0 0
      %3788 = vmatprep.subr.bf16.mxu0 0
      %3789 = vmatpush1.bf16.msra.mxu0 0
      %3790 = vmatprep.subr.bf16.mxu0 0
      %3791 = vmatpush1.bf16.msra.mxu0 0
      %3792 = vmatprep.subr.bf16.mxu0 0
      %3793 = vmatpush1.bf16.msra.mxu0 0
      %3794 = vmatprep.subr.bf16.mxu0 0
      %3795 = vmatpush1.bf16.msra.mxu0 0
      %3796 = vmatprep.subr.bf16.mxu0 0
      %3797 = vmatpush1.bf16.msra.mxu0 0
      %3798 = vmatprep.mubr.bf16.mxu0 0
      %3799 = vmatmul.mubr.bf16.gmra.mrb[0].mxu0 %v3743
      %v3800 = vpop.f32.mrb[0].mxu0
      %v3801 = vadd.f32 0.0, %v3800
      %v3802 = vpop.f32.mrb[0].mxu0
      %v3803 = vadd.f32 0.0, %v3802
      %v3804 = vpop.f32.mrb[0].mxu0
      %v3805 = vadd.f32 0.0, %v3804
      %v3806 = vpop.f32.mrb[0].mxu0
      %v3807 = vadd.f32 0.0, %v3806
      %3808 = vmatprep.mubr.bf16.mxu0 0
      %3809 = vmatmul.mubr.bf16.gmra.mrb[0].mxu0 %v3746
      %v3810 = vpop.f32.mrb[0].mxu0
      %v3811 = vadd.f32 0.0, %v3810
      %v3812 = vpop.f32.mrb[0].mxu0
      %v3813 = vadd.f32 0.0, %v3812
      %v3814 = vpop.f32.mrb[0].mxu0
      %v3815 = vadd.f32 0.0, %v3814
      %v3816 = vpop.f32.mrb[0].mxu0
      %v3817 = vadd.f32 0.0, %v3816
      %3818 = vmatprep.mubr.bf16.mxu0 0
      %3819 = vmatmul.mubr.bf16.gmra.mrb[0].mxu0 %v3749
      %v3820 = vpop.f32.mrb[0].mxu0
      %v3821 = vadd.f32 0.0, %v3820
      %v3822 = vpop.f32.mrb[0].mxu0
      %v3823 = vadd.f32 0.0, %v3822
      %v3824 = vpop.f32.mrb[0].mxu0
      %v3825 = vadd.f32 0.0, %v3824
      %v3826 = vpop.f32.mrb[0].mxu0
      %v3827 = vadd.f32 0.0, %v3826
      %3828 = vmatprep.mubr.bf16.mxu0 0
      %3829 = vmatmul.mubr.bf16.gmra.mrb[0].mxu0 %v3752
      %v3830 = vpop.f32.mrb[0].mxu0
      %v3831 = vadd.f32 0.0, %v3830
      %v3832 = vpop.f32.mrb[0].mxu0
      %v3833 = vadd.f32 0.0, %v3832
      %v3834 = vpop.f32.mrb[0].mxu0
      %v3835 = vadd.f32 0.0, %v3834
      %v3836 = vpop.f32.mrb[0].mxu0
      %v3837 = vadd.f32 0.0, %v3836
      %3838 = vmatprep.mubr.bf16.mxu0 0
      %3839 = vmatmul.mubr.bf16.gmra.mrb[0].mxu0 %v3755
      %v3840 = vpop.f32.mrb[0].mxu0
      %v3841 = vadd.f32 0.0, %v3840
      %v3842 = vpop.f32.mrb[0].mxu0
      %v3843 = vadd.f32 0.0, %v3842
      %v3844 = vpop.f32.mrb[0].mxu0
      %v3845 = vadd.f32 0.0, %v3844
      %v3846 = vpop.f32.mrb[0].mxu0
      %v3847 = vadd.f32 0.0, %v3846
      %3848 = vmatprep.mubr.bf16.mxu0 0
      %3849 = vmatmul.mubr.bf16.gmra.mrb[0].mxu0 %v3758
      %v3850 = vpop.f32.mrb[0].mxu0
      %v3851 = vadd.f32 0.0, %v3850
      %v3852 = vpop.f32.mrb[0].mxu0
      %v3853 = vadd.f32 0.0, %v3852
      %v3854 = vpop.f32.mrb[0].mxu0
      %v3855 = vadd.f32 0.0, %v3854
      %v3856 = vpop.f32.mrb[0].mxu0
      %v3857 = vadd.f32 0.0, %v3856
      %3858 = vmatprep.mubr.bf16.mxu0 0
      %3859 = vmatmul.mubr.bf16.gmra.mrb[0].mxu0 %v3761
      %v3860 = vpop.f32.mrb[0].mxu0
      %v3861 = vadd.f32 0.0, %v3860
      %v3862 = vpop.f32.mrb[0].mxu0
      %v3863 = vadd.f32 0.0, %v3862
      %v3864 = vpop.f32.mrb[0].mxu0
      %v3865 = vadd.f32 0.0, %v3864
      %v3866 = vpop.f32.mrb[0].mxu0
      %v3867 = vadd.f32 0.0, %v3866
      %3868 = vmatprep.mubr.bf16.mxu0 0
      %3869 = vmatmul.mubr.bf16.gmra.mrb[0].mxu0 %v3764
      %v3870 = vpop.f32.mrb[0].mxu0
      %v3871 = vadd.f32 0.0, %v3870
      %v3872 = vpop.f32.mrb[0].mxu0
      %v3873 = vadd.f32 0.0, %v3872
      %v3874 = vpop.f32.mrb[0].mxu0
      %v3875 = vadd.f32 0.0, %v3874
      %v3876 = vpop.f32.mrb[0].mxu0
      %v3877 = vadd.f32 0.0, %v3876
      %3878 = vdwg.mxu0
      %3879 = vmatprep.subr.bf16.mxu0 0
      %3880 = vmatpush1.bf16.msra.mxu0 %v3720
      %3881 = vmatprep.subr.bf16.mxu0 0
      %3882 = vmatpush1.bf16.msra.mxu0 %v3723
      %3883 = vmatprep.subr.bf16.mxu0 0
      %3884 = vmatpush1.bf16.msra.mxu0 %v3726
      %3885 = vmatprep.subr.bf16.mxu0 0
      %3886 = vmatpush1.bf16.msra.mxu0 %v3729
      %3887 = vmatprep.subr.bf16.mxu0 0
      %3888 = vmatpush1.bf16.msra.mxu0 0
      %3889 = vmatprep.subr.bf16.mxu0 0
      %3890 = vmatpush1.bf16.msra.mxu0 0
      %3891 = vmatprep.subr.bf16.mxu0 0
      %3892 = vmatpush1.bf16.msra.mxu0 0
      %3893 = vmatprep.subr.bf16.mxu0 0
      %3894 = vmatpush1.bf16.msra.mxu0 0
      %3895 = vmatprep.subr.bf16.mxu0 0
      %3896 = vmatpush1.bf16.msra.mxu0 0
      %3897 = vmatprep.subr.bf16.mxu0 0
      %3898 = vmatpush1.bf16.msra.mxu0 0
      %3899 = vmatprep.subr.bf16.mxu0 0
      %3900 = vmatpush1.bf16.msra.mxu0 0
      %3901 = vmatprep.subr.bf16.mxu0 0
      %3902 = vmatpush1.bf16.msra.mxu0 0
      %3903 = vmatprep.subr.bf16.mxu0 0
      %3904 = vmatpush1.bf16.msra.mxu0 0
      %3905 = vmatprep.subr.bf16.mxu0 0
      %3906 = vmatpush1.bf16.msra.mxu0 0
      %3907 = vmatprep.subr.bf16.mxu0 0
      %3908 = vmatpush1.bf16.msra.mxu0 0
      %3909 = vmatprep.subr.bf16.mxu0 0
      %3910 = vmatpush1.bf16.msra.mxu0 0
      %3911 = vmatprep.mubr.bf16.mxu0 0
      %3912 = vmatmul.mubr.bf16.gmra.mrb[0].mxu0 %v3743
      %v3913 = vpop.f32.mrb[0].mxu0
      %v3914 = vadd.f32 0.0, %v3913
      %v3915 = vpop.f32.mrb[0].mxu0
      %v3916 = vpop.f32.mrb[0].mxu0
      %v3917 = vadd.f32 0.0, %v3916
      %v3918 = vpop.f32.mrb[0].mxu0
      %3919 = vmatprep.mubr.bf16.mxu0 0
      %3920 = vmatmul.mubr.bf16.gmra.mrb[0].mxu0 %v3746
      %v3921 = vpop.f32.mrb[0].mxu0
      %v3922 = vadd.f32 0.0, %v3921
      %v3923 = vpop.f32.mrb[0].mxu0
      %v3924 = vpop.f32.mrb[0].mxu0
      %v3925 = vadd.f32 0.0, %v3924
      %v3926 = vpop.f32.mrb[0].mxu0
      %3927 = vmatprep.mubr.bf16.mxu0 0
      %3928 = vmatmul.mubr.bf16.gmra.mrb[0].mxu0 %v3749
      %v3929 = vpop.f32.mrb[0].mxu0
      %v3930 = vadd.f32 0.0, %v3929
      %v3931 = vpop.f32.mrb[0].mxu0
      %v3932 = vpop.f32.mrb[0].mxu0
      %v3933 = vadd.f32 0.0, %v3932
      %v3934 = vpop.f32.mrb[0].mxu0
      %3935 = vmatprep.mubr.bf16.mxu0 0
      %3936 = vmatmul.mubr.bf16.gmra.mrb[0].mxu0 %v3752
      %v3937 = vpop.f32.mrb[0].mxu0
      %v3938 = vadd.f32 0.0, %v3937
      %v3939 = vpop.f32.mrb[0].mxu0
      %v3940 = vpop.f32.mrb[0].mxu0
      %v3941 = vadd.f32 0.0, %v3940
      %v3942 = vpop.f32.mrb[0].mxu0
      %3943 = vmatprep.mubr.bf16.mxu0 0
      %3944 = vmatmul.mubr.bf16.gmra.mrb[0].mxu0 %v3755
      %v3945 = vpop.f32.mrb[0].mxu0
      %v3946 = vadd.f32 0.0, %v3945
      %v3947 = vpop.f32.mrb[0].mxu0
      %v3948 = vpop.f32.mrb[0].mxu0
      %v3949 = vadd.f32 0.0, %v3948
      %v3950 = vpop.f32.mrb[0].mxu0
      %3951 = vmatprep.mubr.bf16.mxu0 0
      %3952 = vmatmul.mubr.bf16.gmra.mrb[0].mxu0 %v3758
      %v3953 = vpop.f32.mrb[0].mxu0
      %v3954 = vadd.f32 0.0, %v3953
      %v3955 = vpop.f32.mrb[0].mxu0
      %v3956 = vpop.f32.mrb[0].mxu0
      %v3957 = vadd.f32 0.0, %v3956
      %v3958 = vpop.f32.mrb[0].mxu0
      %3959 = vmatprep.mubr.bf16.mxu0 0
      %3960 = vmatmul.mubr.bf16.gmra.mrb[0].mxu0 %v3761
      %v3961 = vpop.f32.mrb[0].mxu0
      %v3962 = vadd.f32 0.0, %v3961
      %v3963 = vpop.f32.mrb[0].mxu0
      %v3964 = vpop.f32.mrb[0].mxu0
      %v3965 = vadd.f32 0.0, %v3964
      %v3966 = vpop.f32.mrb[0].mxu0
      %3967 = vmatprep.mubr.bf16.mxu0 0
      %3968 = vmatmul.mubr.bf16.gmra.mrb[0].mxu0 %v3764
      %v3969 = vpop.f32.mrb[0].mxu0
      %v3970 = vadd.f32 0.0, %v3969
      %v3971 = vpop.f32.mrb[0].mxu0
      %v3972 = vpop.f32.mrb[0].mxu0
      %v3973 = vadd.f32 0.0, %v3972
      %v3974 = vpop.f32.mrb[0].mxu0
      %3975 = vdwg.mxu0
      %v3976 = vadd.f32 %v3569, %v3801
      %v3977 = vadd.f32 %v3570, %v3803
      %v3978 = vadd.f32 %v3571, %v3914
      %v3979 = vadd.f32 %v3572, %v3805
      %v3980 = vadd.f32 %v3573, %v3807
      %v3981 = vadd.f32 %v3574, %v3917
      %v3982 = vadd.f32 %v3575, %v3811
      %v3983 = vadd.f32 %v3576, %v3813
      %v3984 = vadd.f32 %v3577, %v3922
      %v3985 = vadd.f32 %v3578, %v3815
      %v3986 = vadd.f32 %v3579, %v3817
      %v3987 = vadd.f32 %v3580, %v3925
      %v3988 = vadd.f32 %v3581, %v3821
      %v3989 = vadd.f32 %v3582, %v3823
      %v3990 = vadd.f32 %v3583, %v3930
      %v3991 = vadd.f32 %v3584, %v3825
      %v3992 = vadd.f32 %v3585, %v3827
      %v3993 = vadd.f32 %v3586, %v3933
      %v3994 = vadd.f32 %v3587, %v3831
      %v3995 = vadd.f32 %v3588, %v3833
      %v3996 = vadd.f32 %v3589, %v3938
      %v3997 = vadd.f32 %v3590, %v3835
      %v3998 = vadd.f32 %v3591, %v3837
      %v3999 = vadd.f32 %v3592, %v3941
      %v4000 = vadd.f32 %v3593, %v3841
      %v4001 = vadd.f32 %v3594, %v3843
      %v4002 = vadd.f32 %v3595, %v3946
      %v4003 = vadd.f32 %v3596, %v3845
      %v4004 = vadd.f32 %v3597, %v3847
      %v4005 = vadd.f32 %v3598, %v3949
      %v4006 = vadd.f32 %v3599, %v3851
      %v4007 = vadd.f32 %v3600, %v3853
      %v4008 = vadd.f32 %v3601, %v3954
      %v4009 = vadd.f32 %v3602, %v3855
      %v4010 = vadd.f32 %v3603, %v3857
      %v4011 = vadd.f32 %v3604, %v3957
      %v4012 = vadd.f32 %v3605, %v3861
      %v4013 = vadd.f32 %v3606, %v3863
      %v4014 = vadd.f32 %v3607, %v3962
      %v4015 = vadd.f32 %v3608, %v3865
      %v4016 = vadd.f32 %v3609, %v3867
      %v4017 = vadd.f32 %v3610, %v3965
      %v4018 = vadd.f32 %v3611, %v3871
      %v4019 = vadd.f32 %v3612, %v3873
      %v4020 = vadd.f32 %v3613, %v3970
      %v4021 = vadd.f32 %v3614, %v3875
      %v4022 = vadd.f32 %v3615, %v3877
      %v4023 = vadd.f32 %v3616, %v3973
      %v4032 = vmax.bf16 %v3625, %v3663
      %v4033 = vmax.bf16 %v3626, %v3665
      %v4034 = vmax.bf16 %v3627, %v3667
      %v4035 = vmax.bf16 %v3628, %v3669
      %v4036 = vmax.bf16 %v3629, %v3671
      %v4037 = vmax.bf16 %v3630, %v3673
      %v4038 = vmax.bf16 %v3631, %v3675
      %v4039 = vmax.bf16 %v3632, %v3677
      %v4040 = vld [vmem:[%s3] sm:$0x7]
      %v4042 = vlaneseq
      %v4043 = vshrl.u32 %v4042, 7
      %v4044 = vsub.s32 0, %v4043
      %v4045 = vrot.slane %v4040, %v4044
      %v4046 = vlaneseq
      %v4047 = vshrl.u32 %v4046, 7
      %v4048 = vsub.s32 1, %v4047
      %v4049 = vrot.slane %v4040, %v4048
      %v4050 = vlaneseq
      %v4051 = vshrl.u32 %v4050, 7
      %v4052 = vsub.s32 2, %v4051
      %v4053 = vrot.slane %v4040, %v4052
      %v4057 = vadd.f32 %v3976, %v4045
      %v4058 = vadd.f32 %v3977, %v4049
      %v4059 = vadd.f32 %v3978, %v4053
      %v4060 = vadd.f32 %v3979, %v4045
      %v4061 = vadd.f32 %v3980, %v4049
      %v4062 = vadd.f32 %v3981, %v4053
      %v4063 = vadd.f32 %v3982, %v4045
      %v4064 = vadd.f32 %v3983, %v4049
      %v4065 = vadd.f32 %v3984, %v4053
      %v4066 = vadd.f32 %v3985, %v4045
      %v4067 = vadd.f32 %v3986, %v4049
      %v4068 = vadd.f32 %v3987, %v4053
      %v4069 = vadd.f32 %v3988, %v4045
      %v4070 = vadd.f32 %v3989, %v4049
      %v4071 = vadd.f32 %v3990, %v4053
      %v4072 = vadd.f32 %v3991, %v4045
      %v4073 = vadd.f32 %v3992, %v4049
      %v4074 = vadd.f32 %v3993, %v4053
      %v4075 = vadd.f32 %v3994, %v4045
      %v4076 = vadd.f32 %v3995, %v4049
      %v4077 = vadd.f32 %v3996, %v4053
      %v4078 = vadd.f32 %v3997, %v4045
      %v4079 = vadd.f32 %v3998, %v4049
      %v4080 = vadd.f32 %v3999, %v4053
      %v4081 = vadd.f32 %v4000, %v4045
      %v4082 = vadd.f32 %v4001, %v4049
      %v4083 = vadd.f32 %v4002, %v4053
      %v4084 = vadd.f32 %v4003, %v4045
      %v4085 = vadd.f32 %v4004, %v4049
      %v4086 = vadd.f32 %v4005, %v4053
      %v4087 = vadd.f32 %v4006, %v4045
      %v4088 = vadd.f32 %v4007, %v4049
      %v4089 = vadd.f32 %v4008, %v4053
      %v4090 = vadd.f32 %v4009, %v4045
      %v4091 = vadd.f32 %v4010, %v4049
      %v4092 = vadd.f32 %v4011, %v4053
      %v4093 = vadd.f32 %v4012, %v4045
      %v4094 = vadd.f32 %v4013, %v4049
      %v4095 = vadd.f32 %v4014, %v4053
      %v4096 = vadd.f32 %v4015, %v4045
      %v4097 = vadd.f32 %v4016, %v4049
      %v4098 = vadd.f32 %v4017, %v4053
      %v4099 = vadd.f32 %v4018, %v4045
      %v4100 = vadd.f32 %v4019, %v4049
      %v4101 = vadd.f32 %v4020, %v4053
      %v4102 = vadd.f32 %v4021, %v4045
      %v4103 = vadd.f32 %v4022, %v4049
      %v4104 = vadd.f32 %v4023, %v4053
      %v4105 = vmax.f32 %v4057, 0.0
      %v4106 = vmax.f32 %v4058, 0.0
      %v4107 = vmax.f32 %v4059, 0.0
      %v4108 = vmax.f32 %v4060, 0.0
      %v4109 = vmax.f32 %v4061, 0.0
      %v4110 = vmax.f32 %v4062, 0.0
      %v4111 = vmax.f32 %v4063, 0.0
      %v4112 = vmax.f32 %v4064, 0.0
      %v4113 = vmax.f32 %v4065, 0.0
      %v4114 = vmax.f32 %v4066, 0.0
      %v4115 = vmax.f32 %v4067, 0.0
      %v4116 = vmax.f32 %v4068, 0.0
      %v4117 = vmax.f32 %v4069, 0.0
      %v4118 = vmax.f32 %v4070, 0.0
      %v4119 = vmax.f32 %v4071, 0.0
      %v4120 = vmax.f32 %v4072, 0.0
      %v4121 = vmax.f32 %v4073, 0.0
      %v4122 = vmax.f32 %v4074, 0.0
      %v4123 = vmax.f32 %v4075, 0.0
      %v4124 = vmax.f32 %v4076, 0.0
      %v4125 = vmax.f32 %v4077, 0.0
      %v4126 = vmax.f32 %v4078, 0.0
      %v4127 = vmax.f32 %v4079, 0.0
      %v4128 = vmax.f32 %v4080, 0.0
      %v4129 = vmax.f32 %v4081, 0.0
      %v4130 = vmax.f32 %v4082, 0.0
      %v4131 = vmax.f32 %v4083, 0.0
      %v4132 = vmax.f32 %v4084, 0.0
      %v4133 = vmax.f32 %v4085, 0.0
      %v4134 = vmax.f32 %v4086, 0.0
      %v4135 = vmax.f32 %v4087, 0.0
      %v4136 = vmax.f32 %v4088, 0.0
      %v4137 = vmax.f32 %v4089, 0.0
      %v4138 = vmax.f32 %v4090, 0.0
      %v4139 = vmax.f32 %v4091, 0.0
      %v4140 = vmax.f32 %v4092, 0.0
      %v4141 = vmax.f32 %v4093, 0.0
      %v4142 = vmax.f32 %v4094, 0.0
      %v4143 = vmax.f32 %v4095, 0.0
      %v4144 = vmax.f32 %v4096, 0.0
      %v4145 = vmax.f32 %v4097, 0.0
      %v4146 = vmax.f32 %v4098, 0.0
      %v4147 = vmax.f32 %v4099, 0.0
      %v4148 = vmax.f32 %v4100, 0.0
      %v4149 = vmax.f32 %v4101, 0.0
      %v4150 = vmax.f32 %v4102, 0.0
      %v4151 = vmax.f32 %v4103, 0.0
      %v4152 = vmax.f32 %v4104, 0.0
      %v4153 = vpack.c.bf16 %v4108, %v4105
      %v4154 = vpack.c.bf16 %v4109, %v4106
      %v4155 = vpack.c.bf16 %v4110, %v4107
      %v4156 = vpack.c.bf16 %v4114, %v4111
      %v4157 = vpack.c.bf16 %v4115, %v4112
      %v4158 = vpack.c.bf16 %v4116, %v4113
      %v4159 = vpack.c.bf16 %v4120, %v4117
      %v4160 = vpack.c.bf16 %v4121, %v4118
      %v4161 = vpack.c.bf16 %v4122, %v4119
      %v4162 = vpack.c.bf16 %v4126, %v4123
      %v4163 = vpack.c.bf16 %v4127, %v4124
      %v4164 = vpack.c.bf16 %v4128, %v4125
      %v4165 = vpack.c.bf16 %v4132, %v4129
      %v4166 = vpack.c.bf16 %v4133, %v4130
      %v4167 = vpack.c.bf16 %v4134, %v4131
      %v4168 = vpack.c.bf16 %v4138, %v4135
      %v4169 = vpack.c.bf16 %v4139, %v4136
      %v4170 = vpack.c.bf16 %v4140, %v4137
      %v4171 = vpack.c.bf16 %v4144, %v4141
      %v4172 = vpack.c.bf16 %v4145, %v4142
      %v4173 = vpack.c.bf16 %v4146, %v4143
      %v4174 = vpack.c.bf16 %v4150, %v4147
      %v4175 = vpack.c.bf16 %v4151, %v4148
      %v4176 = vpack.c.bf16 %v4152, %v4149
      %v4201 = vunpack.c.l.b16 %v4153
      %v4202 = vunpack.c.l.b16 %v4154
      %v4203 = vunpack.c.l.b16 %v4155
      %v4204 = vunpack.c.h.b16 %v4153
      %v4205 = vunpack.c.h.b16 %v4154
      %v4206 = vunpack.c.h.b16 %v4155
      %v4207 = vunpack.c.l.b16 %v4156
      %v4208 = vunpack.c.l.b16 %v4157
      %v4209 = vunpack.c.l.b16 %v4158
      %v4210 = vunpack.c.h.b16 %v4156
      %v4211 = vunpack.c.h.b16 %v4157
      %v4212 = vunpack.c.h.b16 %v4158
      %v4213 = vunpack.c.l.b16 %v4159
      %v4214 = vunpack.c.l.b16 %v4160
      %v4215 = vunpack.c.l.b16 %v4161
      %v4216 = vunpack.c.h.b16 %v4159
      %v4217 = vunpack.c.h.b16 %v4160
      %v4218 = vunpack.c.h.b16 %v4161
      %v4219 = vunpack.c.l.b16 %v4162
      %v4220 = vunpack.c.l.b16 %v4163
      %v4221 = vunpack.c.l.b16 %v4164
      %v4222 = vunpack.c.h.b16 %v4162
      %v4223 = vunpack.c.h.b16 %v4163
      %v4224 = vunpack.c.h.b16 %v4164
      %v4225 = vunpack.c.l.b16 %v4165
      %v4226 = vunpack.c.l.b16 %v4166
      %v4227 = vunpack.c.l.b16 %v4167
      %v4228 = vunpack.c.h.b16 %v4165
      %v4229 = vunpack.c.h.b16 %v4166
      %v4230 = vunpack.c.h.b16 %v4167
      %v4231 = vunpack.c.l.b16 %v4168
      %v4232 = vunpack.c.l.b16 %v4169
      %v4233 = vunpack.c.l.b16 %v4170
      %v4234 = vunpack.c.h.b16 %v4168
      %v4235 = vunpack.c.h.b16 %v4169
      %v4236 = vunpack.c.h.b16 %v4170
      %v4237 = vunpack.c.l.b16 %v4171
      %v4238 = vunpack.c.l.b16 %v4172
      %v4239 = vunpack.c.l.b16 %v4173
      %v4240 = vunpack.c.h.b16 %v4171
      %v4241 = vunpack.c.h.b16 %v4172
      %v4242 = vunpack.c.h.b16 %v4173
      %v4243 = vunpack.c.l.b16 %v4174
      %v4244 = vunpack.c.l.b16 %v4175
      %v4245 = vunpack.c.l.b16 %v4176
      %v4246 = vunpack.c.h.b16 %v4174
      %v4247 = vunpack.c.h.b16 %v4175
      %v4248 = vunpack.c.h.b16 %v4176
      %v4249 = vpack.c.b16 %v4202, %v4201
      %v4250 = vpack.c.b16 %v4203, %v4203
      %v4251 = vpack.c.b16 %v4205, %v4204
      %v4252 = vpack.c.b16 %v4206, %v4206
      %v4253 = vpack.c.b16 %v4208, %v4207
      %v4254 = vpack.c.b16 %v4209, %v4209
      %v4255 = vpack.c.b16 %v4211, %v4210
      %v4256 = vpack.c.b16 %v4212, %v4212
      %v4257 = vpack.c.b16 %v4214, %v4213
      %v4258 = vpack.c.b16 %v4215, %v4215
      %v4259 = vpack.c.b16 %v4217, %v4216
      %v4260 = vpack.c.b16 %v4218, %v4218
      %v4261 = vpack.c.b16 %v4220, %v4219
      %v4262 = vpack.c.b16 %v4221, %v4221
      %v4263 = vpack.c.b16 %v4223, %v4222
      %v4264 = vpack.c.b16 %v4224, %v4224
      %v4265 = vpack.c.b16 %v4226, %v4225
      %v4266 = vpack.c.b16 %v4227, %v4227
      %v4267 = vpack.c.b16 %v4229, %v4228
      %v4268 = vpack.c.b16 %v4230, %v4230
      %v4269 = vpack.c.b16 %v4232, %v4231
      %v4270 = vpack.c.b16 %v4233, %v4233
      %v4271 = vpack.c.b16 %v4235, %v4234
      %v4272 = vpack.c.b16 %v4236, %v4236
      %v4273 = vpack.c.b16 %v4238, %v4237
      %v4274 = vpack.c.b16 %v4239, %v4239
      %v4275 = vpack.c.b16 %v4241, %v4240
      %v4276 = vpack.c.b16 %v4242, %v4242
      %v4277 = vpack.c.b16 %v4244, %v4243
      %v4278 = vpack.c.b16 %v4245, %v4245
      %v4279 = vpack.c.b16 %v4247, %v4246
      %v4280 = vpack.c.b16 %v4248, %v4248
      %4313 = vst [vmem:[%s303] sm:$0xff] %v4249
      %4314 = vst [vmem:[%s303 + $0x8] sm:$0xf] %v4250
      %4315 = vst [vmem:[%s303 + $0xc] sm:$0xff] %v4251
      %4316 = vst [vmem:[%s303 + $0x14] sm:$0xf] %v4252
      %4317 = vst [vmem:[%s303 + $0x18] sm:$0xff] %v4253
      %4318 = vst [vmem:[%s303 + $0x20] sm:$0xf] %v4254
      %4319 = vst [vmem:[%s303 + $0x24] sm:$0xff] %v4255
      %4320 = vst [vmem:[%s303 + $0x2c] sm:$0xf] %v4256
      %4321 = vst [vmem:[%s303 + $0x30] sm:$0xff] %v4257
      %4322 = vst [vmem:[%s303 + $0x38] sm:$0xf] %v4258
      %4323 = vst [vmem:[%s303 + $0x3c] sm:$0xff] %v4259
      %4324 = vst [vmem:[%s303 + $0x44] sm:$0xf] %v4260
      %4325 = vst [vmem:[%s303 + $0x48] sm:$0xff] %v4261
      %4326 = vst [vmem:[%s303 + $0x50] sm:$0xf] %v4262
      %4327 = vst [vmem:[%s303 + $0x54] sm:$0xff] %v4263
      %4328 = vst [vmem:[%s303 + $0x5c] sm:$0xf] %v4264
      %4329 = vst [vmem:[%s303 + $0x60] sm:$0xff] %v4265
      %4330 = vst [vmem:[%s303 + $0x68] sm:$0xf] %v4266
      %4331 = vst [vmem:[%s303 + $0x6c] sm:$0xff] %v4267
      %4332 = vst [vmem:[%s303 + $0x74] sm:$0xf] %v4268
      %4333 = vst [vmem:[%s303 + $0x78] sm:$0xff] %v4269
      %4334 = vst [vmem:[%s303 + $0x80] sm:$0xf] %v4270
      %4335 = vst [vmem:[%s303 + $0x84] sm:$0xff] %v4271
      %4336 = vst [vmem:[%s303 + $0x8c] sm:$0xf] %v4272
      %4337 = vst [vmem:[%s303 + $0x90] sm:$0xff] %v4273
      %4338 = vst [vmem:[%s303 + $0x98] sm:$0xf] %v4274
      %4339 = vst [vmem:[%s303 + $0x9c] sm:$0xff] %v4275
      %4340 = vst [vmem:[%s303 + $0xa4] sm:$0xf] %v4276
      %4341 = vst [vmem:[%s303 + $0xa8] sm:$0xff] %v4277
      %4342 = vst [vmem:[%s303 + $0xb0] sm:$0xf] %v4278
      %4343 = vst [vmem:[%s303 + $0xb4] sm:$0xff] %v4279
      %4344 = vst [vmem:[%s303 + $0xbc] sm:$0xf] %v4280
      %v4353 = vunpack.c.l.b16 %v4032
      %v4354 = vunpack.c.h.b16 %v4032
      %v4355 = vunpack.c.l.b16 %v4033
      %v4356 = vunpack.c.h.b16 %v4033
      %v4357 = vunpack.c.l.b16 %v4034
      %v4358 = vunpack.c.h.b16 %v4034
      %v4359 = vunpack.c.l.b16 %v4035
      %v4360 = vunpack.c.h.b16 %v4035
      %v4361 = vunpack.c.l.b16 %v4036
      %v4362 = vunpack.c.h.b16 %v4036
      %v4363 = vunpack.c.l.b16 %v4037
      %v4364 = vunpack.c.h.b16 %v4037
      %v4365 = vunpack.c.l.b16 %v4038
      %v4366 = vunpack.c.h.b16 %v4038
      %v4367 = vunpack.c.l.b16 %v4039
      %v4368 = vunpack.c.h.b16 %v4039
      %v4369 = vpack.c.b16 %v4353, %v4353
      %v4370 = vpack.c.b16 %v4354, %v4354
      %v4371 = vpack.c.b16 %v4355, %v4355
      %v4372 = vpack.c.b16 %v4356, %v4356
      %v4373 = vpack.c.b16 %v4357, %v4357
      %v4374 = vpack.c.b16 %v4358, %v4358
      %v4375 = vpack.c.b16 %v4359, %v4359
      %v4376 = vpack.c.b16 %v4360, %v4360
      %v4377 = vpack.c.b16 %v4361, %v4361
      %v4378 = vpack.c.b16 %v4362, %v4362
      %v4379 = vpack.c.b16 %v4363, %v4363
      %v4380 = vpack.c.b16 %v4364, %v4364
      %v4381 = vpack.c.b16 %v4365, %v4365
      %v4382 = vpack.c.b16 %v4366, %v4366
      %v4383 = vpack.c.b16 %v4367, %v4367
      %v4384 = vpack.c.b16 %v4368, %v4368
      %vm4401 = vcmask 519168
      %4402 = vst.msk [vmem:[%s309] sm:$0xf] %vm4401, %v4369
      %4403 = vst.msk [vmem:[%s309 + $0x4] sm:$0xf] %vm4401, %v4370
      %4404 = vst.msk [vmem:[%s309 + $0x8] sm:$0xf] %vm4401, %v4371
      %4405 = vst.msk [vmem:[%s309 + $0xc] sm:$0xf] %vm4401, %v4372
      %4406 = vst.msk [vmem:[%s309 + $0x10] sm:$0xf] %vm4401, %v4373
      %4407 = vst.msk [vmem:[%s309 + $0x14] sm:$0xf] %vm4401, %v4374
      %4408 = vst.msk [vmem:[%s309 + $0x18] sm:$0xf] %vm4401, %v4375
      %4409 = vst.msk [vmem:[%s309 + $0x1c] sm:$0xf] %vm4401, %v4376
      %4410 = vst.msk [vmem:[%s309 + $0x20] sm:$0xf] %vm4401, %v4377
      %4411 = vst.msk [vmem:[%s309 + $0x24] sm:$0xf] %vm4401, %v4378
      %4412 = vst.msk [vmem:[%s309 + $0x28] sm:$0xf] %vm4401, %v4379
      %4413 = vst.msk [vmem:[%s309 + $0x2c] sm:$0xf] %vm4401, %v4380
      %4414 = vst.msk [vmem:[%s309 + $0x30] sm:$0xf] %vm4401, %v4381
      %4415 = vst.msk [vmem:[%s309 + $0x34] sm:$0xf] %vm4401, %v4382
      %4416 = vst.msk [vmem:[%s309 + $0x38] sm:$0xf] %vm4401, %v4383
      %4417 = vst.msk [vmem:[%s309 + $0x3c] sm:$0xf] %vm4401, %v4384
      %s4418 = smul.u32 16, %s17
      %p4419 = scmp.lt.s32.totalorder %s4418, 31
      %s4420 = scalar_select %p4419, %s4418, 31
      %s4421 = smul.addr %s4420, 3
      %s4422 = smul.addr %s4421, 4
      %s4423 = scalar_lea.vmem %s4, %s4422
      %s4424 = smul.u32 16, %s17
      %p4425 = scmp.lt.s32.totalorder %s4424, 31
      %s4426 = scalar_select %p4425, %s4424, 31
      %s4427 = smul.addr %s4426, 4
      %s4428 = scalar_lea.vmem %s5, %s4427
      // Predicated region
      $region37: #{inception_b_forward.4} parent=35 // pred_check
        %p4429 = pneg %p133
      $region38: #{inception_b_forward.4} parent=35 // pred_check_branch
        %4431 = sbr.rel (%p4429) target = $region40
      $region39: #{inception_b_forward.4} parent=35 // pred_region
        %s4432 = smul.u32 16, %s17
      $region40: #{inception_b_forward.4} parent=35 // pred_fallthru
        _
      // Predicated region
      $region41: #{inception_b_forward.4} parent=35 // pred_check
        %p4433 = pneg %p159
      $region42: #{inception_b_forward.4} parent=35 // pred_check_branch
        %4435 = sbr.rel (%p4433) target = $region44
      $region43: #{inception_b_forward.4} parent=35 // pred_region
        %s4436 = smul.u32 16, %s17
      $region44: #{inception_b_forward.4} parent=35 // pred_fallthru
        _
    $region36: #{inception_b_forward.4} parent=5 // pred_fallthru
      _
    %p4437 = scmp.le.s32.totalorder 2, %s12
    // Predicated region
    $region45: #{inception_b_forward.4} parent=5 // pred_check
      %p4438 = pneg %p4437
    $region46: #{inception_b_forward.4} parent=5 // pred_check_branch
      %4440 = sbr.rel (%p4438) target = $region48
    $region47: #{inception_b_forward.4} parent=5 // pred_region
      %s4441 = ssub.s32 %s12, 2
      // Predicated region
      $region49: #{inception_b_forward.4} parent=47 // pred_check
        %p4442 = pneg %p139
      $region50: #{inception_b_forward.4} parent=47 // pred_check_branch
        %4444 = sbr.rel (%p4442) target = $region52
      $region51: #{inception_b_forward.4} parent=47 // pred_region
        %s4445 = smul.u32 16, %s18
        %p4446 = scmp.lt.s32.totalorder %s4445, 31
        %s4447 = scalar_select %p4446, %s4445, 31
        %s4448 = smul.addr %s4447, 3
        %s4449 = smul.addr %s4448, 4
        %s4450 = scalar_lea.vmem %s4, %s4449
      $region52: #{inception_b_forward.4} parent=47 // pred_fallthru
        _
      // Predicated region
      $region53: #{inception_b_forward.4} parent=47 // pred_check
        %p4451 = pneg %p165
      $region54: #{inception_b_forward.4} parent=47 // pred_check_branch
        %4453 = sbr.rel (%p4451) target = $region56
      $region55: #{inception_b_forward.4} parent=47 // pred_region
        %s4454 = smul.u32 16, %s18
        %p4455 = scmp.lt.s32.totalorder %s4454, 31
        %s4456 = scalar_select %p4455, %s4454, 31
        %s4457 = smul.addr %s4456, 4
        %s4458 = scalar_lea.vmem %s5, %s4457
      $region56: #{inception_b_forward.4} parent=47 // pred_fallthru
        _
    $region48: #{inception_b_forward.4} parent=5 // pred_fallthru
      _
  $region6: #{inception_b_forward.4} parent=0 // loop_footer
    %s16 = sadd.s32 1, %s12
  $region7: #{inception_b_forward.4} parent=0 // loop_footer_branch
    %11 = sbr.rel target = $region3
  $region8: #{inception_b_forward.4} parent=0 // loop_exit
    _

// kernel: inception_b_forward.6
$region0: #{inception_b_forward.6}
  #allocation0 [shape = 'u32[]', space=smem, size = 0x4, offset = 0x4, fixed_abs, tag = 'smem constant byte address 0x4 - core index']
  #allocation1 [shape = 'u32[144,128]{1,0:T(1,128)}', space=vmem, size = 0x12000, scoped, tag = 'internal scratch']
  #allocation2 [shape = 'bf16[192,64]{1,0:T(16,128)(2,1)}', space=vmem, size = 0xc000, scoped, tag = 'scratch operand']
  %s0 = inlined_call_operand.vmem [shape: bf16[832,64], index: 0, kind: input, shape index: {}, may-alias: {0,1}]
  %s1 = inlined_call_operand.vmem [shape: bf16[832,64], index: 1, kind: input, shape index: {}, may-alias: {0,1}]
  %s2 = inlined_call_operand.vmem [shape: bf16[9,64,96], index: 2, kind: input, shape index: {}]
  %s3 = inlined_call_operand.vmem [shape: f32[1,96], index: 3, kind: input, shape index: {}]
  %s4 = inlined_call_operand.vmem [shape: bf16[768,96], index: 4, kind: output, shape index: {}]
  %s5 = sld [smem:[#allocation0]]
  $region49: #{inception_b_forward.6} parent=0
    _
  %s7 = ssub.s32 1, %s5
  %s8 = scalar_select 0, %s7, %s5
  loop: start=0, step=1, limit=8
  $region2: #{inception_b_forward.6} parent=0 // loop_pre_header
    _
  $region3: #{inception_b_forward.6} parent=0 // loop_header
    %s10 = sphi 0, %s14
    %p11 = scmp.ge.s32.totalorder %s10, 8
    %s20 = sphi 0, %s22
    %s23 = sphi 0, %s20
    %s24 = sphi 0, %s23
    %s40 = sphi 0, %s24
    %s50 = sphi 0, %s52
    %s53 = sphi 0, %s50
    %s54 = sphi 0, %s53
    %s70 = sphi 0, %s54
    %s74 = sphi 0, %s74
    %s76 = sphi 0, %s74
    %s77 = sphi 0, %s76
    %s91 = sphi 0, %s77
    %s95 = sphi 0, %s95
    %s97 = sphi 0, %s95
    %s98 = sphi 0, %s97
    %s112 = sphi 0, %s98
    %s118 = sphi 0, %s120
    %s121 = sphi 0, %s118
    %s122 = sphi 0, %s121
    %s138 = sphi 0, %s122
  $region4: #{inception_b_forward.6} parent=0 // loop_header_branch
    %13 = sbr.rel (%p11) target = $region8
  $region5: #{inception_b_forward.6} parent=0 // loop_body
    %s15 = ssub.s32 %s10, 1
    %s16 = ssub.s32 %s10, 2
    %s17 = sadd.s32 %s10, 1
    %s18 = ssub.s32 %s10, %s17
    %p19 = scmp.eq.s32.totalorder %s18, 0
    %s21 = sadd.s32 %s20, 1
    %s22 = scalar_select %p19, %s20, %s21
    %p25 = pneg %p19
    %p26 = scmp.eq.s32.totalorder %s10, 5
    %p27 = por %p25, %p26
    %p28 = scmp.ne.s32.totalorder %s20, %s23
    %p29 = scmp.eq.s32.totalorder %s10, 0
    %p30 = por %p28, %p29
    %p31 = scmp.ne.s32.totalorder %s20, %s23
    %p32 = scmp.eq.s32.totalorder %s15, 5
    %p33 = por %p31, %p32
    %p34 = scmp.ne.s32.totalorder %s23, %s24
    %p35 = scmp.eq.s32.totalorder %s15, 0
    %p36 = por %p34, %p35
    %p37 = scmp.ne.s32.totalorder %s23, %s24
    %p38 = scmp.eq.s32.totalorder %s16, 5
    %p39 = por %p37, %p38
    %p41 = scmp.ne.s32.totalorder %s24, %s40
    %p42 = scmp.eq.s32.totalorder %s16, 0
    %p43 = por %p41, %p42
    %s44 = sadd.s32 %s10, 1
    %s45 = smul.u32 %s44, 2
    %s46 = sadd.s32 %s17, 1
    %s47 = smul.u32 %s46, 2
    %s48 = ssub.s32 %s45, %s47
    %p49 = scmp.eq.s32.totalorder %s48, 0
    %s51 = sadd.s32 %s50, 1
    %s52 = scalar_select %p49, %s50, %s51
    %p55 = pneg %p49
    %p56 = scmp.eq.s32.totalorder %s10, 5
    %p57 = por %p55, %p56
    %p58 = scmp.ne.s32.totalorder %s50, %s53
    %p59 = scmp.eq.s32.totalorder %s10, 0
    %p60 = por %p58, %p59
    %p61 = scmp.ne.s32.totalorder %s50, %s53
    %p62 = scmp.eq.s32.totalorder %s15, 5
    %p63 = por %p61, %p62
    %p64 = scmp.ne.s32.totalorder %s53, %s54
    %p65 = scmp.eq.s32.totalorder %s15, 0
    %p66 = por %p64, %p65
    %p67 = scmp.ne.s32.totalorder %s53, %s54
    %p68 = scmp.eq.s32.totalorder %s16, 5
    %p69 = por %p67, %p68
    %p71 = scmp.ne.s32.totalorder %s54, %s70
    %p72 = scmp.eq.s32.totalorder %s16, 0
    %p73 = por %p71, %p72
    %s75 = sadd.s32 %s74, 1
    %p78 = scmp.eq.s32.totalorder %s10, 5
    %p79 = scmp.ne.s32.totalorder %s74, %s76
    %p80 = scmp.eq.s32.totalorder %s10, 0
    %p81 = por %p79, %p80
    %p82 = scmp.ne.s32.totalorder %s74, %s76
    %p83 = scmp.eq.s32.totalorder %s15, 5
    %p84 = por %p82, %p83
    %p85 = scmp.ne.s32.totalorder %s76, %s77
    %p86 = scmp.eq.s32.totalorder %s15, 0
    %p87 = por %p85, %p86
    %p88 = scmp.ne.s32.totalorder %s76, %s77
    %p89 = scmp.eq.s32.totalorder %s16, 5
    %p90 = por %p88, %p89
    %p92 = scmp.ne.s32.totalorder %s77, %s91
    %p93 = scmp.eq.s32.totalorder %s16, 0
    %p94 = por %p92, %p93
    %s96 = sadd.s32 %s95, 1
    %p99 = scmp.eq.s32.totalorder %s10, 5
    %p100 = scmp.ne.s32.totalorder %s95, %s97
    %p101 = scmp.eq.s32.totalorder %s10, 0
    %p102 = por %p100, %p101
    %p103 = scmp.ne.s32.totalorder %s95, %s97
    %p104 = scmp.eq.s32.totalorder %s15, 5
    %p105 = por %p103, %p104
    %p106 = scmp.ne.s32.totalorder %s97, %s98
    %p107 = scmp.eq.s32.totalorder %s15, 0
    %p108 = por %p106, %p107
    %p109 = scmp.ne.s32.totalorder %s97, %s98
    %p110 = scmp.eq.s32.totalorder %s16, 5
    %p111 = por %p109, %p110
    %p113 = scmp.ne.s32.totalorder %s98, %s112
    %p114 = scmp.eq.s32.totalorder %s16, 0
    %p115 = por %p113, %p114
    %s116 = ssub.s32 %s10, %s17
    %p117 = scmp.eq.s32.totalorder %s116, 0
    %s119 = sadd.s32 %s118, 1
    %s120 = scalar_select %p117, %s118, %s119
    %p123 = pneg %p117
    %p124 = scmp.eq.s32.totalorder %s10, 5
    %p125 = por %p123, %p124
    %p126 = scmp.ne.s32.totalorder %s118, %s121
    %p127 = scmp.eq.s32.totalorder %s10, 0
    %p128 = por %p126, %p127
    %p129 = scmp.ne.s32.totalorder %s118, %s121
    %p130 = scmp.eq.s32.totalorder %s15, 5
    %p131 = por %p129, %p130
    %p132 = scmp.ne.s32.totalorder %s121, %s122
    %p133 = scmp.eq.s32.totalorder %s15, 0
    %p134 = por %p132, %p133
    %p135 = scmp.ne.s32.totalorder %s121, %s122
    %p136 = scmp.eq.s32.totalorder %s16, 5
    %p137 = por %p135, %p136
    %p139 = scmp.ne.s32.totalorder %s122, %s138
    %p140 = scmp.eq.s32.totalorder %s16, 0
    %p141 = por %p139, %p140
    %p142 = scmp.le.s32.totalorder 1, %s10
    %p143 = scmp.lt.s32.totalorder %s10, 7
    %p144 = pnand %p142, %p143
    %p145 = pneg %p144
    // Predicated region
    $region9: #{inception_b_forward.6} parent=5 // pred_check
      _
    $region10: #{inception_b_forward.6} parent=5 // pred_check_branch
      %147 = sbr.rel (%p144) target = $region12
    $region11: #{inception_b_forward.6} parent=5 // pred_region
      %s148 = ssub.s32 %s10, 1
      // Predicated region
      $region13: #{inception_b_forward.6} parent=11 // pred_check
        %p149 = pneg %p87
      $region14: #{inception_b_forward.6} parent=11 // pred_check_branch
        %151 = sbr.rel (%p149) target = $region16
      $region15: #{inception_b_forward.6} parent=11 // pred_region
        _
      $region16: #{inception_b_forward.6} parent=11 // pred_fallthru
        _
      // Predicated region
      $region17: #{inception_b_forward.6} parent=11 // pred_check
        %p152 = pneg %p108
      $region18: #{inception_b_forward.6} parent=11 // pred_check_branch
        %154 = sbr.rel (%p152) target = $region20
      $region19: #{inception_b_forward.6} parent=11 // pred_region
        _
      $region20: #{inception_b_forward.6} parent=11 // pred_fallthru
        _
    $region12: #{inception_b_forward.6} parent=5 // pred_fallthru
      _
    %p155 = scmp.lt.s32.totalorder %s10, 6
    // Predicated region
    $region21: #{inception_b_forward.6} parent=5 // pred_check
      %p156 = pneg %p155
    $region22: #{inception_b_forward.6} parent=5 // pred_check_branch
      %158 = sbr.rel (%p156) target = $region24
    $region23: #{inception_b_forward.6} parent=5 // pred_region
      // Predicated region
      $region25: #{inception_b_forward.6} parent=23 // pred_check
        %p159 = pneg %p30
      $region26: #{inception_b_forward.6} parent=23 // pred_check_branch
        %161 = sbr.rel (%p159) target = $region28
      $region27: #{inception_b_forward.6} parent=23 // pred_region
        %s162 = smul.u32 16, %s10
        %s163 = ssub.s32 104, %s162
        %p164 = scmp.lt.s32.totalorder %s163, 16
        %s165 = scalar_select %p164, %s163, 16
        %s166 = smul.u32 64, %s165
        %p167 = scmp.lt.s32.totalorder %s162, 103
        %s168 = scalar_select %p167, %s162, 103
        %s169 = smul.addr %s168, 4
        %s170 = scalar_lea.vmem %s0, %s169
        %s171 = smul.u32 16, %s10
        %s172 = ssub.s32 104, %s171
        %p173 = scmp.lt.s32.totalorder %s172, 16
        %s174 = scalar_select %p173, %s172, 16
        %s175 = smul.u32 64, %s174
      $region28: #{inception_b_forward.6} parent=23 // pred_fallthru
        _
      // Predicated region
      $region29: #{inception_b_forward.6} parent=23 // pred_check
        %p176 = pneg %p60
      $region30: #{inception_b_forward.6} parent=23 // pred_check_branch
        %178 = sbr.rel (%p176) target = $region32
      $region31: #{inception_b_forward.6} parent=23 // pred_region
        %s179 = sadd.s32 %s10, 1
        %s180 = smul.u32 %s179, 2
        %s181 = smul.u32 8, %s180
        %p182 = scmp.lt.s32.totalorder %s181, 103
        %s183 = scalar_select %p182, %s181, 103
        %s184 = smul.addr %s183, 4
        %s185 = scalar_lea.vmem %s1, %s184
        %s186 = sadd.s32 %s10, 1
        %s187 = smul.u32 %s186, 2
        %s188 = smul.u32 8, %s187
      $region32: #{inception_b_forward.6} parent=23 // pred_fallthru
        _
    $region24: #{inception_b_forward.6} parent=5 // pred_fallthru
      _
    %p189 = scmp.le.s32.totalorder 1, %s10
    %p190 = scmp.lt.s32.totalorder %s10, 7
    %p191 = pnand %p189, %p190
    %p192 = pneg %p191
    // Predicated region
    $region33: #{inception_b_forward.6} parent=5 // pred_check
      _
    $region34: #{inception_b_forward.6} parent=5 // pred_check_branch
      %194 = sbr.rel (%p191) target = $region36
    $region35: #{inception_b_forward.6} parent=5 // pred_region
      %s195 = ssub.s32 %s10, 1
      %s196 = smul.u32 16, %s15
      %s197 = ssub.s32 104, %s196
      %p198 = scmp.lt.s32.totalorder %s197, 16
      %s199 = scalar_select %p198, %s197, 16
      %s200 = smul.u32 64, %s199
      %p201 = scmp.lt.s32.totalorder %s196, 103
      %s202 = scalar_select %p201, %s196, 103
      %s203 = smul.addr %s202, 4
      %s204 = scalar_lea.vmem %s0, %s203
      %p205 = pneg %p36
      %p206 = pneg %p33
      %s207 = sadd.s32 %s15, 1
      %s208 = smul.u32 %s207, 2
      %s209 = smul.u32 8, %s208
      %p210 = scmp.lt.s32.totalorder %s209, 103
      %s211 = scalar_select %p210, %s209, 103
      %s212 = smul.addr %s211, 4
      %s213 = scalar_lea.vmem %s1, %s212
      %p214 = pneg %p66
      %p215 = pneg %p63
      %p216 = pneg %p87
      %p217 = pneg %p84
      %p218 = pneg %p108
      %p219 = pneg %p105
      %p220 = pneg %p134
      %p221 = pneg %p131
      %s222 = smul.u32 16, %s15
      %p223 = scmp.lt.s32.totalorder %s222, 95
      %s224 = scalar_select %p223, %s222, 95
      %s225 = smul.addr %s224, 4
      %s226 = scalar_lea.vmem %s4, %s225
      %s227 = smul.u32 16, %s15
      %s228 = ssub.s32 104, %s227
      %p229 = scmp.lt.s32.totalorder %s228, 16
      %s230 = scalar_select %p229, %s228, 16
      %s231 = smul.u32 64, %s230
      %p232 = scmp.lt.s32.totalorder %s227, 103
      %s233 = scalar_select %p232, %s227, 103
      %s234 = smul.addr %s233, 4
      %s235 = scalar_lea.vmem %s0, %s234
      %s236 = smul.u32 16, %s15
      %s237 = ssub.s32 104, %s236
      %p238 = scmp.lt.s32.totalorder %s237, 16
      %s239 = scalar_select %p238, %s237, 16
      %s240 = smul.u32 64, %s239
      %s241 = sadd.s32 %s15, 1
      %s242 = smul.u32 %s241, 2
      %s243 = smul.u32 8, %s242
      %p244 = scmp.lt.s32.totalorder %s243, 103
      %s245 = scalar_select %p244, %s243, 103
      %s246 = smul.addr %s245, 4
      %s247 = scalar_lea.vmem %s1, %s246
      %s248 = sadd.s32 %s15, 1
      %s249 = smul.u32 %s248, 2
      %s250 = smul.u32 8, %s249
      %s251 = smul.u32 16, %s15
      %p252 = scmp.lt.s32.totalorder %s251, 95
      %s253 = scalar_select %p252, %s251, 95
      %s254 = smul.addr %s253, 4
      %s255 = scalar_lea.vmem %s4, %s254
      %s256 = smul.u32 16, %s15
      %v258 = vld [vmem:[%s235] sm:$0xf]
      %v259 = vld [vmem:[%s235 + $0x4] sm:$0xf]
      %v260 = vld [vmem:[%s235 + $0x8] sm:$0xf]
      %v261 = vld [vmem:[%s235 + $0xc] sm:$0xf]
      %v262 = vld [vmem:[%s235 + $0x10] sm:$0xf]
      %v263 = vld [vmem:[%s235 + $0x14] sm:$0xf]
      %v264 = vld [vmem:[%s235 + $0x18] sm:$0xf]
      %v265 = vld [vmem:[%s235 + $0x1c] sm:$0xf]
      %v266 = vld [vmem:[%s235 + $0x20] sm:$0xf]
      %v267 = vld [vmem:[%s235 + $0x24] sm:$0xf]
      %v268 = vld [vmem:[%s235 + $0x28] sm:$0xf]
      %v269 = vld [vmem:[%s235 + $0x2c] sm:$0xf]
      %v270 = vld [vmem:[%s235 + $0x30] sm:$0xf]
      %v271 = vld [vmem:[%s235 + $0x34] sm:$0xf]
      %v272 = vld [vmem:[%s235 + $0x38] sm:$0xf]
      %v273 = vld [vmem:[%s235 + $0x3c] sm:$0xf]
      %v290 = vunpack.c.l.b16 %v258
      %v291 = vunpack.c.l.b16 %v259
      %v292 = vunpack.c.l.b16 %v260
      %v293 = vunpack.c.l.b16 %v261
      %v294 = vunpack.c.l.b16 %v262
      %v295 = vunpack.c.l.b16 %v263
      %v296 = vunpack.c.l.b16 %v264
      %v297 = vunpack.c.l.b16 %v265
      %v298 = vunpack.c.l.b16 %v266
      %v299 = vunpack.c.l.b16 %v267
      %v300 = vunpack.c.l.b16 %v268
      %v301 = vunpack.c.l.b16 %v269
      %v302 = vunpack.c.l.b16 %v270
      %v303 = vunpack.c.l.b16 %v271
      %v304 = vunpack.c.l.b16 %v272
      %v305 = vunpack.c.l.b16 %v273
      %v306 = vpack.c.b16 %v291, %v290
      %v307 = vpack.c.b16 %v293, %v292
      %v308 = vpack.c.b16 %v295, %v294
      %v309 = vpack.c.b16 %v297, %v296
      %v310 = vpack.c.b16 %v299, %v298
      %v311 = vpack.c.b16 %v301, %v300
      %v312 = vpack.c.b16 %v303, %v302
      %v313 = vpack.c.b16 %v305, %v304
      %vm322 = vcmask 523264
      %323 = vst.msk [vmem:[#allocation2] sm:$0xff] %vm322, %v306
      %324 = vst.msk [vmem:[#allocation2 + $0x8] sm:$0xff] %vm322, %v307
      %325 = vst.msk [vmem:[#allocation2 + $0x10] sm:$0xff] %vm322, %v308
      %326 = vst.msk [vmem:[#allocation2 + $0x18] sm:$0xff] %vm322, %v309
      %327 = vst.msk [vmem:[#allocation2 + $0x20] sm:$0xff] %vm322, %v310
      %328 = vst.msk [vmem:[#allocation2 + $0x28] sm:$0xff] %vm322, %v311
      %329 = vst.msk [vmem:[#allocation2 + $0x30] sm:$0xff] %vm322, %v312
      %330 = vst.msk [vmem:[#allocation2 + $0x38] sm:$0xff] %vm322, %v313
      %v331 = vld [vmem:[%s247] sm:$0xf]
      %v332 = vld [vmem:[%s247 + $0x4] sm:$0xf]
      %v333 = vld [vmem:[%s247 + $0x8] sm:$0xf]
      %v334 = vld [vmem:[%s247 + $0xc] sm:$0xf]
      %v335 = vld [vmem:[%s247 + $0x10] sm:$0xf]
      %v336 = vld [vmem:[%s247 + $0x14] sm:$0xf]
      %v337 = vld [vmem:[%s247 + $0x18] sm:$0xf]
      %v338 = vld [vmem:[%s247 + $0x1c] sm:$0xf]
      %v347 = vunpack.c.l.b16 %v331
      %v348 = vunpack.c.l.b16 %v332
      %v349 = vunpack.c.l.b16 %v333
      %v350 = vunpack.c.l.b16 %v334
      %v351 = vunpack.c.l.b16 %v335
      %v352 = vunpack.c.l.b16 %v336
      %v353 = vunpack.c.l.b16 %v337
      %v354 = vunpack.c.l.b16 %v338
      %v355 = vpack.c.b16 %v348, %v347
      %v356 = vpack.c.b16 %v350, %v349
      %v357 = vpack.c.b16 %v352, %v351
      %v358 = vpack.c.b16 %v354, %v353
      %363 = vst.msk [vmem:[#allocation2 + $0x40] sm:$0xff] %vm322, %v355
      %364 = vst.msk [vmem:[#allocation2 + $0x48] sm:$0xff] %vm322, %v356
      %365 = vst.msk [vmem:[#allocation2 + $0x50] sm:$0xff] %vm322, %v357
      %366 = vst.msk [vmem:[#allocation2 + $0x58] sm:$0xff] %vm322, %v358
      %v367 = vld [vmem:[#allocation2] sm:$0xff]
      %v368 = vld [vmem:[#allocation2 + $0x8] sm:$0xff]
      %v369 = vld [vmem:[#allocation2 + $0x10] sm:$0xff]
      %v370 = vld [vmem:[#allocation2 + $0x18] sm:$0xff]
      %v371 = vld [vmem:[#allocation2 + $0x20] sm:$0xff]
      %v372 = vld [vmem:[#allocation2 + $0x28] sm:$0xff]
      %v373 = vld [vmem:[#allocation2 + $0x30] sm:$0xff]
      %v374 = vld [vmem:[#allocation2 + $0x38] sm:$0xff]
      %v375 = vld [vmem:[%s2] sm:$0xf]
      %v376 = vld [vmem:[%s2 + $0x4] sm:$0xf]
      %v377 = vld [vmem:[%s2 + $0x8] sm:$0xf]
      %v378 = vld [vmem:[%s2 + $0xc] sm:$0xf]
      %v379 = vld [vmem:[%s2 + $0x10] sm:$0xf]
      %v380 = vld [vmem:[%s2 + $0x14] sm:$0xf]
      %v381 = vld [vmem:[%s2 + $0x18] sm:$0xf]
      %v382 = vld [vmem:[%s2 + $0x1c] sm:$0xf]
      %v383 = vld [vmem:[#allocation2 + $0x40] sm:$0x1]
      %s384 = scalar_lea.vmem %s2, 32
      %v385 = vld [vmem:[%s384] sm:$0xf]
      %v386 = vld [vmem:[%s384 + $0x4] sm:$0xf]
      %v387 = vld [vmem:[%s384 + $0x8] sm:$0xf]
      %v388 = vld [vmem:[%s384 + $0xc] sm:$0xf]
      %v389 = vld [vmem:[%s384 + $0x10] sm:$0xf]
      %v390 = vld [vmem:[%s384 + $0x14] sm:$0xf]
      %v391 = vld [vmem:[%s384 + $0x18] sm:$0xf]
      %v392 = vld [vmem:[%s384 + $0x1c] sm:$0xf]
      %vm393 = vsmask.f32 7424
      %v395 = vshrl.u32 %v367, 16
      %v397 = vshll.u32 %v367, 16
      %v399 = vrot.slane %v397, 1
      %v400 = vor.u32 %v395, %v399
      %v402 = vshll.u32 %v368, 16
      %v404 = vrot.slane %v402, 1
      %v405 = vsel %vm393, %v400, %v404
      %v406 = vshrl.u32 %v368, 16
      %v408 = vor.u32 %v406, %v404
      %v410 = vshll.u32 %v369, 16
      %v412 = vrot.slane %v410, 1
      %v413 = vsel %vm393, %v408, %v412
      %v414 = vshrl.u32 %v369, 16
      %v416 = vor.u32 %v414, %v412
      %v418 = vshll.u32 %v370, 16
      %v420 = vrot.slane %v418, 1
      %v421 = vsel %vm393, %v416, %v420
      %v422 = vshrl.u32 %v370, 16
      %v424 = vor.u32 %v422, %v420
      %v426 = vshll.u32 %v371, 16
      %v428 = vrot.slane %v426, 1
      %v429 = vsel %vm393, %v424, %v428
      %v430 = vshrl.u32 %v371, 16
      %v432 = vor.u32 %v430, %v428
      %v434 = vshll.u32 %v372, 16
      %v436 = vrot.slane %v434, 1
      %v437 = vsel %vm393, %v432, %v436
      %v438 = vshrl.u32 %v372, 16
      %v440 = vor.u32 %v438, %v436
      %v442 = vshll.u32 %v373, 16
      %v444 = vrot.slane %v442, 1
      %v445 = vsel %vm393, %v440, %v444
      %v446 = vshrl.u32 %v373, 16
      %v448 = vor.u32 %v446, %v444
      %v450 = vshll.u32 %v374, 16
      %v452 = vrot.slane %v450, 1
      %v453 = vsel %vm393, %v448, %v452
      %v454 = vshrl.u32 %v374, 16
      %v456 = vor.u32 %v454, %v452
      %v458 = vshll.u32 %v383, 16
      %v460 = vrot.slane %v458, 1
      %v461 = vsel %vm393, %v456, %v460
      %v470 = vunpack.c.l.b16 %v385
      %v471 = vunpack.c.l.b16 %v386
      %v472 = vunpack.c.l.b16 %v387
      %v473 = vunpack.c.l.b16 %v388
      %v474 = vunpack.c.l.b16 %v389
      %v475 = vunpack.c.l.b16 %v390
      %v476 = vunpack.c.l.b16 %v391
      %v477 = vunpack.c.l.b16 %v392
      %v478 = vpack.c.b16 %v471, %v470
      %v479 = vpack.c.b16 %v473, %v472
      %v480 = vpack.c.b16 %v475, %v474
      %v481 = vpack.c.b16 %v477, %v476
      %v487 = vsel %vm322, %v405, 0
      %v490 = vsel %vm322, %v413, 0
      %v493 = vsel %vm322, %v421, 0
      %v496 = vsel %vm322, %v429, 0
      %v499 = vsel %vm322, %v437, 0
      %v502 = vsel %vm322, %v445, 0
      %v505 = vsel %vm322, %v453, 0
      %v508 = vsel %vm322, %v461, 0
      %510 = vmatprep.subr.bf16.mxu0 0
      %511 = vmatpush1.bf16.msra.mxu0 %v478
      %512 = vmatprep.subr.bf16.mxu0 0
      %513 = vmatpush1.bf16.msra.mxu0 %v479
      %514 = vmatprep.subr.bf16.mxu0 0
      %515 = vmatpush1.bf16.msra.mxu0 %v480
      %516 = vmatprep.subr.bf16.mxu0 0
      %517 = vmatpush1.bf16.msra.mxu0 %v481
      %518 = vmatprep.subr.bf16.mxu0 0
      %519 = vmatpush1.bf16.msra.mxu0 0
      %520 = vmatprep.subr.bf16.mxu0 0
      %521 = vmatpush1.bf16.msra.mxu0 0
      %522 = vmatprep.subr.bf16.mxu0 0
      %523 = vmatpush1.bf16.msra.mxu0 0
      %524 = vmatprep.subr.bf16.mxu0 0
      %525 = vmatpush1.bf16.msra.mxu0 0
      %526 = vmatprep.subr.bf16.mxu0 0
      %527 = vmatpush1.bf16.msra.mxu0 0
      %528 = vmatprep.subr.bf16.mxu0 0
      %529 = vmatpush1.bf16.msra.mxu0 0
      %530 = vmatprep.subr.bf16.mxu0 0
      %531 = vmatpush1.bf16.msra.mxu0 0
      %532 = vmatprep.subr.bf16.mxu0 0
      %533 = vmatpush1.bf16.msra.mxu0 0
      %534 = vmatprep.subr.bf16.mxu0 0
      %535 = vmatpush1.bf16.msra.mxu0 0
      %536 = vmatprep.subr.bf16.mxu0 0
      %537 = vmatpush1.bf16.msra.mxu0 0
      %538 = vmatprep.subr.bf16.mxu0 0
      %539 = vmatpush1.bf16.msra.mxu0 0
      %540 = vmatprep.subr.bf16.mxu0 0
      %541 = vmatpush1.bf16.msra.mxu0 0
      %542 = vmatprep.mubr.bf16.mxu0 0
      %543 = vmatmul.mubr.bf16.gmra.mrb[0].mxu0 %v487
      %v544 = vpop.f32.mrb[0].mxu0
      %v545 = vadd.f32 0.0, %v544
      %v546 = vpop.f32.mrb[0].mxu0
      %v547 = vpop.f32.mrb[0].mxu0
      %v548 = vadd.f32 0.0, %v547
      %v549 = vpop.f32.mrb[0].mxu0
      %550 = vmatprep.mubr.bf16.mxu0 0
      %551 = vmatmul.mubr.bf16.gmra.mrb[0].mxu0 %v490
      %v552 = vpop.f32.mrb[0].mxu0
      %v553 = vadd.f32 0.0, %v552
      %v554 = vpop.f32.mrb[0].mxu0
      %v555 = vpop.f32.mrb[0].mxu0
      %v556 = vadd.f32 0.0, %v555
      %v557 = vpop.f32.mrb[0].mxu0
      %558 = vmatprep.mubr.bf16.mxu0 0
      %559 = vmatmul.mubr.bf16.gmra.mrb[0].mxu0 %v493
      %v560 = vpop.f32.mrb[0].mxu0
      %v561 = vadd.f32 0.0, %v560
      %v562 = vpop.f32.mrb[0].mxu0
      %v563 = vpop.f32.mrb[0].mxu0
      %v564 = vadd.f32 0.0, %v563
      %v565 = vpop.f32.mrb[0].mxu0
      %566 = vmatprep.mubr.bf16.mxu0 0
      %567 = vmatmul.mubr.bf16.gmra.mrb[0].mxu0 %v496
      %v568 = vpop.f32.mrb[0].mxu0
      %v569 = vadd.f32 0.0, %v568
      %v570 = vpop.f32.mrb[0].mxu0
      %v571 = vpop.f32.mrb[0].mxu0
      %v572 = vadd.f32 0.0, %v571
      %v573 = vpop.f32.mrb[0].mxu0
      %574 = vmatprep.mubr.bf16.mxu0 0
      %575 = vmatmul.mubr.bf16.gmra.mrb[0].mxu0 %v499
      %v576 = vpop.f32.mrb[0].mxu0
      %v577 = vadd.f32 0.0, %v576
      %v578 = vpop.f32.mrb[0].mxu0
      %v579 = vpop.f32.mrb[0].mxu0
      %v580 = vadd.f32 0.0, %v579
      %v581 = vpop.f32.mrb[0].mxu0
      %582 = vmatprep.mubr.bf16.mxu0 0
      %583 = vmatmul.mubr.bf16.gmra.mrb[0].mxu0 %v502
      %v584 = vpop.f32.mrb[0].mxu0
      %v585 = vadd.f32 0.0, %v584
      %v586 = vpop.f32.mrb[0].mxu0
      %v587 = vpop.f32.mrb[0].mxu0
      %v588 = vadd.f32 0.0, %v587
      %v589 = vpop.f32.mrb[0].mxu0
      %590 = vmatprep.mubr.bf16.mxu0 0
      %591 = vmatmul.mubr.bf16.gmra.mrb[0].mxu0 %v505
      %v592 = vpop.f32.mrb[0].mxu0
      %v593 = vadd.f32 0.0, %v592
      %v594 = vpop.f32.mrb[0].mxu0
      %v595 = vpop.f32.mrb[0].mxu0
      %v596 = vadd.f32 0.0, %v595
      %v597 = vpop.f32.mrb[0].mxu0
      %598 = vmatprep.mubr.bf16.mxu0 0
      %599 = vmatmul.mubr.bf16.gmra.mrb[0].mxu0 %v508
      %v600 = vpop.f32.mrb[0].mxu0
      %v601 = vadd.f32 0.0, %v600
      %v602 = vpop.f32.mrb[0].mxu0
      %v603 = vpop.f32.mrb[0].mxu0
      %v604 = vadd.f32 0.0, %v603
      %v605 = vpop.f32.mrb[0].mxu0
      %606 = vdwg.mxu0
      %v615 = vunpack.c.l.b16 %v375
      %v616 = vunpack.c.l.b16 %v376
      %v617 = vunpack.c.l.b16 %v377
      %v618 = vunpack.c.l.b16 %v378
      %v619 = vunpack.c.l.b16 %v379
      %v620 = vunpack.c.l.b16 %v380
      %v621 = vunpack.c.l.b16 %v381
      %v622 = vunpack.c.l.b16 %v382
      %v623 = vpack.c.b16 %v616, %v615
      %v624 = vpack.c.b16 %v618, %v617
      %v625 = vpack.c.b16 %v620, %v619
      %v626 = vpack.c.b16 %v622, %v621
      %v631 = vsel %vm322, %v367, 0
      %v633 = vsel %vm322, %v368, 0
      %v635 = vsel %vm322, %v369, 0
      %v637 = vsel %vm322, %v370, 0
      %v639 = vsel %vm322, %v371, 0
      %v641 = vsel %vm322, %v372, 0
      %v643 = vsel %vm322, %v373, 0
      %v645 = vsel %vm322, %v374, 0
      %647 = vmatprep.subr.bf16.mxu0 0
      %648 = vmatpush1.bf16.msra.mxu0 %v623
      %649 = vmatprep.subr.bf16.mxu0 0
      %650 = vmatpush1.bf16.msra.mxu0 %v624
      %651 = vmatprep.subr.bf16.mxu0 0
      %652 = vmatpush1.bf16.msra.mxu0 %v625
      %653 = vmatprep.subr.bf16.mxu0 0
      %654 = vmatpush1.bf16.msra.mxu0 %v626
      %655 = vmatprep.subr.bf16.mxu0 0
      %656 = vmatpush1.bf16.msra.mxu0 0
      %657 = vmatprep.subr.bf16.mxu0 0
      %658 = vmatpush1.bf16.msra.mxu0 0
      %659 = vmatprep.subr.bf16.mxu0 0
      %660 = vmatpush1.bf16.msra.mxu0 0
      %661 = vmatprep.subr.bf16.mxu0 0
      %662 = vmatpush1.bf16.msra.mxu0 0
      %663 = vmatprep.subr.bf16.mxu0 0
      %664 = vmatpush1.bf16.msra.mxu0 0
      %665 = vmatprep.subr.bf16.mxu0 0
      %666 = vmatpush1.bf16.msra.mxu0 0
      %667 = vmatprep.subr.bf16.mxu0 0
      %668 = vmatpush1.bf16.msra.mxu0 0
      %669 = vmatprep.subr.bf16.mxu0 0
      %670 = vmatpush1.bf16.msra.mxu0 0
      %671 = vmatprep.subr.bf16.mxu0 0
      %672 = vmatpush1.bf16.msra.mxu0 0
      %673 = vmatprep.subr.bf16.mxu0 0
      %674 = vmatpush1.bf16.msra.mxu0 0
      %675 = vmatprep.subr.bf16.mxu0 0
      %676 = vmatpush1.bf16.msra.mxu0 0
      %677 = vmatprep.subr.bf16.mxu0 0
      %678 = vmatpush1.bf16.msra.mxu0 0
      %679 = vmatprep.mubr.bf16.mxu0 0
      %680 = vmatmul.mubr.bf16.gmra.mrb[0].mxu0 %v631
      %v681 = vpop.f32.mrb[0].mxu0
      %v682 = vadd.f32 %v545, %v681
      %v683 = vpop.f32.mrb[0].mxu0
      %v684 = vpop.f32.mrb[0].mxu0
      %v685 = vadd.f32 %v548, %v684
      %v686 = vpop.f32.mrb[0].mxu0
      %687 = vmatprep.mubr.bf16.mxu0 0
      %688 = vmatmul.mubr.bf16.gmra.mrb[0].mxu0 %v633
      %v689 = vpop.f32.mrb[0].mxu0
      %v690 = vadd.f32 %v553, %v689
      %v691 = vpop.f32.mrb[0].mxu0
      %v692 = vpop.f32.mrb[0].mxu0
      %v693 = vadd.f32 %v556, %v692
      %v694 = vpop.f32.mrb[0].mxu0
      %695 = vmatprep.mubr.bf16.mxu0 0
      %696 = vmatmul.mubr.bf16.gmra.mrb[0].mxu0 %v635
      %v697 = vpop.f32.mrb[0].mxu0
      %v698 = vadd.f32 %v561, %v697
      %v699 = vpop.f32.mrb[0].mxu0
      %v700 = vpop.f32.mrb[0].mxu0
      %v701 = vadd.f32 %v564, %v700
      %v702 = vpop.f32.mrb[0].mxu0
      %703 = vmatprep.mubr.bf16.mxu0 0
      %704 = vmatmul.mubr.bf16.gmra.mrb[0].mxu0 %v637
      %v705 = vpop.f32.mrb[0].mxu0
      %v706 = vadd.f32 %v569, %v705
      %v707 = vpop.f32.mrb[0].mxu0
      %v708 = vpop.f32.mrb[0].mxu0
      %v709 = vadd.f32 %v572, %v708
      %v710 = vpop.f32.mrb[0].mxu0
      %711 = vmatprep.mubr.bf16.mxu0 0
      %712 = vmatmul.mubr.bf16.gmra.mrb[0].mxu0 %v639
      %v713 = vpop.f32.mrb[0].mxu0
      %v714 = vadd.f32 %v577, %v713
      %v715 = vpop.f32.mrb[0].mxu0
      %v716 = vpop.f32.mrb[0].mxu0
      %v717 = vadd.f32 %v580, %v716
      %v718 = vpop.f32.mrb[0].mxu0
      %719 = vmatprep.mubr.bf16.mxu0 0
      %720 = vmatmul.mubr.bf16.gmra.mrb[0].mxu0 %v641
      %v721 = vpop.f32.mrb[0].mxu0
      %v722 = vadd.f32 %v585, %v721
      %v723 = vpop.f32.mrb[0].mxu0
      %v724 = vpop.f32.mrb[0].mxu0
      %v725 = vadd.f32 %v588, %v724
      %v726 = vpop.f32.mrb[0].mxu0
      %727 = vmatprep.mubr.bf16.mxu0 0
      %728 = vmatmul.mubr.bf16.gmra.mrb[0].mxu0 %v643
      %v729 = vpop.f32.mrb[0].mxu0
      %v730 = vadd.f32 %v593, %v729
      %v731 = vpop.f32.mrb[0].mxu0
      %v732 = vpop.f32.mrb[0].mxu0
      %v733 = vadd.f32 %v596, %v732
      %v734 = vpop.f32.mrb[0].mxu0
      %735 = vmatprep.mubr.bf16.mxu0 0
      %736 = vmatmul.mubr.bf16.gmra.mrb[0].mxu0 %v645
      %v737 = vpop.f32.mrb[0].mxu0
      %v738 = vadd.f32 %v601, %v737
      %v739 = vpop.f32.mrb[0].mxu0
      %v740 = vpop.f32.mrb[0].mxu0
      %v741 = vadd.f32 %v604, %v740
      %v742 = vpop.f32.mrb[0].mxu0
      %743 = vdwg.mxu0
      %v744 = vld [vmem:[#allocation2] sm:$0xfe]
      %s745 = scalar_lea.vmem %s2, 64
      %v746 = vld [vmem:[%s745] sm:$0xf]
      %v747 = vld [vmem:[%s745 + $0x4] sm:$0xf]
      %v748 = vld [vmem:[%s745 + $0x8] sm:$0xf]
      %v749 = vld [vmem:[%s745 + $0xc] sm:$0xf]
      %v750 = vld [vmem:[%s745 + $0x10] sm:$0xf]
      %v751 = vld [vmem:[%s745 + $0x14] sm:$0xf]
      %v752 = vld [vmem:[%s745 + $0x18] sm:$0xf]
      %v753 = vld [vmem:[%s745 + $0x1c] sm:$0xf]
      %vm763 = vcmask 1046528
      %v764 = vrot.slane %v744, 1
      %v765 = vrot.slane %v368, 1
      %v766 = vsel %vm763, %v764, %v765
      %v767 = vrot.slane %v369, 1
      %v768 = vsel %vm763, %v765, %v767
      %v769 = vrot.slane %v370, 1
      %v770 = vsel %vm763, %v767, %v769
      %v771 = vrot.slane %v371, 1
      %v772 = vsel %vm763, %v769, %v771
      %v773 = vrot.slane %v372, 1
      %v774 = vsel %vm763, %v771, %v773
      %v775 = vrot.slane %v373, 1
      %v776 = vsel %vm763, %v773, %v775
      %v777 = vrot.slane %v374, 1
      %v778 = vsel %vm763, %v775, %v777
      %v779 = vrot.slane %v383, 1
      %v780 = vsel %vm763, %v777, %v779
      %v789 = vunpack.c.l.b16 %v746
      %v790 = vunpack.c.l.b16 %v747
      %v791 = vunpack.c.l.b16 %v748
      %v792 = vunpack.c.l.b16 %v749
      %v793 = vunpack.c.l.b16 %v750
      %v794 = vunpack.c.l.b16 %v751
      %v795 = vunpack.c.l.b16 %v752
      %v796 = vunpack.c.l.b16 %v753
      %v797 = vpack.c.b16 %v790, %v789
      %v798 = vpack.c.b16 %v792, %v791
      %v799 = vpack.c.b16 %v794, %v793
      %v800 = vpack.c.b16 %v796, %v795
      %v806 = vsel %vm322, %v766, 0
      %v809 = vsel %vm322, %v768, 0
      %v812 = vsel %vm322, %v770, 0
      %v815 = vsel %vm322, %v772, 0
      %v818 = vsel %vm322, %v774, 0
      %v821 = vsel %vm322, %v776, 0
      %v824 = vsel %vm322, %v778, 0
      %v827 = vsel %vm322, %v780, 0
      %829 = vmatprep.subr.bf16.mxu0 0
      %830 = vmatpush1.bf16.msra.mxu0 %v797
      %831 = vmatprep.subr.bf16.mxu0 0
      %832 = vmatpush1.bf16.msra.mxu0 %v798
      %833 = vmatprep.subr.bf16.mxu0 0
      %834 = vmatpush1.bf16.msra.mxu0 %v799
      %835 = vmatprep.subr.bf16.mxu0 0
      %836 = vmatpush1.bf16.msra.mxu0 %v800
      %837 = vmatprep.subr.bf16.mxu0 0
      %838 = vmatpush1.bf16.msra.mxu0 0
      %839 = vmatprep.subr.bf16.mxu0 0
      %840 = vmatpush1.bf16.msra.mxu0 0
      %841 = vmatprep.subr.bf16.mxu0 0
      %842 = vmatpush1.bf16.msra.mxu0 0
      %843 = vmatprep.subr.bf16.mxu0 0
      %844 = vmatpush1.bf16.msra.mxu0 0
      %845 = vmatprep.subr.bf16.mxu0 0
      %846 = vmatpush1.bf16.msra.mxu0 0
      %847 = vmatprep.subr.bf16.mxu0 0
      %848 = vmatpush1.bf16.msra.mxu0 0
      %849 = vmatprep.subr.bf16.mxu0 0
      %850 = vmatpush1.bf16.msra.mxu0 0
      %851 = vmatprep.subr.bf16.mxu0 0
      %852 = vmatpush1.bf16.msra.mxu0 0
      %853 = vmatprep.subr.bf16.mxu0 0
      %854 = vmatpush1.bf16.msra.mxu0 0
      %855 = vmatprep.subr.bf16.mxu0 0
      %856 = vmatpush1.bf16.msra.mxu0 0
      %857 = vmatprep.subr.bf16.mxu0 0
      %858 = vmatpush1.bf16.msra.mxu0 0
      %859 = vmatprep.subr.bf16.mxu0 0
      %860 = vmatpush1.bf16.msra.mxu0 0
      %861 = vmatprep.mubr.bf16.mxu0 0
      %862 = vmatmul.mubr.bf16.gmra.mrb[0].mxu0 %v806
      %v863 = vpop.f32.mrb[0].mxu0
      %v864 = vadd.f32 0.0, %v863
      %v865 = vpop.f32.mrb[0].mxu0
      %v866 = vpop.f32.mrb[0].mxu0
      %v867 = vadd.f32 0.0, %v866
      %v868 = vpop.f32.mrb[0].mxu0
      %869 = vmatprep.mubr.bf16.mxu0 0
      %870 = vmatmul.mubr.bf16.gmra.mrb[0].mxu0 %v809
      %v871 = vpop.f32.mrb[0].mxu0
      %v872 = vadd.f32 0.0, %v871
      %v873 = vpop.f32.mrb[0].mxu0
      %v874 = vpop.f32.mrb[0].mxu0
      %v875 = vadd.f32 0.0, %v874
      %v876 = vpop.f32.mrb[0].mxu0
      %877 = vmatprep.mubr.bf16.mxu0 0
      %878 = vmatmul.mubr.bf16.gmra.mrb[0].mxu0 %v812
      %v879 = vpop.f32.mrb[0].mxu0
      %v880 = vadd.f32 0.0, %v879
      %v881 = vpop.f32.mrb[0].mxu0
      %v882 = vpop.f32.mrb[0].mxu0
      %v883 = vadd.f32 0.0, %v882
      %v884 = vpop.f32.mrb[0].mxu0
      %885 = vmatprep.mubr.bf16.mxu0 0
      %886 = vmatmul.mubr.bf16.gmra.mrb[0].mxu0 %v815
      %v887 = vpop.f32.mrb[0].mxu0
      %v888 = vadd.f32 0.0, %v887
      %v889 = vpop.f32.mrb[0].mxu0
      %v890 = vpop.f32.mrb[0].mxu0
      %v891 = vadd.f32 0.0, %v890
      %v892 = vpop.f32.mrb[0].mxu0
      %893 = vmatprep.mubr.bf16.mxu0 0
      %894 = vmatmul.mubr.bf16.gmra.mrb[0].mxu0 %v818
      %v895 = vpop.f32.mrb[0].mxu0
      %v896 = vadd.f32 0.0, %v895
      %v897 = vpop.f32.mrb[0].mxu0
      %v898 = vpop.f32.mrb[0].mxu0
      %v899 = vadd.f32 0.0, %v898
      %v900 = vpop.f32.mrb[0].mxu0
      %901 = vmatprep.mubr.bf16.mxu0 0
      %902 = vmatmul.mubr.bf16.gmra.mrb[0].mxu0 %v821
      %v903 = vpop.f32.mrb[0].mxu0
      %v904 = vadd.f32 0.0, %v903
      %v905 = vpop.f32.mrb[0].mxu0
      %v906 = vpop.f32.mrb[0].mxu0
      %v907 = vadd.f32 0.0, %v906
      %v908 = vpop.f32.mrb[0].mxu0
      %909 = vmatprep.mubr.bf16.mxu0 0
      %910 = vmatmul.mubr.bf16.gmra.mrb[0].mxu0 %v824
      %v911 = vpop.f32.mrb[0].mxu0
      %v912 = vadd.f32 0.0, %v911
      %v913 = vpop.f32.mrb[0].mxu0
      %v914 = vpop.f32.mrb[0].mxu0
      %v915 = vadd.f32 0.0, %v914
      %v916 = vpop.f32.mrb[0].mxu0
      %917 = vmatprep.mubr.bf16.mxu0 0
      %918 = vmatmul.mubr.bf16.gmra.mrb[0].mxu0 %v827
      %v919 = vpop.f32.mrb[0].mxu0
      %v920 = vadd.f32 0.0, %v919
      %v921 = vpop.f32.mrb[0].mxu0
      %v922 = vpop.f32.mrb[0].mxu0
      %v923 = vadd.f32 0.0, %v922
      %v924 = vpop.f32.mrb[0].mxu0
      %925 = vdwg.mxu0
      %v926 = vadd.f32 %v682, %v864
      %v927 = vadd.f32 %v685, %v867
      %v928 = vadd.f32 %v690, %v872
      %v929 = vadd.f32 %v693, %v875
      %v930 = vadd.f32 %v698, %v880
      %v931 = vadd.f32 %v701, %v883
      %v932 = vadd.f32 %v706, %v888
      %v933 = vadd.f32 %v709, %v891
      %v934 = vadd.f32 %v714, %v896
      %v935 = vadd.f32 %v717, %v899
      %v936 = vadd.f32 %v722, %v904
      %v937 = vadd.f32 %v725, %v907
      %v938 = vadd.f32 %v730, %v912
      %v939 = vadd.f32 %v733, %v915
      %v940 = vadd.f32 %v738, %v920
      %v941 = vadd.f32 %v741, %v923
      %v942 = vld [vmem:[#allocation2 + $0x8] sm:$0xfe]
      %v943 = vld [vmem:[#allocation2 + $0x10] sm:$0xff]
      %v944 = vld [vmem:[#allocation2 + $0x18] sm:$0xff]
      %v945 = vld [vmem:[#allocation2 + $0x20] sm:$0xff]
      %v946 = vld [vmem:[#allocation2 + $0x28] sm:$0xff]
      %v947 = vld [vmem:[#allocation2 + $0x30] sm:$0xff]
      %v948 = vld [vmem:[#allocation2 + $0x38] sm:$0xff]
      %v949 = vld [vmem:[#allocation2 + $0x40] sm:$0xff]
      %v950 = vld [vmem:[#allocation2 + $0x48] sm:$0x3]
      %s951 = scalar_lea.vmem %s2, 96
      %v952 = vld [vmem:[%s951] sm:$0xf]
      %v953 = vld [vmem:[%s951 + $0x4] sm:$0xf]
      %v954 = vld [vmem:[%s951 + $0x8] sm:$0xf]
      %v955 = vld [vmem:[%s951 + $0xc] sm:$0xf]
      %v956 = vld [vmem:[%s951 + $0x10] sm:$0xf]
      %v957 = vld [vmem:[%s951 + $0x14] sm:$0xf]
      %v958 = vld [vmem:[%s951 + $0x18] sm:$0xf]
      %v959 = vld [vmem:[%s951 + $0x1c] sm:$0xf]
      %vm960 = vsmask.f32 6400
      %v962 = vshrl.u32 %v942, 16
      %v964 = vrot.slane %v962, 1
      %v965 = vshll.u32 %v942, 16
      %v967 = vrot.slane %v965, 2
      %v968 = vor.u32 %v964, %v967
      %v970 = vshrl.u32 %v943, 16
      %v972 = vrot.slane %v970, 1
      %v973 = vshll.u32 %v943, 16
      %v975 = vrot.slane %v973, 2
      %v976 = vor.u32 %v972, %v975
      %v977 = vsel %vm960, %v968, %v976
      %v979 = vshrl.u32 %v944, 16
      %v981 = vrot.slane %v979, 1
      %v982 = vshll.u32 %v944, 16
      %v984 = vrot.slane %v982, 2
      %v985 = vor.u32 %v981, %v984
      %v986 = vsel %vm960, %v976, %v985
      %v988 = vshrl.u32 %v945, 16
      %v990 = vrot.slane %v988, 1
      %v991 = vshll.u32 %v945, 16
      %v993 = vrot.slane %v991, 2
      %v994 = vor.u32 %v990, %v993
      %v995 = vsel %vm960, %v985, %v994
      %v997 = vshrl.u32 %v946, 16
      %v999 = vrot.slane %v997, 1
      %v1000 = vshll.u32 %v946, 16
      %v1002 = vrot.slane %v1000, 2
      %v1003 = vor.u32 %v999, %v1002
      %v1004 = vsel %vm960, %v994, %v1003
      %v1006 = vshrl.u32 %v947, 16
      %v1008 = vrot.slane %v1006, 1
      %v1009 = vshll.u32 %v947, 16
      %v1011 = vrot.slane %v1009, 2
      %v1012 = vor.u32 %v1008, %v1011
      %v1013 = vsel %vm960, %v1003, %v1012
      %v1015 = vshrl.u32 %v948, 16
      %v1017 = vrot.slane %v1015, 1
      %v1018 = vshll.u32 %v948, 16
      %v1020 = vrot.slane %v1018, 2
      %v1021 = vor.u32 %v1017, %v1020
      %v1022 = vsel %vm960, %v1012, %v1021
      %v1024 = vshrl.u32 %v949, 16
      %v1026 = vrot.slane %v1024, 1
      %v1027 = vshll.u32 %v949, 16
      %v1029 = vrot.slane %v1027, 2
      %v1030 = vor.u32 %v1026, %v1029
      %v1031 = vsel %vm960, %v1021, %v1030
      %v1033 = vshrl.u32 %v950, 16
      %v1035 = vrot.slane %v1033, 1
      %v1036 = vshll.u32 %v950, 16
      %v1038 = vrot.slane %v1036, 2
      %v1039 = vor.u32 %v1035, %v1038
      %v1040 = vsel %vm960, %v1030, %v1039
      %v1049 = vunpack.c.l.b16 %v952
      %v1050 = vunpack.c.l.b16 %v953
      %v1051 = vunpack.c.l.b16 %v954
      %v1052 = vunpack.c.l.b16 %v955
      %v1053 = vunpack.c.l.b16 %v956
      %v1054 = vunpack.c.l.b16 %v957
      %v1055 = vunpack.c.l.b16 %v958
      %v1056 = vunpack.c.l.b16 %v959
      %v1057 = vpack.c.b16 %v1050, %v1049
      %v1058 = vpack.c.b16 %v1052, %v1051
      %v1059 = vpack.c.b16 %v1054, %v1053
      %v1060 = vpack.c.b16 %v1056, %v1055
      %v1066 = vsel %vm322, %v977, 0
      %v1069 = vsel %vm322, %v986, 0
      %v1072 = vsel %vm322, %v995, 0
      %v1075 = vsel %vm322, %v1004, 0
      %v1078 = vsel %vm322, %v1013, 0
      %v1081 = vsel %vm322, %v1022, 0
      %v1084 = vsel %vm322, %v1031, 0
      %v1087 = vsel %vm322, %v1040, 0
      %1089 = vmatprep.subr.bf16.mxu0 0
      %1090 = vmatpush1.bf16.msra.mxu0 %v1057
      %1091 = vmatprep.subr.bf16.mxu0 0
      %1092 = vmatpush1.bf16.msra.mxu0 %v1058
      %1093 = vmatprep.subr.bf16.mxu0 0
      %1094 = vmatpush1.bf16.msra.mxu0 %v1059
      %1095 = vmatprep.subr.bf16.mxu0 0
      %1096 = vmatpush1.bf16.msra.mxu0 %v1060
      %1097 = vmatprep.subr.bf16.mxu0 0
      %1098 = vmatpush1.bf16.msra.mxu0 0
      %1099 = vmatprep.subr.bf16.mxu0 0
      %1100 = vmatpush1.bf16.msra.mxu0 0
      %1101 = vmatprep.subr.bf16.mxu0 0
      %1102 = vmatpush1.bf16.msra.mxu0 0
      %1103 = vmatprep.subr.bf16.mxu0 0
      %1104 = vmatpush1.bf16.msra.mxu0 0
      %1105 = vmatprep.subr.bf16.mxu0 0
      %1106 = vmatpush1.bf16.msra.mxu0 0
      %1107 = vmatprep.subr.bf16.mxu0 0
      %1108 = vmatpush1.bf16.msra.mxu0 0
      %1109 = vmatprep.subr.bf16.mxu0 0
      %1110 = vmatpush1.bf16.msra.mxu0 0
      %1111 = vmatprep.subr.bf16.mxu0 0
      %1112 = vmatpush1.bf16.msra.mxu0 0
      %1113 = vmatprep.subr.bf16.mxu0 0
      %1114 = vmatpush1.bf16.msra.mxu0 0
      %1115 = vmatprep.subr.bf16.mxu0 0
      %1116 = vmatpush1.bf16.msra.mxu0 0
      %1117 = vmatprep.subr.bf16.mxu0 0
      %1118 = vmatpush1.bf16.msra.mxu0 0
      %1119 = vmatprep.subr.bf16.mxu0 0
      %1120 = vmatpush1.bf16.msra.mxu0 0
      %1121 = vmatprep.mubr.bf16.mxu0 0
      %1122 = vmatmul.mubr.bf16.gmra.mrb[0].mxu0 %v1066
      %v1123 = vpop.f32.mrb[0].mxu0
      %v1124 = vadd.f32 0.0, %v1123
      %v1125 = vpop.f32.mrb[0].mxu0
      %v1126 = vpop.f32.mrb[0].mxu0
      %v1127 = vadd.f32 0.0, %v1126
      %v1128 = vpop.f32.mrb[0].mxu0
      %1129 = vmatprep.mubr.bf16.mxu0 0
      %1130 = vmatmul.mubr.bf16.gmra.mrb[0].mxu0 %v1069
      %v1131 = vpop.f32.mrb[0].mxu0
      %v1132 = vadd.f32 0.0, %v1131
      %v1133 = vpop.f32.mrb[0].mxu0
      %v1134 = vpop.f32.mrb[0].mxu0
      %v1135 = vadd.f32 0.0, %v1134
      %v1136 = vpop.f32.mrb[0].mxu0
      %1137 = vmatprep.mubr.bf16.mxu0 0
      %1138 = vmatmul.mubr.bf16.gmra.mrb[0].mxu0 %v1072
      %v1139 = vpop.f32.mrb[0].mxu0
      %v1140 = vadd.f32 0.0, %v1139
      %v1141 = vpop.f32.mrb[0].mxu0
      %v1142 = vpop.f32.mrb[0].mxu0
      %v1143 = vadd.f32 0.0, %v1142
      %v1144 = vpop.f32.mrb[0].mxu0
      %1145 = vmatprep.mubr.bf16.mxu0 0
      %1146 = vmatmul.mubr.bf16.gmra.mrb[0].mxu0 %v1075
      %v1147 = vpop.f32.mrb[0].mxu0
      %v1148 = vadd.f32 0.0, %v1147
      %v1149 = vpop.f32.mrb[0].mxu0
      %v1150 = vpop.f32.mrb[0].mxu0
      %v1151 = vadd.f32 0.0, %v1150
      %v1152 = vpop.f32.mrb[0].mxu0
      %1153 = vmatprep.mubr.bf16.mxu0 0
      %1154 = vmatmul.mubr.bf16.gmra.mrb[0].mxu0 %v1078
      %v1155 = vpop.f32.mrb[0].mxu0
      %v1156 = vadd.f32 0.0, %v1155
      %v1157 = vpop.f32.mrb[0].mxu0
      %v1158 = vpop.f32.mrb[0].mxu0
      %v1159 = vadd.f32 0.0, %v1158
      %v1160 = vpop.f32.mrb[0].mxu0
      %1161 = vmatprep.mubr.bf16.mxu0 0
      %1162 = vmatmul.mubr.bf16.gmra.mrb[0].mxu0 %v1081
      %v1163 = vpop.f32.mrb[0].mxu0
      %v1164 = vadd.f32 0.0, %v1163
      %v1165 = vpop.f32.mrb[0].mxu0
      %v1166 = vpop.f32.mrb[0].mxu0
      %v1167 = vadd.f32 0.0, %v1166
      %v1168 = vpop.f32.mrb[0].mxu0
      %1169 = vmatprep.mubr.bf16.mxu0 0
      %1170 = vmatmul.mubr.bf16.gmra.mrb[0].mxu0 %v1084
      %v1171 = vpop.f32.mrb[0].mxu0
      %v1172 = vadd.f32 0.0, %v1171
      %v1173 = vpop.f32.mrb[0].mxu0
      %v1174 = vpop.f32.mrb[0].mxu0
      %v1175 = vadd.f32 0.0, %v1174
      %v1176 = vpop.f32.mrb[0].mxu0
      %1177 = vmatprep.mubr.bf16.mxu0 0
      %1178 = vmatmul.mubr.bf16.gmra.mrb[0].mxu0 %v1087
      %v1179 = vpop.f32.mrb[0].mxu0
      %v1180 = vadd.f32 0.0, %v1179
      %v1181 = vpop.f32.mrb[0].mxu0
      %v1182 = vpop.f32.mrb[0].mxu0
      %v1183 = vadd.f32 0.0, %v1182
      %v1184 = vpop.f32.mrb[0].mxu0
      %1185 = vdwg.mxu0
      %v1186 = vadd.f32 %v926, %v1124
      %v1187 = vadd.f32 %v927, %v1127
      %v1188 = vadd.f32 %v928, %v1132
      %v1189 = vadd.f32 %v929, %v1135
      %v1190 = vadd.f32 %v930, %v1140
      %v1191 = vadd.f32 %v931, %v1143
      %v1192 = vadd.f32 %v932, %v1148
      %v1193 = vadd.f32 %v933, %v1151
      %v1194 = vadd.f32 %v934, %v1156
      %v1195 = vadd.f32 %v935, %v1159
      %v1196 = vadd.f32 %v936, %v1164
      %v1197 = vadd.f32 %v937, %v1167
      %v1198 = vadd.f32 %v938, %v1172
      %v1199 = vadd.f32 %v939, %v1175
      %v1200 = vadd.f32 %v940, %v1180
      %v1201 = vadd.f32 %v941, %v1183
      %v1202 = vld [vmem:[#allocation2 + $0x8] sm:$0xfc]
      %s1203 = scalar_lea.vmem %s2, 128
      %v1204 = vld [vmem:[%s1203] sm:$0xf]
      %v1205 = vld [vmem:[%s1203 + $0x4] sm:$0xf]
      %v1206 = vld [vmem:[%s1203 + $0x8] sm:$0xf]
      %v1207 = vld [vmem:[%s1203 + $0xc] sm:$0xf]
      %v1208 = vld [vmem:[%s1203 + $0x10] sm:$0xf]
      %v1209 = vld [vmem:[%s1203 + $0x14] sm:$0xf]
      %v1210 = vld [vmem:[%s1203 + $0x18] sm:$0xf]
      %v1211 = vld [vmem:[%s1203 + $0x1c] sm:$0xf]
      %vm1221 = vcmask 1045504
      %v1222 = vrot.slane %v1202, 2
      %v1223 = vrot.slane %v943, 2
      %v1224 = vsel %vm1221, %v1222, %v1223
      %v1225 = vrot.slane %v944, 2
      %v1226 = vsel %vm1221, %v1223, %v1225
      %v1227 = vrot.slane %v945, 2
      %v1228 = vsel %vm1221, %v1225, %v1227
      %v1229 = vrot.slane %v946, 2
      %v1230 = vsel %vm1221, %v1227, %v1229
      %v1231 = vrot.slane %v947, 2
      %v1232 = vsel %vm1221, %v1229, %v1231
      %v1233 = vrot.slane %v948, 2
      %v1234 = vsel %vm1221, %v1231, %v1233
      %v1235 = vrot.slane %v949, 2
      %v1236 = vsel %vm1221, %v1233, %v1235
      %v1237 = vrot.slane %v950, 2
      %v1238 = vsel %vm1221, %v1235, %v1237
      %v1247 = vunpack.c.l.b16 %v1204
      %v1248 = vunpack.c.l.b16 %v1205
      %v1249 = vunpack.c.l.b16 %v1206
      %v1250 = vunpack.c.l.b16 %v1207
      %v1251 = vunpack.c.l.b16 %v1208
      %v1252 = vunpack.c.l.b16 %v1209
      %v1253 = vunpack.c.l.b16 %v1210
      %v1254 = vunpack.c.l.b16 %v1211
      %v1255 = vpack.c.b16 %v1248, %v1247
      %v1256 = vpack.c.b16 %v1250, %v1249
      %v1257 = vpack.c.b16 %v1252, %v1251
      %v1258 = vpack.c.b16 %v1254, %v1253
      %v1264 = vsel %vm322, %v1224, 0
      %v1267 = vsel %vm322, %v1226, 0
      %v1270 = vsel %vm322, %v1228, 0
      %v1273 = vsel %vm322, %v1230, 0
      %v1276 = vsel %vm322, %v1232, 0
      %v1279 = vsel %vm322, %v1234, 0
      %v1282 = vsel %vm322, %v1236, 0
      %v1285 = vsel %vm322, %v1238, 0
      %1287 = vmatprep.subr.bf16.mxu0 0
      %1288 = vmatpush1.bf16.msra.mxu0 %v1255
      %1289 = vmatprep.subr.bf16.mxu0 0
      %1290 = vmatpush1.bf16.msra.mxu0 %v1256
      %1291 = vmatprep.subr.bf16.mxu0 0
      %1292 = vmatpush1.bf16.msra.mxu0 %v1257
      %1293 = vmatprep.subr.bf16.mxu0 0
      %1294 = vmatpush1.bf16.msra.mxu0 %v1258
      %1295 = vmatprep.subr.bf16.mxu0 0
      %1296 = vmatpush1.bf16.msra.mxu0 0
      %1297 = vmatprep.subr.bf16.mxu0 0
      %1298 = vmatpush1.bf16.msra.mxu0 0
      %1299 = vmatprep.subr.bf16.mxu0 0
      %1300 = vmatpush1.bf16.msra.mxu0 0
      %1301 = vmatprep.subr.bf16.mxu0 0
      %1302 = vmatpush1.bf16.msra.mxu0 0
      %1303 = vmatprep.subr.bf16.mxu0 0
      %1304 = vmatpush1.bf16.msra.mxu0 0
      %1305 = vmatprep.subr.bf16.mxu0 0
      %1306 = vmatpush1.bf16.msra.mxu0 0
      %1307 = vmatprep.subr.bf16.mxu0 0
      %1308 = vmatpush1.bf16.msra.mxu0 0
      %1309 = vmatprep.subr.bf16.mxu0 0
      %1310 = vmatpush1.bf16.msra.mxu0 0
      %1311 = vmatprep.subr.bf16.mxu0 0
      %1312 = vmatpush1.bf16.msra.mxu0 0
      %1313 = vmatprep.subr.bf16.mxu0 0
      %1314 = vmatpush1.bf16.msra.mxu0 0
      %1315 = vmatprep.subr.bf16.mxu0 0
      %1316 = vmatpush1.bf16.msra.mxu0 0
      %1317 = vmatprep.subr.bf16.mxu0 0
      %1318 = vmatpush1.bf16.msra.mxu0 0
      %1319 = vmatprep.mubr.bf16.mxu0 0
      %1320 = vmatmul.mubr.bf16.gmra.mrb[0].mxu0 %v1264
      %v1321 = vpop.f32.mrb[0].mxu0
      %v1322 = vadd.f32 0.0, %v1321
      %v1323 = vpop.f32.mrb[0].mxu0
      %v1324 = vpop.f32.mrb[0].mxu0
      %v1325 = vadd.f32 0.0, %v1324
      %v1326 = vpop.f32.mrb[0].mxu0
      %1327 = vmatprep.mubr.bf16.mxu0 0
      %1328 = vmatmul.mubr.bf16.gmra.mrb[0].mxu0 %v1267
      %v1329 = vpop.f32.mrb[0].mxu0
      %v1330 = vadd.f32 0.0, %v1329
      %v1331 = vpop.f32.mrb[0].mxu0
      %v1332 = vpop.f32.mrb[0].mxu0
      %v1333 = vadd.f32 0.0, %v1332
      %v1334 = vpop.f32.mrb[0].mxu0
      %1335 = vmatprep.mubr.bf16.mxu0 0
      %1336 = vmatmul.mubr.bf16.gmra.mrb[0].mxu0 %v1270
      %v1337 = vpop.f32.mrb[0].mxu0
      %v1338 = vadd.f32 0.0, %v1337
      %v1339 = vpop.f32.mrb[0].mxu0
      %v1340 = vpop.f32.mrb[0].mxu0
      %v1341 = vadd.f32 0.0, %v1340
      %v1342 = vpop.f32.mrb[0].mxu0
      %1343 = vmatprep.mubr.bf16.mxu0 0
      %1344 = vmatmul.mubr.bf16.gmra.mrb[0].mxu0 %v1273
      %v1345 = vpop.f32.mrb[0].mxu0
      %v1346 = vadd.f32 0.0, %v1345
      %v1347 = vpop.f32.mrb[0].mxu0
      %v1348 = vpop.f32.mrb[0].mxu0
      %v1349 = vadd.f32 0.0, %v1348
      %v1350 = vpop.f32.mrb[0].mxu0
      %1351 = vmatprep.mubr.bf16.mxu0 0
      %1352 = vmatmul.mubr.bf16.gmra.mrb[0].mxu0 %v1276
      %v1353 = vpop.f32.mrb[0].mxu0
      %v1354 = vadd.f32 0.0, %v1353
      %v1355 = vpop.f32.mrb[0].mxu0
      %v1356 = vpop.f32.mrb[0].mxu0
      %v1357 = vadd.f32 0.0, %v1356
      %v1358 = vpop.f32.mrb[0].mxu0
      %1359 = vmatprep.mubr.bf16.mxu0 0
      %1360 = vmatmul.mubr.bf16.gmra.mrb[0].mxu0 %v1279
      %v1361 = vpop.f32.mrb[0].mxu0
      %v1362 = vadd.f32 0.0, %v1361
      %v1363 = vpop.f32.mrb[0].mxu0
      %v1364 = vpop.f32.mrb[0].mxu0
      %v1365 = vadd.f32 0.0, %v1364
      %v1366 = vpop.f32.mrb[0].mxu0
      %1367 = vmatprep.mubr.bf16.mxu0 0
      %1368 = vmatmul.mubr.bf16.gmra.mrb[0].mxu0 %v1282
      %v1369 = vpop.f32.mrb[0].mxu0
      %v1370 = vadd.f32 0.0, %v1369
      %v1371 = vpop.f32.mrb[0].mxu0
      %v1372 = vpop.f32.mrb[0].mxu0
      %v1373 = vadd.f32 0.0, %v1372
      %v1374 = vpop.f32.mrb[0].mxu0
      %1375 = vmatprep.mubr.bf16.mxu0 0
      %1376 = vmatmul.mubr.bf16.gmra.mrb[0].mxu0 %v1285
      %v1377 = vpop.f32.mrb[0].mxu0
      %v1378 = vadd.f32 0.0, %v1377
      %v1379 = vpop.f32.mrb[0].mxu0
      %v1380 = vpop.f32.mrb[0].mxu0
      %v1381 = vadd.f32 0.0, %v1380
      %v1382 = vpop.f32.mrb[0].mxu0
      %1383 = vdwg.mxu0
      %v1384 = vadd.f32 %v1186, %v1322
      %v1385 = vadd.f32 %v1187, %v1325
      %v1386 = vadd.f32 %v1188, %v1330
      %v1387 = vadd.f32 %v1189, %v1333
      %v1388 = vadd.f32 %v1190, %v1338
      %v1389 = vadd.f32 %v1191, %v1341
      %v1390 = vadd.f32 %v1192, %v1346
      %v1391 = vadd.f32 %v1193, %v1349
      %v1392 = vadd.f32 %v1194, %v1354
      %v1393 = vadd.f32 %v1195, %v1357
      %v1394 = vadd.f32 %v1196, %v1362
      %v1395 = vadd.f32 %v1197, %v1365
      %v1396 = vadd.f32 %v1198, %v1370
      %v1397 = vadd.f32 %v1199, %v1373
      %v1398 = vadd.f32 %v1200, %v1378
      %v1399 = vadd.f32 %v1201, %v1381
      %v1400 = vld [vmem:[#allocation2 + $0x48] sm:$0x7]
      %s1401 = scalar_lea.vmem %s2, 160
      %v1402 = vld [vmem:[%s1401] sm:$0xf]
      %v1403 = vld [vmem:[%s1401 + $0x4] sm:$0xf]
      %v1404 = vld [vmem:[%s1401 + $0x8] sm:$0xf]
      %v1405 = vld [vmem:[%s1401 + $0xc] sm:$0xf]
      %v1406 = vld [vmem:[%s1401 + $0x10] sm:$0xf]
      %v1407 = vld [vmem:[%s1401 + $0x14] sm:$0xf]
      %v1408 = vld [vmem:[%s1401 + $0x18] sm:$0xf]
      %v1409 = vld [vmem:[%s1401 + $0x1c] sm:$0xf]
      %vm1410 = vsmask.f32 5376
      %v1412 = vshrl.u32 %v1202, 16
      %v1414 = vrot.slane %v1412, 2
      %v1415 = vshll.u32 %v1202, 16
      %v1417 = vrot.slane %v1415, 3
      %v1418 = vor.u32 %v1414, %v1417
      %v1419 = vrot.slane %v970, 2
      %v1420 = vrot.slane %v973, 3
      %v1421 = vor.u32 %v1419, %v1420
      %v1422 = vsel %vm1410, %v1418, %v1421
      %v1423 = vrot.slane %v979, 2
      %v1424 = vrot.slane %v982, 3
      %v1425 = vor.u32 %v1423, %v1424
      %v1426 = vsel %vm1410, %v1421, %v1425
      %v1427 = vrot.slane %v988, 2
      %v1428 = vrot.slane %v991, 3
      %v1429 = vor.u32 %v1427, %v1428
      %v1430 = vsel %vm1410, %v1425, %v1429
      %v1431 = vrot.slane %v997, 2
      %v1432 = vrot.slane %v1000, 3
      %v1433 = vor.u32 %v1431, %v1432
      %v1434 = vsel %vm1410, %v1429, %v1433
      %v1435 = vrot.slane %v1006, 2
      %v1436 = vrot.slane %v1009, 3
      %v1437 = vor.u32 %v1435, %v1436
      %v1438 = vsel %vm1410, %v1433, %v1437
      %v1439 = vrot.slane %v1015, 2
      %v1440 = vrot.slane %v1018, 3
      %v1441 = vor.u32 %v1439, %v1440
      %v1442 = vsel %vm1410, %v1437, %v1441
      %v1443 = vrot.slane %v1024, 2
      %v1444 = vrot.slane %v1027, 3
      %v1445 = vor.u32 %v1443, %v1444
      %v1446 = vsel %vm1410, %v1441, %v1445
      %v1448 = vshrl.u32 %v1400, 16
      %v1450 = vrot.slane %v1448, 2
      %v1451 = vshll.u32 %v1400, 16
      %v1453 = vrot.slane %v1451, 3
      %v1454 = vor.u32 %v1450, %v1453
      %v1455 = vsel %vm1410, %v1445, %v1454
      %v1464 = vunpack.c.l.b16 %v1402
      %v1465 = vunpack.c.l.b16 %v1403
      %v1466 = vunpack.c.l.b16 %v1404
      %v1467 = vunpack.c.l.b16 %v1405
      %v1468 = vunpack.c.l.b16 %v1406
      %v1469 = vunpack.c.l.b16 %v1407
      %v1470 = vunpack.c.l.b16 %v1408
      %v1471 = vunpack.c.l.b16 %v1409
      %v1472 = vpack.c.b16 %v1465, %v1464
      %v1473 = vpack.c.b16 %v1467, %v1466
      %v1474 = vpack.c.b16 %v1469, %v1468
      %v1475 = vpack.c.b16 %v1471, %v1470
      %v1481 = vsel %vm322, %v1422, 0
      %v1484 = vsel %vm322, %v1426, 0
      %v1487 = vsel %vm322, %v1430, 0
      %v1490 = vsel %vm322, %v1434, 0
      %v1493 = vsel %vm322, %v1438, 0
      %v1496 = vsel %vm322, %v1442, 0
      %v1499 = vsel %vm322, %v1446, 0
      %v1502 = vsel %vm322, %v1455, 0
      %1504 = vmatprep.subr.bf16.mxu0 0
      %1505 = vmatpush1.bf16.msra.mxu0 %v1472
      %1506 = vmatprep.subr.bf16.mxu0 0
      %1507 = vmatpush1.bf16.msra.mxu0 %v1473
      %1508 = vmatprep.subr.bf16.mxu0 0
      %1509 = vmatpush1.bf16.msra.mxu0 %v1474
      %1510 = vmatprep.subr.bf16.mxu0 0
      %1511 = vmatpush1.bf16.msra.mxu0 %v1475
      %1512 = vmatprep.subr.bf16.mxu0 0
      %1513 = vmatpush1.bf16.msra.mxu0 0
      %1514 = vmatprep.subr.bf16.mxu0 0
      %1515 = vmatpush1.bf16.msra.mxu0 0
      %1516 = vmatprep.subr.bf16.mxu0 0
      %1517 = vmatpush1.bf16.msra.mxu0 0
      %1518 = vmatprep.subr.bf16.mxu0 0
      %1519 = vmatpush1.bf16.msra.mxu0 0
      %1520 = vmatprep.subr.bf16.mxu0 0
      %1521 = vmatpush1.bf16.msra.mxu0 0
      %1522 = vmatprep.subr.bf16.mxu0 0
      %1523 = vmatpush1.bf16.msra.mxu0 0
      %1524 = vmatprep.subr.bf16.mxu0 0
      %1525 = vmatpush1.bf16.msra.mxu0 0
      %1526 = vmatprep.subr.bf16.mxu0 0
      %1527 = vmatpush1.bf16.msra.mxu0 0
      %1528 = vmatprep.subr.bf16.mxu0 0
      %1529 = vmatpush1.bf16.msra.mxu0 0
      %1530 = vmatprep.subr.bf16.mxu0 0
      %1531 = vmatpush1.bf16.msra.mxu0 0
      %1532 = vmatprep.subr.bf16.mxu0 0
      %1533 = vmatpush1.bf16.msra.mxu0 0
      %1534 = vmatprep.subr.bf16.mxu0 0
      %1535 = vmatpush1.bf16.msra.mxu0 0
      %1536 = vmatprep.mubr.bf16.mxu0 0
      %1537 = vmatmul.mubr.bf16.gmra.mrb[0].mxu0 %v1481
      %v1538 = vpop.f32.mrb[0].mxu0
      %v1539 = vadd.f32 0.0, %v1538
      %v1540 = vpop.f32.mrb[0].mxu0
      %v1541 = vpop.f32.mrb[0].mxu0
      %v1542 = vadd.f32 0.0, %v1541
      %v1543 = vpop.f32.mrb[0].mxu0
      %1544 = vmatprep.mubr.bf16.mxu0 0
      %1545 = vmatmul.mubr.bf16.gmra.mrb[0].mxu0 %v1484
      %v1546 = vpop.f32.mrb[0].mxu0
      %v1547 = vadd.f32 0.0, %v1546
      %v1548 = vpop.f32.mrb[0].mxu0
      %v1549 = vpop.f32.mrb[0].mxu0
      %v1550 = vadd.f32 0.0, %v1549
      %v1551 = vpop.f32.mrb[0].mxu0
      %1552 = vmatprep.mubr.bf16.mxu0 0
      %1553 = vmatmul.mubr.bf16.gmra.mrb[0].mxu0 %v1487
      %v1554 = vpop.f32.mrb[0].mxu0
      %v1555 = vadd.f32 0.0, %v1554
      %v1556 = vpop.f32.mrb[0].mxu0
      %v1557 = vpop.f32.mrb[0].mxu0
      %v1558 = vadd.f32 0.0, %v1557
      %v1559 = vpop.f32.mrb[0].mxu0
      %1560 = vmatprep.mubr.bf16.mxu0 0
      %1561 = vmatmul.mubr.bf16.gmra.mrb[0].mxu0 %v1490
      %v1562 = vpop.f32.mrb[0].mxu0
      %v1563 = vadd.f32 0.0, %v1562
      %v1564 = vpop.f32.mrb[0].mxu0
      %v1565 = vpop.f32.mrb[0].mxu0
      %v1566 = vadd.f32 0.0, %v1565
      %v1567 = vpop.f32.mrb[0].mxu0
      %1568 = vmatprep.mubr.bf16.mxu0 0
      %1569 = vmatmul.mubr.bf16.gmra.mrb[0].mxu0 %v1493
      %v1570 = vpop.f32.mrb[0].mxu0
      %v1571 = vadd.f32 0.0, %v1570
      %v1572 = vpop.f32.mrb[0].mxu0
      %v1573 = vpop.f32.mrb[0].mxu0
      %v1574 = vadd.f32 0.0, %v1573
      %v1575 = vpop.f32.mrb[0].mxu0
      %1576 = vmatprep.mubr.bf16.mxu0 0
      %1577 = vmatmul.mubr.bf16.gmra.mrb[0].mxu0 %v1496
      %v1578 = vpop.f32.mrb[0].mxu0
      %v1579 = vadd.f32 0.0, %v1578
      %v1580 = vpop.f32.mrb[0].mxu0
      %v1581 = vpop.f32.mrb[0].mxu0
      %v1582 = vadd.f32 0.0, %v1581
      %v1583 = vpop.f32.mrb[0].mxu0
      %1584 = vmatprep.mubr.bf16.mxu0 0
      %1585 = vmatmul.mubr.bf16.gmra.mrb[0].mxu0 %v1499
      %v1586 = vpop.f32.mrb[0].mxu0
      %v1587 = vadd.f32 0.0, %v1586
      %v1588 = vpop.f32.mrb[0].mxu0
      %v1589 = vpop.f32.mrb[0].mxu0
      %v1590 = vadd.f32 0.0, %v1589
      %v1591 = vpop.f32.mrb[0].mxu0
      %1592 = vmatprep.mubr.bf16.mxu0 0
      %1593 = vmatmul.mubr.bf16.gmra.mrb[0].mxu0 %v1502
      %v1594 = vpop.f32.mrb[0].mxu0
      %v1595 = vadd.f32 0.0, %v1594
      %v1596 = vpop.f32.mrb[0].mxu0
      %v1597 = vpop.f32.mrb[0].mxu0
      %v1598 = vadd.f32 0.0, %v1597
      %v1599 = vpop.f32.mrb[0].mxu0
      %1600 = vdwg.mxu0
      %v1601 = vadd.f32 %v1384, %v1539
      %v1602 = vadd.f32 %v1385, %v1542
      %v1603 = vadd.f32 %v1386, %v1547
      %v1604 = vadd.f32 %v1387, %v1550
      %v1605 = vadd.f32 %v1388, %v1555
      %v1606 = vadd.f32 %v1389, %v1558
      %v1607 = vadd.f32 %v1390, %v1563
      %v1608 = vadd.f32 %v1391, %v1566
      %v1609 = vadd.f32 %v1392, %v1571
      %v1610 = vadd.f32 %v1393, %v1574
      %v1611 = vadd.f32 %v1394, %v1579
      %v1612 = vadd.f32 %v1395, %v1582
      %v1613 = vadd.f32 %v1396, %v1587
      %v1614 = vadd.f32 %v1397, %v1590
      %v1615 = vadd.f32 %v1398, %v1595
      %v1616 = vadd.f32 %v1399, %v1598
      %v1617 = vld [vmem:[#allocation2 + $0x10] sm:$0xf8]
      %v1618 = vld [vmem:[#allocation2 + $0x18] sm:$0xff]
      %v1619 = vld [vmem:[#allocation2 + $0x20] sm:$0xff]
      %v1620 = vld [vmem:[#allocation2 + $0x28] sm:$0xff]
      %v1621 = vld [vmem:[#allocation2 + $0x30] sm:$0xff]
      %v1622 = vld [vmem:[#allocation2 + $0x38] sm:$0xff]
      %v1623 = vld [vmem:[#allocation2 + $0x40] sm:$0xff]
      %v1624 = vld [vmem:[#allocation2 + $0x48] sm:$0xff]
      %v1625 = vld [vmem:[#allocation2 + $0x50] sm:$0x7]
      %s1626 = scalar_lea.vmem %s2, 192
      %v1627 = vld [vmem:[%s1626] sm:$0xf]
      %v1628 = vld [vmem:[%s1626 + $0x4] sm:$0xf]
      %v1629 = vld [vmem:[%s1626 + $0x8] sm:$0xf]
      %v1630 = vld [vmem:[%s1626 + $0xc] sm:$0xf]
      %v1631 = vld [vmem:[%s1626 + $0x10] sm:$0xf]
      %v1632 = vld [vmem:[%s1626 + $0x14] sm:$0xf]
      %v1633 = vld [vmem:[%s1626 + $0x18] sm:$0xf]
      %v1634 = vld [vmem:[%s1626 + $0x1c] sm:$0xf]
      %vm1644 = vcmask 1044480
      %v1645 = vrot.slane %v1617, 3
      %v1646 = vrot.slane %v1618, 3
      %v1647 = vsel %vm1644, %v1645, %v1646
      %v1648 = vrot.slane %v1619, 3
      %v1649 = vsel %vm1644, %v1646, %v1648
      %v1650 = vrot.slane %v1620, 3
      %v1651 = vsel %vm1644, %v1648, %v1650
      %v1652 = vrot.slane %v1621, 3
      %v1653 = vsel %vm1644, %v1650, %v1652
      %v1654 = vrot.slane %v1622, 3
      %v1655 = vsel %vm1644, %v1652, %v1654
      %v1656 = vrot.slane %v1623, 3
      %v1657 = vsel %vm1644, %v1654, %v1656
      %v1658 = vrot.slane %v1624, 3
      %v1659 = vsel %vm1644, %v1656, %v1658
      %v1660 = vrot.slane %v1625, 3
      %v1661 = vsel %vm1644, %v1658, %v1660
      %v1670 = vunpack.c.l.b16 %v1627
      %v1671 = vunpack.c.l.b16 %v1628
      %v1672 = vunpack.c.l.b16 %v1629
      %v1673 = vunpack.c.l.b16 %v1630
      %v1674 = vunpack.c.l.b16 %v1631
      %v1675 = vunpack.c.l.b16 %v1632
      %v1676 = vunpack.c.l.b16 %v1633
      %v1677 = vunpack.c.l.b16 %v1634
      %v1678 = vpack.c.b16 %v1671, %v1670
      %v1679 = vpack.c.b16 %v1673, %v1672
      %v1680 = vpack.c.b16 %v1675, %v1674
      %v1681 = vpack.c.b16 %v1677, %v1676
      %v1687 = vsel %vm322, %v1647, 0
      %v1690 = vsel %vm322, %v1649, 0
      %v1693 = vsel %vm322, %v1651, 0
      %v1696 = vsel %vm322, %v1653, 0
      %v1699 = vsel %vm322, %v1655, 0
      %v1702 = vsel %vm322, %v1657, 0
      %v1705 = vsel %vm322, %v1659, 0
      %v1708 = vsel %vm322, %v1661, 0
      %1710 = vmatprep.subr.bf16.mxu0 0
      %1711 = vmatpush1.bf16.msra.mxu0 %v1678
      %1712 = vmatprep.subr.bf16.mxu0 0
      %1713 = vmatpush1.bf16.msra.mxu0 %v1679
      %1714 = vmatprep.subr.bf16.mxu0 0
      %1715 = vmatpush1.bf16.msra.mxu0 %v1680
      %1716 = vmatprep.subr.bf16.mxu0 0
      %1717 = vmatpush1.bf16.msra.mxu0 %v1681
      %1718 = vmatprep.subr.bf16.mxu0 0
      %1719 = vmatpush1.bf16.msra.mxu0 0
      %1720 = vmatprep.subr.bf16.mxu0 0
      %1721 = vmatpush1.bf16.msra.mxu0 0
      %1722 = vmatprep.subr.bf16.mxu0 0
      %1723 = vmatpush1.bf16.msra.mxu0 0
      %1724 = vmatprep.subr.bf16.mxu0 0
      %1725 = vmatpush1.bf16.msra.mxu0 0
      %1726 = vmatprep.subr.bf16.mxu0 0
      %1727 = vmatpush1.bf16.msra.mxu0 0
      %1728 = vmatprep.subr.bf16.mxu0 0
      %1729 = vmatpush1.bf16.msra.mxu0 0
      %1730 = vmatprep.subr.bf16.mxu0 0
      %1731 = vmatpush1.bf16.msra.mxu0 0
      %1732 = vmatprep.subr.bf16.mxu0 0
      %1733 = vmatpush1.bf16.msra.mxu0 0
      %1734 = vmatprep.subr.bf16.mxu0 0
      %1735 = vmatpush1.bf16.msra.mxu0 0
      %1736 = vmatprep.subr.bf16.mxu0 0
      %1737 = vmatpush1.bf16.msra.mxu0 0
      %1738 = vmatprep.subr.bf16.mxu0 0
      %1739 = vmatpush1.bf16.msra.mxu0 0
      %1740 = vmatprep.subr.bf16.mxu0 0
      %1741 = vmatpush1.bf16.msra.mxu0 0
      %1742 = vmatprep.mubr.bf16.mxu0 0
      %1743 = vmatmul.mubr.bf16.gmra.mrb[0].mxu0 %v1687
      %v1744 = vpop.f32.mrb[0].mxu0
      %v1745 = vadd.f32 0.0, %v1744
      %v1746 = vpop.f32.mrb[0].mxu0
      %v1747 = vpop.f32.mrb[0].mxu0
      %v1748 = vadd.f32 0.0, %v1747
      %v1749 = vpop.f32.mrb[0].mxu0
      %1750 = vmatprep.mubr.bf16.mxu0 0
      %1751 = vmatmul.mubr.bf16.gmra.mrb[0].mxu0 %v1690
      %v1752 = vpop.f32.mrb[0].mxu0
      %v1753 = vadd.f32 0.0, %v1752
      %v1754 = vpop.f32.mrb[0].mxu0
      %v1755 = vpop.f32.mrb[0].mxu0
      %v1756 = vadd.f32 0.0, %v1755
      %v1757 = vpop.f32.mrb[0].mxu0
      %1758 = vmatprep.mubr.bf16.mxu0 0
      %1759 = vmatmul.mubr.bf16.gmra.mrb[0].mxu0 %v1693
      %v1760 = vpop.f32.mrb[0].mxu0
      %v1761 = vadd.f32 0.0, %v1760
      %v1762 = vpop.f32.mrb[0].mxu0
      %v1763 = vpop.f32.mrb[0].mxu0
      %v1764 = vadd.f32 0.0, %v1763
      %v1765 = vpop.f32.mrb[0].mxu0
      %1766 = vmatprep.mubr.bf16.mxu0 0
      %1767 = vmatmul.mubr.bf16.gmra.mrb[0].mxu0 %v1696
      %v1768 = vpop.f32.mrb[0].mxu0
      %v1769 = vadd.f32 0.0, %v1768
      %v1770 = vpop.f32.mrb[0].mxu0
      %v1771 = vpop.f32.mrb[0].mxu0
      %v1772 = vadd.f32 0.0, %v1771
      %v1773 = vpop.f32.mrb[0].mxu0
      %1774 = vmatprep.mubr.bf16.mxu0 0
      %1775 = vmatmul.mubr.bf16.gmra.mrb[0].mxu0 %v1699
      %v1776 = vpop.f32.mrb[0].mxu0
      %v1777 = vadd.f32 0.0, %v1776
      %v1778 = vpop.f32.mrb[0].mxu0
      %v1779 = vpop.f32.mrb[0].mxu0
      %v1780 = vadd.f32 0.0, %v1779
      %v1781 = vpop.f32.mrb[0].mxu0
      %1782 = vmatprep.mubr.bf16.mxu0 0
      %1783 = vmatmul.mubr.bf16.gmra.mrb[0].mxu0 %v1702
      %v1784 = vpop.f32.mrb[0].mxu0
      %v1785 = vadd.f32 0.0, %v1784
      %v1786 = vpop.f32.mrb[0].mxu0
      %v1787 = vpop.f32.mrb[0].mxu0
      %v1788 = vadd.f32 0.0, %v1787
      %v1789 = vpop.f32.mrb[0].mxu0
      %1790 = vmatprep.mubr.bf16.mxu0 0
      %1791 = vmatmul.mubr.bf16.gmra.mrb[0].mxu0 %v1705
      %v1792 = vpop.f32.mrb[0].mxu0
      %v1793 = vadd.f32 0.0, %v1792
      %v1794 = vpop.f32.mrb[0].mxu0
      %v1795 = vpop.f32.mrb[0].mxu0
      %v1796 = vadd.f32 0.0, %v1795
      %v1797 = vpop.f32.mrb[0].mxu0
      %1798 = vmatprep.mubr.bf16.mxu0 0
      %1799 = vmatmul.mubr.bf16.gmra.mrb[0].mxu0 %v1708
      %v1800 = vpop.f32.mrb[0].mxu0
      %v1801 = vadd.f32 0.0, %v1800
      %v1802 = vpop.f32.mrb[0].mxu0
      %v1803 = vpop.f32.mrb[0].mxu0
      %v1804 = vadd.f32 0.0, %v1803
      %v1805 = vpop.f32.mrb[0].mxu0
      %1806 = vdwg.mxu0
      %v1807 = vadd.f32 %v1601, %v1745
      %v1808 = vadd.f32 %v1602, %v1748
      %v1809 = vadd.f32 %v1603, %v1753
      %v1810 = vadd.f32 %v1604, %v1756
      %v1811 = vadd.f32 %v1605, %v1761
      %v1812 = vadd.f32 %v1606, %v1764
      %v1813 = vadd.f32 %v1607, %v1769
      %v1814 = vadd.f32 %v1608, %v1772
      %v1815 = vadd.f32 %v1609, %v1777
      %v1816 = vadd.f32 %v1610, %v1780
      %v1817 = vadd.f32 %v1611, %v1785
      %v1818 = vadd.f32 %v1612, %v1788
      %v1819 = vadd.f32 %v1613, %v1793
      %v1820 = vadd.f32 %v1614, %v1796
      %v1821 = vadd.f32 %v1615, %v1801
      %v1822 = vadd.f32 %v1616, %v1804
      %v1823 = vld [vmem:[#allocation2 + $0x50] sm:$0xf]
      %s1824 = scalar_lea.vmem %s2, 224
      %v1825 = vld [vmem:[%s1824] sm:$0xf]
      %v1826 = vld [vmem:[%s1824 + $0x4] sm:$0xf]
      %v1827 = vld [vmem:[%s1824 + $0x8] sm:$0xf]
      %v1828 = vld [vmem:[%s1824 + $0xc] sm:$0xf]
      %v1829 = vld [vmem:[%s1824 + $0x10] sm:$0xf]
      %v1830 = vld [vmem:[%s1824 + $0x14] sm:$0xf]
      %v1831 = vld [vmem:[%s1824 + $0x18] sm:$0xf]
      %v1832 = vld [vmem:[%s1824 + $0x1c] sm:$0xf]
      %vm1833 = vsmask.f32 4352
      %v1835 = vshrl.u32 %v1617, 16
      %v1837 = vrot.slane %v1835, 3
      %v1838 = vshll.u32 %v1617, 16
      %v1840 = vrot.slane %v1838, 4
      %v1841 = vor.u32 %v1837, %v1840
      %v1843 = vshrl.u32 %v1618, 16
      %v1845 = vrot.slane %v1843, 3
      %v1846 = vshll.u32 %v1618, 16
      %v1848 = vrot.slane %v1846, 4
      %v1849 = vor.u32 %v1845, %v1848
      %v1850 = vsel %vm1833, %v1841, %v1849
      %v1852 = vshrl.u32 %v1619, 16
      %v1854 = vrot.slane %v1852, 3
      %v1855 = vshll.u32 %v1619, 16
      %v1857 = vrot.slane %v1855, 4
      %v1858 = vor.u32 %v1854, %v1857
      %v1859 = vsel %vm1833, %v1849, %v1858
      %v1861 = vshrl.u32 %v1620, 16
      %v1863 = vrot.slane %v1861, 3
      %v1864 = vshll.u32 %v1620, 16
      %v1866 = vrot.slane %v1864, 4
      %v1867 = vor.u32 %v1863, %v1866
      %v1868 = vsel %vm1833, %v1858, %v1867
      %v1870 = vshrl.u32 %v1621, 16
      %v1872 = vrot.slane %v1870, 3
      %v1873 = vshll.u32 %v1621, 16
      %v1875 = vrot.slane %v1873, 4
      %v1876 = vor.u32 %v1872, %v1875
      %v1877 = vsel %vm1833, %v1867, %v1876
      %v1879 = vshrl.u32 %v1622, 16
      %v1881 = vrot.slane %v1879, 3
      %v1882 = vshll.u32 %v1622, 16
      %v1884 = vrot.slane %v1882, 4
      %v1885 = vor.u32 %v1881, %v1884
      %v1886 = vsel %vm1833, %v1876, %v1885
      %v1888 = vshrl.u32 %v1623, 16
      %v1890 = vrot.slane %v1888, 3
      %v1891 = vshll.u32 %v1623, 16
      %v1893 = vrot.slane %v1891, 4
      %v1894 = vor.u32 %v1890, %v1893
      %v1895 = vsel %vm1833, %v1885, %v1894
      %v1897 = vshrl.u32 %v1624, 16
      %v1899 = vrot.slane %v1897, 3
      %v1900 = vshll.u32 %v1624, 16
      %v1902 = vrot.slane %v1900, 4
      %v1903 = vor.u32 %v1899, %v1902
      %v1904 = vsel %vm1833, %v1894, %v1903
      %v1906 = vshrl.u32 %v1823, 16
      %v1908 = vrot.slane %v1906, 3
      %v1909 = vshll.u32 %v1823, 16
      %v1911 = vrot.slane %v1909, 4
      %v1912 = vor.u32 %v1908, %v1911
      %v1913 = vsel %vm1833, %v1903, %v1912
      %v1922 = vunpack.c.l.b16 %v1825
      %v1923 = vunpack.c.l.b16 %v1826
      %v1924 = vunpack.c.l.b16 %v1827
      %v1925 = vunpack.c.l.b16 %v1828
      %v1926 = vunpack.c.l.b16 %v1829
      %v1927 = vunpack.c.l.b16 %v1830
      %v1928 = vunpack.c.l.b16 %v1831
      %v1929 = vunpack.c.l.b16 %v1832
      %v1930 = vpack.c.b16 %v1923, %v1922
      %v1931 = vpack.c.b16 %v1925, %v1924
      %v1932 = vpack.c.b16 %v1927, %v1926
      %v1933 = vpack.c.b16 %v1929, %v1928
      %v1939 = vsel %vm322, %v1850, 0
      %v1942 = vsel %vm322, %v1859, 0
      %v1945 = vsel %vm322, %v1868, 0
      %v1948 = vsel %vm322, %v1877, 0
      %v1951 = vsel %vm322, %v1886, 0
      %v1954 = vsel %vm322, %v1895, 0
      %v1957 = vsel %vm322, %v1904, 0
      %v1960 = vsel %vm322, %v1913, 0
      %1962 = vmatprep.subr.bf16.mxu0 0
      %1963 = vmatpush1.bf16.msra.mxu0 %v1930
      %1964 = vmatprep.subr.bf16.mxu0 0
      %1965 = vmatpush1.bf16.msra.mxu0 %v1931
      %1966 = vmatprep.subr.bf16.mxu0 0
      %1967 = vmatpush1.bf16.msra.mxu0 %v1932
      %1968 = vmatprep.subr.bf16.mxu0 0
      %1969 = vmatpush1.bf16.msra.mxu0 %v1933
      %1970 = vmatprep.subr.bf16.mxu0 0
      %1971 = vmatpush1.bf16.msra.mxu0 0
      %1972 = vmatprep.subr.bf16.mxu0 0
      %1973 = vmatpush1.bf16.msra.mxu0 0
      %1974 = vmatprep.subr.bf16.mxu0 0
      %1975 = vmatpush1.bf16.msra.mxu0 0
      %1976 = vmatprep.subr.bf16.mxu0 0
      %1977 = vmatpush1.bf16.msra.mxu0 0
      %1978 = vmatprep.subr.bf16.mxu0 0
      %1979 = vmatpush1.bf16.msra.mxu0 0
      %1980 = vmatprep.subr.bf16.mxu0 0
      %1981 = vmatpush1.bf16.msra.mxu0 0
      %1982 = vmatprep.subr.bf16.mxu0 0
      %1983 = vmatpush1.bf16.msra.mxu0 0
      %1984 = vmatprep.subr.bf16.mxu0 0
      %1985 = vmatpush1.bf16.msra.mxu0 0
      %1986 = vmatprep.subr.bf16.mxu0 0
      %1987 = vmatpush1.bf16.msra.mxu0 0
      %1988 = vmatprep.subr.bf16.mxu0 0
      %1989 = vmatpush1.bf16.msra.mxu0 0
      %1990 = vmatprep.subr.bf16.mxu0 0
      %1991 = vmatpush1.bf16.msra.mxu0 0
      %1992 = vmatprep.subr.bf16.mxu0 0
      %1993 = vmatpush1.bf16.msra.mxu0 0
      %1994 = vmatprep.mubr.bf16.mxu0 0
      %1995 = vmatmul.mubr.bf16.gmra.mrb[0].mxu0 %v1939
      %v1996 = vpop.f32.mrb[0].mxu0
      %v1997 = vadd.f32 0.0, %v1996
      %v1998 = vpop.f32.mrb[0].mxu0
      %v1999 = vpop.f32.mrb[0].mxu0
      %v2000 = vadd.f32 0.0, %v1999
      %v2001 = vpop.f32.mrb[0].mxu0
      %2002 = vmatprep.mubr.bf16.mxu0 0
      %2003 = vmatmul.mubr.bf16.gmra.mrb[0].mxu0 %v1942
      %v2004 = vpop.f32.mrb[0].mxu0
      %v2005 = vadd.f32 0.0, %v2004
      %v2006 = vpop.f32.mrb[0].mxu0
      %v2007 = vpop.f32.mrb[0].mxu0
      %v2008 = vadd.f32 0.0, %v2007
      %v2009 = vpop.f32.mrb[0].mxu0
      %2010 = vmatprep.mubr.bf16.mxu0 0
      %2011 = vmatmul.mubr.bf16.gmra.mrb[0].mxu0 %v1945
      %v2012 = vpop.f32.mrb[0].mxu0
      %v2013 = vadd.f32 0.0, %v2012
      %v2014 = vpop.f32.mrb[0].mxu0
      %v2015 = vpop.f32.mrb[0].mxu0
      %v2016 = vadd.f32 0.0, %v2015
      %v2017 = vpop.f32.mrb[0].mxu0
      %2018 = vmatprep.mubr.bf16.mxu0 0
      %2019 = vmatmul.mubr.bf16.gmra.mrb[0].mxu0 %v1948
      %v2020 = vpop.f32.mrb[0].mxu0
      %v2021 = vadd.f32 0.0, %v2020
      %v2022 = vpop.f32.mrb[0].mxu0
      %v2023 = vpop.f32.mrb[0].mxu0
      %v2024 = vadd.f32 0.0, %v2023
      %v2025 = vpop.f32.mrb[0].mxu0
      %2026 = vmatprep.mubr.bf16.mxu0 0
      %2027 = vmatmul.mubr.bf16.gmra.mrb[0].mxu0 %v1951
      %v2028 = vpop.f32.mrb[0].mxu0
      %v2029 = vadd.f32 0.0, %v2028
      %v2030 = vpop.f32.mrb[0].mxu0
      %v2031 = vpop.f32.mrb[0].mxu0
      %v2032 = vadd.f32 0.0, %v2031
      %v2033 = vpop.f32.mrb[0].mxu0
      %2034 = vmatprep.mubr.bf16.mxu0 0
      %2035 = vmatmul.mubr.bf16.gmra.mrb[0].mxu0 %v1954
      %v2036 = vpop.f32.mrb[0].mxu0
      %v2037 = vadd.f32 0.0, %v2036
      %v2038 = vpop.f32.mrb[0].mxu0
      %v2039 = vpop.f32.mrb[0].mxu0
      %v2040 = vadd.f32 0.0, %v2039
      %v2041 = vpop.f32.mrb[0].mxu0
      %2042 = vmatprep.mubr.bf16.mxu0 0
      %2043 = vmatmul.mubr.bf16.gmra.mrb[0].mxu0 %v1957
      %v2044 = vpop.f32.mrb[0].mxu0
      %v2045 = vadd.f32 0.0, %v2044
      %v2046 = vpop.f32.mrb[0].mxu0
      %v2047 = vpop.f32.mrb[0].mxu0
      %v2048 = vadd.f32 0.0, %v2047
      %v2049 = vpop.f32.mrb[0].mxu0
      %2050 = vmatprep.mubr.bf16.mxu0 0
      %2051 = vmatmul.mubr.bf16.gmra.mrb[0].mxu0 %v1960
      %v2052 = vpop.f32.mrb[0].mxu0
      %v2053 = vadd.f32 0.0, %v2052
      %v2054 = vpop.f32.mrb[0].mxu0
      %v2055 = vpop.f32.mrb[0].mxu0
      %v2056 = vadd.f32 0.0, %v2055
      %v2057 = vpop.f32.mrb[0].mxu0
      %2058 = vdwg.mxu0
      %v2059 = vadd.f32 %v1807, %v1997
      %v2060 = vadd.f32 %v1808, %v2000
      %v2061 = vadd.f32 %v1809, %v2005
      %v2062 = vadd.f32 %v1810, %v2008
      %v2063 = vadd.f32 %v1811, %v2013
      %v2064 = vadd.f32 %v1812, %v2016
      %v2065 = vadd.f32 %v1813, %v2021
      %v2066 = vadd.f32 %v1814, %v2024
      %v2067 = vadd.f32 %v1815, %v2029
      %v2068 = vadd.f32 %v1816, %v2032
      %v2069 = vadd.f32 %v1817, %v2037
      %v2070 = vadd.f32 %v1818, %v2040
      %v2071 = vadd.f32 %v1819, %v2045
      %v2072 = vadd.f32 %v1820, %v2048
      %v2073 = vadd.f32 %v1821, %v2053
      %v2074 = vadd.f32 %v1822, %v2056
      %v2075 = vld [vmem:[#allocation2 + $0x10] sm:$0xf0]
      %s2076 = scalar_lea.vmem %s2, 256
      %v2077 = vld [vmem:[%s2076] sm:$0xf]
      %v2078 = vld [vmem:[%s2076 + $0x4] sm:$0xf]
      %v2079 = vld [vmem:[%s2076 + $0x8] sm:$0xf]
      %v2080 = vld [vmem:[%s2076 + $0xc] sm:$0xf]
      %v2081 = vld [vmem:[%s2076 + $0x10] sm:$0xf]
      %v2082 = vld [vmem:[%s2076 + $0x14] sm:$0xf]
      %v2083 = vld [vmem:[%s2076 + $0x18] sm:$0xf]
      %v2084 = vld [vmem:[%s2076 + $0x1c] sm:$0xf]
      %vm2087 = vcmask 1043456
      %v2088 = vrot.slane %v2075, 4
      %v2089 = vrot.slane %v1618, 4
      %v2090 = vsel %vm2087, %v2088, %v2089
      %v2091 = vrot.slane %v1619, 4
      %v2092 = vsel %vm2087, %v2089, %v2091
      %v2093 = vrot.slane %v1620, 4
      %v2094 = vsel %vm2087, %v2091, %v2093
      %v2095 = vrot.slane %v1621, 4
      %v2096 = vsel %vm2087, %v2093, %v2095
      %v2097 = vrot.slane %v1622, 4
      %v2098 = vsel %vm2087, %v2095, %v2097
      %v2099 = vrot.slane %v1623, 4
      %v2100 = vsel %vm2087, %v2097, %v2099
      %v2101 = vrot.slane %v1624, 4
      %v2102 = vsel %vm2087, %v2099, %v2101
      %v2103 = vrot.slane %v1823, 4
      %v2104 = vsel %vm2087, %v2101, %v2103
      %v2113 = vunpack.c.l.b16 %v2077
      %v2114 = vunpack.c.l.b16 %v2078
      %v2115 = vunpack.c.l.b16 %v2079
      %v2116 = vunpack.c.l.b16 %v2080
      %v2117 = vunpack.c.l.b16 %v2081
      %v2118 = vunpack.c.l.b16 %v2082
      %v2119 = vunpack.c.l.b16 %v2083
      %v2120 = vunpack.c.l.b16 %v2084
      %v2121 = vpack.c.b16 %v2114, %v2113
      %v2122 = vpack.c.b16 %v2116, %v2115
      %v2123 = vpack.c.b16 %v2118, %v2117
      %v2124 = vpack.c.b16 %v2120, %v2119
      %v2130 = vsel %vm322, %v2090, 0
      %v2133 = vsel %vm322, %v2092, 0
      %v2136 = vsel %vm322, %v2094, 0
      %v2139 = vsel %vm322, %v2096, 0
      %v2142 = vsel %vm322, %v2098, 0
      %v2145 = vsel %vm322, %v2100, 0
      %v2148 = vsel %vm322, %v2102, 0
      %v2151 = vsel %vm322, %v2104, 0
      %2153 = vmatprep.subr.bf16.mxu0 0
      %2154 = vmatpush1.bf16.msra.mxu0 %v2121
      %2155 = vmatprep.subr.bf16.mxu0 0
      %2156 = vmatpush1.bf16.msra.mxu0 %v2122
      %2157 = vmatprep.subr.bf16.mxu0 0
      %2158 = vmatpush1.bf16.msra.mxu0 %v2123
      %2159 = vmatprep.subr.bf16.mxu0 0
      %2160 = vmatpush1.bf16.msra.mxu0 %v2124
      %2161 = vmatprep.subr.bf16.mxu0 0
      %2162 = vmatpush1.bf16.msra.mxu0 0
      %2163 = vmatprep.subr.bf16.mxu0 0
      %2164 = vmatpush1.bf16.msra.mxu0 0
      %2165 = vmatprep.subr.bf16.mxu0 0
      %2166 = vmatpush1.bf16.msra.mxu0 0
      %2167 = vmatprep.subr.bf16.mxu0 0
      %2168 = vmatpush1.bf16.msra.mxu0 0
      %2169 = vmatprep.subr.bf16.mxu0 0
      %2170 = vmatpush1.bf16.msra.mxu0 0
      %2171 = vmatprep.subr.bf16.mxu0 0
      %2172 = vmatpush1.bf16.msra.mxu0 0
      %2173 = vmatprep.subr.bf16.mxu0 0
      %2174 = vmatpush1.bf16.msra.mxu0 0
      %2175 = vmatprep.subr.bf16.mxu0 0
      %2176 = vmatpush1.bf16.msra.mxu0 0
      %2177 = vmatprep.subr.bf16.mxu0 0
      %2178 = vmatpush1.bf16.msra.mxu0 0
      %2179 = vmatprep.subr.bf16.mxu0 0
      %2180 = vmatpush1.bf16.msra.mxu0 0
      %2181 = vmatprep.subr.bf16.mxu0 0
      %2182 = vmatpush1.bf16.msra.mxu0 0
      %2183 = vmatprep.subr.bf16.mxu0 0
      %2184 = vmatpush1.bf16.msra.mxu0 0
      %2185 = vmatprep.mubr.bf16.mxu0 0
      %2186 = vmatmul.mubr.bf16.gmra.mrb[0].mxu0 %v2130
      %v2187 = vpop.f32.mrb[0].mxu0
      %v2188 = vadd.f32 0.0, %v2187
      %v2189 = vpop.f32.mrb[0].mxu0
      %v2190 = vpop.f32.mrb[0].mxu0
      %v2191 = vadd.f32 0.0, %v2190
      %v2192 = vpop.f32.mrb[0].mxu0
      %2193 = vmatprep.mubr.bf16.mxu0 0
      %2194 = vmatmul.mubr.bf16.gmra.mrb[0].mxu0 %v2133
      %v2195 = vpop.f32.mrb[0].mxu0
      %v2196 = vadd.f32 0.0, %v2195
      %v2197 = vpop.f32.mrb[0].mxu0
      %v2198 = vpop.f32.mrb[0].mxu0
      %v2199 = vadd.f32 0.0, %v2198
      %v2200 = vpop.f32.mrb[0].mxu0
      %2201 = vmatprep.mubr.bf16.mxu0 0
      %2202 = vmatmul.mubr.bf16.gmra.mrb[0].mxu0 %v2136
      %v2203 = vpop.f32.mrb[0].mxu0
      %v2204 = vadd.f32 0.0, %v2203
      %v2205 = vpop.f32.mrb[0].mxu0
      %v2206 = vpop.f32.mrb[0].mxu0
      %v2207 = vadd.f32 0.0, %v2206
      %v2208 = vpop.f32.mrb[0].mxu0
      %2209 = vmatprep.mubr.bf16.mxu0 0
      %2210 = vmatmul.mubr.bf16.gmra.mrb[0].mxu0 %v2139
      %v2211 = vpop.f32.mrb[0].mxu0
      %v2212 = vadd.f32 0.0, %v2211
      %v2213 = vpop.f32.mrb[0].mxu0
      %v2214 = vpop.f32.mrb[0].mxu0
      %v2215 = vadd.f32 0.0, %v2214
      %v2216 = vpop.f32.mrb[0].mxu0
      %2217 = vmatprep.mubr.bf16.mxu0 0
      %2218 = vmatmul.mubr.bf16.gmra.mrb[0].mxu0 %v2142
      %v2219 = vpop.f32.mrb[0].mxu0
      %v2220 = vadd.f32 0.0, %v2219
      %v2221 = vpop.f32.mrb[0].mxu0
      %v2222 = vpop.f32.mrb[0].mxu0
      %v2223 = vadd.f32 0.0, %v2222
      %v2224 = vpop.f32.mrb[0].mxu0
      %2225 = vmatprep.mubr.bf16.mxu0 0
      %2226 = vmatmul.mubr.bf16.gmra.mrb[0].mxu0 %v2145
      %v2227 = vpop.f32.mrb[0].mxu0
      %v2228 = vadd.f32 0.0, %v2227
      %v2229 = vpop.f32.mrb[0].mxu0
      %v2230 = vpop.f32.mrb[0].mxu0
      %v2231 = vadd.f32 0.0, %v2230
      %v2232 = vpop.f32.mrb[0].mxu0
      %2233 = vmatprep.mubr.bf16.mxu0 0
      %2234 = vmatmul.mubr.bf16.gmra.mrb[0].mxu0 %v2148
      %v2235 = vpop.f32.mrb[0].mxu0
      %v2236 = vadd.f32 0.0, %v2235
      %v2237 = vpop.f32.mrb[0].mxu0
      %v2238 = vpop.f32.mrb[0].mxu0
      %v2239 = vadd.f32 0.0, %v2238
      %v2240 = vpop.f32.mrb[0].mxu0
      %2241 = vmatprep.mubr.bf16.mxu0 0
      %2242 = vmatmul.mubr.bf16.gmra.mrb[0].mxu0 %v2151
      %v2243 = vpop.f32.mrb[0].mxu0
      %v2244 = vadd.f32 0.0, %v2243
      %v2245 = vpop.f32.mrb[0].mxu0
      %v2246 = vpop.f32.mrb[0].mxu0
      %v2247 = vadd.f32 0.0, %v2246
      %v2248 = vpop.f32.mrb[0].mxu0
      %2249 = vdwg.mxu0
      %v2250 = vadd.f32 %v2059, %v2188
      %v2251 = vadd.f32 %v2060, %v2191
      %v2252 = vadd.f32 %v2061, %v2196
      %v2253 = vadd.f32 %v2062, %v2199
      %v2254 = vadd.f32 %v2063, %v2204
      %v2255 = vadd.f32 %v2064, %v2207
      %v2256 = vadd.f32 %v2065, %v2212
      %v2257 = vadd.f32 %v2066, %v2215
      %v2258 = vadd.f32 %v2067, %v2220
      %v2259 = vadd.f32 %v2068, %v2223
      %v2260 = vadd.f32 %v2069, %v2228
      %v2261 = vadd.f32 %v2070, %v2231
      %v2262 = vadd.f32 %v2071, %v2236
      %v2263 = vadd.f32 %v2072, %v2239
      %v2264 = vadd.f32 %v2073, %v2244
      %v2265 = vadd.f32 %v2074, %v2247
      %v2266 = vld [vmem:[%s3] sm:$0x1]
      %v2268 = vlaneseq
      %v2269 = vshrl.u32 %v2268, 7
      %v2270 = vsub.s32 0, %v2269
      %v2271 = vrot.slane %v2266, %v2270
      %v2273 = vadd.f32 %v2250, %v2271
      %v2274 = vadd.f32 %v2251, %v2271
      %v2275 = vadd.f32 %v2252, %v2271
      %v2276 = vadd.f32 %v2253, %v2271
      %v2277 = vadd.f32 %v2254, %v2271
      %v2278 = vadd.f32 %v2255, %v2271
      %v2279 = vadd.f32 %v2256, %v2271
      %v2280 = vadd.f32 %v2257, %v2271
      %v2281 = vadd.f32 %v2258, %v2271
      %v2282 = vadd.f32 %v2259, %v2271
      %v2283 = vadd.f32 %v2260, %v2271
      %v2284 = vadd.f32 %v2261, %v2271
      %v2285 = vadd.f32 %v2262, %v2271
      %v2286 = vadd.f32 %v2263, %v2271
      %v2287 = vadd.f32 %v2264, %v2271
      %v2288 = vadd.f32 %v2265, %v2271
      %v2289 = vmax.f32 %v2273, 0.0
      %v2290 = vmax.f32 %v2274, 0.0
      %v2291 = vmax.f32 %v2275, 0.0
      %v2292 = vmax.f32 %v2276, 0.0
      %v2293 = vmax.f32 %v2277, 0.0
      %v2294 = vmax.f32 %v2278, 0.0
      %v2295 = vmax.f32 %v2279, 0.0
      %v2296 = vmax.f32 %v2280, 0.0
      %v2297 = vmax.f32 %v2281, 0.0
      %v2298 = vmax.f32 %v2282, 0.0
      %v2299 = vmax.f32 %v2283, 0.0
      %v2300 = vmax.f32 %v2284, 0.0
      %v2301 = vmax.f32 %v2285, 0.0
      %v2302 = vmax.f32 %v2286, 0.0
      %v2303 = vmax.f32 %v2287, 0.0
      %v2304 = vmax.f32 %v2288, 0.0
      %v2305 = vpack.c.bf16 %v2290, %v2289
      %v2306 = vpack.c.bf16 %v2292, %v2291
      %v2307 = vpack.c.bf16 %v2294, %v2293
      %v2308 = vpack.c.bf16 %v2296, %v2295
      %v2309 = vpack.c.bf16 %v2298, %v2297
      %v2310 = vpack.c.bf16 %v2300, %v2299
      %v2311 = vpack.c.bf16 %v2302, %v2301
      %v2312 = vpack.c.bf16 %v2304, %v2303
      %v2321 = vunpack.c.l.b16 %v2305
      %v2322 = vunpack.c.h.b16 %v2305
      %v2323 = vunpack.c.l.b16 %v2306
      %v2324 = vunpack.c.h.b16 %v2306
      %v2325 = vunpack.c.l.b16 %v2307
      %v2326 = vunpack.c.h.b16 %v2307
      %v2327 = vunpack.c.l.b16 %v2308
      %v2328 = vunpack.c.h.b16 %v2308
      %v2329 = vunpack.c.l.b16 %v2309
      %v2330 = vunpack.c.h.b16 %v2309
      %v2331 = vunpack.c.l.b16 %v2310
      %v2332 = vunpack.c.h.b16 %v2310
      %v2333 = vunpack.c.l.b16 %v2311
      %v2334 = vunpack.c.h.b16 %v2311
      %v2335 = vunpack.c.l.b16 %v2312
      %v2336 = vunpack.c.h.b16 %v2312
      %v2337 = vpack.c.b16 %v2321, %v2321
      %v2338 = vpack.c.b16 %v2322, %v2322
      %v2339 = vpack.c.b16 %v2323, %v2323
      %v2340 = vpack.c.b16 %v2324, %v2324
      %v2341 = vpack.c.b16 %v2325, %v2325
      %v2342 = vpack.c.b16 %v2326, %v2326
      %v2343 = vpack.c.b16 %v2327, %v2327
      %v2344 = vpack.c.b16 %v2328, %v2328
      %v2345 = vpack.c.b16 %v2329, %v2329
      %v2346 = vpack.c.b16 %v2330, %v2330
      %v2347 = vpack.c.b16 %v2331, %v2331
      %v2348 = vpack.c.b16 %v2332, %v2332
      %v2349 = vpack.c.b16 %v2333, %v2333
      %v2350 = vpack.c.b16 %v2334, %v2334
      %v2351 = vpack.c.b16 %v2335, %v2335
      %v2352 = vpack.c.b16 %v2336, %v2336
      %vm2369 = vcmask 781312
      %2370 = vst.msk [vmem:[%s255] sm:$0xf] %vm2369, %v2337
      %2371 = vst.msk [vmem:[%s255 + $0x4] sm:$0xf] %vm2369, %v2338
      %2372 = vst.msk [vmem:[%s255 + $0x8] sm:$0xf] %vm2369, %v2339
      %2373 = vst.msk [vmem:[%s255 + $0xc] sm:$0xf] %vm2369, %v2340
      %2374 = vst.msk [vmem:[%s255 + $0x10] sm:$0xf] %vm2369, %v2341
      %2375 = vst.msk [vmem:[%s255 + $0x14] sm:$0xf] %vm2369, %v2342
      %2376 = vst.msk [vmem:[%s255 + $0x18] sm:$0xf] %vm2369, %v2343
      %2377 = vst.msk [vmem:[%s255 + $0x1c] sm:$0xf] %vm2369, %v2344
      %2378 = vst.msk [vmem:[%s255 + $0x20] sm:$0xf] %vm2369, %v2345
      %2379 = vst.msk [vmem:[%s255 + $0x24] sm:$0xf] %vm2369, %v2346
      %2380 = vst.msk [vmem:[%s255 + $0x28] sm:$0xf] %vm2369, %v2347
      %2381 = vst.msk [vmem:[%s255 + $0x2c] sm:$0xf] %vm2369, %v2348
      %2382 = vst.msk [vmem:[%s255 + $0x30] sm:$0xf] %vm2369, %v2349
      %2383 = vst.msk [vmem:[%s255 + $0x34] sm:$0xf] %vm2369, %v2350
      %2384 = vst.msk [vmem:[%s255 + $0x38] sm:$0xf] %vm2369, %v2351
      %2385 = vst.msk [vmem:[%s255 + $0x3c] sm:$0xf] %vm2369, %v2352
      %s2386 = smul.u32 16, %s15
      %p2387 = scmp.lt.s32.totalorder %s2386, 95
      %s2388 = scalar_select %p2387, %s2386, 95
      %s2389 = smul.addr %s2388, 4
      %s2390 = scalar_lea.vmem %s4, %s2389
      // Predicated region
      $region37: #{inception_b_forward.6} parent=35 // pred_check
        %p2391 = pneg %p131
      $region38: #{inception_b_forward.6} parent=35 // pred_check_branch
        %2393 = sbr.rel (%p2391) target = $region40
      $region39: #{inception_b_forward.6} parent=35 // pred_region
        %s2394 = smul.u32 16, %s15
      $region40: #{inception_b_forward.6} parent=35 // pred_fallthru
        _
    $region36: #{inception_b_forward.6} parent=5 // pred_fallthru
      _
    %p2395 = scmp.le.s32.totalorder 2, %s10
    // Predicated region
    $region41: #{inception_b_forward.6} parent=5 // pred_check
      %p2396 = pneg %p2395
    $region42: #{inception_b_forward.6} parent=5 // pred_check_branch
      %2398 = sbr.rel (%p2396) target = $region44
    $region43: #{inception_b_forward.6} parent=5 // pred_region
      %s2399 = ssub.s32 %s10, 2
      // Predicated region
      $region45: #{inception_b_forward.6} parent=43 // pred_check
        %p2400 = pneg %p137
      $region46: #{inception_b_forward.6} parent=43 // pred_check_branch
        %2402 = sbr.rel (%p2400) target = $region48
      $region47: #{inception_b_forward.6} parent=43 // pred_region
        %s2403 = smul.u32 16, %s16
        %p2404 = scmp.lt.s32.totalorder %s2403, 95
        %s2405 = scalar_select %p2404, %s2403, 95
        %s2406 = smul.addr %s2405, 4
        %s2407 = scalar_lea.vmem %s4, %s2406
      $region48: #{inception_b_forward.6} parent=43 // pred_fallthru
        _
    $region44: #{inception_b_forward.6} parent=5 // pred_fallthru
      _
  $region6: #{inception_b_forward.6} parent=0 // loop_footer
    %s14 = sadd.s32 1, %s10
  $region7: #{inception_b_forward.6} parent=0 // loop_footer_branch
    %9 = sbr.rel target = $region3
  $region8: #{inception_b_forward.6} parent=0 // loop_exit
    _

// kernel: inception_b_forward.7
$region0: #{inception_b_forward.7}
  #allocation0 [shape = 'u32[]', space=smem, size = 0x4, offset = 0x4, fixed_abs, tag = 'smem constant byte address 0x4 - core index']
  #allocation1 [shape = 'u32[144,128]{1,0:T(1,128)}', space=vmem, size = 0x12000, scoped, tag = 'internal scratch']
  #allocation2 [shape = 'bf16[144,384]{1,0:T(16,128)(2,1)}', space=vmem, size = 0x1b000, scoped, tag = 'scratch operand']
  %s0 = inlined_call_operand.vmem [shape: bf16[272,384], index: 0, kind: input, shape index: {}, may-alias: {0,1}]
  %s1 = inlined_call_operand.vmem [shape: bf16[272,384], index: 1, kind: input, shape index: {}, may-alias: {0,1}]
  %s2 = inlined_call_operand.vmem [shape: bf16[9,96,96], index: 2, kind: input, shape index: {}]
  %s3 = inlined_call_operand.vmem [shape: f32[1,96], index: 3, kind: input, shape index: {}]
  %s4 = inlined_call_operand.vmem [shape: bf16[256,96], index: 4, kind: output, shape index: {}]
  %s5 = sld [smem:[#allocation0]]
  $region49: #{inception_b_forward.7} parent=0
    _
  %s7 = ssub.s32 1, %s5
  %s8 = scalar_select 0, %s7, %s5
  loop: start=0, step=1, limit=4
  $region2: #{inception_b_forward.7} parent=0 // loop_pre_header
    _
  $region3: #{inception_b_forward.7} parent=0 // loop_header
    %s10 = sphi 0, %s14
    %p11 = scmp.ge.s32.totalorder %s10, 4
    %s20 = sphi 0, %s22
    %s23 = sphi 0, %s20
    %s24 = sphi 0, %s23
    %s40 = sphi 0, %s24
    %s50 = sphi 0, %s52
    %s53 = sphi 0, %s50
    %s54 = sphi 0, %s53
    %s70 = sphi 0, %s54
    %s74 = sphi 0, %s74
    %s76 = sphi 0, %s74
    %s77 = sphi 0, %s76
    %s91 = sphi 0, %s77
    %s95 = sphi 0, %s95
    %s97 = sphi 0, %s95
    %s98 = sphi 0, %s97
    %s112 = sphi 0, %s98
    %s118 = sphi 0, %s120
    %s121 = sphi 0, %s118
    %s122 = sphi 0, %s121
    %s138 = sphi 0, %s122
  $region4: #{inception_b_forward.7} parent=0 // loop_header_branch
    %13 = sbr.rel (%p11) target = $region8
  $region5: #{inception_b_forward.7} parent=0 // loop_body
    %s15 = ssub.s32 %s10, 1
    %s16 = ssub.s32 %s10, 2
    %s17 = sadd.s32 %s10, 1
    %s18 = ssub.s32 %s10, %s17
    %p19 = scmp.eq.s32.totalorder %s18, 0
    %s21 = sadd.s32 %s20, 1
    %s22 = scalar_select %p19, %s20, %s21
    %p25 = pneg %p19
    %p26 = scmp.eq.s32.totalorder %s10, 1
    %p27 = por %p25, %p26
    %p28 = scmp.ne.s32.totalorder %s20, %s23
    %p29 = scmp.eq.s32.totalorder %s10, 0
    %p30 = por %p28, %p29
    %p31 = scmp.ne.s32.totalorder %s20, %s23
    %p32 = scmp.eq.s32.totalorder %s15, 1
    %p33 = por %p31, %p32
    %p34 = scmp.ne.s32.totalorder %s23, %s24
    %p35 = scmp.eq.s32.totalorder %s15, 0
    %p36 = por %p34, %p35
    %p37 = scmp.ne.s32.totalorder %s23, %s24
    %p38 = scmp.eq.s32.totalorder %s16, 1
    %p39 = por %p37, %p38
    %p41 = scmp.ne.s32.totalorder %s24, %s40
    %p42 = scmp.eq.s32.totalorder %s16, 0
    %p43 = por %p41, %p42
    %s44 = sadd.s32 %s10, 1
    %s45 = smul.u32 %s44, 8
    %s46 = sadd.s32 %s17, 1
    %s47 = smul.u32 %s46, 8
    %s48 = ssub.s32 %s45, %s47
    %p49 = scmp.eq.s32.totalorder %s48, 0
    %s51 = sadd.s32 %s50, 1
    %s52 = scalar_select %p49, %s50, %s51
    %p55 = pneg %p49
    %p56 = scmp.eq.s32.totalorder %s10, 1
    %p57 = por %p55, %p56
    %p58 = scmp.ne.s32.totalorder %s50, %s53
    %p59 = scmp.eq.s32.totalorder %s10, 0
    %p60 = por %p58, %p59
    %p61 = scmp.ne.s32.totalorder %s50, %s53
    %p62 = scmp.eq.s32.totalorder %s15, 1
    %p63 = por %p61, %p62
    %p64 = scmp.ne.s32.totalorder %s53, %s54
    %p65 = scmp.eq.s32.totalorder %s15, 0
    %p66 = por %p64, %p65
    %p67 = scmp.ne.s32.totalorder %s53, %s54
    %p68 = scmp.eq.s32.totalorder %s16, 1
    %p69 = por %p67, %p68
    %p71 = scmp.ne.s32.totalorder %s54, %s70
    %p72 = scmp.eq.s32.totalorder %s16, 0
    %p73 = por %p71, %p72
    %s75 = sadd.s32 %s74, 1
    %p78 = scmp.eq.s32.totalorder %s10, 1
    %p79 = scmp.ne.s32.totalorder %s74, %s76
    %p80 = scmp.eq.s32.totalorder %s10, 0
    %p81 = por %p79, %p80
    %p82 = scmp.ne.s32.totalorder %s74, %s76
    %p83 = scmp.eq.s32.totalorder %s15, 1
    %p84 = por %p82, %p83
    %p85 = scmp.ne.s32.totalorder %s76, %s77
    %p86 = scmp.eq.s32.totalorder %s15, 0
    %p87 = por %p85, %p86
    %p88 = scmp.ne.s32.totalorder %s76, %s77
    %p89 = scmp.eq.s32.totalorder %s16, 1
    %p90 = por %p88, %p89
    %p92 = scmp.ne.s32.totalorder %s77, %s91
    %p93 = scmp.eq.s32.totalorder %s16, 0
    %p94 = por %p92, %p93
    %s96 = sadd.s32 %s95, 1
    %p99 = scmp.eq.s32.totalorder %s10, 1
    %p100 = scmp.ne.s32.totalorder %s95, %s97
    %p101 = scmp.eq.s32.totalorder %s10, 0
    %p102 = por %p100, %p101
    %p103 = scmp.ne.s32.totalorder %s95, %s97
    %p104 = scmp.eq.s32.totalorder %s15, 1
    %p105 = por %p103, %p104
    %p106 = scmp.ne.s32.totalorder %s97, %s98
    %p107 = scmp.eq.s32.totalorder %s15, 0
    %p108 = por %p106, %p107
    %p109 = scmp.ne.s32.totalorder %s97, %s98
    %p110 = scmp.eq.s32.totalorder %s16, 1
    %p111 = por %p109, %p110
    %p113 = scmp.ne.s32.totalorder %s98, %s112
    %p114 = scmp.eq.s32.totalorder %s16, 0
    %p115 = por %p113, %p114
    %s116 = ssub.s32 %s10, %s17
    %p117 = scmp.eq.s32.totalorder %s116, 0
    %s119 = sadd.s32 %s118, 1
    %s120 = scalar_select %p117, %s118, %s119
    %p123 = pneg %p117
    %p124 = scmp.eq.s32.totalorder %s10, 1
    %p125 = por %p123, %p124
    %p126 = scmp.ne.s32.totalorder %s118, %s121
    %p127 = scmp.eq.s32.totalorder %s10, 0
    %p128 = por %p126, %p127
    %p129 = scmp.ne.s32.totalorder %s118, %s121
    %p130 = scmp.eq.s32.totalorder %s15, 1
    %p131 = por %p129, %p130
    %p132 = scmp.ne.s32.totalorder %s121, %s122
    %p133 = scmp.eq.s32.totalorder %s15, 0
    %p134 = por %p132, %p133
    %p135 = scmp.ne.s32.totalorder %s121, %s122
    %p136 = scmp.eq.s32.totalorder %s16, 1
    %p137 = por %p135, %p136
    %p139 = scmp.ne.s32.totalorder %s122, %s138
    %p140 = scmp.eq.s32.totalorder %s16, 0
    %p141 = por %p139, %p140
    %p142 = scmp.le.s32.totalorder 1, %s10
    %p143 = scmp.lt.s32.totalorder %s10, 3
    %p144 = pnand %p142, %p143
    %p145 = pneg %p144
    // Predicated region
    $region9: #{inception_b_forward.7} parent=5 // pred_check
      _
    $region10: #{inception_b_forward.7} parent=5 // pred_check_branch
      %147 = sbr.rel (%p144) target = $region12
    $region11: #{inception_b_forward.7} parent=5 // pred_region
      %s148 = ssub.s32 %s10, 1
      // Predicated region
      $region13: #{inception_b_forward.7} parent=11 // pred_check
        %p149 = pneg %p87
      $region14: #{inception_b_forward.7} parent=11 // pred_check_branch
        %151 = sbr.rel (%p149) target = $region16
      $region15: #{inception_b_forward.7} parent=11 // pred_region
        _
      $region16: #{inception_b_forward.7} parent=11 // pred_fallthru
        _
      // Predicated region
      $region17: #{inception_b_forward.7} parent=11 // pred_check
        %p152 = pneg %p108
      $region18: #{inception_b_forward.7} parent=11 // pred_check_branch
        %154 = sbr.rel (%p152) target = $region20
      $region19: #{inception_b_forward.7} parent=11 // pred_region
        _
      $region20: #{inception_b_forward.7} parent=11 // pred_fallthru
        _
    $region12: #{inception_b_forward.7} parent=5 // pred_fallthru
      _
    %p155 = scmp.lt.s32.totalorder %s10, 2
    // Predicated region
    $region21: #{inception_b_forward.7} parent=5 // pred_check
      %p156 = pneg %p155
    $region22: #{inception_b_forward.7} parent=5 // pred_check_branch
      %158 = sbr.rel (%p156) target = $region24
    $region23: #{inception_b_forward.7} parent=5 // pred_region
      // Predicated region
      $region25: #{inception_b_forward.7} parent=23 // pred_check
        %p159 = pneg %p30
      $region26: #{inception_b_forward.7} parent=23 // pred_check_branch
        %161 = sbr.rel (%p159) target = $region28
      $region27: #{inception_b_forward.7} parent=23 // pred_region
        %s162 = smul.u32 16, %s10
        %s163 = ssub.s32 34, %s162
        %p164 = scmp.lt.s32.totalorder %s163, 16
        %s165 = scalar_select %p164, %s163, 16
        %s166 = smul.u32 64, %s165
        %s167 = smul.u32 %s166, 3
        %p168 = scmp.lt.s32.totalorder %s162, 33
        %s169 = scalar_select %p168, %s162, 33
        %s170 = smul.addr %s169, 3
        %s171 = smul.addr %s170, 4
        %s172 = scalar_lea.vmem %s0, %s171
        %s173 = smul.u32 16, %s10
        %s174 = ssub.s32 34, %s173
        %p175 = scmp.lt.s32.totalorder %s174, 16
        %s176 = scalar_select %p175, %s174, 16
        %s177 = smul.u32 64, %s176
        %s178 = smul.u32 %s177, 3
      $region28: #{inception_b_forward.7} parent=23 // pred_fallthru
        _
      // Predicated region
      $region29: #{inception_b_forward.7} parent=23 // pred_check
        %p179 = pneg %p60
      $region30: #{inception_b_forward.7} parent=23 // pred_check_branch
        %181 = sbr.rel (%p179) target = $region32
      $region31: #{inception_b_forward.7} parent=23 // pred_region
        %s182 = sadd.s32 %s10, 1
        %s183 = smul.u32 %s182, 8
        %s184 = smul.u32 2, %s183
        %p185 = scmp.lt.s32.totalorder %s184, 33
        %s186 = scalar_select %p185, %s184, 33
        %s187 = smul.addr %s186, 3
        %s188 = smul.addr %s187, 4
        %s189 = scalar_lea.vmem %s1, %s188
        %s190 = sadd.s32 %s10, 1
        %s191 = smul.u32 %s190, 8
        %s192 = smul.u32 2, %s191
      $region32: #{inception_b_forward.7} parent=23 // pred_fallthru
        _
    $region24: #{inception_b_forward.7} parent=5 // pred_fallthru
      _
    %p193 = scmp.le.s32.totalorder 1, %s10
    %p194 = scmp.lt.s32.totalorder %s10, 3
    %p195 = pnand %p193, %p194
    %p196 = pneg %p195
    // Predicated region
    $region33: #{inception_b_forward.7} parent=5 // pred_check
      _
    $region34: #{inception_b_forward.7} parent=5 // pred_check_branch
      %198 = sbr.rel (%p195) target = $region36
    $region35: #{inception_b_forward.7} parent=5 // pred_region
      %s199 = ssub.s32 %s10, 1
      %s200 = smul.u32 16, %s15
      %s201 = ssub.s32 34, %s200
      %p202 = scmp.lt.s32.totalorder %s201, 16
      %s203 = scalar_select %p202, %s201, 16
      %s204 = smul.u32 64, %s203
      %s205 = smul.u32 %s204, 3
      %p206 = scmp.lt.s32.totalorder %s200, 33
      %s207 = scalar_select %p206, %s200, 33
      %s208 = smul.addr %s207, 3
      %s209 = smul.addr %s208, 4
      %s210 = scalar_lea.vmem %s0, %s209
      %p211 = pneg %p36
      %p212 = pneg %p33
      %s213 = sadd.s32 %s15, 1
      %s214 = smul.u32 %s213, 8
      %s215 = smul.u32 2, %s214
      %p216 = scmp.lt.s32.totalorder %s215, 33
      %s217 = scalar_select %p216, %s215, 33
      %s218 = smul.addr %s217, 3
      %s219 = smul.addr %s218, 4
      %s220 = scalar_lea.vmem %s1, %s219
      %p221 = pneg %p66
      %p222 = pneg %p63
      %p223 = pneg %p87
      %p224 = pneg %p84
      %p225 = pneg %p108
      %p226 = pneg %p105
      %p227 = pneg %p134
      %p228 = pneg %p131
      %s229 = smul.u32 16, %s15
      %p230 = scmp.lt.s32.totalorder %s229, 31
      %s231 = scalar_select %p230, %s229, 31
      %s232 = smul.addr %s231, 4
      %s233 = scalar_lea.vmem %s4, %s232
      %s234 = smul.u32 16, %s15
      %s235 = ssub.s32 34, %s234
      %p236 = scmp.lt.s32.totalorder %s235, 16
      %s237 = scalar_select %p236, %s235, 16
      %s238 = smul.u32 64, %s237
      %s239 = smul.u32 %s238, 3
      %p240 = scmp.lt.s32.totalorder %s234, 33
      %s241 = scalar_select %p240, %s234, 33
      %s242 = smul.addr %s241, 3
      %s243 = smul.addr %s242, 4
      %s244 = scalar_lea.vmem %s0, %s243
      %s245 = smul.u32 16, %s15
      %s246 = ssub.s32 34, %s245
      %p247 = scmp.lt.s32.totalorder %s246, 16
      %s248 = scalar_select %p247, %s246, 16
      %s249 = smul.u32 64, %s248
      %s250 = smul.u32 %s249, 3
      %s251 = sadd.s32 %s15, 1
      %s252 = smul.u32 %s251, 8
      %s253 = smul.u32 2, %s252
      %p254 = scmp.lt.s32.totalorder %s253, 33
      %s255 = scalar_select %p254, %s253, 33
      %s256 = smul.addr %s255, 3
      %s257 = smul.addr %s256, 4
      %s258 = scalar_lea.vmem %s1, %s257
      %s259 = sadd.s32 %s15, 1
      %s260 = smul.u32 %s259, 8
      %s261 = smul.u32 2, %s260
      %s262 = smul.u32 16, %s15
      %p263 = scmp.lt.s32.totalorder %s262, 31
      %s264 = scalar_select %p263, %s262, 31
      %s265 = smul.addr %s264, 4
      %s266 = scalar_lea.vmem %s4, %s265
      %s267 = smul.u32 16, %s15
      %v269 = vld [vmem:[%s244] sm:$0xff]
      %v270 = vld [vmem:[%s244 + $0x8] sm:$0xf]
      %v271 = vld [vmem:[%s244 + $0xc] sm:$0xff]
      %v272 = vld [vmem:[%s244 + $0x14] sm:$0xf]
      %v273 = vld [vmem:[%s244 + $0x18] sm:$0xff]
      %v274 = vld [vmem:[%s244 + $0x20] sm:$0xf]
      %v275 = vld [vmem:[%s244 + $0x24] sm:$0xff]
      %v276 = vld [vmem:[%s244 + $0x2c] sm:$0xf]
      %v277 = vld [vmem:[%s244 + $0x30] sm:$0xff]
      %v278 = vld [vmem:[%s244 + $0x38] sm:$0xf]
      %v279 = vld [vmem:[%s244 + $0x3c] sm:$0xff]
      %v280 = vld [vmem:[%s244 + $0x44] sm:$0xf]
      %v281 = vld [vmem:[%s244 + $0x48] sm:$0xff]
      %v282 = vld [vmem:[%s244 + $0x50] sm:$0xf]
      %v283 = vld [vmem:[%s244 + $0x54] sm:$0xff]
      %v284 = vld [vmem:[%s244 + $0x5c] sm:$0xf]
      %v285 = vld [vmem:[%s244 + $0x60] sm:$0xff]
      %v286 = vld [vmem:[%s244 + $0x68] sm:$0xf]
      %v287 = vld [vmem:[%s244 + $0x6c] sm:$0xff]
      %v288 = vld [vmem:[%s244 + $0x74] sm:$0xf]
      %v289 = vld [vmem:[%s244 + $0x78] sm:$0xff]
      %v290 = vld [vmem:[%s244 + $0x80] sm:$0xf]
      %v291 = vld [vmem:[%s244 + $0x84] sm:$0xff]
      %v292 = vld [vmem:[%s244 + $0x8c] sm:$0xf]
      %v293 = vld [vmem:[%s244 + $0x90] sm:$0xff]
      %v294 = vld [vmem:[%s244 + $0x98] sm:$0xf]
      %v295 = vld [vmem:[%s244 + $0x9c] sm:$0xff]
      %v296 = vld [vmem:[%s244 + $0xa4] sm:$0xf]
      %v297 = vld [vmem:[%s244 + $0xa8] sm:$0xff]
      %v298 = vld [vmem:[%s244 + $0xb0] sm:$0xf]
      %v299 = vld [vmem:[%s244 + $0xb4] sm:$0xff]
      %v300 = vld [vmem:[%s244 + $0xbc] sm:$0xf]
      %v333 = vunpack.c.l.b16 %v269
      %v334 = vunpack.c.h.b16 %v269
      %v335 = vunpack.c.l.b16 %v270
      %v336 = vunpack.c.l.b16 %v271
      %v337 = vunpack.c.h.b16 %v271
      %v338 = vunpack.c.l.b16 %v272
      %v339 = vunpack.c.l.b16 %v273
      %v340 = vunpack.c.h.b16 %v273
      %v341 = vunpack.c.l.b16 %v274
      %v342 = vunpack.c.l.b16 %v275
      %v343 = vunpack.c.h.b16 %v275
      %v344 = vunpack.c.l.b16 %v276
      %v345 = vunpack.c.l.b16 %v277
      %v346 = vunpack.c.h.b16 %v277
      %v347 = vunpack.c.l.b16 %v278
      %v348 = vunpack.c.l.b16 %v279
      %v349 = vunpack.c.h.b16 %v279
      %v350 = vunpack.c.l.b16 %v280
      %v351 = vunpack.c.l.b16 %v281
      %v352 = vunpack.c.h.b16 %v281
      %v353 = vunpack.c.l.b16 %v282
      %v354 = vunpack.c.l.b16 %v283
      %v355 = vunpack.c.h.b16 %v283
      %v356 = vunpack.c.l.b16 %v284
      %v357 = vunpack.c.l.b16 %v285
      %v358 = vunpack.c.h.b16 %v285
      %v359 = vunpack.c.l.b16 %v286
      %v360 = vunpack.c.l.b16 %v287
      %v361 = vunpack.c.h.b16 %v287
      %v362 = vunpack.c.l.b16 %v288
      %v363 = vunpack.c.l.b16 %v289
      %v364 = vunpack.c.h.b16 %v289
      %v365 = vunpack.c.l.b16 %v290
      %v366 = vunpack.c.l.b16 %v291
      %v367 = vunpack.c.h.b16 %v291
      %v368 = vunpack.c.l.b16 %v292
      %v369 = vunpack.c.l.b16 %v293
      %v370 = vunpack.c.h.b16 %v293
      %v371 = vunpack.c.l.b16 %v294
      %v372 = vunpack.c.l.b16 %v295
      %v373 = vunpack.c.h.b16 %v295
      %v374 = vunpack.c.l.b16 %v296
      %v375 = vunpack.c.l.b16 %v297
      %v376 = vunpack.c.h.b16 %v297
      %v377 = vunpack.c.l.b16 %v298
      %v378 = vunpack.c.l.b16 %v299
      %v379 = vunpack.c.h.b16 %v299
      %v380 = vunpack.c.l.b16 %v300
      %v381 = vpack.c.b16 %v336, %v333
      %v382 = vpack.c.b16 %v337, %v334
      %v383 = vpack.c.b16 %v338, %v335
      %v384 = vpack.c.b16 %v342, %v339
      %v385 = vpack.c.b16 %v343, %v340
      %v386 = vpack.c.b16 %v344, %v341
      %v387 = vpack.c.b16 %v348, %v345
      %v388 = vpack.c.b16 %v349, %v346
      %v389 = vpack.c.b16 %v350, %v347
      %v390 = vpack.c.b16 %v354, %v351
      %v391 = vpack.c.b16 %v355, %v352
      %v392 = vpack.c.b16 %v356, %v353
      %v393 = vpack.c.b16 %v360, %v357
      %v394 = vpack.c.b16 %v361, %v358
      %v395 = vpack.c.b16 %v362, %v359
      %v396 = vpack.c.b16 %v366, %v363
      %v397 = vpack.c.b16 %v367, %v364
      %v398 = vpack.c.b16 %v368, %v365
      %v399 = vpack.c.b16 %v372, %v369
      %v400 = vpack.c.b16 %v373, %v370
      %v401 = vpack.c.b16 %v374, %v371
      %v402 = vpack.c.b16 %v378, %v375
      %v403 = vpack.c.b16 %v379, %v376
      %v404 = vpack.c.b16 %v380, %v377
      %429 = vst [vmem:[#allocation2] sm:$0xff] %v381
      %430 = vst [vmem:[#allocation2 + $0x8] sm:$0xff] %v382
      %431 = vst [vmem:[#allocation2 + $0x10] sm:$0xff] %v383
      %432 = vst [vmem:[#allocation2 + $0x18] sm:$0xff] %v384
      %433 = vst [vmem:[#allocation2 + $0x20] sm:$0xff] %v385
      %434 = vst [vmem:[#allocation2 + $0x28] sm:$0xff] %v386
      %435 = vst [vmem:[#allocation2 + $0x30] sm:$0xff] %v387
      %436 = vst [vmem:[#allocation2 + $0x38] sm:$0xff] %v388
      %437 = vst [vmem:[#allocation2 + $0x40] sm:$0xff] %v389
      %438 = vst [vmem:[#allocation2 + $0x48] sm:$0xff] %v390
      %439 = vst [vmem:[#allocation2 + $0x50] sm:$0xff] %v391
      %440 = vst [vmem:[#allocation2 + $0x58] sm:$0xff] %v392
      %441 = vst [vmem:[#allocation2 + $0x60] sm:$0xff] %v393
      %442 = vst [vmem:[#allocation2 + $0x68] sm:$0xff] %v394
      %443 = vst [vmem:[#allocation2 + $0x70] sm:$0xff] %v395
      %444 = vst [vmem:[#allocation2 + $0x78] sm:$0xff] %v396
      %445 = vst [vmem:[#allocation2 + $0x80] sm:$0xff] %v397
      %446 = vst [vmem:[#allocation2 + $0x88] sm:$0xff] %v398
      %447 = vst [vmem:[#allocation2 + $0x90] sm:$0xff] %v399
      %448 = vst [vmem:[#allocation2 + $0x98] sm:$0xff] %v400
      %449 = vst [vmem:[#allocation2 + $0xa0] sm:$0xff] %v401
      %450 = vst [vmem:[#allocation2 + $0xa8] sm:$0xff] %v402
      %451 = vst [vmem:[#allocation2 + $0xb0] sm:$0xff] %v403
      %452 = vst [vmem:[#allocation2 + $0xb8] sm:$0xff] %v404
      %v453 = vld [vmem:[%s258] sm:$0xff]
      %v454 = vld [vmem:[%s258 + $0x8] sm:$0xf]
      %v455 = vld [vmem:[%s258 + $0xc] sm:$0xff]
      %v456 = vld [vmem:[%s258 + $0x14] sm:$0xf]
      %v461 = vunpack.c.l.b16 %v453
      %v462 = vunpack.c.h.b16 %v453
      %v463 = vunpack.c.l.b16 %v454
      %v464 = vunpack.c.l.b16 %v455
      %v465 = vunpack.c.h.b16 %v455
      %v466 = vunpack.c.l.b16 %v456
      %v467 = vpack.c.b16 %v464, %v461
      %v468 = vpack.c.b16 %v465, %v462
      %v469 = vpack.c.b16 %v466, %v463
      %473 = vst [vmem:[#allocation2 + $0xc0] sm:$0xff] %v467
      %474 = vst [vmem:[#allocation2 + $0xc8] sm:$0xff] %v468
      %475 = vst [vmem:[#allocation2 + $0xd0] sm:$0xff] %v469
      %v476 = vld [vmem:[#allocation2] sm:$0xff]
      %v477 = vld [vmem:[#allocation2 + $0x18] sm:$0xff]
      %v478 = vld [vmem:[#allocation2 + $0x30] sm:$0xff]
      %v479 = vld [vmem:[#allocation2 + $0x48] sm:$0xff]
      %v480 = vld [vmem:[#allocation2 + $0x60] sm:$0xff]
      %v481 = vld [vmem:[#allocation2 + $0x78] sm:$0xff]
      %v482 = vld [vmem:[#allocation2 + $0x90] sm:$0xff]
      %v483 = vld [vmem:[#allocation2 + $0xa8] sm:$0xff]
      %v484 = vld [vmem:[%s2] sm:$0xf]
      %v485 = vld [vmem:[%s2 + $0x4] sm:$0xf]
      %v486 = vld [vmem:[%s2 + $0x8] sm:$0xf]
      %v487 = vld [vmem:[%s2 + $0xc] sm:$0xf]
      %v488 = vld [vmem:[%s2 + $0x10] sm:$0xf]
      %v489 = vld [vmem:[%s2 + $0x14] sm:$0xf]
      %v490 = vld [vmem:[%s2 + $0x18] sm:$0xf]
      %v491 = vld [vmem:[%s2 + $0x1c] sm:$0xf]
      %v492 = vld [vmem:[%s2 + $0x20] sm:$0xf]
      %v493 = vld [vmem:[%s2 + $0x24] sm:$0xf]
      %v494 = vld [vmem:[%s2 + $0x28] sm:$0xf]
      %v495 = vld [vmem:[%s2 + $0x2c] sm:$0xf]
      %v496 = vld [vmem:[#allocation2 + $0x8] sm:$0xff]
      %v497 = vld [vmem:[#allocation2 + $0x20] sm:$0xff]
      %v498 = vld [vmem:[#allocation2 + $0x38] sm:$0xff]
      %v499 = vld [vmem:[#allocation2 + $0x50] sm:$0xff]
      %v500 = vld [vmem:[#allocation2 + $0x68] sm:$0xff]
      %v501 = vld [vmem:[#allocation2 + $0x80] sm:$0xff]
      %v502 = vld [vmem:[#allocation2 + $0x98] sm:$0xff]
      %v503 = vld [vmem:[#allocation2 + $0xb0] sm:$0xff]
      %s504 = scalar_lea.vmem %s2, 48
      %v505 = vld [vmem:[%s504] sm:$0xf]
      %v506 = vld [vmem:[%s504 + $0x4] sm:$0xf]
      %v507 = vld [vmem:[%s504 + $0x8] sm:$0xf]
      %v508 = vld [vmem:[%s504 + $0xc] sm:$0xf]
      %v509 = vld [vmem:[%s504 + $0x10] sm:$0xf]
      %v510 = vld [vmem:[%s504 + $0x14] sm:$0xf]
      %v511 = vld [vmem:[%s504 + $0x18] sm:$0xf]
      %v512 = vld [vmem:[%s504 + $0x1c] sm:$0xf]
      %v513 = vld [vmem:[%s504 + $0x20] sm:$0xf]
      %v514 = vld [vmem:[%s504 + $0x24] sm:$0xf]
      %v515 = vld [vmem:[%s504 + $0x28] sm:$0xf]
      %v516 = vld [vmem:[%s504 + $0x2c] sm:$0xf]
      %533 = vrot.lane.b32.xlu0 %v476, 32
      %v534 = vpop.permute.xlu0 %533
      %535 = vrot.lane.b32.xlu0 %v496, 32
      %v536 = vpop.permute.xlu0 %535
      %537 = vrot.lane.b32.xlu0 %v477, 32
      %v538 = vpop.permute.xlu0 %537
      %539 = vrot.lane.b32.xlu0 %v497, 32
      %v540 = vpop.permute.xlu0 %539
      %541 = vrot.lane.b32.xlu0 %v478, 32
      %v542 = vpop.permute.xlu0 %541
      %543 = vrot.lane.b32.xlu0 %v498, 32
      %v544 = vpop.permute.xlu0 %543
      %545 = vrot.lane.b32.xlu0 %v479, 32
      %v546 = vpop.permute.xlu0 %545
      %547 = vrot.lane.b32.xlu0 %v499, 32
      %v548 = vpop.permute.xlu0 %547
      %549 = vrot.lane.b32.xlu0 %v480, 32
      %v550 = vpop.permute.xlu0 %549
      %551 = vrot.lane.b32.xlu0 %v500, 32
      %v552 = vpop.permute.xlu0 %551
      %553 = vrot.lane.b32.xlu0 %v481, 32
      %v554 = vpop.permute.xlu0 %553
      %555 = vrot.lane.b32.xlu0 %v501, 32
      %v556 = vpop.permute.xlu0 %555
      %557 = vrot.lane.b32.xlu0 %v482, 32
      %v558 = vpop.permute.xlu0 %557
      %559 = vrot.lane.b32.xlu0 %v502, 32
      %v560 = vpop.permute.xlu0 %559
      %561 = vrot.lane.b32.xlu0 %v483, 32
      %v562 = vpop.permute.xlu0 %561
      %563 = vrot.lane.b32.xlu0 %v503, 32
      %v564 = vpop.permute.xlu0 %563
      %vm565 = vcmask 261120
      %v566 = vsel %vm565, %v534, %v536
      %v567 = vsel %vm565, %v538, %v540
      %v568 = vsel %vm565, %v542, %v544
      %v569 = vsel %vm565, %v546, %v548
      %v570 = vsel %vm565, %v550, %v552
      %v571 = vsel %vm565, %v554, %v556
      %v572 = vsel %vm565, %v558, %v560
      %v573 = vsel %vm565, %v562, %v564
      %v586 = vunpack.c.l.b16 %v505
      %v587 = vunpack.c.l.b16 %v506
      %v588 = vunpack.c.l.b16 %v507
      %v589 = vunpack.c.l.b16 %v508
      %v590 = vunpack.c.l.b16 %v509
      %v591 = vunpack.c.l.b16 %v510
      %v592 = vunpack.c.l.b16 %v511
      %v593 = vunpack.c.l.b16 %v512
      %v594 = vunpack.c.l.b16 %v513
      %v595 = vunpack.c.l.b16 %v514
      %v596 = vunpack.c.l.b16 %v515
      %v597 = vunpack.c.l.b16 %v516
      %v598 = vpack.c.b16 %v587, %v586
      %v599 = vpack.c.b16 %v589, %v588
      %v600 = vpack.c.b16 %v591, %v590
      %v601 = vpack.c.b16 %v593, %v592
      %v602 = vpack.c.b16 %v595, %v594
      %v603 = vpack.c.b16 %v597, %v596
      %vm610 = vcmask 785408
      %v612 = vsel %vm610, %v566, 0
      %v615 = vsel %vm610, %v567, 0
      %v618 = vsel %vm610, %v568, 0
      %v621 = vsel %vm610, %v569, 0
      %v624 = vsel %vm610, %v570, 0
      %v627 = vsel %vm610, %v571, 0
      %v630 = vsel %vm610, %v572, 0
      %v633 = vsel %vm610, %v573, 0
      %635 = vmatprep.subr.bf16.mxu0 0
      %636 = vmatpush1.bf16.msra.mxu0 %v598
      %637 = vmatprep.subr.bf16.mxu0 0
      %638 = vmatpush1.bf16.msra.mxu0 %v599
      %639 = vmatprep.subr.bf16.mxu0 0
      %640 = vmatpush1.bf16.msra.mxu0 %v600
      %641 = vmatprep.subr.bf16.mxu0 0
      %642 = vmatpush1.bf16.msra.mxu0 %v601
      %643 = vmatprep.subr.bf16.mxu0 0
      %644 = vmatpush1.bf16.msra.mxu0 %v602
      %645 = vmatprep.subr.bf16.mxu0 0
      %646 = vmatpush1.bf16.msra.mxu0 %v603
      %647 = vmatprep.subr.bf16.mxu0 0
      %648 = vmatpush1.bf16.msra.mxu0 0
      %649 = vmatprep.subr.bf16.mxu0 0
      %650 = vmatpush1.bf16.msra.mxu0 0
      %651 = vmatprep.subr.bf16.mxu0 0
      %652 = vmatpush1.bf16.msra.mxu0 0
      %653 = vmatprep.subr.bf16.mxu0 0
      %654 = vmatpush1.bf16.msra.mxu0 0
      %655 = vmatprep.subr.bf16.mxu0 0
      %656 = vmatpush1.bf16.msra.mxu0 0
      %657 = vmatprep.subr.bf16.mxu0 0
      %658 = vmatpush1.bf16.msra.mxu0 0
      %659 = vmatprep.subr.bf16.mxu0 0
      %660 = vmatpush1.bf16.msra.mxu0 0
      %661 = vmatprep.subr.bf16.mxu0 0
      %662 = vmatpush1.bf16.msra.mxu0 0
      %663 = vmatprep.subr.bf16.mxu0 0
      %664 = vmatpush1.bf16.msra.mxu0 0
      %665 = vmatprep.subr.bf16.mxu0 0
      %666 = vmatpush1.bf16.msra.mxu0 0
      %667 = vmatprep.mubr.bf16.mxu0 0
      %668 = vmatmul.mubr.bf16.gmra.mrb[0].mxu0 %v612
      %v669 = vpop.f32.mrb[0].mxu0
      %v670 = vadd.f32 0.0, %v669
      %v671 = vpop.f32.mrb[0].mxu0
      %v672 = vpop.f32.mrb[0].mxu0
      %v673 = vadd.f32 0.0, %v672
      %v674 = vpop.f32.mrb[0].mxu0
      %675 = vmatprep.mubr.bf16.mxu0 0
      %676 = vmatmul.mubr.bf16.gmra.mrb[0].mxu0 %v615
      %v677 = vpop.f32.mrb[0].mxu0
      %v678 = vadd.f32 0.0, %v677
      %v679 = vpop.f32.mrb[0].mxu0
      %v680 = vpop.f32.mrb[0].mxu0
      %v681 = vadd.f32 0.0, %v680
      %v682 = vpop.f32.mrb[0].mxu0
      %683 = vmatprep.mubr.bf16.mxu0 0
      %684 = vmatmul.mubr.bf16.gmra.mrb[0].mxu0 %v618
      %v685 = vpop.f32.mrb[0].mxu0
      %v686 = vadd.f32 0.0, %v685
      %v687 = vpop.f32.mrb[0].mxu0
      %v688 = vpop.f32.mrb[0].mxu0
      %v689 = vadd.f32 0.0, %v688
      %v690 = vpop.f32.mrb[0].mxu0
      %691 = vmatprep.mubr.bf16.mxu0 0
      %692 = vmatmul.mubr.bf16.gmra.mrb[0].mxu0 %v621
      %v693 = vpop.f32.mrb[0].mxu0
      %v694 = vadd.f32 0.0, %v693
      %v695 = vpop.f32.mrb[0].mxu0
      %v696 = vpop.f32.mrb[0].mxu0
      %v697 = vadd.f32 0.0, %v696
      %v698 = vpop.f32.mrb[0].mxu0
      %699 = vmatprep.mubr.bf16.mxu0 0
      %700 = vmatmul.mubr.bf16.gmra.mrb[0].mxu0 %v624
      %v701 = vpop.f32.mrb[0].mxu0
      %v702 = vadd.f32 0.0, %v701
      %v703 = vpop.f32.mrb[0].mxu0
      %v704 = vpop.f32.mrb[0].mxu0
      %v705 = vadd.f32 0.0, %v704
      %v706 = vpop.f32.mrb[0].mxu0
      %707 = vmatprep.mubr.bf16.mxu0 0
      %708 = vmatmul.mubr.bf16.gmra.mrb[0].mxu0 %v627
      %v709 = vpop.f32.mrb[0].mxu0
      %v710 = vadd.f32 0.0, %v709
      %v711 = vpop.f32.mrb[0].mxu0
      %v712 = vpop.f32.mrb[0].mxu0
      %v713 = vadd.f32 0.0, %v712
      %v714 = vpop.f32.mrb[0].mxu0
      %715 = vmatprep.mubr.bf16.mxu0 0
      %716 = vmatmul.mubr.bf16.gmra.mrb[0].mxu0 %v630
      %v717 = vpop.f32.mrb[0].mxu0
      %v718 = vadd.f32 0.0, %v717
      %v719 = vpop.f32.mrb[0].mxu0
      %v720 = vpop.f32.mrb[0].mxu0
      %v721 = vadd.f32 0.0, %v720
      %v722 = vpop.f32.mrb[0].mxu0
      %723 = vmatprep.mubr.bf16.mxu0 0
      %724 = vmatmul.mubr.bf16.gmra.mrb[0].mxu0 %v633
      %v725 = vpop.f32.mrb[0].mxu0
      %v726 = vadd.f32 0.0, %v725
      %v727 = vpop.f32.mrb[0].mxu0
      %v728 = vpop.f32.mrb[0].mxu0
      %v729 = vadd.f32 0.0, %v728
      %v730 = vpop.f32.mrb[0].mxu0
      %731 = vdwg.mxu0
      %v744 = vunpack.c.l.b16 %v484
      %v745 = vunpack.c.l.b16 %v485
      %v746 = vunpack.c.l.b16 %v486
      %v747 = vunpack.c.l.b16 %v487
      %v748 = vunpack.c.l.b16 %v488
      %v749 = vunpack.c.l.b16 %v489
      %v750 = vunpack.c.l.b16 %v490
      %v751 = vunpack.c.l.b16 %v491
      %v752 = vunpack.c.l.b16 %v492
      %v753 = vunpack.c.l.b16 %v493
      %v754 = vunpack.c.l.b16 %v494
      %v755 = vunpack.c.l.b16 %v495
      %v756 = vpack.c.b16 %v745, %v744
      %v757 = vpack.c.b16 %v747, %v746
      %v758 = vpack.c.b16 %v749, %v748
      %v759 = vpack.c.b16 %v751, %v750
      %v760 = vpack.c.b16 %v753, %v752
      %v761 = vpack.c.b16 %v755, %v754
      %v769 = vsel %vm610, %v476, 0
      %v772 = vsel %vm610, %v477, 0
      %v775 = vsel %vm610, %v478, 0
      %v778 = vsel %vm610, %v479, 0
      %v781 = vsel %vm610, %v480, 0
      %v784 = vsel %vm610, %v481, 0
      %v787 = vsel %vm610, %v482, 0
      %v790 = vsel %vm610, %v483, 0
      %792 = vmatprep.subr.bf16.mxu0 0
      %793 = vmatpush1.bf16.msra.mxu0 %v756
      %794 = vmatprep.subr.bf16.mxu0 0
      %795 = vmatpush1.bf16.msra.mxu0 %v757
      %796 = vmatprep.subr.bf16.mxu0 0
      %797 = vmatpush1.bf16.msra.mxu0 %v758
      %798 = vmatprep.subr.bf16.mxu0 0
      %799 = vmatpush1.bf16.msra.mxu0 %v759
      %800 = vmatprep.subr.bf16.mxu0 0
      %801 = vmatpush1.bf16.msra.mxu0 %v760
      %802 = vmatprep.subr.bf16.mxu0 0
      %803 = vmatpush1.bf16.msra.mxu0 %v761
      %804 = vmatprep.subr.bf16.mxu0 0
      %805 = vmatpush1.bf16.msra.mxu0 0
      %806 = vmatprep.subr.bf16.mxu0 0
      %807 = vmatpush1.bf16.msra.mxu0 0
      %808 = vmatprep.subr.bf16.mxu0 0
      %809 = vmatpush1.bf16.msra.mxu0 0
      %810 = vmatprep.subr.bf16.mxu0 0
      %811 = vmatpush1.bf16.msra.mxu0 0
      %812 = vmatprep.subr.bf16.mxu0 0
      %813 = vmatpush1.bf16.msra.mxu0 0
      %814 = vmatprep.subr.bf16.mxu0 0
      %815 = vmatpush1.bf16.msra.mxu0 0
      %816 = vmatprep.subr.bf16.mxu0 0
      %817 = vmatpush1.bf16.msra.mxu0 0
      %818 = vmatprep.subr.bf16.mxu0 0
      %819 = vmatpush1.bf16.msra.mxu0 0
      %820 = vmatprep.subr.bf16.mxu0 0
      %821 = vmatpush1.bf16.msra.mxu0 0
      %822 = vmatprep.subr.bf16.mxu0 0
      %823 = vmatpush1.bf16.msra.mxu0 0
      %824 = vmatprep.mubr.bf16.mxu0 0
      %825 = vmatmul.mubr.bf16.gmra.mrb[0].mxu0 %v769
      %v826 = vpop.f32.mrb[0].mxu0
      %v827 = vadd.f32 %v670, %v826
      %v828 = vpop.f32.mrb[0].mxu0
      %v829 = vpop.f32.mrb[0].mxu0
      %v830 = vadd.f32 %v673, %v829
      %v831 = vpop.f32.mrb[0].mxu0
      %832 = vmatprep.mubr.bf16.mxu0 0
      %833 = vmatmul.mubr.bf16.gmra.mrb[0].mxu0 %v772
      %v834 = vpop.f32.mrb[0].mxu0
      %v835 = vadd.f32 %v678, %v834
      %v836 = vpop.f32.mrb[0].mxu0
      %v837 = vpop.f32.mrb[0].mxu0
      %v838 = vadd.f32 %v681, %v837
      %v839 = vpop.f32.mrb[0].mxu0
      %840 = vmatprep.mubr.bf16.mxu0 0
      %841 = vmatmul.mubr.bf16.gmra.mrb[0].mxu0 %v775
      %v842 = vpop.f32.mrb[0].mxu0
      %v843 = vadd.f32 %v686, %v842
      %v844 = vpop.f32.mrb[0].mxu0
      %v845 = vpop.f32.mrb[0].mxu0
      %v846 = vadd.f32 %v689, %v845
      %v847 = vpop.f32.mrb[0].mxu0
      %848 = vmatprep.mubr.bf16.mxu0 0
      %849 = vmatmul.mubr.bf16.gmra.mrb[0].mxu0 %v778
      %v850 = vpop.f32.mrb[0].mxu0
      %v851 = vadd.f32 %v694, %v850
      %v852 = vpop.f32.mrb[0].mxu0
      %v853 = vpop.f32.mrb[0].mxu0
      %v854 = vadd.f32 %v697, %v853
      %v855 = vpop.f32.mrb[0].mxu0
      %856 = vmatprep.mubr.bf16.mxu0 0
      %857 = vmatmul.mubr.bf16.gmra.mrb[0].mxu0 %v781
      %v858 = vpop.f32.mrb[0].mxu0
      %v859 = vadd.f32 %v702, %v858
      %v860 = vpop.f32.mrb[0].mxu0
      %v861 = vpop.f32.mrb[0].mxu0
      %v862 = vadd.f32 %v705, %v861
      %v863 = vpop.f32.mrb[0].mxu0
      %864 = vmatprep.mubr.bf16.mxu0 0
      %865 = vmatmul.mubr.bf16.gmra.mrb[0].mxu0 %v784
      %v866 = vpop.f32.mrb[0].mxu0
      %v867 = vadd.f32 %v710, %v866
      %v868 = vpop.f32.mrb[0].mxu0
      %v869 = vpop.f32.mrb[0].mxu0
      %v870 = vadd.f32 %v713, %v869
      %v871 = vpop.f32.mrb[0].mxu0
      %872 = vmatprep.mubr.bf16.mxu0 0
      %873 = vmatmul.mubr.bf16.gmra.mrb[0].mxu0 %v787
      %v874 = vpop.f32.mrb[0].mxu0
      %v875 = vadd.f32 %v718, %v874
      %v876 = vpop.f32.mrb[0].mxu0
      %v877 = vpop.f32.mrb[0].mxu0
      %v878 = vadd.f32 %v721, %v877
      %v879 = vpop.f32.mrb[0].mxu0
      %880 = vmatprep.mubr.bf16.mxu0 0
      %881 = vmatmul.mubr.bf16.gmra.mrb[0].mxu0 %v790
      %v882 = vpop.f32.mrb[0].mxu0
      %v883 = vadd.f32 %v726, %v882
      %v884 = vpop.f32.mrb[0].mxu0
      %v885 = vpop.f32.mrb[0].mxu0
      %v886 = vadd.f32 %v729, %v885
      %v887 = vpop.f32.mrb[0].mxu0
      %888 = vdwg.mxu0
      %v889 = vld [vmem:[#allocation2] sm:$0xff]
      %v890 = vld [vmem:[#allocation2 + $0x18] sm:$0xff]
      %v891 = vld [vmem:[#allocation2 + $0x30] sm:$0xff]
      %v892 = vld [vmem:[#allocation2 + $0x48] sm:$0xff]
      %v893 = vld [vmem:[#allocation2 + $0x60] sm:$0xff]
      %v894 = vld [vmem:[#allocation2 + $0x78] sm:$0xff]
      %v895 = vld [vmem:[#allocation2 + $0x90] sm:$0xff]
      %v896 = vld [vmem:[#allocation2 + $0xa8] sm:$0xff]
      %v897 = vld [vmem:[#allocation2 + $0xc0] sm:$0x1]
      %s898 = scalar_lea.vmem %s2, 96
      %v899 = vld [vmem:[%s898] sm:$0xf]
      %v900 = vld [vmem:[%s898 + $0x4] sm:$0xf]
      %v901 = vld [vmem:[%s898 + $0x8] sm:$0xf]
      %v902 = vld [vmem:[%s898 + $0xc] sm:$0xf]
      %v903 = vld [vmem:[%s898 + $0x10] sm:$0xf]
      %v904 = vld [vmem:[%s898 + $0x14] sm:$0xf]
      %v905 = vld [vmem:[%s898 + $0x18] sm:$0xf]
      %v906 = vld [vmem:[%s898 + $0x1c] sm:$0xf]
      %v907 = vld [vmem:[%s898 + $0x20] sm:$0xf]
      %v908 = vld [vmem:[%s898 + $0x24] sm:$0xf]
      %v909 = vld [vmem:[%s898 + $0x28] sm:$0xf]
      %v910 = vld [vmem:[%s898 + $0x2c] sm:$0xf]
      %vm911 = vsmask.f32 7424
      %v913 = vshrl.u32 %v889, 16
      %v915 = vshll.u32 %v889, 16
      %v917 = vrot.slane %v915, 1
      %v918 = vor.u32 %v913, %v917
      %v920 = vshll.u32 %v890, 16
      %v922 = vrot.slane %v920, 1
      %v923 = vsel %vm911, %v918, %v922
      %v924 = vshrl.u32 %v890, 16
      %v926 = vor.u32 %v924, %v922
      %v928 = vshll.u32 %v891, 16
      %v930 = vrot.slane %v928, 1
      %v931 = vsel %vm911, %v926, %v930
      %v932 = vshrl.u32 %v891, 16
      %v934 = vor.u32 %v932, %v930
      %v936 = vshll.u32 %v892, 16
      %v938 = vrot.slane %v936, 1
      %v939 = vsel %vm911, %v934, %v938
      %v940 = vshrl.u32 %v892, 16
      %v942 = vor.u32 %v940, %v938
      %v944 = vshll.u32 %v893, 16
      %v946 = vrot.slane %v944, 1
      %v947 = vsel %vm911, %v942, %v946
      %v948 = vshrl.u32 %v893, 16
      %v950 = vor.u32 %v948, %v946
      %v952 = vshll.u32 %v894, 16
      %v954 = vrot.slane %v952, 1
      %v955 = vsel %vm911, %v950, %v954
      %v956 = vshrl.u32 %v894, 16
      %v958 = vor.u32 %v956, %v954
      %v960 = vshll.u32 %v895, 16
      %v962 = vrot.slane %v960, 1
      %v963 = vsel %vm911, %v958, %v962
      %v964 = vshrl.u32 %v895, 16
      %v966 = vor.u32 %v964, %v962
      %v968 = vshll.u32 %v896, 16
      %v970 = vrot.slane %v968, 1
      %v971 = vsel %vm911, %v966, %v970
      %v972 = vshrl.u32 %v896, 16
      %v974 = vor.u32 %v972, %v970
      %v976 = vshll.u32 %v897, 16
      %v978 = vrot.slane %v976, 1
      %v979 = vsel %vm911, %v974, %v978
      %v992 = vunpack.c.l.b16 %v899
      %v993 = vunpack.c.l.b16 %v900
      %v994 = vunpack.c.l.b16 %v901
      %v995 = vunpack.c.l.b16 %v902
      %v996 = vunpack.c.l.b16 %v903
      %v997 = vunpack.c.l.b16 %v904
      %v998 = vunpack.c.l.b16 %v905
      %v999 = vunpack.c.l.b16 %v906
      %v1000 = vunpack.c.l.b16 %v907
      %v1001 = vunpack.c.l.b16 %v908
      %v1002 = vunpack.c.l.b16 %v909
      %v1003 = vunpack.c.l.b16 %v910
      %v1004 = vpack.c.b16 %v993, %v992
      %v1005 = vpack.c.b16 %v995, %v994
      %v1006 = vpack.c.b16 %v997, %v996
      %v1007 = vpack.c.b16 %v999, %v998
      %v1008 = vpack.c.b16 %v1001, %v1000
      %v1009 = vpack.c.b16 %v1003, %v1002
      %v1017 = vsel %vm610, %v923, 0
      %v1020 = vsel %vm610, %v931, 0
      %v1023 = vsel %vm610, %v939, 0
      %v1026 = vsel %vm610, %v947, 0
      %v1029 = vsel %vm610, %v955, 0
      %v1032 = vsel %vm610, %v963, 0
      %v1035 = vsel %vm610, %v971, 0
      %v1038 = vsel %vm610, %v979, 0
      %1040 = vmatprep.subr.bf16.mxu0 0
      %1041 = vmatpush1.bf16.msra.mxu0 %v1004
      %1042 = vmatprep.subr.bf16.mxu0 0
      %1043 = vmatpush1.bf16.msra.mxu0 %v1005
      %1044 = vmatprep.subr.bf16.mxu0 0
      %1045 = vmatpush1.bf16.msra.mxu0 %v1006
      %1046 = vmatprep.subr.bf16.mxu0 0
      %1047 = vmatpush1.bf16.msra.mxu0 %v1007
      %1048 = vmatprep.subr.bf16.mxu0 0
      %1049 = vmatpush1.bf16.msra.mxu0 %v1008
      %1050 = vmatprep.subr.bf16.mxu0 0
      %1051 = vmatpush1.bf16.msra.mxu0 %v1009
      %1052 = vmatprep.subr.bf16.mxu0 0
      %1053 = vmatpush1.bf16.msra.mxu0 0
      %1054 = vmatprep.subr.bf16.mxu0 0
      %1055 = vmatpush1.bf16.msra.mxu0 0
      %1056 = vmatprep.subr.bf16.mxu0 0
      %1057 = vmatpush1.bf16.msra.mxu0 0
      %1058 = vmatprep.subr.bf16.mxu0 0
      %1059 = vmatpush1.bf16.msra.mxu0 0
      %1060 = vmatprep.subr.bf16.mxu0 0
      %1061 = vmatpush1.bf16.msra.mxu0 0
      %1062 = vmatprep.subr.bf16.mxu0 0
      %1063 = vmatpush1.bf16.msra.mxu0 0
      %1064 = vmatprep.subr.bf16.mxu0 0
      %1065 = vmatpush1.bf16.msra.mxu0 0
      %1066 = vmatprep.subr.bf16.mxu0 0
      %1067 = vmatpush1.bf16.msra.mxu0 0
      %1068 = vmatprep.subr.bf16.mxu0 0
      %1069 = vmatpush1.bf16.msra.mxu0 0
      %1070 = vmatprep.subr.bf16.mxu0 0
      %1071 = vmatpush1.bf16.msra.mxu0 0
      %1072 = vmatprep.mubr.bf16.mxu0 0
      %1073 = vmatmul.mubr.bf16.gmra.mrb[0].mxu0 %v1017
      %v1074 = vpop.f32.mrb[0].mxu0
      %v1075 = vadd.f32 0.0, %v1074
      %v1076 = vpop.f32.mrb[0].mxu0
      %v1077 = vpop.f32.mrb[0].mxu0
      %v1078 = vadd.f32 0.0, %v1077
      %v1079 = vpop.f32.mrb[0].mxu0
      %1080 = vmatprep.mubr.bf16.mxu0 0
      %1081 = vmatmul.mubr.bf16.gmra.mrb[0].mxu0 %v1020
      %v1082 = vpop.f32.mrb[0].mxu0
      %v1083 = vadd.f32 0.0, %v1082
      %v1084 = vpop.f32.mrb[0].mxu0
      %v1085 = vpop.f32.mrb[0].mxu0
      %v1086 = vadd.f32 0.0, %v1085
      %v1087 = vpop.f32.mrb[0].mxu0
      %1088 = vmatprep.mubr.bf16.mxu0 0
      %1089 = vmatmul.mubr.bf16.gmra.mrb[0].mxu0 %v1023
      %v1090 = vpop.f32.mrb[0].mxu0
      %v1091 = vadd.f32 0.0, %v1090
      %v1092 = vpop.f32.mrb[0].mxu0
      %v1093 = vpop.f32.mrb[0].mxu0
      %v1094 = vadd.f32 0.0, %v1093
      %v1095 = vpop.f32.mrb[0].mxu0
      %1096 = vmatprep.mubr.bf16.mxu0 0
      %1097 = vmatmul.mubr.bf16.gmra.mrb[0].mxu0 %v1026
      %v1098 = vpop.f32.mrb[0].mxu0
      %v1099 = vadd.f32 0.0, %v1098
      %v1100 = vpop.f32.mrb[0].mxu0
      %v1101 = vpop.f32.mrb[0].mxu0
      %v1102 = vadd.f32 0.0, %v1101
      %v1103 = vpop.f32.mrb[0].mxu0
      %1104 = vmatprep.mubr.bf16.mxu0 0
      %1105 = vmatmul.mubr.bf16.gmra.mrb[0].mxu0 %v1029
      %v1106 = vpop.f32.mrb[0].mxu0
      %v1107 = vadd.f32 0.0, %v1106
      %v1108 = vpop.f32.mrb[0].mxu0
      %v1109 = vpop.f32.mrb[0].mxu0
      %v1110 = vadd.f32 0.0, %v1109
      %v1111 = vpop.f32.mrb[0].mxu0
      %1112 = vmatprep.mubr.bf16.mxu0 0
      %1113 = vmatmul.mubr.bf16.gmra.mrb[0].mxu0 %v1032
      %v1114 = vpop.f32.mrb[0].mxu0
      %v1115 = vadd.f32 0.0, %v1114
      %v1116 = vpop.f32.mrb[0].mxu0
      %v1117 = vpop.f32.mrb[0].mxu0
      %v1118 = vadd.f32 0.0, %v1117
      %v1119 = vpop.f32.mrb[0].mxu0
      %1120 = vmatprep.mubr.bf16.mxu0 0
      %1121 = vmatmul.mubr.bf16.gmra.mrb[0].mxu0 %v1035
      %v1122 = vpop.f32.mrb[0].mxu0
      %v1123 = vadd.f32 0.0, %v1122
      %v1124 = vpop.f32.mrb[0].mxu0
      %v1125 = vpop.f32.mrb[0].mxu0
      %v1126 = vadd.f32 0.0, %v1125
      %v1127 = vpop.f32.mrb[0].mxu0
      %1128 = vmatprep.mubr.bf16.mxu0 0
      %1129 = vmatmul.mubr.bf16.gmra.mrb[0].mxu0 %v1038
      %v1130 = vpop.f32.mrb[0].mxu0
      %v1131 = vadd.f32 0.0, %v1130
      %v1132 = vpop.f32.mrb[0].mxu0
      %v1133 = vpop.f32.mrb[0].mxu0
      %v1134 = vadd.f32 0.0, %v1133
      %v1135 = vpop.f32.mrb[0].mxu0
      %1136 = vdwg.mxu0
      %v1137 = vadd.f32 %v827, %v1075
      %v1138 = vadd.f32 %v830, %v1078
      %v1139 = vadd.f32 %v835, %v1083
      %v1140 = vadd.f32 %v838, %v1086
      %v1141 = vadd.f32 %v843, %v1091
      %v1142 = vadd.f32 %v846, %v1094
      %v1143 = vadd.f32 %v851, %v1099
      %v1144 = vadd.f32 %v854, %v1102
      %v1145 = vadd.f32 %v859, %v1107
      %v1146 = vadd.f32 %v862, %v1110
      %v1147 = vadd.f32 %v867, %v1115
      %v1148 = vadd.f32 %v870, %v1118
      %v1149 = vadd.f32 %v875, %v1123
      %v1150 = vadd.f32 %v878, %v1126
      %v1151 = vadd.f32 %v883, %v1131
      %v1152 = vadd.f32 %v886, %v1134
      %v1153 = vld [vmem:[#allocation2 + $0x8] sm:$0xff]
      %v1154 = vld [vmem:[#allocation2 + $0x10] sm:$0xff]
      %v1155 = vld [vmem:[#allocation2 + $0x20] sm:$0xff]
      %v1156 = vld [vmem:[#allocation2 + $0x28] sm:$0xff]
      %v1157 = vld [vmem:[#allocation2 + $0x38] sm:$0xff]
      %v1158 = vld [vmem:[#allocation2 + $0x40] sm:$0xff]
      %v1159 = vld [vmem:[#allocation2 + $0x50] sm:$0xff]
      %v1160 = vld [vmem:[#allocation2 + $0x58] sm:$0xff]
      %v1161 = vld [vmem:[#allocation2 + $0x68] sm:$0xff]
      %v1162 = vld [vmem:[#allocation2 + $0x70] sm:$0xff]
      %v1163 = vld [vmem:[#allocation2 + $0x80] sm:$0xff]
      %v1164 = vld [vmem:[#allocation2 + $0x88] sm:$0xff]
      %v1165 = vld [vmem:[#allocation2 + $0x98] sm:$0xff]
      %v1166 = vld [vmem:[#allocation2 + $0xa0] sm:$0xff]
      %v1167 = vld [vmem:[#allocation2 + $0xb0] sm:$0xff]
      %v1168 = vld [vmem:[#allocation2 + $0xb8] sm:$0xff]
      %s1169 = scalar_lea.vmem %s2, 144
      %v1170 = vld [vmem:[%s1169] sm:$0xf]
      %v1171 = vld [vmem:[%s1169 + $0x4] sm:$0xf]
      %v1172 = vld [vmem:[%s1169 + $0x8] sm:$0xf]
      %v1173 = vld [vmem:[%s1169 + $0xc] sm:$0xf]
      %v1174 = vld [vmem:[%s1169 + $0x10] sm:$0xf]
      %v1175 = vld [vmem:[%s1169 + $0x14] sm:$0xf]
      %v1176 = vld [vmem:[%s1169 + $0x18] sm:$0xf]
      %v1177 = vld [vmem:[%s1169 + $0x1c] sm:$0xf]
      %v1178 = vld [vmem:[%s1169 + $0x20] sm:$0xf]
      %v1179 = vld [vmem:[%s1169 + $0x24] sm:$0xf]
      %v1180 = vld [vmem:[%s1169 + $0x28] sm:$0xf]
      %v1181 = vld [vmem:[%s1169 + $0x2c] sm:$0xf]
      %1198 = vrot.lane.b32.xlu0 %v1153, 64
      %v1199 = vpop.permute.xlu0 %1198
      %1200 = vrot.lane.b32.xlu0 %v1154, 64
      %v1201 = vpop.permute.xlu0 %1200
      %1202 = vrot.lane.b32.xlu0 %v1155, 64
      %v1203 = vpop.permute.xlu0 %1202
      %1204 = vrot.lane.b32.xlu0 %v1156, 64
      %v1205 = vpop.permute.xlu0 %1204
      %1206 = vrot.lane.b32.xlu0 %v1157, 64
      %v1207 = vpop.permute.xlu0 %1206
      %1208 = vrot.lane.b32.xlu0 %v1158, 64
      %v1209 = vpop.permute.xlu0 %1208
      %1210 = vrot.lane.b32.xlu0 %v1159, 64
      %v1211 = vpop.permute.xlu0 %1210
      %1212 = vrot.lane.b32.xlu0 %v1160, 64
      %v1213 = vpop.permute.xlu0 %1212
      %1214 = vrot.lane.b32.xlu0 %v1161, 64
      %v1215 = vpop.permute.xlu0 %1214
      %1216 = vrot.lane.b32.xlu0 %v1162, 64
      %v1217 = vpop.permute.xlu0 %1216
      %1218 = vrot.lane.b32.xlu0 %v1163, 64
      %v1219 = vpop.permute.xlu0 %1218
      %1220 = vrot.lane.b32.xlu0 %v1164, 64
      %v1221 = vpop.permute.xlu0 %1220
      %1222 = vrot.lane.b32.xlu0 %v1165, 64
      %v1223 = vpop.permute.xlu0 %1222
      %1224 = vrot.lane.b32.xlu0 %v1166, 64
      %v1225 = vpop.permute.xlu0 %1224
      %1226 = vrot.lane.b32.xlu0 %v1167, 64
      %v1227 = vpop.permute.xlu0 %1226
      %1228 = vrot.lane.b32.xlu0 %v1168, 64
      %v1229 = vpop.permute.xlu0 %1228
      %vm1230 = vcmask 523264
      %v1231 = vsel %vm1230, %v1199, %v1201
      %v1232 = vsel %vm1230, %v1203, %v1205
      %v1233 = vsel %vm1230, %v1207, %v1209
      %v1234 = vsel %vm1230, %v1211, %v1213
      %v1235 = vsel %vm1230, %v1215, %v1217
      %v1236 = vsel %vm1230, %v1219, %v1221
      %v1237 = vsel %vm1230, %v1223, %v1225
      %v1238 = vsel %vm1230, %v1227, %v1229
      %v1251 = vunpack.c.l.b16 %v1170
      %v1252 = vunpack.c.l.b16 %v1171
      %v1253 = vunpack.c.l.b16 %v1172
      %v1254 = vunpack.c.l.b16 %v1173
      %v1255 = vunpack.c.l.b16 %v1174
      %v1256 = vunpack.c.l.b16 %v1175
      %v1257 = vunpack.c.l.b16 %v1176
      %v1258 = vunpack.c.l.b16 %v1177
      %v1259 = vunpack.c.l.b16 %v1178
      %v1260 = vunpack.c.l.b16 %v1179
      %v1261 = vunpack.c.l.b16 %v1180
      %v1262 = vunpack.c.l.b16 %v1181
      %v1263 = vpack.c.b16 %v1252, %v1251
      %v1264 = vpack.c.b16 %v1254, %v1253
      %v1265 = vpack.c.b16 %v1256, %v1255
      %v1266 = vpack.c.b16 %v1258, %v1257
      %v1267 = vpack.c.b16 %v1260, %v1259
      %v1268 = vpack.c.b16 %v1262, %v1261
      %v1276 = vsel %vm610, %v1231, 0
      %v1279 = vsel %vm610, %v1232, 0
      %v1282 = vsel %vm610, %v1233, 0
      %v1285 = vsel %vm610, %v1234, 0
      %v1288 = vsel %vm610, %v1235, 0
      %v1291 = vsel %vm610, %v1236, 0
      %v1294 = vsel %vm610, %v1237, 0
      %v1297 = vsel %vm610, %v1238, 0
      %1299 = vmatprep.subr.bf16.mxu0 0
      %1300 = vmatpush1.bf16.msra.mxu0 %v1263
      %1301 = vmatprep.subr.bf16.mxu0 0
      %1302 = vmatpush1.bf16.msra.mxu0 %v1264
      %1303 = vmatprep.subr.bf16.mxu0 0
      %1304 = vmatpush1.bf16.msra.mxu0 %v1265
      %1305 = vmatprep.subr.bf16.mxu0 0
      %1306 = vmatpush1.bf16.msra.mxu0 %v1266
      %1307 = vmatprep.subr.bf16.mxu0 0
      %1308 = vmatpush1.bf16.msra.mxu0 %v1267
      %1309 = vmatprep.subr.bf16.mxu0 0
      %1310 = vmatpush1.bf16.msra.mxu0 %v1268
      %1311 = vmatprep.subr.bf16.mxu0 0
      %1312 = vmatpush1.bf16.msra.mxu0 0
      %1313 = vmatprep.subr.bf16.mxu0 0
      %1314 = vmatpush1.bf16.msra.mxu0 0
      %1315 = vmatprep.subr.bf16.mxu0 0
      %1316 = vmatpush1.bf16.msra.mxu0 0
      %1317 = vmatprep.subr.bf16.mxu0 0
      %1318 = vmatpush1.bf16.msra.mxu0 0
      %1319 = vmatprep.subr.bf16.mxu0 0
      %1320 = vmatpush1.bf16.msra.mxu0 0
      %1321 = vmatprep.subr.bf16.mxu0 0
      %1322 = vmatpush1.bf16.msra.mxu0 0
      %1323 = vmatprep.subr.bf16.mxu0 0
      %1324 = vmatpush1.bf16.msra.mxu0 0
      %1325 = vmatprep.subr.bf16.mxu0 0
      %1326 = vmatpush1.bf16.msra.mxu0 0
      %1327 = vmatprep.subr.bf16.mxu0 0
      %1328 = vmatpush1.bf16.msra.mxu0 0
      %1329 = vmatprep.subr.bf16.mxu0 0
      %1330 = vmatpush1.bf16.msra.mxu0 0
      %1331 = vmatprep.mubr.bf16.mxu0 0
      %1332 = vmatmul.mubr.bf16.gmra.mrb[0].mxu0 %v1276
      %v1333 = vpop.f32.mrb[0].mxu0
      %v1334 = vadd.f32 0.0, %v1333
      %v1335 = vpop.f32.mrb[0].mxu0
      %v1336 = vpop.f32.mrb[0].mxu0
      %v1337 = vadd.f32 0.0, %v1336
      %v1338 = vpop.f32.mrb[0].mxu0
      %1339 = vmatprep.mubr.bf16.mxu0 0
      %1340 = vmatmul.mubr.bf16.gmra.mrb[0].mxu0 %v1279
      %v1341 = vpop.f32.mrb[0].mxu0
      %v1342 = vadd.f32 0.0, %v1341
      %v1343 = vpop.f32.mrb[0].mxu0
      %v1344 = vpop.f32.mrb[0].mxu0
      %v1345 = vadd.f32 0.0, %v1344
      %v1346 = vpop.f32.mrb[0].mxu0
      %1347 = vmatprep.mubr.bf16.mxu0 0
      %1348 = vmatmul.mubr.bf16.gmra.mrb[0].mxu0 %v1282
      %v1349 = vpop.f32.mrb[0].mxu0
      %v1350 = vadd.f32 0.0, %v1349
      %v1351 = vpop.f32.mrb[0].mxu0
      %v1352 = vpop.f32.mrb[0].mxu0
      %v1353 = vadd.f32 0.0, %v1352
      %v1354 = vpop.f32.mrb[0].mxu0
      %1355 = vmatprep.mubr.bf16.mxu0 0
      %1356 = vmatmul.mubr.bf16.gmra.mrb[0].mxu0 %v1285
      %v1357 = vpop.f32.mrb[0].mxu0
      %v1358 = vadd.f32 0.0, %v1357
      %v1359 = vpop.f32.mrb[0].mxu0
      %v1360 = vpop.f32.mrb[0].mxu0
      %v1361 = vadd.f32 0.0, %v1360
      %v1362 = vpop.f32.mrb[0].mxu0
      %1363 = vmatprep.mubr.bf16.mxu0 0
      %1364 = vmatmul.mubr.bf16.gmra.mrb[0].mxu0 %v1288
      %v1365 = vpop.f32.mrb[0].mxu0
      %v1366 = vadd.f32 0.0, %v1365
      %v1367 = vpop.f32.mrb[0].mxu0
      %v1368 = vpop.f32.mrb[0].mxu0
      %v1369 = vadd.f32 0.0, %v1368
      %v1370 = vpop.f32.mrb[0].mxu0
      %1371 = vmatprep.mubr.bf16.mxu0 0
      %1372 = vmatmul.mubr.bf16.gmra.mrb[0].mxu0 %v1291
      %v1373 = vpop.f32.mrb[0].mxu0
      %v1374 = vadd.f32 0.0, %v1373
      %v1375 = vpop.f32.mrb[0].mxu0
      %v1376 = vpop.f32.mrb[0].mxu0
      %v1377 = vadd.f32 0.0, %v1376
      %v1378 = vpop.f32.mrb[0].mxu0
      %1379 = vmatprep.mubr.bf16.mxu0 0
      %1380 = vmatmul.mubr.bf16.gmra.mrb[0].mxu0 %v1294
      %v1381 = vpop.f32.mrb[0].mxu0
      %v1382 = vadd.f32 0.0, %v1381
      %v1383 = vpop.f32.mrb[0].mxu0
      %v1384 = vpop.f32.mrb[0].mxu0
      %v1385 = vadd.f32 0.0, %v1384
      %v1386 = vpop.f32.mrb[0].mxu0
      %1387 = vmatprep.mubr.bf16.mxu0 0
      %1388 = vmatmul.mubr.bf16.gmra.mrb[0].mxu0 %v1297
      %v1389 = vpop.f32.mrb[0].mxu0
      %v1390 = vadd.f32 0.0, %v1389
      %v1391 = vpop.f32.mrb[0].mxu0
      %v1392 = vpop.f32.mrb[0].mxu0
      %v1393 = vadd.f32 0.0, %v1392
      %v1394 = vpop.f32.mrb[0].mxu0
      %1395 = vdwg.mxu0
      %v1396 = vadd.f32 %v1137, %v1334
      %v1397 = vadd.f32 %v1138, %v1337
      %v1398 = vadd.f32 %v1139, %v1342
      %v1399 = vadd.f32 %v1140, %v1345
      %v1400 = vadd.f32 %v1141, %v1350
      %v1401 = vadd.f32 %v1142, %v1353
      %v1402 = vadd.f32 %v1143, %v1358
      %v1403 = vadd.f32 %v1144, %v1361
      %v1404 = vadd.f32 %v1145, %v1366
      %v1405 = vadd.f32 %v1146, %v1369
      %v1406 = vadd.f32 %v1147, %v1374
      %v1407 = vadd.f32 %v1148, %v1377
      %v1408 = vadd.f32 %v1149, %v1382
      %v1409 = vadd.f32 %v1150, %v1385
      %v1410 = vadd.f32 %v1151, %v1390
      %v1411 = vadd.f32 %v1152, %v1393
      %s1412 = scalar_lea.vmem %s2, 192
      %v1413 = vld [vmem:[%s1412] sm:$0xf]
      %v1414 = vld [vmem:[%s1412 + $0x4] sm:$0xf]
      %v1415 = vld [vmem:[%s1412 + $0x8] sm:$0xf]
      %v1416 = vld [vmem:[%s1412 + $0xc] sm:$0xf]
      %v1417 = vld [vmem:[%s1412 + $0x10] sm:$0xf]
      %v1418 = vld [vmem:[%s1412 + $0x14] sm:$0xf]
      %v1419 = vld [vmem:[%s1412 + $0x18] sm:$0xf]
      %v1420 = vld [vmem:[%s1412 + $0x1c] sm:$0xf]
      %v1421 = vld [vmem:[%s1412 + $0x20] sm:$0xf]
      %v1422 = vld [vmem:[%s1412 + $0x24] sm:$0xf]
      %v1423 = vld [vmem:[%s1412 + $0x28] sm:$0xf]
      %v1424 = vld [vmem:[%s1412 + $0x2c] sm:$0xf]
      %1425 = vrot.lane.b32.xlu0 %v1154, 96
      %v1426 = vpop.permute.xlu0 %1425
      %1427 = vrot.lane.b32.xlu0 %v1156, 96
      %v1428 = vpop.permute.xlu0 %1427
      %1429 = vrot.lane.b32.xlu0 %v1158, 96
      %v1430 = vpop.permute.xlu0 %1429
      %1431 = vrot.lane.b32.xlu0 %v1160, 96
      %v1432 = vpop.permute.xlu0 %1431
      %1433 = vrot.lane.b32.xlu0 %v1162, 96
      %v1434 = vpop.permute.xlu0 %1433
      %1435 = vrot.lane.b32.xlu0 %v1164, 96
      %v1436 = vpop.permute.xlu0 %1435
      %1437 = vrot.lane.b32.xlu0 %v1166, 96
      %v1438 = vpop.permute.xlu0 %1437
      %1439 = vrot.lane.b32.xlu0 %v1168, 96
      %v1440 = vpop.permute.xlu0 %1439
      %v1453 = vunpack.c.l.b16 %v1413
      %v1454 = vunpack.c.l.b16 %v1414
      %v1455 = vunpack.c.l.b16 %v1415
      %v1456 = vunpack.c.l.b16 %v1416
      %v1457 = vunpack.c.l.b16 %v1417
      %v1458 = vunpack.c.l.b16 %v1418
      %v1459 = vunpack.c.l.b16 %v1419
      %v1460 = vunpack.c.l.b16 %v1420
      %v1461 = vunpack.c.l.b16 %v1421
      %v1462 = vunpack.c.l.b16 %v1422
      %v1463 = vunpack.c.l.b16 %v1423
      %v1464 = vunpack.c.l.b16 %v1424
      %v1465 = vpack.c.b16 %v1454, %v1453
      %v1466 = vpack.c.b16 %v1456, %v1455
      %v1467 = vpack.c.b16 %v1458, %v1457
      %v1468 = vpack.c.b16 %v1460, %v1459
      %v1469 = vpack.c.b16 %v1462, %v1461
      %v1470 = vpack.c.b16 %v1464, %v1463
      %v1478 = vsel %vm610, %v1426, 0
      %v1481 = vsel %vm610, %v1428, 0
      %v1484 = vsel %vm610, %v1430, 0
      %v1487 = vsel %vm610, %v1432, 0
      %v1490 = vsel %vm610, %v1434, 0
      %v1493 = vsel %vm610, %v1436, 0
      %v1496 = vsel %vm610, %v1438, 0
      %v1499 = vsel %vm610, %v1440, 0
      %1501 = vmatprep.subr.bf16.mxu0 0
      %1502 = vmatpush1.bf16.msra.mxu0 %v1465
      %1503 = vmatprep.subr.bf16.mxu0 0
      %1504 = vmatpush1.bf16.msra.mxu0 %v1466
      %1505 = vmatprep.subr.bf16.mxu0 0
      %1506 = vmatpush1.bf16.msra.mxu0 %v1467
      %1507 = vmatprep.subr.bf16.mxu0 0
      %1508 = vmatpush1.bf16.msra.mxu0 %v1468
      %1509 = vmatprep.subr.bf16.mxu0 0
      %1510 = vmatpush1.bf16.msra.mxu0 %v1469
      %1511 = vmatprep.subr.bf16.mxu0 0
      %1512 = vmatpush1.bf16.msra.mxu0 %v1470
      %1513 = vmatprep.subr.bf16.mxu0 0
      %1514 = vmatpush1.bf16.msra.mxu0 0
      %1515 = vmatprep.subr.bf16.mxu0 0
      %1516 = vmatpush1.bf16.msra.mxu0 0
      %1517 = vmatprep.subr.bf16.mxu0 0
      %1518 = vmatpush1.bf16.msra.mxu0 0
      %1519 = vmatprep.subr.bf16.mxu0 0
      %1520 = vmatpush1.bf16.msra.mxu0 0
      %1521 = vmatprep.subr.bf16.mxu0 0
      %1522 = vmatpush1.bf16.msra.mxu0 0
      %1523 = vmatprep.subr.bf16.mxu0 0
      %1524 = vmatpush1.bf16.msra.mxu0 0
      %1525 = vmatprep.subr.bf16.mxu0 0
      %1526 = vmatpush1.bf16.msra.mxu0 0
      %1527 = vmatprep.subr.bf16.mxu0 0
      %1528 = vmatpush1.bf16.msra.mxu0 0
      %1529 = vmatprep.subr.bf16.mxu0 0
      %1530 = vmatpush1.bf16.msra.mxu0 0
      %1531 = vmatprep.subr.bf16.mxu0 0
      %1532 = vmatpush1.bf16.msra.mxu0 0
      %1533 = vmatprep.mubr.bf16.mxu0 0
      %1534 = vmatmul.mubr.bf16.gmra.mrb[0].mxu0 %v1478
      %v1535 = vpop.f32.mrb[0].mxu0
      %v1536 = vadd.f32 0.0, %v1535
      %v1537 = vpop.f32.mrb[0].mxu0
      %v1538 = vpop.f32.mrb[0].mxu0
      %v1539 = vadd.f32 0.0, %v1538
      %v1540 = vpop.f32.mrb[0].mxu0
      %1541 = vmatprep.mubr.bf16.mxu0 0
      %1542 = vmatmul.mubr.bf16.gmra.mrb[0].mxu0 %v1481
      %v1543 = vpop.f32.mrb[0].mxu0
      %v1544 = vadd.f32 0.0, %v1543
      %v1545 = vpop.f32.mrb[0].mxu0
      %v1546 = vpop.f32.mrb[0].mxu0
      %v1547 = vadd.f32 0.0, %v1546
      %v1548 = vpop.f32.mrb[0].mxu0
      %1549 = vmatprep.mubr.bf16.mxu0 0
      %1550 = vmatmul.mubr.bf16.gmra.mrb[0].mxu0 %v1484
      %v1551 = vpop.f32.mrb[0].mxu0
      %v1552 = vadd.f32 0.0, %v1551
      %v1553 = vpop.f32.mrb[0].mxu0
      %v1554 = vpop.f32.mrb[0].mxu0
      %v1555 = vadd.f32 0.0, %v1554
      %v1556 = vpop.f32.mrb[0].mxu0
      %1557 = vmatprep.mubr.bf16.mxu0 0
      %1558 = vmatmul.mubr.bf16.gmra.mrb[0].mxu0 %v1487
      %v1559 = vpop.f32.mrb[0].mxu0
      %v1560 = vadd.f32 0.0, %v1559
      %v1561 = vpop.f32.mrb[0].mxu0
      %v1562 = vpop.f32.mrb[0].mxu0
      %v1563 = vadd.f32 0.0, %v1562
      %v1564 = vpop.f32.mrb[0].mxu0
      %1565 = vmatprep.mubr.bf16.mxu0 0
      %1566 = vmatmul.mubr.bf16.gmra.mrb[0].mxu0 %v1490
      %v1567 = vpop.f32.mrb[0].mxu0
      %v1568 = vadd.f32 0.0, %v1567
      %v1569 = vpop.f32.mrb[0].mxu0
      %v1570 = vpop.f32.mrb[0].mxu0
      %v1571 = vadd.f32 0.0, %v1570
      %v1572 = vpop.f32.mrb[0].mxu0
      %1573 = vmatprep.mubr.bf16.mxu0 0
      %1574 = vmatmul.mubr.bf16.gmra.mrb[0].mxu0 %v1493
      %v1575 = vpop.f32.mrb[0].mxu0
      %v1576 = vadd.f32 0.0, %v1575
      %v1577 = vpop.f32.mrb[0].mxu0
      %v1578 = vpop.f32.mrb[0].mxu0
      %v1579 = vadd.f32 0.0, %v1578
      %v1580 = vpop.f32.mrb[0].mxu0
      %1581 = vmatprep.mubr.bf16.mxu0 0
      %1582 = vmatmul.mubr.bf16.gmra.mrb[0].mxu0 %v1496
      %v1583 = vpop.f32.mrb[0].mxu0
      %v1584 = vadd.f32 0.0, %v1583
      %v1585 = vpop.f32.mrb[0].mxu0
      %v1586 = vpop.f32.mrb[0].mxu0
      %v1587 = vadd.f32 0.0, %v1586
      %v1588 = vpop.f32.mrb[0].mxu0
      %1589 = vmatprep.mubr.bf16.mxu0 0
      %1590 = vmatmul.mubr.bf16.gmra.mrb[0].mxu0 %v1499
      %v1591 = vpop.f32.mrb[0].mxu0
      %v1592 = vadd.f32 0.0, %v1591
      %v1593 = vpop.f32.mrb[0].mxu0
      %v1594 = vpop.f32.mrb[0].mxu0
      %v1595 = vadd.f32 0.0, %v1594
      %v1596 = vpop.f32.mrb[0].mxu0
      %1597 = vdwg.mxu0
      %v1598 = vadd.f32 %v1396, %v1536
      %v1599 = vadd.f32 %v1397, %v1539
      %v1600 = vadd.f32 %v1398, %v1544
      %v1601 = vadd.f32 %v1399, %v1547
      %v1602 = vadd.f32 %v1400, %v1552
      %v1603 = vadd.f32 %v1401, %v1555
      %v1604 = vadd.f32 %v1402, %v1560
      %v1605 = vadd.f32 %v1403, %v1563
      %v1606 = vadd.f32 %v1404, %v1568
      %v1607 = vadd.f32 %v1405, %v1571
      %v1608 = vadd.f32 %v1406, %v1576
      %v1609 = vadd.f32 %v1407, %v1579
      %v1610 = vadd.f32 %v1408, %v1584
      %v1611 = vadd.f32 %v1409, %v1587
      %v1612 = vadd.f32 %v1410, %v1592
      %v1613 = vadd.f32 %v1411, %v1595
      %v1614 = vld [vmem:[#allocation2 + $0x8] sm:$0xff]
      %v1615 = vld [vmem:[#allocation2 + $0x10] sm:$0xff]
      %v1616 = vld [vmem:[#allocation2 + $0x20] sm:$0xff]
      %v1617 = vld [vmem:[#allocation2 + $0x28] sm:$0xff]
      %v1618 = vld [vmem:[#allocation2 + $0x38] sm:$0xff]
      %v1619 = vld [vmem:[#allocation2 + $0x40] sm:$0xff]
      %v1620 = vld [vmem:[#allocation2 + $0x50] sm:$0xff]
      %v1621 = vld [vmem:[#allocation2 + $0x58] sm:$0xff]
      %v1622 = vld [vmem:[#allocation2 + $0x68] sm:$0xff]
      %v1623 = vld [vmem:[#allocation2 + $0x70] sm:$0xff]
      %v1624 = vld [vmem:[#allocation2 + $0x80] sm:$0xff]
      %v1625 = vld [vmem:[#allocation2 + $0x88] sm:$0xff]
      %v1626 = vld [vmem:[#allocation2 + $0x98] sm:$0xff]
      %v1627 = vld [vmem:[#allocation2 + $0xa0] sm:$0xff]
      %v1628 = vld [vmem:[#allocation2 + $0xb0] sm:$0xff]
      %v1629 = vld [vmem:[#allocation2 + $0xb8] sm:$0xff]
      %v1630 = vld [vmem:[#allocation2 + $0xc8] sm:$0x1]
      %v1631 = vld [vmem:[#allocation2 + $0xd0] sm:$0x1]
      %s1632 = scalar_lea.vmem %s2, 240
      %v1633 = vld [vmem:[%s1632] sm:$0xf]
      %v1634 = vld [vmem:[%s1632 + $0x4] sm:$0xf]
      %v1635 = vld [vmem:[%s1632 + $0x8] sm:$0xf]
      %v1636 = vld [vmem:[%s1632 + $0xc] sm:$0xf]
      %v1637 = vld [vmem:[%s1632 + $0x10] sm:$0xf]
      %v1638 = vld [vmem:[%s1632 + $0x14] sm:$0xf]
      %v1639 = vld [vmem:[%s1632 + $0x18] sm:$0xf]
      %v1640 = vld [vmem:[%s1632 + $0x1c] sm:$0xf]
      %v1641 = vld [vmem:[%s1632 + $0x20] sm:$0xf]
      %v1642 = vld [vmem:[%s1632 + $0x24] sm:$0xf]
      %v1643 = vld [vmem:[%s1632 + $0x28] sm:$0xf]
      %v1644 = vld [vmem:[%s1632 + $0x2c] sm:$0xf]
      %v1646 = vshrl.u32 %v1614, 16
      %v1648 = vshll.u32 %v1614, 16
      %v1650 = vrot.slane %v1648, 1
      %v1651 = vor.u32 %v1646, %v1650
      %v1653 = vshll.u32 %v1616, 16
      %v1655 = vrot.slane %v1653, 1
      %v1656 = vsel %vm911, %v1651, %v1655
      %v1658 = vshrl.u32 %v1615, 16
      %v1660 = vshll.u32 %v1615, 16
      %v1662 = vrot.slane %v1660, 1
      %v1663 = vor.u32 %v1658, %v1662
      %v1665 = vshll.u32 %v1617, 16
      %v1667 = vrot.slane %v1665, 1
      %v1668 = vsel %vm911, %v1663, %v1667
      %v1669 = vshrl.u32 %v1616, 16
      %v1671 = vor.u32 %v1669, %v1655
      %v1673 = vshll.u32 %v1618, 16
      %v1675 = vrot.slane %v1673, 1
      %v1676 = vsel %vm911, %v1671, %v1675
      %v1677 = vshrl.u32 %v1617, 16
      %v1679 = vor.u32 %v1677, %v1667
      %v1681 = vshll.u32 %v1619, 16
      %v1683 = vrot.slane %v1681, 1
      %v1684 = vsel %vm911, %v1679, %v1683
      %v1685 = vshrl.u32 %v1618, 16
      %v1687 = vor.u32 %v1685, %v1675
      %v1689 = vshll.u32 %v1620, 16
      %v1691 = vrot.slane %v1689, 1
      %v1692 = vsel %vm911, %v1687, %v1691
      %v1693 = vshrl.u32 %v1619, 16
      %v1695 = vor.u32 %v1693, %v1683
      %v1697 = vshll.u32 %v1621, 16
      %v1699 = vrot.slane %v1697, 1
      %v1700 = vsel %vm911, %v1695, %v1699
      %v1701 = vshrl.u32 %v1620, 16
      %v1703 = vor.u32 %v1701, %v1691
      %v1705 = vshll.u32 %v1622, 16
      %v1707 = vrot.slane %v1705, 1
      %v1708 = vsel %vm911, %v1703, %v1707
      %v1709 = vshrl.u32 %v1621, 16
      %v1711 = vor.u32 %v1709, %v1699
      %v1713 = vshll.u32 %v1623, 16
      %v1715 = vrot.slane %v1713, 1
      %v1716 = vsel %vm911, %v1711, %v1715
      %v1717 = vshrl.u32 %v1622, 16
      %v1719 = vor.u32 %v1717, %v1707
      %v1721 = vshll.u32 %v1624, 16
      %v1723 = vrot.slane %v1721, 1
      %v1724 = vsel %vm911, %v1719, %v1723
      %v1725 = vshrl.u32 %v1623, 16
      %v1727 = vor.u32 %v1725, %v1715
      %v1729 = vshll.u32 %v1625, 16
      %v1731 = vrot.slane %v1729, 1
      %v1732 = vsel %vm911, %v1727, %v1731
      %v1733 = vshrl.u32 %v1624, 16
      %v1735 = vor.u32 %v1733, %v1723
      %v1737 = vshll.u32 %v1626, 16
      %v1739 = vrot.slane %v1737, 1
      %v1740 = vsel %vm911, %v1735, %v1739
      %v1741 = vshrl.u32 %v1625, 16
      %v1743 = vor.u32 %v1741, %v1731
      %v1745 = vshll.u32 %v1627, 16
      %v1747 = vrot.slane %v1745, 1
      %v1748 = vsel %vm911, %v1743, %v1747
      %v1749 = vshrl.u32 %v1626, 16
      %v1751 = vor.u32 %v1749, %v1739
      %v1753 = vshll.u32 %v1628, 16
      %v1755 = vrot.slane %v1753, 1
      %v1756 = vsel %vm911, %v1751, %v1755
      %v1757 = vshrl.u32 %v1627, 16
      %v1759 = vor.u32 %v1757, %v1747
      %v1761 = vshll.u32 %v1629, 16
      %v1763 = vrot.slane %v1761, 1
      %v1764 = vsel %vm911, %v1759, %v1763
      %v1765 = vshrl.u32 %v1628, 16
      %v1767 = vor.u32 %v1765, %v1755
      %v1769 = vshll.u32 %v1630, 16
      %v1771 = vrot.slane %v1769, 1
      %v1772 = vsel %vm911, %v1767, %v1771
      %v1773 = vshrl.u32 %v1629, 16
      %v1775 = vor.u32 %v1773, %v1763
      %v1777 = vshll.u32 %v1631, 16
      %v1779 = vrot.slane %v1777, 1
      %v1780 = vsel %vm911, %v1775, %v1779
      %1781 = vrot.lane.b32.xlu0 %v1656, 64
      %v1782 = vpop.permute.xlu0 %1781
      %1783 = vrot.lane.b32.xlu0 %v1668, 64
      %v1784 = vpop.permute.xlu0 %1783
      %1785 = vrot.lane.b32.xlu0 %v1676, 64
      %v1786 = vpop.permute.xlu0 %1785
      %1787 = vrot.lane.b32.xlu0 %v1684, 64
      %v1788 = vpop.permute.xlu0 %1787
      %1789 = vrot.lane.b32.xlu0 %v1692, 64
      %v1790 = vpop.permute.xlu0 %1789
      %1791 = vrot.lane.b32.xlu0 %v1700, 64
      %v1792 = vpop.permute.xlu0 %1791
      %1793 = vrot.lane.b32.xlu0 %v1708, 64
      %v1794 = vpop.permute.xlu0 %1793
      %1795 = vrot.lane.b32.xlu0 %v1716, 64
      %v1796 = vpop.permute.xlu0 %1795
      %1797 = vrot.lane.b32.xlu0 %v1724, 64
      %v1798 = vpop.permute.xlu0 %1797
      %1799 = vrot.lane.b32.xlu0 %v1732, 64
      %v1800 = vpop.permute.xlu0 %1799
      %1801 = vrot.lane.b32.xlu0 %v1740, 64
      %v1802 = vpop.permute.xlu0 %1801
      %1803 = vrot.lane.b32.xlu0 %v1748, 64
      %v1804 = vpop.permute.xlu0 %1803
      %1805 = vrot.lane.b32.xlu0 %v1756, 64
      %v1806 = vpop.permute.xlu0 %1805
      %1807 = vrot.lane.b32.xlu0 %v1764, 64
      %v1808 = vpop.permute.xlu0 %1807
      %1809 = vrot.lane.b32.xlu0 %v1772, 64
      %v1810 = vpop.permute.xlu0 %1809
      %1811 = vrot.lane.b32.xlu0 %v1780, 64
      %v1812 = vpop.permute.xlu0 %1811
      %v1813 = vsel %vm1230, %v1782, %v1784
      %v1814 = vsel %vm1230, %v1786, %v1788
      %v1815 = vsel %vm1230, %v1790, %v1792
      %v1816 = vsel %vm1230, %v1794, %v1796
      %v1817 = vsel %vm1230, %v1798, %v1800
      %v1818 = vsel %vm1230, %v1802, %v1804
      %v1819 = vsel %vm1230, %v1806, %v1808
      %v1820 = vsel %vm1230, %v1810, %v1812
      %v1833 = vunpack.c.l.b16 %v1633
      %v1834 = vunpack.c.l.b16 %v1634
      %v1835 = vunpack.c.l.b16 %v1635
      %v1836 = vunpack.c.l.b16 %v1636
      %v1837 = vunpack.c.l.b16 %v1637
      %v1838 = vunpack.c.l.b16 %v1638
      %v1839 = vunpack.c.l.b16 %v1639
      %v1840 = vunpack.c.l.b16 %v1640
      %v1841 = vunpack.c.l.b16 %v1641
      %v1842 = vunpack.c.l.b16 %v1642
      %v1843 = vunpack.c.l.b16 %v1643
      %v1844 = vunpack.c.l.b16 %v1644
      %v1845 = vpack.c.b16 %v1834, %v1833
      %v1846 = vpack.c.b16 %v1836, %v1835
      %v1847 = vpack.c.b16 %v1838, %v1837
      %v1848 = vpack.c.b16 %v1840, %v1839
      %v1849 = vpack.c.b16 %v1842, %v1841
      %v1850 = vpack.c.b16 %v1844, %v1843
      %v1858 = vsel %vm610, %v1813, 0
      %v1861 = vsel %vm610, %v1814, 0
      %v1864 = vsel %vm610, %v1815, 0
      %v1867 = vsel %vm610, %v1816, 0
      %v1870 = vsel %vm610, %v1817, 0
      %v1873 = vsel %vm610, %v1818, 0
      %v1876 = vsel %vm610, %v1819, 0
      %v1879 = vsel %vm610, %v1820, 0
      %1881 = vmatprep.subr.bf16.mxu0 0
      %1882 = vmatpush1.bf16.msra.mxu0 %v1845
      %1883 = vmatprep.subr.bf16.mxu0 0
      %1884 = vmatpush1.bf16.msra.mxu0 %v1846
      %1885 = vmatprep.subr.bf16.mxu0 0
      %1886 = vmatpush1.bf16.msra.mxu0 %v1847
      %1887 = vmatprep.subr.bf16.mxu0 0
      %1888 = vmatpush1.bf16.msra.mxu0 %v1848
      %1889 = vmatprep.subr.bf16.mxu0 0
      %1890 = vmatpush1.bf16.msra.mxu0 %v1849
      %1891 = vmatprep.subr.bf16.mxu0 0
      %1892 = vmatpush1.bf16.msra.mxu0 %v1850
      %1893 = vmatprep.subr.bf16.mxu0 0
      %1894 = vmatpush1.bf16.msra.mxu0 0
      %1895 = vmatprep.subr.bf16.mxu0 0
      %1896 = vmatpush1.bf16.msra.mxu0 0
      %1897 = vmatprep.subr.bf16.mxu0 0
      %1898 = vmatpush1.bf16.msra.mxu0 0
      %1899 = vmatprep.subr.bf16.mxu0 0
      %1900 = vmatpush1.bf16.msra.mxu0 0
      %1901 = vmatprep.subr.bf16.mxu0 0
      %1902 = vmatpush1.bf16.msra.mxu0 0
      %1903 = vmatprep.subr.bf16.mxu0 0
      %1904 = vmatpush1.bf16.msra.mxu0 0
      %1905 = vmatprep.subr.bf16.mxu0 0
      %1906 = vmatpush1.bf16.msra.mxu0 0
      %1907 = vmatprep.subr.bf16.mxu0 0
      %1908 = vmatpush1.bf16.msra.mxu0 0
      %1909 = vmatprep.subr.bf16.mxu0 0
      %1910 = vmatpush1.bf16.msra.mxu0 0
      %1911 = vmatprep.subr.bf16.mxu0 0
      %1912 = vmatpush1.bf16.msra.mxu0 0
      %1913 = vmatprep.mubr.bf16.mxu0 0
      %1914 = vmatmul.mubr.bf16.gmra.mrb[0].mxu0 %v1858
      %v1915 = vpop.f32.mrb[0].mxu0
      %v1916 = vadd.f32 0.0, %v1915
      %v1917 = vpop.f32.mrb[0].mxu0
      %v1918 = vpop.f32.mrb[0].mxu0
      %v1919 = vadd.f32 0.0, %v1918
      %v1920 = vpop.f32.mrb[0].mxu0
      %1921 = vmatprep.mubr.bf16.mxu0 0
      %1922 = vmatmul.mubr.bf16.gmra.mrb[0].mxu0 %v1861
      %v1923 = vpop.f32.mrb[0].mxu0
      %v1924 = vadd.f32 0.0, %v1923
      %v1925 = vpop.f32.mrb[0].mxu0
      %v1926 = vpop.f32.mrb[0].mxu0
      %v1927 = vadd.f32 0.0, %v1926
      %v1928 = vpop.f32.mrb[0].mxu0
      %1929 = vmatprep.mubr.bf16.mxu0 0
      %1930 = vmatmul.mubr.bf16.gmra.mrb[0].mxu0 %v1864
      %v1931 = vpop.f32.mrb[0].mxu0
      %v1932 = vadd.f32 0.0, %v1931
      %v1933 = vpop.f32.mrb[0].mxu0
      %v1934 = vpop.f32.mrb[0].mxu0
      %v1935 = vadd.f32 0.0, %v1934
      %v1936 = vpop.f32.mrb[0].mxu0
      %1937 = vmatprep.mubr.bf16.mxu0 0
      %1938 = vmatmul.mubr.bf16.gmra.mrb[0].mxu0 %v1867
      %v1939 = vpop.f32.mrb[0].mxu0
      %v1940 = vadd.f32 0.0, %v1939
      %v1941 = vpop.f32.mrb[0].mxu0
      %v1942 = vpop.f32.mrb[0].mxu0
      %v1943 = vadd.f32 0.0, %v1942
      %v1944 = vpop.f32.mrb[0].mxu0
      %1945 = vmatprep.mubr.bf16.mxu0 0
      %1946 = vmatmul.mubr.bf16.gmra.mrb[0].mxu0 %v1870
      %v1947 = vpop.f32.mrb[0].mxu0
      %v1948 = vadd.f32 0.0, %v1947
      %v1949 = vpop.f32.mrb[0].mxu0
      %v1950 = vpop.f32.mrb[0].mxu0
      %v1951 = vadd.f32 0.0, %v1950
      %v1952 = vpop.f32.mrb[0].mxu0
      %1953 = vmatprep.mubr.bf16.mxu0 0
      %1954 = vmatmul.mubr.bf16.gmra.mrb[0].mxu0 %v1873
      %v1955 = vpop.f32.mrb[0].mxu0
      %v1956 = vadd.f32 0.0, %v1955
      %v1957 = vpop.f32.mrb[0].mxu0
      %v1958 = vpop.f32.mrb[0].mxu0
      %v1959 = vadd.f32 0.0, %v1958
      %v1960 = vpop.f32.mrb[0].mxu0
      %1961 = vmatprep.mubr.bf16.mxu0 0
      %1962 = vmatmul.mubr.bf16.gmra.mrb[0].mxu0 %v1876
      %v1963 = vpop.f32.mrb[0].mxu0
      %v1964 = vadd.f32 0.0, %v1963
      %v1965 = vpop.f32.mrb[0].mxu0
      %v1966 = vpop.f32.mrb[0].mxu0
      %v1967 = vadd.f32 0.0, %v1966
      %v1968 = vpop.f32.mrb[0].mxu0
      %1969 = vmatprep.mubr.bf16.mxu0 0
      %1970 = vmatmul.mubr.bf16.gmra.mrb[0].mxu0 %v1879
      %v1971 = vpop.f32.mrb[0].mxu0
      %v1972 = vadd.f32 0.0, %v1971
      %v1973 = vpop.f32.mrb[0].mxu0
      %v1974 = vpop.f32.mrb[0].mxu0
      %v1975 = vadd.f32 0.0, %v1974
      %v1976 = vpop.f32.mrb[0].mxu0
      %1977 = vdwg.mxu0
      %v1978 = vadd.f32 %v1598, %v1916
      %v1979 = vadd.f32 %v1599, %v1919
      %v1980 = vadd.f32 %v1600, %v1924
      %v1981 = vadd.f32 %v1601, %v1927
      %v1982 = vadd.f32 %v1602, %v1932
      %v1983 = vadd.f32 %v1603, %v1935
      %v1984 = vadd.f32 %v1604, %v1940
      %v1985 = vadd.f32 %v1605, %v1943
      %v1986 = vadd.f32 %v1606, %v1948
      %v1987 = vadd.f32 %v1607, %v1951
      %v1988 = vadd.f32 %v1608, %v1956
      %v1989 = vadd.f32 %v1609, %v1959
      %v1990 = vadd.f32 %v1610, %v1964
      %v1991 = vadd.f32 %v1611, %v1967
      %v1992 = vadd.f32 %v1612, %v1972
      %v1993 = vadd.f32 %v1613, %v1975
      %v1994 = vld [vmem:[#allocation2] sm:$0xf0]
      %v1995 = vld [vmem:[#allocation2 + $0xc0] sm:$0x1f]
      %s1996 = scalar_lea.vmem %s2, 288
      %v1997 = vld [vmem:[%s1996] sm:$0xf]
      %v1998 = vld [vmem:[%s1996 + $0x4] sm:$0xf]
      %v1999 = vld [vmem:[%s1996 + $0x8] sm:$0xf]
      %v2000 = vld [vmem:[%s1996 + $0xc] sm:$0xf]
      %v2001 = vld [vmem:[%s1996 + $0x10] sm:$0xf]
      %v2002 = vld [vmem:[%s1996 + $0x14] sm:$0xf]
      %v2003 = vld [vmem:[%s1996 + $0x18] sm:$0xf]
      %v2004 = vld [vmem:[%s1996 + $0x1c] sm:$0xf]
      %v2005 = vld [vmem:[%s1996 + $0x20] sm:$0xf]
      %v2006 = vld [vmem:[%s1996 + $0x24] sm:$0xf]
      %v2007 = vld [vmem:[%s1996 + $0x28] sm:$0xf]
      %v2008 = vld [vmem:[%s1996 + $0x2c] sm:$0xf]
      %vm2009 = vsmask.f32 3328
      %v2011 = vshrl.u32 %v1994, 16
      %v2013 = vrot.slane %v2011, 4
      %v2014 = vshll.u32 %v1994, 16
      %v2016 = vrot.slane %v2014, 5
      %v2017 = vor.u32 %v2013, %v2016
      %v2018 = vrot.slane %v924, 4
      %v2019 = vrot.slane %v920, 5
      %v2020 = vor.u32 %v2018, %v2019
      %v2021 = vsel %vm2009, %v2017, %v2020
      %v2022 = vrot.slane %v932, 4
      %v2023 = vrot.slane %v928, 5
      %v2024 = vor.u32 %v2022, %v2023
      %v2025 = vsel %vm2009, %v2020, %v2024
      %v2026 = vrot.slane %v940, 4
      %v2027 = vrot.slane %v936, 5
      %v2028 = vor.u32 %v2026, %v2027
      %v2029 = vsel %vm2009, %v2024, %v2028
      %v2030 = vrot.slane %v948, 4
      %v2031 = vrot.slane %v944, 5
      %v2032 = vor.u32 %v2030, %v2031
      %v2033 = vsel %vm2009, %v2028, %v2032
      %v2034 = vrot.slane %v956, 4
      %v2035 = vrot.slane %v952, 5
      %v2036 = vor.u32 %v2034, %v2035
      %v2037 = vsel %vm2009, %v2032, %v2036
      %v2038 = vrot.slane %v964, 4
      %v2039 = vrot.slane %v960, 5
      %v2040 = vor.u32 %v2038, %v2039
      %v2041 = vsel %vm2009, %v2036, %v2040
      %v2042 = vrot.slane %v972, 4
      %v2043 = vrot.slane %v968, 5
      %v2044 = vor.u32 %v2042, %v2043
      %v2045 = vsel %vm2009, %v2040, %v2044
      %v2047 = vshrl.u32 %v1995, 16
      %v2049 = vrot.slane %v2047, 4
      %v2050 = vshll.u32 %v1995, 16
      %v2052 = vrot.slane %v2050, 5
      %v2053 = vor.u32 %v2049, %v2052
      %v2054 = vsel %vm2009, %v2044, %v2053
      %v2067 = vunpack.c.l.b16 %v1997
      %v2068 = vunpack.c.l.b16 %v1998
      %v2069 = vunpack.c.l.b16 %v1999
      %v2070 = vunpack.c.l.b16 %v2000
      %v2071 = vunpack.c.l.b16 %v2001
      %v2072 = vunpack.c.l.b16 %v2002
      %v2073 = vunpack.c.l.b16 %v2003
      %v2074 = vunpack.c.l.b16 %v2004
      %v2075 = vunpack.c.l.b16 %v2005
      %v2076 = vunpack.c.l.b16 %v2006
      %v2077 = vunpack.c.l.b16 %v2007
      %v2078 = vunpack.c.l.b16 %v2008
      %v2079 = vpack.c.b16 %v2068, %v2067
      %v2080 = vpack.c.b16 %v2070, %v2069
      %v2081 = vpack.c.b16 %v2072, %v2071
      %v2082 = vpack.c.b16 %v2074, %v2073
      %v2083 = vpack.c.b16 %v2076, %v2075
      %v2084 = vpack.c.b16 %v2078, %v2077
      %v2092 = vsel %vm610, %v2021, 0
      %v2095 = vsel %vm610, %v2025, 0
      %v2098 = vsel %vm610, %v2029, 0
      %v2101 = vsel %vm610, %v2033, 0
      %v2104 = vsel %vm610, %v2037, 0
      %v2107 = vsel %vm610, %v2041, 0
      %v2110 = vsel %vm610, %v2045, 0
      %v2113 = vsel %vm610, %v2054, 0
      %2115 = vmatprep.subr.bf16.mxu0 0
      %2116 = vmatpush1.bf16.msra.mxu0 %v2079
      %2117 = vmatprep.subr.bf16.mxu0 0
      %2118 = vmatpush1.bf16.msra.mxu0 %v2080
      %2119 = vmatprep.subr.bf16.mxu0 0
      %2120 = vmatpush1.bf16.msra.mxu0 %v2081
      %2121 = vmatprep.subr.bf16.mxu0 0
      %2122 = vmatpush1.bf16.msra.mxu0 %v2082
      %2123 = vmatprep.subr.bf16.mxu0 0
      %2124 = vmatpush1.bf16.msra.mxu0 %v2083
      %2125 = vmatprep.subr.bf16.mxu0 0
      %2126 = vmatpush1.bf16.msra.mxu0 %v2084
      %2127 = vmatprep.subr.bf16.mxu0 0
      %2128 = vmatpush1.bf16.msra.mxu0 0
      %2129 = vmatprep.subr.bf16.mxu0 0
      %2130 = vmatpush1.bf16.msra.mxu0 0
      %2131 = vmatprep.subr.bf16.mxu0 0
      %2132 = vmatpush1.bf16.msra.mxu0 0
      %2133 = vmatprep.subr.bf16.mxu0 0
      %2134 = vmatpush1.bf16.msra.mxu0 0
      %2135 = vmatprep.subr.bf16.mxu0 0
      %2136 = vmatpush1.bf16.msra.mxu0 0
      %2137 = vmatprep.subr.bf16.mxu0 0
      %2138 = vmatpush1.bf16.msra.mxu0 0
      %2139 = vmatprep.subr.bf16.mxu0 0
      %2140 = vmatpush1.bf16.msra.mxu0 0
      %2141 = vmatprep.subr.bf16.mxu0 0
      %2142 = vmatpush1.bf16.msra.mxu0 0
      %2143 = vmatprep.subr.bf16.mxu0 0
      %2144 = vmatpush1.bf16.msra.mxu0 0
      %2145 = vmatprep.subr.bf16.mxu0 0
      %2146 = vmatpush1.bf16.msra.mxu0 0
      %2147 = vmatprep.mubr.bf16.mxu0 0
      %2148 = vmatmul.mubr.bf16.gmra.mrb[0].mxu0 %v2092
      %v2149 = vpop.f32.mrb[0].mxu0
      %v2150 = vadd.f32 0.0, %v2149
      %v2151 = vpop.f32.mrb[0].mxu0
      %v2152 = vpop.f32.mrb[0].mxu0
      %v2153 = vadd.f32 0.0, %v2152
      %v2154 = vpop.f32.mrb[0].mxu0
      %2155 = vmatprep.mubr.bf16.mxu0 0
      %2156 = vmatmul.mubr.bf16.gmra.mrb[0].mxu0 %v2095
      %v2157 = vpop.f32.mrb[0].mxu0
      %v2158 = vadd.f32 0.0, %v2157
      %v2159 = vpop.f32.mrb[0].mxu0
      %v2160 = vpop.f32.mrb[0].mxu0
      %v2161 = vadd.f32 0.0, %v2160
      %v2162 = vpop.f32.mrb[0].mxu0
      %2163 = vmatprep.mubr.bf16.mxu0 0
      %2164 = vmatmul.mubr.bf16.gmra.mrb[0].mxu0 %v2098
      %v2165 = vpop.f32.mrb[0].mxu0
      %v2166 = vadd.f32 0.0, %v2165
      %v2167 = vpop.f32.mrb[0].mxu0
      %v2168 = vpop.f32.mrb[0].mxu0
      %v2169 = vadd.f32 0.0, %v2168
      %v2170 = vpop.f32.mrb[0].mxu0
      %2171 = vmatprep.mubr.bf16.mxu0 0
      %2172 = vmatmul.mubr.bf16.gmra.mrb[0].mxu0 %v2101
      %v2173 = vpop.f32.mrb[0].mxu0
      %v2174 = vadd.f32 0.0, %v2173
      %v2175 = vpop.f32.mrb[0].mxu0
      %v2176 = vpop.f32.mrb[0].mxu0
      %v2177 = vadd.f32 0.0, %v2176
      %v2178 = vpop.f32.mrb[0].mxu0
      %2179 = vmatprep.mubr.bf16.mxu0 0
      %2180 = vmatmul.mubr.bf16.gmra.mrb[0].mxu0 %v2104
      %v2181 = vpop.f32.mrb[0].mxu0
      %v2182 = vadd.f32 0.0, %v2181
      %v2183 = vpop.f32.mrb[0].mxu0
      %v2184 = vpop.f32.mrb[0].mxu0
      %v2185 = vadd.f32 0.0, %v2184
      %v2186 = vpop.f32.mrb[0].mxu0
      %2187 = vmatprep.mubr.bf16.mxu0 0
      %2188 = vmatmul.mubr.bf16.gmra.mrb[0].mxu0 %v2107
      %v2189 = vpop.f32.mrb[0].mxu0
      %v2190 = vadd.f32 0.0, %v2189
      %v2191 = vpop.f32.mrb[0].mxu0
      %v2192 = vpop.f32.mrb[0].mxu0
      %v2193 = vadd.f32 0.0, %v2192
      %v2194 = vpop.f32.mrb[0].mxu0
      %2195 = vmatprep.mubr.bf16.mxu0 0
      %2196 = vmatmul.mubr.bf16.gmra.mrb[0].mxu0 %v2110
      %v2197 = vpop.f32.mrb[0].mxu0
      %v2198 = vadd.f32 0.0, %v2197
      %v2199 = vpop.f32.mrb[0].mxu0
      %v2200 = vpop.f32.mrb[0].mxu0
      %v2201 = vadd.f32 0.0, %v2200
      %v2202 = vpop.f32.mrb[0].mxu0
      %2203 = vmatprep.mubr.bf16.mxu0 0
      %2204 = vmatmul.mubr.bf16.gmra.mrb[0].mxu0 %v2113
      %v2205 = vpop.f32.mrb[0].mxu0
      %v2206 = vadd.f32 0.0, %v2205
      %v2207 = vpop.f32.mrb[0].mxu0
      %v2208 = vpop.f32.mrb[0].mxu0
      %v2209 = vadd.f32 0.0, %v2208
      %v2210 = vpop.f32.mrb[0].mxu0
      %2211 = vdwg.mxu0
      %v2212 = vadd.f32 %v1978, %v2150
      %v2213 = vadd.f32 %v1979, %v2153
      %v2214 = vadd.f32 %v1980, %v2158
      %v2215 = vadd.f32 %v1981, %v2161
      %v2216 = vadd.f32 %v1982, %v2166
      %v2217 = vadd.f32 %v1983, %v2169
      %v2218 = vadd.f32 %v1984, %v2174
      %v2219 = vadd.f32 %v1985, %v2177
      %v2220 = vadd.f32 %v1986, %v2182
      %v2221 = vadd.f32 %v1987, %v2185
      %v2222 = vadd.f32 %v1988, %v2190
      %v2223 = vadd.f32 %v1989, %v2193
      %v2224 = vadd.f32 %v1990, %v2198
      %v2225 = vadd.f32 %v1991, %v2201
      %v2226 = vadd.f32 %v1992, %v2206
      %v2227 = vadd.f32 %v1993, %v2209
      %v2228 = vld [vmem:[#allocation2] sm:$0xf0]
      %v2229 = vld [vmem:[#allocation2 + $0x8] sm:$0xf0]
      %v2230 = vld [vmem:[#allocation2 + $0x18] sm:$0xff]
      %v2231 = vld [vmem:[#allocation2 + $0x20] sm:$0xff]
      %v2232 = vld [vmem:[#allocation2 + $0x30] sm:$0xff]
      %v2233 = vld [vmem:[#allocation2 + $0x38] sm:$0xff]
      %v2234 = vld [vmem:[#allocation2 + $0x48] sm:$0xff]
      %v2235 = vld [vmem:[#allocation2 + $0x50] sm:$0xff]
      %v2236 = vld [vmem:[#allocation2 + $0x60] sm:$0xff]
      %v2237 = vld [vmem:[#allocation2 + $0x68] sm:$0xff]
      %v2238 = vld [vmem:[#allocation2 + $0x78] sm:$0xff]
      %v2239 = vld [vmem:[#allocation2 + $0x80] sm:$0xff]
      %v2240 = vld [vmem:[#allocation2 + $0x90] sm:$0xff]
      %v2241 = vld [vmem:[#allocation2 + $0x98] sm:$0xff]
      %v2242 = vld [vmem:[#allocation2 + $0xa8] sm:$0xff]
      %v2243 = vld [vmem:[#allocation2 + $0xb0] sm:$0xff]
      %v2244 = vld [vmem:[#allocation2 + $0xc0] sm:$0x1f]
      %v2245 = vld [vmem:[#allocation2 + $0xc8] sm:$0x1f]
      %s2246 = scalar_lea.vmem %s2, 336
      %v2247 = vld [vmem:[%s2246] sm:$0xf]
      %v2248 = vld [vmem:[%s2246 + $0x4] sm:$0xf]
      %v2249 = vld [vmem:[%s2246 + $0x8] sm:$0xf]
      %v2250 = vld [vmem:[%s2246 + $0xc] sm:$0xf]
      %v2251 = vld [vmem:[%s2246 + $0x10] sm:$0xf]
      %v2252 = vld [vmem:[%s2246 + $0x14] sm:$0xf]
      %v2253 = vld [vmem:[%s2246 + $0x18] sm:$0xf]
      %v2254 = vld [vmem:[%s2246 + $0x1c] sm:$0xf]
      %v2255 = vld [vmem:[%s2246 + $0x20] sm:$0xf]
      %v2256 = vld [vmem:[%s2246 + $0x24] sm:$0xf]
      %v2257 = vld [vmem:[%s2246 + $0x28] sm:$0xf]
      %v2258 = vld [vmem:[%s2246 + $0x2c] sm:$0xf]
      %v2260 = vshrl.u32 %v2228, 16
      %v2262 = vrot.slane %v2260, 4
      %v2263 = vshll.u32 %v2228, 16
      %v2265 = vrot.slane %v2263, 5
      %v2266 = vor.u32 %v2262, %v2265
      %v2268 = vshrl.u32 %v2230, 16
      %v2270 = vrot.slane %v2268, 4
      %v2271 = vshll.u32 %v2230, 16
      %v2273 = vrot.slane %v2271, 5
      %v2274 = vor.u32 %v2270, %v2273
      %v2275 = vsel %vm2009, %v2266, %v2274
      %v2277 = vshrl.u32 %v2229, 16
      %v2279 = vrot.slane %v2277, 4
      %v2280 = vshll.u32 %v2229, 16
      %v2282 = vrot.slane %v2280, 5
      %v2283 = vor.u32 %v2279, %v2282
      %v2285 = vshrl.u32 %v2231, 16
      %v2287 = vrot.slane %v2285, 4
      %v2288 = vshll.u32 %v2231, 16
      %v2290 = vrot.slane %v2288, 5
      %v2291 = vor.u32 %v2287, %v2290
      %v2292 = vsel %vm2009, %v2283, %v2291
      %v2294 = vshrl.u32 %v2232, 16
      %v2296 = vrot.slane %v2294, 4
      %v2297 = vshll.u32 %v2232, 16
      %v2299 = vrot.slane %v2297, 5
      %v2300 = vor.u32 %v2296, %v2299
      %v2301 = vsel %vm2009, %v2274, %v2300
      %v2303 = vshrl.u32 %v2233, 16
      %v2305 = vrot.slane %v2303, 4
      %v2306 = vshll.u32 %v2233, 16
      %v2308 = vrot.slane %v2306, 5
      %v2309 = vor.u32 %v2305, %v2308
      %v2310 = vsel %vm2009, %v2291, %v2309
      %v2312 = vshrl.u32 %v2234, 16
      %v2314 = vrot.slane %v2312, 4
      %v2315 = vshll.u32 %v2234, 16
      %v2317 = vrot.slane %v2315, 5
      %v2318 = vor.u32 %v2314, %v2317
      %v2319 = vsel %vm2009, %v2300, %v2318
      %v2321 = vshrl.u32 %v2235, 16
      %v2323 = vrot.slane %v2321, 4
      %v2324 = vshll.u32 %v2235, 16
      %v2326 = vrot.slane %v2324, 5
      %v2327 = vor.u32 %v2323, %v2326
      %v2328 = vsel %vm2009, %v2309, %v2327
      %v2330 = vshrl.u32 %v2236, 16
      %v2332 = vrot.slane %v2330, 4
      %v2333 = vshll.u32 %v2236, 16
      %v2335 = vrot.slane %v2333, 5
      %v2336 = vor.u32 %v2332, %v2335
      %v2337 = vsel %vm2009, %v2318, %v2336
      %v2339 = vshrl.u32 %v2237, 16
      %v2341 = vrot.slane %v2339, 4
      %v2342 = vshll.u32 %v2237, 16
      %v2344 = vrot.slane %v2342, 5
      %v2345 = vor.u32 %v2341, %v2344
      %v2346 = vsel %vm2009, %v2327, %v2345
      %v2348 = vshrl.u32 %v2238, 16
      %v2350 = vrot.slane %v2348, 4
      %v2351 = vshll.u32 %v2238, 16
      %v2353 = vrot.slane %v2351, 5
      %v2354 = vor.u32 %v2350, %v2353
      %v2355 = vsel %vm2009, %v2336, %v2354
      %v2357 = vshrl.u32 %v2239, 16
      %v2359 = vrot.slane %v2357, 4
      %v2360 = vshll.u32 %v2239, 16
      %v2362 = vrot.slane %v2360, 5
      %v2363 = vor.u32 %v2359, %v2362
      %v2364 = vsel %vm2009, %v2345, %v2363
      %v2366 = vshrl.u32 %v2240, 16
      %v2368 = vrot.slane %v2366, 4
      %v2369 = vshll.u32 %v2240, 16
      %v2371 = vrot.slane %v2369, 5
      %v2372 = vor.u32 %v2368, %v2371
      %v2373 = vsel %vm2009, %v2354, %v2372
      %v2375 = vshrl.u32 %v2241, 16
      %v2377 = vrot.slane %v2375, 4
      %v2378 = vshll.u32 %v2241, 16
      %v2380 = vrot.slane %v2378, 5
      %v2381 = vor.u32 %v2377, %v2380
      %v2382 = vsel %vm2009, %v2363, %v2381
      %v2384 = vshrl.u32 %v2242, 16
      %v2386 = vrot.slane %v2384, 4
      %v2387 = vshll.u32 %v2242, 16
      %v2389 = vrot.slane %v2387, 5
      %v2390 = vor.u32 %v2386, %v2389
      %v2391 = vsel %vm2009, %v2372, %v2390
      %v2393 = vshrl.u32 %v2243, 16
      %v2395 = vrot.slane %v2393, 4
      %v2396 = vshll.u32 %v2243, 16
      %v2398 = vrot.slane %v2396, 5
      %v2399 = vor.u32 %v2395, %v2398
      %v2400 = vsel %vm2009, %v2381, %v2399
      %v2402 = vshrl.u32 %v2244, 16
      %v2404 = vrot.slane %v2402, 4
      %v2405 = vshll.u32 %v2244, 16
      %v2407 = vrot.slane %v2405, 5
      %v2408 = vor.u32 %v2404, %v2407
      %v2409 = vsel %vm2009, %v2390, %v2408
      %v2411 = vshrl.u32 %v2245, 16
      %v2413 = vrot.slane %v2411, 4
      %v2414 = vshll.u32 %v2245, 16
      %v2416 = vrot.slane %v2414, 5
      %v2417 = vor.u32 %v2413, %v2416
      %v2418 = vsel %vm2009, %v2399, %v2417
      %2419 = vrot.lane.b32.xlu0 %v2275, 32
      %v2420 = vpop.permute.xlu0 %2419
      %2421 = vrot.lane.b32.xlu0 %v2292, 32
      %v2422 = vpop.permute.xlu0 %2421
      %2423 = vrot.lane.b32.xlu0 %v2301, 32
      %v2424 = vpop.permute.xlu0 %2423
      %2425 = vrot.lane.b32.xlu0 %v2310, 32
      %v2426 = vpop.permute.xlu0 %2425
      %2427 = vrot.lane.b32.xlu0 %v2319, 32
      %v2428 = vpop.permute.xlu0 %2427
      %2429 = vrot.lane.b32.xlu0 %v2328, 32
      %v2430 = vpop.permute.xlu0 %2429
      %2431 = vrot.lane.b32.xlu0 %v2337, 32
      %v2432 = vpop.permute.xlu0 %2431
      %2433 = vrot.lane.b32.xlu0 %v2346, 32
      %v2434 = vpop.permute.xlu0 %2433
      %2435 = vrot.lane.b32.xlu0 %v2355, 32
      %v2436 = vpop.permute.xlu0 %2435
      %2437 = vrot.lane.b32.xlu0 %v2364, 32
      %v2438 = vpop.permute.xlu0 %2437
      %2439 = vrot.lane.b32.xlu0 %v2373, 32
      %v2440 = vpop.permute.xlu0 %2439
      %2441 = vrot.lane.b32.xlu0 %v2382, 32
      %v2442 = vpop.permute.xlu0 %2441
      %2443 = vrot.lane.b32.xlu0 %v2391, 32
      %v2444 = vpop.permute.xlu0 %2443
      %2445 = vrot.lane.b32.xlu0 %v2400, 32
      %v2446 = vpop.permute.xlu0 %2445
      %2447 = vrot.lane.b32.xlu0 %v2409, 32
      %v2448 = vpop.permute.xlu0 %2447
      %2449 = vrot.lane.b32.xlu0 %v2418, 32
      %v2450 = vpop.permute.xlu0 %2449
      %v2451 = vsel %vm565, %v2420, %v2422
      %v2452 = vsel %vm565, %v2424, %v2426
      %v2453 = vsel %vm565, %v2428, %v2430
      %v2454 = vsel %vm565, %v2432, %v2434
      %v2455 = vsel %vm565, %v2436, %v2438
      %v2456 = vsel %vm565, %v2440, %v2442
      %v2457 = vsel %vm565, %v2444, %v2446
      %v2458 = vsel %vm565, %v2448, %v2450
      %v2471 = vunpack.c.l.b16 %v2247
      %v2472 = vunpack.c.l.b16 %v2248
      %v2473 = vunpack.c.l.b16 %v2249
      %v2474 = vunpack.c.l.b16 %v2250
      %v2475 = vunpack.c.l.b16 %v2251
      %v2476 = vunpack.c.l.b16 %v2252
      %v2477 = vunpack.c.l.b16 %v2253
      %v2478 = vunpack.c.l.b16 %v2254
      %v2479 = vunpack.c.l.b16 %v2255
      %v2480 = vunpack.c.l.b16 %v2256
      %v2481 = vunpack.c.l.b16 %v2257
      %v2482 = vunpack.c.l.b16 %v2258
      %v2483 = vpack.c.b16 %v2472, %v2471
      %v2484 = vpack.c.b16 %v2474, %v2473
      %v2485 = vpack.c.b16 %v2476, %v2475
      %v2486 = vpack.c.b16 %v2478, %v2477
      %v2487 = vpack.c.b16 %v2480, %v2479
      %v2488 = vpack.c.b16 %v2482, %v2481
      %v2496 = vsel %vm610, %v2451, 0
      %v2499 = vsel %vm610, %v2452, 0
      %v2502 = vsel %vm610, %v2453, 0
      %v2505 = vsel %vm610, %v2454, 0
      %v2508 = vsel %vm610, %v2455, 0
      %v2511 = vsel %vm610, %v2456, 0
      %v2514 = vsel %vm610, %v2457, 0
      %v2517 = vsel %vm610, %v2458, 0
      %2519 = vmatprep.subr.bf16.mxu0 0
      %2520 = vmatpush1.bf16.msra.mxu0 %v2483
      %2521 = vmatprep.subr.bf16.mxu0 0
      %2522 = vmatpush1.bf16.msra.mxu0 %v2484
      %2523 = vmatprep.subr.bf16.mxu0 0
      %2524 = vmatpush1.bf16.msra.mxu0 %v2485
      %2525 = vmatprep.subr.bf16.mxu0 0
      %2526 = vmatpush1.bf16.msra.mxu0 %v2486
      %2527 = vmatprep.subr.bf16.mxu0 0
      %2528 = vmatpush1.bf16.msra.mxu0 %v2487
      %2529 = vmatprep.subr.bf16.mxu0 0
      %2530 = vmatpush1.bf16.msra.mxu0 %v2488
      %2531 = vmatprep.subr.bf16.mxu0 0
      %2532 = vmatpush1.bf16.msra.mxu0 0
      %2533 = vmatprep.subr.bf16.mxu0 0
      %2534 = vmatpush1.bf16.msra.mxu0 0
      %2535 = vmatprep.subr.bf16.mxu0 0
      %2536 = vmatpush1.bf16.msra.mxu0 0
      %2537 = vmatprep.subr.bf16.mxu0 0
      %2538 = vmatpush1.bf16.msra.mxu0 0
      %2539 = vmatprep.subr.bf16.mxu0 0
      %2540 = vmatpush1.bf16.msra.mxu0 0
      %2541 = vmatprep.subr.bf16.mxu0 0
      %2542 = vmatpush1.bf16.msra.mxu0 0
      %2543 = vmatprep.subr.bf16.mxu0 0
      %2544 = vmatpush1.bf16.msra.mxu0 0
      %2545 = vmatprep.subr.bf16.mxu0 0
      %2546 = vmatpush1.bf16.msra.mxu0 0
      %2547 = vmatprep.subr.bf16.mxu0 0
      %2548 = vmatpush1.bf16.msra.mxu0 0
      %2549 = vmatprep.subr.bf16.mxu0 0
      %2550 = vmatpush1.bf16.msra.mxu0 0
      %2551 = vmatprep.mubr.bf16.mxu0 0
      %2552 = vmatmul.mubr.bf16.gmra.mrb[0].mxu0 %v2496
      %v2553 = vpop.f32.mrb[0].mxu0
      %v2554 = vadd.f32 0.0, %v2553
      %v2555 = vpop.f32.mrb[0].mxu0
      %v2556 = vpop.f32.mrb[0].mxu0
      %v2557 = vadd.f32 0.0, %v2556
      %v2558 = vpop.f32.mrb[0].mxu0
      %2559 = vmatprep.mubr.bf16.mxu0 0
      %2560 = vmatmul.mubr.bf16.gmra.mrb[0].mxu0 %v2499
      %v2561 = vpop.f32.mrb[0].mxu0
      %v2562 = vadd.f32 0.0, %v2561
      %v2563 = vpop.f32.mrb[0].mxu0
      %v2564 = vpop.f32.mrb[0].mxu0
      %v2565 = vadd.f32 0.0, %v2564
      %v2566 = vpop.f32.mrb[0].mxu0
      %2567 = vmatprep.mubr.bf16.mxu0 0
      %2568 = vmatmul.mubr.bf16.gmra.mrb[0].mxu0 %v2502
      %v2569 = vpop.f32.mrb[0].mxu0
      %v2570 = vadd.f32 0.0, %v2569
      %v2571 = vpop.f32.mrb[0].mxu0
      %v2572 = vpop.f32.mrb[0].mxu0
      %v2573 = vadd.f32 0.0, %v2572
      %v2574 = vpop.f32.mrb[0].mxu0
      %2575 = vmatprep.mubr.bf16.mxu0 0
      %2576 = vmatmul.mubr.bf16.gmra.mrb[0].mxu0 %v2505
      %v2577 = vpop.f32.mrb[0].mxu0
      %v2578 = vadd.f32 0.0, %v2577
      %v2579 = vpop.f32.mrb[0].mxu0
      %v2580 = vpop.f32.mrb[0].mxu0
      %v2581 = vadd.f32 0.0, %v2580
      %v2582 = vpop.f32.mrb[0].mxu0
      %2583 = vmatprep.mubr.bf16.mxu0 0
      %2584 = vmatmul.mubr.bf16.gmra.mrb[0].mxu0 %v2508
      %v2585 = vpop.f32.mrb[0].mxu0
      %v2586 = vadd.f32 0.0, %v2585
      %v2587 = vpop.f32.mrb[0].mxu0
      %v2588 = vpop.f32.mrb[0].mxu0
      %v2589 = vadd.f32 0.0, %v2588
      %v2590 = vpop.f32.mrb[0].mxu0
      %2591 = vmatprep.mubr.bf16.mxu0 0
      %2592 = vmatmul.mubr.bf16.gmra.mrb[0].mxu0 %v2511
      %v2593 = vpop.f32.mrb[0].mxu0
      %v2594 = vadd.f32 0.0, %v2593
      %v2595 = vpop.f32.mrb[0].mxu0
      %v2596 = vpop.f32.mrb[0].mxu0
      %v2597 = vadd.f32 0.0, %v2596
      %v2598 = vpop.f32.mrb[0].mxu0
      %2599 = vmatprep.mubr.bf16.mxu0 0
      %2600 = vmatmul.mubr.bf16.gmra.mrb[0].mxu0 %v2514
      %v2601 = vpop.f32.mrb[0].mxu0
      %v2602 = vadd.f32 0.0, %v2601
      %v2603 = vpop.f32.mrb[0].mxu0
      %v2604 = vpop.f32.mrb[0].mxu0
      %v2605 = vadd.f32 0.0, %v2604
      %v2606 = vpop.f32.mrb[0].mxu0
      %2607 = vmatprep.mubr.bf16.mxu0 0
      %2608 = vmatmul.mubr.bf16.gmra.mrb[0].mxu0 %v2517
      %v2609 = vpop.f32.mrb[0].mxu0
      %v2610 = vadd.f32 0.0, %v2609
      %v2611 = vpop.f32.mrb[0].mxu0
      %v2612 = vpop.f32.mrb[0].mxu0
      %v2613 = vadd.f32 0.0, %v2612
      %v2614 = vpop.f32.mrb[0].mxu0
      %2615 = vdwg.mxu0
      %v2616 = vadd.f32 %v2212, %v2554
      %v2617 = vadd.f32 %v2213, %v2557
      %v2618 = vadd.f32 %v2214, %v2562
      %v2619 = vadd.f32 %v2215, %v2565
      %v2620 = vadd.f32 %v2216, %v2570
      %v2621 = vadd.f32 %v2217, %v2573
      %v2622 = vadd.f32 %v2218, %v2578
      %v2623 = vadd.f32 %v2219, %v2581
      %v2624 = vadd.f32 %v2220, %v2586
      %v2625 = vadd.f32 %v2221, %v2589
      %v2626 = vadd.f32 %v2222, %v2594
      %v2627 = vadd.f32 %v2223, %v2597
      %v2628 = vadd.f32 %v2224, %v2602
      %v2629 = vadd.f32 %v2225, %v2605
      %v2630 = vadd.f32 %v2226, %v2610
      %v2631 = vadd.f32 %v2227, %v2613
      %v2632 = vld [vmem:[#allocation2] sm:$0xe0]
      %s2633 = scalar_lea.vmem %s2, 384
      %v2634 = vld [vmem:[%s2633] sm:$0xf]
      %v2635 = vld [vmem:[%s2633 + $0x4] sm:$0xf]
      %v2636 = vld [vmem:[%s2633 + $0x8] sm:$0xf]
      %v2637 = vld [vmem:[%s2633 + $0xc] sm:$0xf]
      %v2638 = vld [vmem:[%s2633 + $0x10] sm:$0xf]
      %v2639 = vld [vmem:[%s2633 + $0x14] sm:$0xf]
      %v2640 = vld [vmem:[%s2633 + $0x18] sm:$0xf]
      %v2641 = vld [vmem:[%s2633 + $0x1c] sm:$0xf]
      %v2642 = vld [vmem:[%s2633 + $0x20] sm:$0xf]
      %v2643 = vld [vmem:[%s2633 + $0x24] sm:$0xf]
      %v2644 = vld [vmem:[%s2633 + $0x28] sm:$0xf]
      %v2645 = vld [vmem:[%s2633 + $0x2c] sm:$0xf]
      %vm2655 = vcmask 1042432
      %v2656 = vrot.slane %v2632, 5
      %v2657 = vrot.slane %v890, 5
      %v2658 = vsel %vm2655, %v2656, %v2657
      %v2659 = vrot.slane %v891, 5
      %v2660 = vsel %vm2655, %v2657, %v2659
      %v2661 = vrot.slane %v892, 5
      %v2662 = vsel %vm2655, %v2659, %v2661
      %v2663 = vrot.slane %v893, 5
      %v2664 = vsel %vm2655, %v2661, %v2663
      %v2665 = vrot.slane %v894, 5
      %v2666 = vsel %vm2655, %v2663, %v2665
      %v2667 = vrot.slane %v895, 5
      %v2668 = vsel %vm2655, %v2665, %v2667
      %v2669 = vrot.slane %v896, 5
      %v2670 = vsel %vm2655, %v2667, %v2669
      %v2671 = vrot.slane %v1995, 5
      %v2672 = vsel %vm2655, %v2669, %v2671
      %v2685 = vunpack.c.l.b16 %v2634
      %v2686 = vunpack.c.l.b16 %v2635
      %v2687 = vunpack.c.l.b16 %v2636
      %v2688 = vunpack.c.l.b16 %v2637
      %v2689 = vunpack.c.l.b16 %v2638
      %v2690 = vunpack.c.l.b16 %v2639
      %v2691 = vunpack.c.l.b16 %v2640
      %v2692 = vunpack.c.l.b16 %v2641
      %v2693 = vunpack.c.l.b16 %v2642
      %v2694 = vunpack.c.l.b16 %v2643
      %v2695 = vunpack.c.l.b16 %v2644
      %v2696 = vunpack.c.l.b16 %v2645
      %v2697 = vpack.c.b16 %v2686, %v2685
      %v2698 = vpack.c.b16 %v2688, %v2687
      %v2699 = vpack.c.b16 %v2690, %v2689
      %v2700 = vpack.c.b16 %v2692, %v2691
      %v2701 = vpack.c.b16 %v2694, %v2693
      %v2702 = vpack.c.b16 %v2696, %v2695
      %v2710 = vsel %vm610, %v2658, 0
      %v2713 = vsel %vm610, %v2660, 0
      %v2716 = vsel %vm610, %v2662, 0
      %v2719 = vsel %vm610, %v2664, 0
      %v2722 = vsel %vm610, %v2666, 0
      %v2725 = vsel %vm610, %v2668, 0
      %v2728 = vsel %vm610, %v2670, 0
      %v2731 = vsel %vm610, %v2672, 0
      %2733 = vmatprep.subr.bf16.mxu0 0
      %2734 = vmatpush1.bf16.msra.mxu0 %v2697
      %2735 = vmatprep.subr.bf16.mxu0 0
      %2736 = vmatpush1.bf16.msra.mxu0 %v2698
      %2737 = vmatprep.subr.bf16.mxu0 0
      %2738 = vmatpush1.bf16.msra.mxu0 %v2699
      %2739 = vmatprep.subr.bf16.mxu0 0
      %2740 = vmatpush1.bf16.msra.mxu0 %v2700
      %2741 = vmatprep.subr.bf16.mxu0 0
      %2742 = vmatpush1.bf16.msra.mxu0 %v2701
      %2743 = vmatprep.subr.bf16.mxu0 0
      %2744 = vmatpush1.bf16.msra.mxu0 %v2702
      %2745 = vmatprep.subr.bf16.mxu0 0
      %2746 = vmatpush1.bf16.msra.mxu0 0
      %2747 = vmatprep.subr.bf16.mxu0 0
      %2748 = vmatpush1.bf16.msra.mxu0 0
      %2749 = vmatprep.subr.bf16.mxu0 0
      %2750 = vmatpush1.bf16.msra.mxu0 0
      %2751 = vmatprep.subr.bf16.mxu0 0
      %2752 = vmatpush1.bf16.msra.mxu0 0
      %2753 = vmatprep.subr.bf16.mxu0 0
      %2754 = vmatpush1.bf16.msra.mxu0 0
      %2755 = vmatprep.subr.bf16.mxu0 0
      %2756 = vmatpush1.bf16.msra.mxu0 0
      %2757 = vmatprep.subr.bf16.mxu0 0
      %2758 = vmatpush1.bf16.msra.mxu0 0
      %2759 = vmatprep.subr.bf16.mxu0 0
      %2760 = vmatpush1.bf16.msra.mxu0 0
      %2761 = vmatprep.subr.bf16.mxu0 0
      %2762 = vmatpush1.bf16.msra.mxu0 0
      %2763 = vmatprep.subr.bf16.mxu0 0
      %2764 = vmatpush1.bf16.msra.mxu0 0
      %2765 = vmatprep.mubr.bf16.mxu0 0
      %2766 = vmatmul.mubr.bf16.gmra.mrb[0].mxu0 %v2710
      %v2767 = vpop.f32.mrb[0].mxu0
      %v2768 = vadd.f32 0.0, %v2767
      %v2769 = vpop.f32.mrb[0].mxu0
      %v2770 = vpop.f32.mrb[0].mxu0
      %v2771 = vadd.f32 0.0, %v2770
      %v2772 = vpop.f32.mrb[0].mxu0
      %2773 = vmatprep.mubr.bf16.mxu0 0
      %2774 = vmatmul.mubr.bf16.gmra.mrb[0].mxu0 %v2713
      %v2775 = vpop.f32.mrb[0].mxu0
      %v2776 = vadd.f32 0.0, %v2775
      %v2777 = vpop.f32.mrb[0].mxu0
      %v2778 = vpop.f32.mrb[0].mxu0
      %v2779 = vadd.f32 0.0, %v2778
      %v2780 = vpop.f32.mrb[0].mxu0
      %2781 = vmatprep.mubr.bf16.mxu0 0
      %2782 = vmatmul.mubr.bf16.gmra.mrb[0].mxu0 %v2716
      %v2783 = vpop.f32.mrb[0].mxu0
      %v2784 = vadd.f32 0.0, %v2783
      %v2785 = vpop.f32.mrb[0].mxu0
      %v2786 = vpop.f32.mrb[0].mxu0
      %v2787 = vadd.f32 0.0, %v2786
      %v2788 = vpop.f32.mrb[0].mxu0
      %2789 = vmatprep.mubr.bf16.mxu0 0
      %2790 = vmatmul.mubr.bf16.gmra.mrb[0].mxu0 %v2719
      %v2791 = vpop.f32.mrb[0].mxu0
      %v2792 = vadd.f32 0.0, %v2791
      %v2793 = vpop.f32.mrb[0].mxu0
      %v2794 = vpop.f32.mrb[0].mxu0
      %v2795 = vadd.f32 0.0, %v2794
      %v2796 = vpop.f32.mrb[0].mxu0
      %2797 = vmatprep.mubr.bf16.mxu0 0
      %2798 = vmatmul.mubr.bf16.gmra.mrb[0].mxu0 %v2722
      %v2799 = vpop.f32.mrb[0].mxu0
      %v2800 = vadd.f32 0.0, %v2799
      %v2801 = vpop.f32.mrb[0].mxu0
      %v2802 = vpop.f32.mrb[0].mxu0
      %v2803 = vadd.f32 0.0, %v2802
      %v2804 = vpop.f32.mrb[0].mxu0
      %2805 = vmatprep.mubr.bf16.mxu0 0
      %2806 = vmatmul.mubr.bf16.gmra.mrb[0].mxu0 %v2725
      %v2807 = vpop.f32.mrb[0].mxu0
      %v2808 = vadd.f32 0.0, %v2807
      %v2809 = vpop.f32.mrb[0].mxu0
      %v2810 = vpop.f32.mrb[0].mxu0
      %v2811 = vadd.f32 0.0, %v2810
      %v2812 = vpop.f32.mrb[0].mxu0
      %2813 = vmatprep.mubr.bf16.mxu0 0
      %2814 = vmatmul.mubr.bf16.gmra.mrb[0].mxu0 %v2728
      %v2815 = vpop.f32.mrb[0].mxu0
      %v2816 = vadd.f32 0.0, %v2815
      %v2817 = vpop.f32.mrb[0].mxu0
      %v2818 = vpop.f32.mrb[0].mxu0
      %v2819 = vadd.f32 0.0, %v2818
      %v2820 = vpop.f32.mrb[0].mxu0
      %2821 = vmatprep.mubr.bf16.mxu0 0
      %2822 = vmatmul.mubr.bf16.gmra.mrb[0].mxu0 %v2731
      %v2823 = vpop.f32.mrb[0].mxu0
      %v2824 = vadd.f32 0.0, %v2823
      %v2825 = vpop.f32.mrb[0].mxu0
      %v2826 = vpop.f32.mrb[0].mxu0
      %v2827 = vadd.f32 0.0, %v2826
      %v2828 = vpop.f32.mrb[0].mxu0
      %2829 = vdwg.mxu0
      %v2830 = vadd.f32 %v2616, %v2768
      %v2831 = vadd.f32 %v2617, %v2771
      %v2832 = vadd.f32 %v2618, %v2776
      %v2833 = vadd.f32 %v2619, %v2779
      %v2834 = vadd.f32 %v2620, %v2784
      %v2835 = vadd.f32 %v2621, %v2787
      %v2836 = vadd.f32 %v2622, %v2792
      %v2837 = vadd.f32 %v2623, %v2795
      %v2838 = vadd.f32 %v2624, %v2800
      %v2839 = vadd.f32 %v2625, %v2803
      %v2840 = vadd.f32 %v2626, %v2808
      %v2841 = vadd.f32 %v2627, %v2811
      %v2842 = vadd.f32 %v2628, %v2816
      %v2843 = vadd.f32 %v2629, %v2819
      %v2844 = vadd.f32 %v2630, %v2824
      %v2845 = vadd.f32 %v2631, %v2827
      %v2846 = vld [vmem:[%s3] sm:$0x1]
      %v2848 = vlaneseq
      %v2849 = vshrl.u32 %v2848, 7
      %v2850 = vsub.s32 0, %v2849
      %v2851 = vrot.slane %v2846, %v2850
      %v2853 = vadd.f32 %v2830, %v2851
      %v2854 = vadd.f32 %v2831, %v2851
      %v2855 = vadd.f32 %v2832, %v2851
      %v2856 = vadd.f32 %v2833, %v2851
      %v2857 = vadd.f32 %v2834, %v2851
      %v2858 = vadd.f32 %v2835, %v2851
      %v2859 = vadd.f32 %v2836, %v2851
      %v2860 = vadd.f32 %v2837, %v2851
      %v2861 = vadd.f32 %v2838, %v2851
      %v2862 = vadd.f32 %v2839, %v2851
      %v2863 = vadd.f32 %v2840, %v2851
      %v2864 = vadd.f32 %v2841, %v2851
      %v2865 = vadd.f32 %v2842, %v2851
      %v2866 = vadd.f32 %v2843, %v2851
      %v2867 = vadd.f32 %v2844, %v2851
      %v2868 = vadd.f32 %v2845, %v2851
      %v2869 = vmax.f32 %v2853, 0.0
      %v2870 = vmax.f32 %v2854, 0.0
      %v2871 = vmax.f32 %v2855, 0.0
      %v2872 = vmax.f32 %v2856, 0.0
      %v2873 = vmax.f32 %v2857, 0.0
      %v2874 = vmax.f32 %v2858, 0.0
      %v2875 = vmax.f32 %v2859, 0.0
      %v2876 = vmax.f32 %v2860, 0.0
      %v2877 = vmax.f32 %v2861, 0.0
      %v2878 = vmax.f32 %v2862, 0.0
      %v2879 = vmax.f32 %v2863, 0.0
      %v2880 = vmax.f32 %v2864, 0.0
      %v2881 = vmax.f32 %v2865, 0.0
      %v2882 = vmax.f32 %v2866, 0.0
      %v2883 = vmax.f32 %v2867, 0.0
      %v2884 = vmax.f32 %v2868, 0.0
      %v2885 = vpack.c.bf16 %v2870, %v2869
      %v2886 = vpack.c.bf16 %v2872, %v2871
      %v2887 = vpack.c.bf16 %v2874, %v2873
      %v2888 = vpack.c.bf16 %v2876, %v2875
      %v2889 = vpack.c.bf16 %v2878, %v2877
      %v2890 = vpack.c.bf16 %v2880, %v2879
      %v2891 = vpack.c.bf16 %v2882, %v2881
      %v2892 = vpack.c.bf16 %v2884, %v2883
      %v2901 = vunpack.c.l.b16 %v2885
      %v2902 = vunpack.c.h.b16 %v2885
      %v2903 = vunpack.c.l.b16 %v2886
      %v2904 = vunpack.c.h.b16 %v2886
      %v2905 = vunpack.c.l.b16 %v2887
      %v2906 = vunpack.c.h.b16 %v2887
      %v2907 = vunpack.c.l.b16 %v2888
      %v2908 = vunpack.c.h.b16 %v2888
      %v2909 = vunpack.c.l.b16 %v2889
      %v2910 = vunpack.c.h.b16 %v2889
      %v2911 = vunpack.c.l.b16 %v2890
      %v2912 = vunpack.c.h.b16 %v2890
      %v2913 = vunpack.c.l.b16 %v2891
      %v2914 = vunpack.c.h.b16 %v2891
      %v2915 = vunpack.c.l.b16 %v2892
      %v2916 = vunpack.c.h.b16 %v2892
      %v2917 = vpack.c.b16 %v2901, %v2901
      %v2918 = vpack.c.b16 %v2902, %v2902
      %v2919 = vpack.c.b16 %v2903, %v2903
      %v2920 = vpack.c.b16 %v2904, %v2904
      %v2921 = vpack.c.b16 %v2905, %v2905
      %v2922 = vpack.c.b16 %v2906, %v2906
      %v2923 = vpack.c.b16 %v2907, %v2907
      %v2924 = vpack.c.b16 %v2908, %v2908
      %v2925 = vpack.c.b16 %v2909, %v2909
      %v2926 = vpack.c.b16 %v2910, %v2910
      %v2927 = vpack.c.b16 %v2911, %v2911
      %v2928 = vpack.c.b16 %v2912, %v2912
      %v2929 = vpack.c.b16 %v2913, %v2913
      %v2930 = vpack.c.b16 %v2914, %v2914
      %v2931 = vpack.c.b16 %v2915, %v2915
      %v2932 = vpack.c.b16 %v2916, %v2916
      %vm2949 = vcmask 781312
      %2950 = vst.msk [vmem:[%s266] sm:$0xf] %vm2949, %v2917
      %2951 = vst.msk [vmem:[%s266 + $0x4] sm:$0xf] %vm2949, %v2918
      %2952 = vst.msk [vmem:[%s266 + $0x8] sm:$0xf] %vm2949, %v2919
      %2953 = vst.msk [vmem:[%s266 + $0xc] sm:$0xf] %vm2949, %v2920
      %2954 = vst.msk [vmem:[%s266 + $0x10] sm:$0xf] %vm2949, %v2921
      %2955 = vst.msk [vmem:[%s266 + $0x14] sm:$0xf] %vm2949, %v2922
      %2956 = vst.msk [vmem:[%s266 + $0x18] sm:$0xf] %vm2949, %v2923
      %2957 = vst.msk [vmem:[%s266 + $0x1c] sm:$0xf] %vm2949, %v2924
      %2958 = vst.msk [vmem:[%s266 + $0x20] sm:$0xf] %vm2949, %v2925
      %2959 = vst.msk [vmem:[%s266 + $0x24] sm:$0xf] %vm2949, %v2926
      %2960 = vst.msk [vmem:[%s266 + $0x28] sm:$0xf] %vm2949, %v2927
      %2961 = vst.msk [vmem:[%s266 + $0x2c] sm:$0xf] %vm2949, %v2928
      %2962 = vst.msk [vmem:[%s266 + $0x30] sm:$0xf] %vm2949, %v2929
      %2963 = vst.msk [vmem:[%s266 + $0x34] sm:$0xf] %vm2949, %v2930
      %2964 = vst.msk [vmem:[%s266 + $0x38] sm:$0xf] %vm2949, %v2931
      %2965 = vst.msk [vmem:[%s266 + $0x3c] sm:$0xf] %vm2949, %v2932
      %s2966 = smul.u32 16, %s15
      %p2967 = scmp.lt.s32.totalorder %s2966, 31
      %s2968 = scalar_select %p2967, %s2966, 31
      %s2969 = smul.addr %s2968, 4
      %s2970 = scalar_lea.vmem %s4, %s2969
      // Predicated region
      $region37: #{inception_b_forward.7} parent=35 // pred_check
        %p2971 = pneg %p131
      $region38: #{inception_b_forward.7} parent=35 // pred_check_branch
        %2973 = sbr.rel (%p2971) target = $region40
      $region39: #{inception_b_forward.7} parent=35 // pred_region
        %s2974 = smul.u32 16, %s15
      $region40: #{inception_b_forward.7} parent=35 // pred_fallthru
        _
    $region36: #{inception_b_forward.7} parent=5 // pred_fallthru
      _
    %p2975 = scmp.le.s32.totalorder 2, %s10
    // Predicated region
    $region41: #{inception_b_forward.7} parent=5 // pred_check
      %p2976 = pneg %p2975
    $region42: #{inception_b_forward.7} parent=5 // pred_check_branch
      %2978 = sbr.rel (%p2976) target = $region44
    $region43: #{inception_b_forward.7} parent=5 // pred_region
      %s2979 = ssub.s32 %s10, 2
      // Predicated region
      $region45: #{inception_b_forward.7} parent=43 // pred_check
        %p2980 = pneg %p137
      $region46: #{inception_b_forward.7} parent=43 // pred_check_branch
        %2982 = sbr.rel (%p2980) target = $region48
      $region47: #{inception_b_forward.7} parent=43 // pred_region
        %s2983 = smul.u32 16, %s16
        %p2984 = scmp.lt.s32.totalorder %s2983, 31
        %s2985 = scalar_select %p2984, %s2983, 31
        %s2986 = smul.addr %s2985, 4
        %s2987 = scalar_lea.vmem %s4, %s2986
      $region48: #{inception_b_forward.7} parent=43 // pred_fallthru
        _
    $region44: #{inception_b_forward.7} parent=5 // pred_fallthru
      _
  $region6: #{inception_b_forward.7} parent=0 // loop_footer
    %s14 = sadd.s32 1, %s10
  $region7: #{inception_b_forward.7} parent=0 // loop_footer_branch
    %9 = sbr.rel target = $region3
  $region8: #{inception_b_forward.7} parent=0 // loop_exit
    _

</llo_original>
